<compile_context>
chip_gen: v5e
topology: v5e:2x2
jax: 0.10.0
libtpu: 0.0.40
codegen_flags: <defaults>
</compile_context>

<pallas_src>
import functools

import jax
import jax.numpy as jnp
from jax.experimental import pallas as pl
from jax.experimental.pallas import tpu as pltpu

INPUT_DIM = 10
MODEL_DIM = 64
NUM_HEADS = 4
HEAD_DIM = MODEL_DIM // NUM_HEADS
NUM_LAYERS = 3
OUTPUT_DIM = 10
FFN_DIM = 2048          # nn.TransformerEncoderLayer default dim_feedforward
LN_EPS = 1e-5           # default layer_norm_eps
LANE = 128

# row indices inside the packed per-layer small-vector array
_V_OB, _V_LN1G, _V_LN1B, _V_FF2B, _V_LN2G, _V_LN2B = 0, 1, 2, 3, 4, 5
_V_ROWS = 8             # sublane-aligned row count


def _round_up(n, m):
    return ((n + m - 1) // m) * m


def _layer_norm(x, g, b):
    mu = jnp.mean(x, axis=-1, keepdims=True)
    xc = x - mu
    var = jnp.mean(xc * xc, axis=-1, keepdims=True)
    return xc * jax.lax.rsqrt(var + LN_EPS) * g + b


# ---------------------------------------------------------------------------
# Fused whole-model kernel
# ---------------------------------------------------------------------------
def _fused_model_kernel(x_ref, emb_w_ref, emb_b_ref, qkvw_ref, qkvb_ref,
                        ow_ref, vec_ref, f1w_ref, f1b_ref, f2w_ref,
                        fcw_ref, fcb_ref, o_ref, *, seq_len):
    f32 = jnp.float32
    bf16 = jnp.bfloat16
    mb = x_ref.shape[0]
    scale = 1.0 / float(HEAD_DIM) ** 0.5

    # Block-diagonal additive mask, generated in-kernel (no HBM traffic).
    # (row + 0.5)/S floor-compare avoids vectorized integer division.
    row = jax.lax.broadcasted_iota(jnp.int32, (mb, mb), 0).astype(f32)
    col = jax.lax.broadcasted_iota(jnp.int32, (mb, mb), 1).astype(f32)
    inv_s = 1.0 / float(seq_len)
    same_seq = jnp.floor((row + 0.5) * inv_s) == jnp.floor((col + 0.5) * inv_s)
    attn_bias = jnp.where(same_seq, 0.0, -1e9).astype(f32)

    lane = jax.lax.broadcasted_iota(jnp.int32, (1, MODEL_DIM), 1)

    # ---- embedding (bf16 MXU operands, f32 accumulation) ----
    y = jnp.dot(x_ref[...].astype(bf16), emb_w_ref[...],
                preferred_element_type=f32) + emb_b_ref[...]

    for li in range(NUM_LAYERS):
        vec = vec_ref[li]                       # (8, MODEL_DIM) packed small vectors

        # ---- fused QKV projection: single MXU push with N = 3*MODEL_DIM ----
        qkv = jnp.dot(y.astype(bf16), qkvw_ref[li],
                      preferred_element_type=f32) + qkvb_ref[li]
        q = qkv[:, 0:MODEL_DIM]
        k = qkv[:, MODEL_DIM:2 * MODEL_DIM]
        v = qkv[:, 2 * MODEL_DIM:3 * MODEL_DIM]
        k_bf = k.astype(bf16)

        # ---- multi-head attention, per-head lane masks, fori_loop over heads ----
        def head_body(h, ctx):
            hm = ((lane >= h * HEAD_DIM) & (lane < (h + 1) * HEAD_DIM)).astype(f32)
            s = jax.lax.dot_general((q * hm).astype(bf16), k_bf,
                                    (((1,), (1,)), ((), ())),
                                    preferred_element_type=f32)
            s = s * scale + attn_bias
            s = s - jnp.max(s, axis=-1, keepdims=True)
            p = jnp.exp(s)
            p = p * pl.reciprocal(jnp.sum(p, axis=-1, keepdims=True), approx=True)
            return ctx + jnp.dot(p.astype(bf16), (v * hm).astype(bf16),
                                 preferred_element_type=f32)

        ctx = jax.lax.fori_loop(0, NUM_HEADS, head_body,
                                jnp.zeros((mb, MODEL_DIM), f32))

        attn = jnp.dot(ctx.astype(bf16), ow_ref[li],
                       preferred_element_type=f32) + vec[_V_OB:_V_OB + 1]
        y = _layer_norm(y + attn, vec[_V_LN1G:_V_LN1G + 1], vec[_V_LN1B:_V_LN1B + 1])

        # ---- feed forward: Linear -> ReLU -> Linear (bf16 MXU, f32 elementwise) ----
        h1 = jnp.dot(y.astype(bf16), f1w_ref[li],
                     preferred_element_type=f32) + f1b_ref[li]
        h1 = jnp.maximum(h1, 0.0)
        h2 = jnp.dot(h1.astype(bf16), f2w_ref[li],
                     preferred_element_type=f32) + vec[_V_FF2B:_V_FF2B + 1]
        y = _layer_norm(y + h2, vec[_V_LN2G:_V_LN2G + 1], vec[_V_LN2B:_V_LN2B + 1])

    # ---- output projection, lane-dense (padded to 128 columns) ----
    o_ref[...] = jnp.dot(y.astype(bf16), fcw_ref[...],
                         preferred_element_type=f32) + fcb_ref[...]


# ---------------------------------------------------------------------------
# Parameters (deterministic synthetic init, logical/unpadded shapes)
# ---------------------------------------------------------------------------
def init_params(key):
    def w_init(k, shape):
        return 0.02 * jax.random.normal(k, shape, dtype=jnp.float32)

    keys = jax.random.split(key, 2 + NUM_LAYERS)
    params = {
        "emb_w": w_init(keys[0], (INPUT_DIM, MODEL_DIM)),
        "emb_b": jnp.zeros((MODEL_DIM,), jnp.float32),
        "fc_w": w_init(keys[1], (MODEL_DIM, OUTPUT_DIM)),
        "fc_b": jnp.zeros((OUTPUT_DIM,), jnp.float32),
        "layers": [],
    }
    for li in range(NUM_LAYERS):
        lk = jax.random.split(keys[2 + li], 6)
        params["layers"].append({
            "q_w": w_init(lk[0], (MODEL_DIM, MODEL_DIM)),
            "q_b": jnp.zeros((MODEL_DIM,), jnp.float32),
            "k_w": w_init(lk[1], (MODEL_DIM, MODEL_DIM)),
            "k_b": jnp.zeros((MODEL_DIM,), jnp.float32),
            "v_w": w_init(lk[2], (MODEL_DIM, MODEL_DIM)),
            "v_b": jnp.zeros((MODEL_DIM,), jnp.float32),
            "o_w": w_init(lk[3], (MODEL_DIM, MODEL_DIM)),
            "o_b": jnp.zeros((MODEL_DIM,), jnp.float32),
            "ln1_g": jnp.ones((MODEL_DIM,), jnp.float32),
            "ln1_b": jnp.zeros((MODEL_DIM,), jnp.float32),
            "ff1_w": w_init(lk[4], (MODEL_DIM, FFN_DIM)),
            "ff1_b": jnp.zeros((FFN_DIM,), jnp.float32),
            "ff2_w": w_init(lk[5], (FFN_DIM, MODEL_DIM)),
            "ff2_b": jnp.zeros((MODEL_DIM,), jnp.float32),
            "ln2_g": jnp.ones((MODEL_DIM,), jnp.float32),
            "ln2_b": jnp.zeros((MODEL_DIM,), jnp.float32),
        })
    return params


# ---------------------------------------------------------------------------
# Forward pass: one fused pallas_call
# ---------------------------------------------------------------------------
def wave_transformer(params, x):
    B, S, Din = x.shape
    f32, bf16 = jnp.float32, jnp.bfloat16

    # finest batch split (kept even for v7x megacore) with sublane-aligned blocks
    n_blocks = 1
    for n in (4, 2):
        if B % n == 0 and ((B // n) * S) % 8 == 0:
            n_blocks = n
            break
    Bb = B // n_blocks
    M, Mb = B * S, Bb * S
    out_pad = _round_up(OUTPUT_DIM, LANE)

    x2d = x.reshape(M, Din).astype(f32)                       # unpadded (M, Din)

    emb_w = params["emb_w"].astype(bf16)                      # (Din, 64)
    emb_b = params["emb_b"].reshape(1, MODEL_DIM)
    fcw = jnp.pad(params["fc_w"],
                  ((0, 0), (0, out_pad - OUTPUT_DIM))).astype(bf16)
    fcb = jnp.pad(params["fc_b"], (0, out_pad - OUTPUT_DIM)).reshape(1, out_pad)

    layers = params["layers"]
    qkvw = jnp.stack([jnp.concatenate([l["q_w"], l["k_w"], l["v_w"]], axis=1)
                      for l in layers]).astype(bf16)          # (L, 64, 192)
    qkvb = jnp.stack([jnp.concatenate([l["q_b"], l["k_b"], l["v_b"]])
                      for l in layers])[:, None, :]           # (L, 1, 192)
    ow = jnp.stack([l["o_w"] for l in layers]).astype(bf16)   # (L, 64, 64)
    f1w = jnp.stack([l["ff1_w"] for l in layers]).astype(bf16)  # (L, 64, 2048)
    f1b = jnp.stack([l["ff1_b"] for l in layers])[:, None, :]   # (L, 1, 2048)
    f2w = jnp.stack([l["ff2_w"] for l in layers]).astype(bf16)  # (L, 2048, 64)

    # pack all small per-layer bias/LN vectors into one array (fewer DMA descriptors)
    vecs = jnp.zeros((NUM_LAYERS, _V_ROWS, MODEL_DIM), f32)
    for li, l in enumerate(layers):
        vecs = vecs.at[li, _V_OB].set(l["o_b"])
        vecs = vecs.at[li, _V_LN1G].set(l["ln1_g"])
        vecs = vecs.at[li, _V_LN1B].set(l["ln1_b"])
        vecs = vecs.at[li, _V_FF2B].set(l["ff2_b"])
        vecs = vecs.at[li, _V_LN2G].set(l["ln2_g"])
        vecs = vecs.at[li, _V_LN2B].set(l["ln2_b"])

    args = (x2d, emb_w, emb_b, qkvw, qkvb, ow, vecs, f1w, f1b, f2w, fcw, fcb)

    def resident(a):
        n = a.ndim
        return pl.BlockSpec(a.shape, lambda g, n=n: (0,) * n)

    in_specs = [pl.BlockSpec((Mb, Din), lambda g: (g, 0))]    # x: split over batch
    in_specs += [resident(a) for a in args[1:]]               # weights stay resident

    out = pl.pallas_call(
        functools.partial(_fused_model_kernel, seq_len=S),
        out_shape=jax.ShapeDtypeStruct((M, out_pad), f32),
        grid=(n_blocks,),
        in_specs=in_specs,
        out_specs=pl.BlockSpec((Mb, out_pad), lambda g: (g, 0)),
        compiler_params=pltpu.CompilerParams(
            dimension_semantics=("parallel",),
            vmem_limit_bytes=16 * 1024 * 1024),
    )(*args)

    return out[:, :OUTPUT_DIM].reshape(B, S, OUTPUT_DIM)


if __name__ == "__main__":
    key = jax.random.PRNGKey(0)
    pkey, xkey = jax.random.split(key)
    params = init_params(pkey)
    # Matches the module's driver: x = torch.rand((32, 10, input_dim)), batch_first=True
    x = jax.random.uniform(xkey, (32, 10, INPUT_DIM), dtype=jnp.float32)

    fwd = jax.jit(wave_transformer)
    out = fwd(params, x)
    jax.block_until_ready(out)
    assert out.shape == (32, 10, OUTPUT_DIM)
    print("KERNEL_OK")
</pallas_src>

<mosaic_0001>
module attributes {stable_mosaic.version = 11 : i64} {
  func.func @_fused_model_kernel(%arg0: i32, %arg1: memref<80x10xf32, #tpu.memory_space<vmem>>, %arg2: memref<10x64xbf16, #tpu.memory_space<vmem>>, %arg3: memref<1x64xf32, #tpu.memory_space<vmem>>, %arg4: memref<3x64x192xbf16, #tpu.memory_space<vmem>>, %arg5: memref<3x1x192xf32, #tpu.memory_space<vmem>>, %arg6: memref<3x64x64xbf16, #tpu.memory_space<vmem>>, %arg7: memref<3x8x64xf32, #tpu.memory_space<vmem>>, %arg8: memref<3x64x2048xbf16, #tpu.memory_space<vmem>>, %arg9: memref<3x1x2048xf32, #tpu.memory_space<vmem>>, %arg10: memref<3x2048x64xbf16, #tpu.memory_space<vmem>>, %arg11: memref<64x128xbf16, #tpu.memory_space<vmem>>, %arg12: memref<1x128xf32, #tpu.memory_space<vmem>>, %arg13: memref<80x128xf32, #tpu.memory_space<vmem>>) attributes {dimension_semantics = [#tpu.dimension_semantics<parallel>], iteration_bounds = array<i64: 4>, scalar_prefetch = 0 : i64, scratch_operands = 0 : i64, tpu.core_type = #tpu.core_type<tc>, window_params = [{transform_indices = @transform_0, window_bounds = array<i64: 80, 10>}, {pipeline_mode = #tpu.pipeline_mode<synchronous>, transform_indices = @transform_1, window_bounds = array<i64: 10, 64>}, {pipeline_mode = #tpu.pipeline_mode<synchronous>, transform_indices = @transform_2, window_bounds = array<i64: 1, 64>}, {pipeline_mode = #tpu.pipeline_mode<synchronous>, transform_indices = @transform_3, window_bounds = array<i64: 3, 64, 192>}, {pipeline_mode = #tpu.pipeline_mode<synchronous>, transform_indices = @transform_4, window_bounds = array<i64: 3, 1, 192>}, {pipeline_mode = #tpu.pipeline_mode<synchronous>, transform_indices = @transform_5, window_bounds = array<i64: 3, 64, 64>}, {pipeline_mode = #tpu.pipeline_mode<synchronous>, transform_indices = @transform_6, window_bounds = array<i64: 3, 8, 64>}, {pipeline_mode = #tpu.pipeline_mode<synchronous>, transform_indices = @transform_7, window_bounds = array<i64: 3, 64, 2048>}, {pipeline_mode = #tpu.pipeline_mode<synchronous>, transform_indices = @transform_8, window_bounds = array<i64: 3, 1, 2048>}, {pipeline_mode = #tpu.pipeline_mode<synchronous>, transform_indices = @transform_9, window_bounds = array<i64: 3, 2048, 64>}, {pipeline_mode = #tpu.pipeline_mode<synchronous>, transform_indices = @transform_10, window_bounds = array<i64: 64, 128>}, {pipeline_mode = #tpu.pipeline_mode<synchronous>, transform_indices = @transform_11, window_bounds = array<i64: 1, 128>}, {transform_indices = @transform_12, window_bounds = array<i64: 80, 128>}]} {
    %0 = tpu.iota {dimensions = array<i32: 0>} : vector<80x80xi32>
    %1 = arith.sitofp %0 : vector<80x80xi32> to vector<80x80xf32>
    %2 = tpu.iota {dimensions = array<i32: 1>} : vector<80x80xi32>
    %3 = arith.sitofp %2 : vector<80x80xi32> to vector<80x80xf32>
    %cst = arith.constant 5.000000e-01 : f32
    %4 = vector.broadcast %cst : f32 to vector<80x80xf32>
    %5 = arith.addf %1, %4 : vector<80x80xf32>
    %cst_0 = arith.constant 1.000000e-01 : f32
    %6 = vector.broadcast %cst_0 : f32 to vector<80x80xf32>
    %7 = arith.mulf %5, %6 : vector<80x80xf32>
    %8 = math.floor %7 : vector<80x80xf32>
    %cst_1 = arith.constant 5.000000e-01 : f32
    %9 = vector.broadcast %cst_1 : f32 to vector<80x80xf32>
    %10 = arith.addf %3, %9 : vector<80x80xf32>
    %cst_2 = arith.constant 1.000000e-01 : f32
    %11 = vector.broadcast %cst_2 : f32 to vector<80x80xf32>
    %12 = arith.mulf %10, %11 : vector<80x80xf32>
    %13 = math.floor %12 : vector<80x80xf32>
    %14 = arith.cmpf oeq, %8, %13 : vector<80x80xf32>
    %cst_3 = arith.constant 0.000000e+00 : f32
    %cst_4 = arith.constant -1.000000e+09 : f32
    %15 = vector.broadcast %cst_3 : f32 to vector<80x80xf32>
    %16 = vector.broadcast %cst_4 : f32 to vector<80x80xf32>
    %17 = arith.select %14, %15, %16 : vector<80x80xi1>, vector<80x80xf32>
    %18 = tpu.iota {dimensions = array<i32: 1>} : vector<1x64xi32>
    %c0 = arith.constant 0 : index
    %c0_5 = arith.constant 0 : index
    %19 = vector.load %arg1[%c0, %c0_5] : memref<80x10xf32, #tpu.memory_space<vmem>>, vector<80x10xf32>
    %20 = arith.truncf %19 : vector<80x10xf32> to vector<80x10xbf16>
    %c0_6 = arith.constant 0 : index
    %c0_7 = arith.constant 0 : index
    %21 = vector.load %arg2[%c0_6, %c0_7] : memref<10x64xbf16, #tpu.memory_space<vmem>>, vector<10x64xbf16>
    %cst_8 = arith.constant dense<0.000000e+00> : vector<80x64xf32>
    %22 = tpu.matmul %20, %21, %cst_8 {dimension_numbers = #tpu.dot_dimension_numbers<[1], [0], [0], [1], [0, 0, 1, 1], [], []>} : vector<80x10xbf16>, vector<10x64xbf16>, vector<80x64xf32> -> vector<80x64xf32>
    %c0_9 = arith.constant 0 : index
    %c0_10 = arith.constant 0 : index
    %23 = vector.load %arg3[%c0_9, %c0_10] : memref<1x64xf32, #tpu.memory_space<vmem>>, vector<1x64xf32>
    %24 = vector.broadcast %23 : vector<1x64xf32> to vector<80x64xf32>
    %25 = arith.addf %22, %24 : vector<80x64xf32>
    %c0_11 = arith.constant 0 : index
    %c0_12 = arith.constant 0 : index
    %c0_13 = arith.constant 0 : index
    %26 = vector.load %arg7[%c0_11, %c0_12, %c0_13] : memref<3x8x64xf32, #tpu.memory_space<vmem>>, vector<1x8x64xf32>
    %27 = vector.shape_cast %26 : vector<1x8x64xf32> to vector<8x64xf32>
    %28 = arith.truncf %25 : vector<80x64xf32> to vector<80x64xbf16>
    %c0_14 = arith.constant 0 : index
    %c0_15 = arith.constant 0 : index
    %c0_16 = arith.constant 0 : index
    %29 = vector.load %arg4[%c0_14, %c0_15, %c0_16] : memref<3x64x192xbf16, #tpu.memory_space<vmem>>, vector<1x64x192xbf16>
    %30 = vector.shape_cast %29 : vector<1x64x192xbf16> to vector<64x192xbf16>
    %cst_17 = arith.constant dense<0.000000e+00> : vector<80x192xf32>
    %31 = tpu.matmul %28, %30, %cst_17 {dimension_numbers = #tpu.dot_dimension_numbers<[1], [0], [0], [1], [0, 0, 1, 1], [], []>} : vector<80x64xbf16>, vector<64x192xbf16>, vector<80x192xf32> -> vector<80x192xf32>
    %c0_18 = arith.constant 0 : index
    %c0_19 = arith.constant 0 : index
    %c0_20 = arith.constant 0 : index
    %32 = vector.load %arg5[%c0_18, %c0_19, %c0_20] : memref<3x1x192xf32, #tpu.memory_space<vmem>>, vector<1x1x192xf32>
    %33 = vector.shape_cast %32 : vector<1x1x192xf32> to vector<1x192xf32>
    %34 = vector.broadcast %33 : vector<1x192xf32> to vector<80x192xf32>
    %35 = arith.addf %31, %34 : vector<80x192xf32>
    %36 = vector.extract_strided_slice %35 {offsets = [0, 0], sizes = [80, 64], strides = [1, 1]} : vector<80x192xf32> to vector<80x64xf32>
    %37 = vector.extract_strided_slice %35 {offsets = [0, 64], sizes = [80, 64], strides = [1, 1]} : vector<80x192xf32> to vector<80x64xf32>
    %38 = vector.extract_strided_slice %35 {offsets = [0, 128], sizes = [80, 64], strides = [1, 1]} : vector<80x192xf32> to vector<80x64xf32>
    %39 = arith.truncf %37 : vector<80x64xf32> to vector<80x64xbf16>
    %cst_21 = arith.constant 0.000000e+00 : f32
    %40 = vector.broadcast %cst_21 : f32 to vector<80x64xf32>
    %c0_i32 = arith.constant 0 : i32
    %c4_i32 = arith.constant 4 : i32
    %41 = arith.addi %c0_i32, %c4_i32 : i32
    %c1_i32 = arith.constant 1 : i32
    %42 = scf.for %arg14 = %c0_i32 to %41 step %c1_i32 iter_args(%arg15 = %40) -> (vector<80x64xf32>)  : i32 {
      %c16_i32 = arith.constant 16 : i32
      %294 = arith.muli %arg14, %c16_i32 : i32
      %295 = vector.broadcast %294 : i32 to vector<1x64xi32>
      %296 = arith.cmpi sge, %18, %295 : vector<1x64xi32>
      %c1_i32_136 = arith.constant 1 : i32
      %297 = arith.addi %arg14, %c1_i32_136 : i32
      %c16_i32_137 = arith.constant 16 : i32
      %298 = arith.muli %297, %c16_i32_137 : i32
      %299 = vector.broadcast %298 : i32 to vector<1x64xi32>
      %300 = arith.cmpi slt, %18, %299 : vector<1x64xi32>
      %301 = arith.andi %296, %300 : vector<1x64xi1>
      %302 = arith.extui %301 : vector<1x64xi1> to vector<1x64xi32>
      %303 = arith.sitofp %302 : vector<1x64xi32> to vector<1x64xf32>
      %304 = vector.broadcast %303 : vector<1x64xf32> to vector<80x64xf32>
      %305 = arith.mulf %36, %304 : vector<80x64xf32>
      %306 = arith.truncf %305 : vector<80x64xf32> to vector<80x64xbf16>
      %cst_138 = arith.constant dense<0.000000e+00> : vector<80x80xf32>
      %307 = tpu.matmul %306, %39, %cst_138 {dimension_numbers = #tpu.dot_dimension_numbers<[1], [1], [0], [0], [0, 0, 1, 0], [], []>} : vector<80x64xbf16>, vector<80x64xbf16>, vector<80x80xf32> -> vector<80x80xf32>
      %cst_139 = arith.constant 2.500000e-01 : f32
      %308 = vector.broadcast %cst_139 : f32 to vector<80x80xf32>
      %309 = arith.mulf %307, %308 : vector<80x80xf32>
      %310 = arith.addf %309, %17 : vector<80x80xf32>
      %cst_140 = arith.constant dense<0xFF800000> : vector<80xf32>
      %311 = vector.multi_reduction <maximumf>, %310, %cst_140 [1] : vector<80x80xf32> to vector<80xf32>
      %312 = vector.shape_cast %311 : vector<80xf32> to vector<80x1xf32>
      %313 = vector.broadcast %312 : vector<80x1xf32> to vector<80x80xf32>
      %314 = arith.subf %310, %313 : vector<80x80xf32>
      %315 = math.exp %314 : vector<80x80xf32>
      %cst_141 = arith.constant dense<0.000000e+00> : vector<80xf32>
      %316 = vector.multi_reduction <add>, %315, %cst_141 [1] : vector<80x80xf32> to vector<80xf32>
      %317 = vector.shape_cast %316 : vector<80xf32> to vector<80x1xf32>
      %318 = tpu.reciprocal %317 {approx = true} : vector<80x1xf32> -> vector<80x1xf32>
      %319 = vector.broadcast %318 : vector<80x1xf32> to vector<80x80xf32>
      %320 = arith.mulf %315, %319 : vector<80x80xf32>
      %321 = arith.truncf %320 : vector<80x80xf32> to vector<80x80xbf16>
      %322 = vector.broadcast %303 : vector<1x64xf32> to vector<80x64xf32>
      %323 = arith.mulf %38, %322 : vector<80x64xf32>
      %324 = arith.truncf %323 : vector<80x64xf32> to vector<80x64xbf16>
      %cst_142 = arith.constant dense<0.000000e+00> : vector<80x64xf32>
      %325 = tpu.matmul %321, %324, %cst_142 {dimension_numbers = #tpu.dot_dimension_numbers<[1], [0], [0], [1], [0, 0, 1, 1], [], []>} : vector<80x80xbf16>, vector<80x64xbf16>, vector<80x64xf32> -> vector<80x64xf32>
      %326 = arith.addf %arg15, %325 : vector<80x64xf32>
      scf.yield %326 : vector<80x64xf32>
    }
    %c4_i32_22 = arith.constant 4 : i32
    %43 = arith.truncf %42 : vector<80x64xf32> to vector<80x64xbf16>
    %c0_23 = arith.constant 0 : index
    %c0_24 = arith.constant 0 : index
    %c0_25 = arith.constant 0 : index
    %44 = vector.load %arg6[%c0_23, %c0_24, %c0_25] : memref<3x64x64xbf16, #tpu.memory_space<vmem>>, vector<1x64x64xbf16>
    %45 = vector.shape_cast %44 : vector<1x64x64xbf16> to vector<64x64xbf16>
    %cst_26 = arith.constant dense<0.000000e+00> : vector<80x64xf32>
    %46 = tpu.matmul %43, %45, %cst_26 {dimension_numbers = #tpu.dot_dimension_numbers<[1], [0], [0], [1], [0, 0, 1, 1], [], []>} : vector<80x64xbf16>, vector<64x64xbf16>, vector<80x64xf32> -> vector<80x64xf32>
    %47 = vector.extract_strided_slice %27 {offsets = [0, 0], sizes = [1, 64], strides = [1, 1]} : vector<8x64xf32> to vector<1x64xf32>
    %48 = vector.broadcast %47 : vector<1x64xf32> to vector<80x64xf32>
    %49 = arith.addf %46, %48 : vector<80x64xf32>
    %50 = arith.addf %25, %49 : vector<80x64xf32>
    %51 = vector.extract_strided_slice %27 {offsets = [1, 0], sizes = [1, 64], strides = [1, 1]} : vector<8x64xf32> to vector<1x64xf32>
    %52 = vector.extract_strided_slice %27 {offsets = [2, 0], sizes = [1, 64], strides = [1, 1]} : vector<8x64xf32> to vector<1x64xf32>
    %cst_27 = arith.constant dense<0.000000e+00> : vector<80xf32>
    %53 = vector.multi_reduction <add>, %50, %cst_27 [1] : vector<80x64xf32> to vector<80xf32>
    %54 = vector.shape_cast %53 : vector<80xf32> to vector<80x1xf32>
    %cst_28 = arith.constant 6.400000e+01 : f32
    %55 = vector.broadcast %cst_28 : f32 to vector<80x1xf32>
    %56 = arith.divf %54, %55 : vector<80x1xf32>
    %57 = vector.broadcast %56 : vector<80x1xf32> to vector<80x64xf32>
    %58 = arith.subf %50, %57 : vector<80x64xf32>
    %59 = arith.mulf %58, %58 : vector<80x64xf32>
    %cst_29 = arith.constant dense<0.000000e+00> : vector<80xf32>
    %60 = vector.multi_reduction <add>, %59, %cst_29 [1] : vector<80x64xf32> to vector<80xf32>
    %61 = vector.shape_cast %60 : vector<80xf32> to vector<80x1xf32>
    %cst_30 = arith.constant 6.400000e+01 : f32
    %62 = vector.broadcast %cst_30 : f32 to vector<80x1xf32>
    %63 = arith.divf %61, %62 : vector<80x1xf32>
    %cst_31 = arith.constant 9.99999974E-6 : f32
    %64 = vector.broadcast %cst_31 : f32 to vector<80x1xf32>
    %65 = arith.addf %63, %64 : vector<80x1xf32>
    %66 = math.rsqrt %65 : vector<80x1xf32>
    %67 = vector.broadcast %66 : vector<80x1xf32> to vector<80x64xf32>
    %68 = arith.mulf %58, %67 : vector<80x64xf32>
    %69 = vector.broadcast %51 : vector<1x64xf32> to vector<80x64xf32>
    %70 = arith.mulf %68, %69 : vector<80x64xf32>
    %71 = vector.broadcast %52 : vector<1x64xf32> to vector<80x64xf32>
    %72 = arith.addf %70, %71 : vector<80x64xf32>
    %73 = arith.truncf %72 : vector<80x64xf32> to vector<80x64xbf16>
    %c0_32 = arith.constant 0 : index
    %c0_33 = arith.constant 0 : index
    %c0_34 = arith.constant 0 : index
    %74 = vector.load %arg8[%c0_32, %c0_33, %c0_34] : memref<3x64x2048xbf16, #tpu.memory_space<vmem>>, vector<1x64x2048xbf16>
    %75 = vector.shape_cast %74 : vector<1x64x2048xbf16> to vector<64x2048xbf16>
    %cst_35 = arith.constant dense<0.000000e+00> : vector<80x2048xf32>
    %76 = tpu.matmul %73, %75, %cst_35 {dimension_numbers = #tpu.dot_dimension_numbers<[1], [0], [0], [1], [0, 0, 1, 1], [], []>} : vector<80x64xbf16>, vector<64x2048xbf16>, vector<80x2048xf32> -> vector<80x2048xf32>
    %c0_36 = arith.constant 0 : index
    %c0_37 = arith.constant 0 : index
    %c0_38 = arith.constant 0 : index
    %77 = vector.load %arg9[%c0_36, %c0_37, %c0_38] : memref<3x1x2048xf32, #tpu.memory_space<vmem>>, vector<1x1x2048xf32>
    %78 = vector.shape_cast %77 : vector<1x1x2048xf32> to vector<1x2048xf32>
    %79 = vector.broadcast %78 : vector<1x2048xf32> to vector<80x2048xf32>
    %80 = arith.addf %76, %79 : vector<80x2048xf32>
    %cst_39 = arith.constant 0.000000e+00 : f32
    %81 = vector.broadcast %cst_39 : f32 to vector<80x2048xf32>
    %82 = arith.maximumf %80, %81 : vector<80x2048xf32>
    %83 = arith.truncf %82 : vector<80x2048xf32> to vector<80x2048xbf16>
    %c0_40 = arith.constant 0 : index
    %c0_41 = arith.constant 0 : index
    %c0_42 = arith.constant 0 : index
    %84 = vector.load %arg10[%c0_40, %c0_41, %c0_42] : memref<3x2048x64xbf16, #tpu.memory_space<vmem>>, vector<1x2048x64xbf16>
    %85 = vector.shape_cast %84 : vector<1x2048x64xbf16> to vector<2048x64xbf16>
    %cst_43 = arith.constant dense<0.000000e+00> : vector<80x64xf32>
    %86 = tpu.matmul %83, %85, %cst_43 {dimension_numbers = #tpu.dot_dimension_numbers<[1], [0], [0], [1], [0, 0, 1, 1], [], []>} : vector<80x2048xbf16>, vector<2048x64xbf16>, vector<80x64xf32> -> vector<80x64xf32>
    %87 = vector.extract_strided_slice %27 {offsets = [3, 0], sizes = [1, 64], strides = [1, 1]} : vector<8x64xf32> to vector<1x64xf32>
    %88 = vector.broadcast %87 : vector<1x64xf32> to vector<80x64xf32>
    %89 = arith.addf %86, %88 : vector<80x64xf32>
    %90 = arith.addf %72, %89 : vector<80x64xf32>
    %91 = vector.extract_strided_slice %27 {offsets = [4, 0], sizes = [1, 64], strides = [1, 1]} : vector<8x64xf32> to vector<1x64xf32>
    %92 = vector.extract_strided_slice %27 {offsets = [5, 0], sizes = [1, 64], strides = [1, 1]} : vector<8x64xf32> to vector<1x64xf32>
    %cst_44 = arith.constant dense<0.000000e+00> : vector<80xf32>
    %93 = vector.multi_reduction <add>, %90, %cst_44 [1] : vector<80x64xf32> to vector<80xf32>
    %94 = vector.shape_cast %93 : vector<80xf32> to vector<80x1xf32>
    %cst_45 = arith.constant 6.400000e+01 : f32
    %95 = vector.broadcast %cst_45 : f32 to vector<80x1xf32>
    %96 = arith.divf %94, %95 : vector<80x1xf32>
    %97 = vector.broadcast %96 : vector<80x1xf32> to vector<80x64xf32>
    %98 = arith.subf %90, %97 : vector<80x64xf32>
    %99 = arith.mulf %98, %98 : vector<80x64xf32>
    %cst_46 = arith.constant dense<0.000000e+00> : vector<80xf32>
    %100 = vector.multi_reduction <add>, %99, %cst_46 [1] : vector<80x64xf32> to vector<80xf32>
    %101 = vector.shape_cast %100 : vector<80xf32> to vector<80x1xf32>
    %cst_47 = arith.constant 6.400000e+01 : f32
    %102 = vector.broadcast %cst_47 : f32 to vector<80x1xf32>
    %103 = arith.divf %101, %102 : vector<80x1xf32>
    %cst_48 = arith.constant 9.99999974E-6 : f32
    %104 = vector.broadcast %cst_48 : f32 to vector<80x1xf32>
    %105 = arith.addf %103, %104 : vector<80x1xf32>
    %106 = math.rsqrt %105 : vector<80x1xf32>
    %107 = vector.broadcast %106 : vector<80x1xf32> to vector<80x64xf32>
    %108 = arith.mulf %98, %107 : vector<80x64xf32>
    %109 = vector.broadcast %91 : vector<1x64xf32> to vector<80x64xf32>
    %110 = arith.mulf %108, %109 : vector<80x64xf32>
    %111 = vector.broadcast %92 : vector<1x64xf32> to vector<80x64xf32>
    %112 = arith.addf %110, %111 : vector<80x64xf32>
    %c1 = arith.constant 1 : index
    %c0_49 = arith.constant 0 : index
    %c0_50 = arith.constant 0 : index
    %113 = vector.load %arg7[%c1, %c0_49, %c0_50] : memref<3x8x64xf32, #tpu.memory_space<vmem>>, vector<1x8x64xf32>
    %114 = vector.shape_cast %113 : vector<1x8x64xf32> to vector<8x64xf32>
    %115 = arith.truncf %112 : vector<80x64xf32> to vector<80x64xbf16>
    %c1_51 = arith.constant 1 : index
    %c0_52 = arith.constant 0 : index
    %c0_53 = arith.constant 0 : index
    %116 = vector.load %arg4[%c1_51, %c0_52, %c0_53] : memref<3x64x192xbf16, #tpu.memory_space<vmem>>, vector<1x64x192xbf16>
    %117 = vector.shape_cast %116 : vector<1x64x192xbf16> to vector<64x192xbf16>
    %cst_54 = arith.constant dense<0.000000e+00> : vector<80x192xf32>
    %118 = tpu.matmul %115, %117, %cst_54 {dimension_numbers = #tpu.dot_dimension_numbers<[1], [0], [0], [1], [0, 0, 1, 1], [], []>} : vector<80x64xbf16>, vector<64x192xbf16>, vector<80x192xf32> -> vector<80x192xf32>
    %c1_55 = arith.constant 1 : index
    %c0_56 = arith.constant 0 : index
    %c0_57 = arith.constant 0 : index
    %119 = vector.load %arg5[%c1_55, %c0_56, %c0_57] : memref<3x1x192xf32, #tpu.memory_space<vmem>>, vector<1x1x192xf32>
    %120 = vector.shape_cast %119 : vector<1x1x192xf32> to vector<1x192xf32>
    %121 = vector.broadcast %120 : vector<1x192xf32> to vector<80x192xf32>
    %122 = arith.addf %118, %121 : vector<80x192xf32>
    %123 = vector.extract_strided_slice %122 {offsets = [0, 0], sizes = [80, 64], strides = [1, 1]} : vector<80x192xf32> to vector<80x64xf32>
    %124 = vector.extract_strided_slice %122 {offsets = [0, 64], sizes = [80, 64], strides = [1, 1]} : vector<80x192xf32> to vector<80x64xf32>
    %125 = vector.extract_strided_slice %122 {offsets = [0, 128], sizes = [80, 64], strides = [1, 1]} : vector<80x192xf32> to vector<80x64xf32>
    %126 = arith.truncf %124 : vector<80x64xf32> to vector<80x64xbf16>
    %cst_58 = arith.constant 0.000000e+00 : f32
    %127 = vector.broadcast %cst_58 : f32 to vector<80x64xf32>
    %c0_i32_59 = arith.constant 0 : i32
    %c4_i32_60 = arith.constant 4 : i32
    %128 = arith.addi %c0_i32_59, %c4_i32_60 : i32
    %c1_i32_61 = arith.constant 1 : i32
    %129 = scf.for %arg14 = %c0_i32_59 to %128 step %c1_i32_61 iter_args(%arg15 = %127) -> (vector<80x64xf32>)  : i32 {
      %c16_i32 = arith.constant 16 : i32
      %294 = arith.muli %arg14, %c16_i32 : i32
      %295 = vector.broadcast %294 : i32 to vector<1x64xi32>
      %296 = arith.cmpi sge, %18, %295 : vector<1x64xi32>
      %c1_i32_136 = arith.constant 1 : i32
      %297 = arith.addi %arg14, %c1_i32_136 : i32
      %c16_i32_137 = arith.constant 16 : i32
      %298 = arith.muli %297, %c16_i32_137 : i32
      %299 = vector.broadcast %298 : i32 to vector<1x64xi32>
      %300 = arith.cmpi slt, %18, %299 : vector<1x64xi32>
      %301 = arith.andi %296, %300 : vector<1x64xi1>
      %302 = arith.extui %301 : vector<1x64xi1> to vector<1x64xi32>
      %303 = arith.sitofp %302 : vector<1x64xi32> to vector<1x64xf32>
      %304 = vector.broadcast %303 : vector<1x64xf32> to vector<80x64xf32>
      %305 = arith.mulf %123, %304 : vector<80x64xf32>
      %306 = arith.truncf %305 : vector<80x64xf32> to vector<80x64xbf16>
      %cst_138 = arith.constant dense<0.000000e+00> : vector<80x80xf32>
      %307 = tpu.matmul %306, %126, %cst_138 {dimension_numbers = #tpu.dot_dimension_numbers<[1], [1], [0], [0], [0, 0, 1, 0], [], []>} : vector<80x64xbf16>, vector<80x64xbf16>, vector<80x80xf32> -> vector<80x80xf32>
      %cst_139 = arith.constant 2.500000e-01 : f32
      %308 = vector.broadcast %cst_139 : f32 to vector<80x80xf32>
      %309 = arith.mulf %307, %308 : vector<80x80xf32>
      %310 = arith.addf %309, %17 : vector<80x80xf32>
      %cst_140 = arith.constant dense<0xFF800000> : vector<80xf32>
      %311 = vector.multi_reduction <maximumf>, %310, %cst_140 [1] : vector<80x80xf32> to vector<80xf32>
      %312 = vector.shape_cast %311 : vector<80xf32> to vector<80x1xf32>
      %313 = vector.broadcast %312 : vector<80x1xf32> to vector<80x80xf32>
      %314 = arith.subf %310, %313 : vector<80x80xf32>
      %315 = math.exp %314 : vector<80x80xf32>
      %cst_141 = arith.constant dense<0.000000e+00> : vector<80xf32>
      %316 = vector.multi_reduction <add>, %315, %cst_141 [1] : vector<80x80xf32> to vector<80xf32>
      %317 = vector.shape_cast %316 : vector<80xf32> to vector<80x1xf32>
      %318 = tpu.reciprocal %317 {approx = true} : vector<80x1xf32> -> vector<80x1xf32>
      %319 = vector.broadcast %318 : vector<80x1xf32> to vector<80x80xf32>
      %320 = arith.mulf %315, %319 : vector<80x80xf32>
      %321 = arith.truncf %320 : vector<80x80xf32> to vector<80x80xbf16>
      %322 = vector.broadcast %303 : vector<1x64xf32> to vector<80x64xf32>
      %323 = arith.mulf %125, %322 : vector<80x64xf32>
      %324 = arith.truncf %323 : vector<80x64xf32> to vector<80x64xbf16>
      %cst_142 = arith.constant dense<0.000000e+00> : vector<80x64xf32>
      %325 = tpu.matmul %321, %324, %cst_142 {dimension_numbers = #tpu.dot_dimension_numbers<[1], [0], [0], [1], [0, 0, 1, 1], [], []>} : vector<80x80xbf16>, vector<80x64xbf16>, vector<80x64xf32> -> vector<80x64xf32>
      %326 = arith.addf %arg15, %325 : vector<80x64xf32>
      scf.yield %326 : vector<80x64xf32>
    }
    %c4_i32_62 = arith.constant 4 : i32
    %130 = arith.truncf %129 : vector<80x64xf32> to vector<80x64xbf16>
    %c1_63 = arith.constant 1 : index
    %c0_64 = arith.constant 0 : index
    %c0_65 = arith.constant 0 : index
    %131 = vector.load %arg6[%c1_63, %c0_64, %c0_65] : memref<3x64x64xbf16, #tpu.memory_space<vmem>>, vector<1x64x64xbf16>
    %132 = vector.shape_cast %131 : vector<1x64x64xbf16> to vector<64x64xbf16>
    %cst_66 = arith.constant dense<0.000000e+00> : vector<80x64xf32>
    %133 = tpu.matmul %130, %132, %cst_66 {dimension_numbers = #tpu.dot_dimension_numbers<[1], [0], [0], [1], [0, 0, 1, 1], [], []>} : vector<80x64xbf16>, vector<64x64xbf16>, vector<80x64xf32> -> vector<80x64xf32>
    %134 = vector.extract_strided_slice %114 {offsets = [0, 0], sizes = [1, 64], strides = [1, 1]} : vector<8x64xf32> to vector<1x64xf32>
    %135 = vector.broadcast %134 : vector<1x64xf32> to vector<80x64xf32>
    %136 = arith.addf %133, %135 : vector<80x64xf32>
    %137 = arith.addf %112, %136 : vector<80x64xf32>
    %138 = vector.extract_strided_slice %114 {offsets = [1, 0], sizes = [1, 64], strides = [1, 1]} : vector<8x64xf32> to vector<1x64xf32>
    %139 = vector.extract_strided_slice %114 {offsets = [2, 0], sizes = [1, 64], strides = [1, 1]} : vector<8x64xf32> to vector<1x64xf32>
    %cst_67 = arith.constant dense<0.000000e+00> : vector<80xf32>
    %140 = vector.multi_reduction <add>, %137, %cst_67 [1] : vector<80x64xf32> to vector<80xf32>
    %141 = vector.shape_cast %140 : vector<80xf32> to vector<80x1xf32>
    %cst_68 = arith.constant 6.400000e+01 : f32
    %142 = vector.broadcast %cst_68 : f32 to vector<80x1xf32>
    %143 = arith.divf %141, %142 : vector<80x1xf32>
    %144 = vector.broadcast %143 : vector<80x1xf32> to vector<80x64xf32>
    %145 = arith.subf %137, %144 : vector<80x64xf32>
    %146 = arith.mulf %145, %145 : vector<80x64xf32>
    %cst_69 = arith.constant dense<0.000000e+00> : vector<80xf32>
    %147 = vector.multi_reduction <add>, %146, %cst_69 [1] : vector<80x64xf32> to vector<80xf32>
    %148 = vector.shape_cast %147 : vector<80xf32> to vector<80x1xf32>
    %cst_70 = arith.constant 6.400000e+01 : f32
    %149 = vector.broadcast %cst_70 : f32 to vector<80x1xf32>
    %150 = arith.divf %148, %149 : vector<80x1xf32>
    %cst_71 = arith.constant 9.99999974E-6 : f32
    %151 = vector.broadcast %cst_71 : f32 to vector<80x1xf32>
    %152 = arith.addf %150, %151 : vector<80x1xf32>
    %153 = math.rsqrt %152 : vector<80x1xf32>
    %154 = vector.broadcast %153 : vector<80x1xf32> to vector<80x64xf32>
    %155 = arith.mulf %145, %154 : vector<80x64xf32>
    %156 = vector.broadcast %138 : vector<1x64xf32> to vector<80x64xf32>
    %157 = arith.mulf %155, %156 : vector<80x64xf32>
    %158 = vector.broadcast %139 : vector<1x64xf32> to vector<80x64xf32>
    %159 = arith.addf %157, %158 : vector<80x64xf32>
    %160 = arith.truncf %159 : vector<80x64xf32> to vector<80x64xbf16>
    %c1_72 = arith.constant 1 : index
    %c0_73 = arith.constant 0 : index
    %c0_74 = arith.constant 0 : index
    %161 = vector.load %arg8[%c1_72, %c0_73, %c0_74] : memref<3x64x2048xbf16, #tpu.memory_space<vmem>>, vector<1x64x2048xbf16>
    %162 = vector.shape_cast %161 : vector<1x64x2048xbf16> to vector<64x2048xbf16>
    %cst_75 = arith.constant dense<0.000000e+00> : vector<80x2048xf32>
    %163 = tpu.matmul %160, %162, %cst_75 {dimension_numbers = #tpu.dot_dimension_numbers<[1], [0], [0], [1], [0, 0, 1, 1], [], []>} : vector<80x64xbf16>, vector<64x2048xbf16>, vector<80x2048xf32> -> vector<80x2048xf32>
    %c1_76 = arith.constant 1 : index
    %c0_77 = arith.constant 0 : index
    %c0_78 = arith.constant 0 : index
    %164 = vector.load %arg9[%c1_76, %c0_77, %c0_78] : memref<3x1x2048xf32, #tpu.memory_space<vmem>>, vector<1x1x2048xf32>
    %165 = vector.shape_cast %164 : vector<1x1x2048xf32> to vector<1x2048xf32>
    %166 = vector.broadcast %165 : vector<1x2048xf32> to vector<80x2048xf32>
    %167 = arith.addf %163, %166 : vector<80x2048xf32>
    %cst_79 = arith.constant 0.000000e+00 : f32
    %168 = vector.broadcast %cst_79 : f32 to vector<80x2048xf32>
    %169 = arith.maximumf %167, %168 : vector<80x2048xf32>
    %170 = arith.truncf %169 : vector<80x2048xf32> to vector<80x2048xbf16>
    %c1_80 = arith.constant 1 : index
    %c0_81 = arith.constant 0 : index
    %c0_82 = arith.constant 0 : index
    %171 = vector.load %arg10[%c1_80, %c0_81, %c0_82] : memref<3x2048x64xbf16, #tpu.memory_space<vmem>>, vector<1x2048x64xbf16>
    %172 = vector.shape_cast %171 : vector<1x2048x64xbf16> to vector<2048x64xbf16>
    %cst_83 = arith.constant dense<0.000000e+00> : vector<80x64xf32>
    %173 = tpu.matmul %170, %172, %cst_83 {dimension_numbers = #tpu.dot_dimension_numbers<[1], [0], [0], [1], [0, 0, 1, 1], [], []>} : vector<80x2048xbf16>, vector<2048x64xbf16>, vector<80x64xf32> -> vector<80x64xf32>
    %174 = vector.extract_strided_slice %114 {offsets = [3, 0], sizes = [1, 64], strides = [1, 1]} : vector<8x64xf32> to vector<1x64xf32>
    %175 = vector.broadcast %174 : vector<1x64xf32> to vector<80x64xf32>
    %176 = arith.addf %173, %175 : vector<80x64xf32>
    %177 = arith.addf %159, %176 : vector<80x64xf32>
    %178 = vector.extract_strided_slice %114 {offsets = [4, 0], sizes = [1, 64], strides = [1, 1]} : vector<8x64xf32> to vector<1x64xf32>
    %179 = vector.extract_strided_slice %114 {offsets = [5, 0], sizes = [1, 64], strides = [1, 1]} : vector<8x64xf32> to vector<1x64xf32>
    %cst_84 = arith.constant dense<0.000000e+00> : vector<80xf32>
    %180 = vector.multi_reduction <add>, %177, %cst_84 [1] : vector<80x64xf32> to vector<80xf32>
    %181 = vector.shape_cast %180 : vector<80xf32> to vector<80x1xf32>
    %cst_85 = arith.constant 6.400000e+01 : f32
    %182 = vector.broadcast %cst_85 : f32 to vector<80x1xf32>
    %183 = arith.divf %181, %182 : vector<80x1xf32>
    %184 = vector.broadcast %183 : vector<80x1xf32> to vector<80x64xf32>
    %185 = arith.subf %177, %184 : vector<80x64xf32>
    %186 = arith.mulf %185, %185 : vector<80x64xf32>
    %cst_86 = arith.constant dense<0.000000e+00> : vector<80xf32>
    %187 = vector.multi_reduction <add>, %186, %cst_86 [1] : vector<80x64xf32> to vector<80xf32>
    %188 = vector.shape_cast %187 : vector<80xf32> to vector<80x1xf32>
    %cst_87 = arith.constant 6.400000e+01 : f32
    %189 = vector.broadcast %cst_87 : f32 to vector<80x1xf32>
    %190 = arith.divf %188, %189 : vector<80x1xf32>
    %cst_88 = arith.constant 9.99999974E-6 : f32
    %191 = vector.broadcast %cst_88 : f32 to vector<80x1xf32>
    %192 = arith.addf %190, %191 : vector<80x1xf32>
    %193 = math.rsqrt %192 : vector<80x1xf32>
    %194 = vector.broadcast %193 : vector<80x1xf32> to vector<80x64xf32>
    %195 = arith.mulf %185, %194 : vector<80x64xf32>
    %196 = vector.broadcast %178 : vector<1x64xf32> to vector<80x64xf32>
    %197 = arith.mulf %195, %196 : vector<80x64xf32>
    %198 = vector.broadcast %179 : vector<1x64xf32> to vector<80x64xf32>
    %199 = arith.addf %197, %198 : vector<80x64xf32>
    %c2 = arith.constant 2 : index
    %c0_89 = arith.constant 0 : index
    %c0_90 = arith.constant 0 : index
    %200 = vector.load %arg7[%c2, %c0_89, %c0_90] : memref<3x8x64xf32, #tpu.memory_space<vmem>>, vector<1x8x64xf32>
    %201 = vector.shape_cast %200 : vector<1x8x64xf32> to vector<8x64xf32>
    %202 = arith.truncf %199 : vector<80x64xf32> to vector<80x64xbf16>
    %c2_91 = arith.constant 2 : index
    %c0_92 = arith.constant 0 : index
    %c0_93 = arith.constant 0 : index
    %203 = vector.load %arg4[%c2_91, %c0_92, %c0_93] : memref<3x64x192xbf16, #tpu.memory_space<vmem>>, vector<1x64x192xbf16>
    %204 = vector.shape_cast %203 : vector<1x64x192xbf16> to vector<64x192xbf16>
    %cst_94 = arith.constant dense<0.000000e+00> : vector<80x192xf32>
    %205 = tpu.matmul %202, %204, %cst_94 {dimension_numbers = #tpu.dot_dimension_numbers<[1], [0], [0], [1], [0, 0, 1, 1], [], []>} : vector<80x64xbf16>, vector<64x192xbf16>, vector<80x192xf32> -> vector<80x192xf32>
    %c2_95 = arith.constant 2 : index
    %c0_96 = arith.constant 0 : index
    %c0_97 = arith.constant 0 : index
    %206 = vector.load %arg5[%c2_95, %c0_96, %c0_97] : memref<3x1x192xf32, #tpu.memory_space<vmem>>, vector<1x1x192xf32>
    %207 = vector.shape_cast %206 : vector<1x1x192xf32> to vector<1x192xf32>
    %208 = vector.broadcast %207 : vector<1x192xf32> to vector<80x192xf32>
    %209 = arith.addf %205, %208 : vector<80x192xf32>
    %210 = vector.extract_strided_slice %209 {offsets = [0, 0], sizes = [80, 64], strides = [1, 1]} : vector<80x192xf32> to vector<80x64xf32>
    %211 = vector.extract_strided_slice %209 {offsets = [0, 64], sizes = [80, 64], strides = [1, 1]} : vector<80x192xf32> to vector<80x64xf32>
    %212 = vector.extract_strided_slice %209 {offsets = [0, 128], sizes = [80, 64], strides = [1, 1]} : vector<80x192xf32> to vector<80x64xf32>
    %213 = arith.truncf %211 : vector<80x64xf32> to vector<80x64xbf16>
    %cst_98 = arith.constant 0.000000e+00 : f32
    %214 = vector.broadcast %cst_98 : f32 to vector<80x64xf32>
    %c0_i32_99 = arith.constant 0 : i32
    %c4_i32_100 = arith.constant 4 : i32
    %215 = arith.addi %c0_i32_99, %c4_i32_100 : i32
    %c1_i32_101 = arith.constant 1 : i32
    %216 = scf.for %arg14 = %c0_i32_99 to %215 step %c1_i32_101 iter_args(%arg15 = %214) -> (vector<80x64xf32>)  : i32 {
      %c16_i32 = arith.constant 16 : i32
      %294 = arith.muli %arg14, %c16_i32 : i32
      %295 = vector.broadcast %294 : i32 to vector<1x64xi32>
      %296 = arith.cmpi sge, %18, %295 : vector<1x64xi32>
      %c1_i32_136 = arith.constant 1 : i32
      %297 = arith.addi %arg14, %c1_i32_136 : i32
      %c16_i32_137 = arith.constant 16 : i32
      %298 = arith.muli %297, %c16_i32_137 : i32
      %299 = vector.broadcast %298 : i32 to vector<1x64xi32>
      %300 = arith.cmpi slt, %18, %299 : vector<1x64xi32>
      %301 = arith.andi %296, %300 : vector<1x64xi1>
      %302 = arith.extui %301 : vector<1x64xi1> to vector<1x64xi32>
      %303 = arith.sitofp %302 : vector<1x64xi32> to vector<1x64xf32>
      %304 = vector.broadcast %303 : vector<1x64xf32> to vector<80x64xf32>
      %305 = arith.mulf %210, %304 : vector<80x64xf32>
      %306 = arith.truncf %305 : vector<80x64xf32> to vector<80x64xbf16>
      %cst_138 = arith.constant dense<0.000000e+00> : vector<80x80xf32>
      %307 = tpu.matmul %306, %213, %cst_138 {dimension_numbers = #tpu.dot_dimension_numbers<[1], [1], [0], [0], [0, 0, 1, 0], [], []>} : vector<80x64xbf16>, vector<80x64xbf16>, vector<80x80xf32> -> vector<80x80xf32>
      %cst_139 = arith.constant 2.500000e-01 : f32
      %308 = vector.broadcast %cst_139 : f32 to vector<80x80xf32>
      %309 = arith.mulf %307, %308 : vector<80x80xf32>
      %310 = arith.addf %309, %17 : vector<80x80xf32>
      %cst_140 = arith.constant dense<0xFF800000> : vector<80xf32>
      %311 = vector.multi_reduction <maximumf>, %310, %cst_140 [1] : vector<80x80xf32> to vector<80xf32>
      %312 = vector.shape_cast %311 : vector<80xf32> to vector<80x1xf32>
      %313 = vector.broadcast %312 : vector<80x1xf32> to vector<80x80xf32>
      %314 = arith.subf %310, %313 : vector<80x80xf32>
      %315 = math.exp %314 : vector<80x80xf32>
      %cst_141 = arith.constant dense<0.000000e+00> : vector<80xf32>
      %316 = vector.multi_reduction <add>, %315, %cst_141 [1] : vector<80x80xf32> to vector<80xf32>
      %317 = vector.shape_cast %316 : vector<80xf32> to vector<80x1xf32>
      %318 = tpu.reciprocal %317 {approx = true} : vector<80x1xf32> -> vector<80x1xf32>
      %319 = vector.broadcast %318 : vector<80x1xf32> to vector<80x80xf32>
      %320 = arith.mulf %315, %319 : vector<80x80xf32>
      %321 = arith.truncf %320 : vector<80x80xf32> to vector<80x80xbf16>
      %322 = vector.broadcast %303 : vector<1x64xf32> to vector<80x64xf32>
      %323 = arith.mulf %212, %322 : vector<80x64xf32>
      %324 = arith.truncf %323 : vector<80x64xf32> to vector<80x64xbf16>
      %cst_142 = arith.constant dense<0.000000e+00> : vector<80x64xf32>
      %325 = tpu.matmul %321, %324, %cst_142 {dimension_numbers = #tpu.dot_dimension_numbers<[1], [0], [0], [1], [0, 0, 1, 1], [], []>} : vector<80x80xbf16>, vector<80x64xbf16>, vector<80x64xf32> -> vector<80x64xf32>
      %326 = arith.addf %arg15, %325 : vector<80x64xf32>
      scf.yield %326 : vector<80x64xf32>
    }
    %c4_i32_102 = arith.constant 4 : i32
    %217 = arith.truncf %216 : vector<80x64xf32> to vector<80x64xbf16>
    %c2_103 = arith.constant 2 : index
    %c0_104 = arith.constant 0 : index
    %c0_105 = arith.constant 0 : index
    %218 = vector.load %arg6[%c2_103, %c0_104, %c0_105] : memref<3x64x64xbf16, #tpu.memory_space<vmem>>, vector<1x64x64xbf16>
    %219 = vector.shape_cast %218 : vector<1x64x64xbf16> to vector<64x64xbf16>
    %cst_106 = arith.constant dense<0.000000e+00> : vector<80x64xf32>
    %220 = tpu.matmul %217, %219, %cst_106 {dimension_numbers = #tpu.dot_dimension_numbers<[1], [0], [0], [1], [0, 0, 1, 1], [], []>} : vector<80x64xbf16>, vector<64x64xbf16>, vector<80x64xf32> -> vector<80x64xf32>
    %221 = vector.extract_strided_slice %201 {offsets = [0, 0], sizes = [1, 64], strides = [1, 1]} : vector<8x64xf32> to vector<1x64xf32>
    %222 = vector.broadcast %221 : vector<1x64xf32> to vector<80x64xf32>
    %223 = arith.addf %220, %222 : vector<80x64xf32>
    %224 = arith.addf %199, %223 : vector<80x64xf32>
    %225 = vector.extract_strided_slice %201 {offsets = [1, 0], sizes = [1, 64], strides = [1, 1]} : vector<8x64xf32> to vector<1x64xf32>
    %226 = vector.extract_strided_slice %201 {offsets = [2, 0], sizes = [1, 64], strides = [1, 1]} : vector<8x64xf32> to vector<1x64xf32>
    %cst_107 = arith.constant dense<0.000000e+00> : vector<80xf32>
    %227 = vector.multi_reduction <add>, %224, %cst_107 [1] : vector<80x64xf32> to vector<80xf32>
    %228 = vector.shape_cast %227 : vector<80xf32> to vector<80x1xf32>
    %cst_108 = arith.constant 6.400000e+01 : f32
    %229 = vector.broadcast %cst_108 : f32 to vector<80x1xf32>
    %230 = arith.divf %228, %229 : vector<80x1xf32>
    %231 = vector.broadcast %230 : vector<80x1xf32> to vector<80x64xf32>
    %232 = arith.subf %224, %231 : vector<80x64xf32>
    %233 = arith.mulf %232, %232 : vector<80x64xf32>
    %cst_109 = arith.constant dense<0.000000e+00> : vector<80xf32>
    %234 = vector.multi_reduction <add>, %233, %cst_109 [1] : vector<80x64xf32> to vector<80xf32>
    %235 = vector.shape_cast %234 : vector<80xf32> to vector<80x1xf32>
    %cst_110 = arith.constant 6.400000e+01 : f32
    %236 = vector.broadcast %cst_110 : f32 to vector<80x1xf32>
    %237 = arith.divf %235, %236 : vector<80x1xf32>
    %cst_111 = arith.constant 9.99999974E-6 : f32
    %238 = vector.broadcast %cst_111 : f32 to vector<80x1xf32>
    %239 = arith.addf %237, %238 : vector<80x1xf32>
    %240 = math.rsqrt %239 : vector<80x1xf32>
    %241 = vector.broadcast %240 : vector<80x1xf32> to vector<80x64xf32>
    %242 = arith.mulf %232, %241 : vector<80x64xf32>
    %243 = vector.broadcast %225 : vector<1x64xf32> to vector<80x64xf32>
    %244 = arith.mulf %242, %243 : vector<80x64xf32>
    %245 = vector.broadcast %226 : vector<1x64xf32> to vector<80x64xf32>
    %246 = arith.addf %244, %245 : vector<80x64xf32>
    %247 = arith.truncf %246 : vector<80x64xf32> to vector<80x64xbf16>
    %c2_112 = arith.constant 2 : index
    %c0_113 = arith.constant 0 : index
    %c0_114 = arith.constant 0 : index
    %248 = vector.load %arg8[%c2_112, %c0_113, %c0_114] : memref<3x64x2048xbf16, #tpu.memory_space<vmem>>, vector<1x64x2048xbf16>
    %249 = vector.shape_cast %248 : vector<1x64x2048xbf16> to vector<64x2048xbf16>
    %cst_115 = arith.constant dense<0.000000e+00> : vector<80x2048xf32>
    %250 = tpu.matmul %247, %249, %cst_115 {dimension_numbers = #tpu.dot_dimension_numbers<[1], [0], [0], [1], [0, 0, 1, 1], [], []>} : vector<80x64xbf16>, vector<64x2048xbf16>, vector<80x2048xf32> -> vector<80x2048xf32>
    %c2_116 = arith.constant 2 : index
    %c0_117 = arith.constant 0 : index
    %c0_118 = arith.constant 0 : index
    %251 = vector.load %arg9[%c2_116, %c0_117, %c0_118] : memref<3x1x2048xf32, #tpu.memory_space<vmem>>, vector<1x1x2048xf32>
    %252 = vector.shape_cast %251 : vector<1x1x2048xf32> to vector<1x2048xf32>
    %253 = vector.broadcast %252 : vector<1x2048xf32> to vector<80x2048xf32>
    %254 = arith.addf %250, %253 : vector<80x2048xf32>
    %cst_119 = arith.constant 0.000000e+00 : f32
    %255 = vector.broadcast %cst_119 : f32 to vector<80x2048xf32>
    %256 = arith.maximumf %254, %255 : vector<80x2048xf32>
    %257 = arith.truncf %256 : vector<80x2048xf32> to vector<80x2048xbf16>
    %c2_120 = arith.constant 2 : index
    %c0_121 = arith.constant 0 : index
    %c0_122 = arith.constant 0 : index
    %258 = vector.load %arg10[%c2_120, %c0_121, %c0_122] : memref<3x2048x64xbf16, #tpu.memory_space<vmem>>, vector<1x2048x64xbf16>
    %259 = vector.shape_cast %258 : vector<1x2048x64xbf16> to vector<2048x64xbf16>
    %cst_123 = arith.constant dense<0.000000e+00> : vector<80x64xf32>
    %260 = tpu.matmul %257, %259, %cst_123 {dimension_numbers = #tpu.dot_dimension_numbers<[1], [0], [0], [1], [0, 0, 1, 1], [], []>} : vector<80x2048xbf16>, vector<2048x64xbf16>, vector<80x64xf32> -> vector<80x64xf32>
    %261 = vector.extract_strided_slice %201 {offsets = [3, 0], sizes = [1, 64], strides = [1, 1]} : vector<8x64xf32> to vector<1x64xf32>
    %262 = vector.broadcast %261 : vector<1x64xf32> to vector<80x64xf32>
    %263 = arith.addf %260, %262 : vector<80x64xf32>
    %264 = arith.addf %246, %263 : vector<80x64xf32>
    %265 = vector.extract_strided_slice %201 {offsets = [4, 0], sizes = [1, 64], strides = [1, 1]} : vector<8x64xf32> to vector<1x64xf32>
    %266 = vector.extract_strided_slice %201 {offsets = [5, 0], sizes = [1, 64], strides = [1, 1]} : vector<8x64xf32> to vector<1x64xf32>
    %cst_124 = arith.constant dense<0.000000e+00> : vector<80xf32>
    %267 = vector.multi_reduction <add>, %264, %cst_124 [1] : vector<80x64xf32> to vector<80xf32>
    %268 = vector.shape_cast %267 : vector<80xf32> to vector<80x1xf32>
    %cst_125 = arith.constant 6.400000e+01 : f32
    %269 = vector.broadcast %cst_125 : f32 to vector<80x1xf32>
    %270 = arith.divf %268, %269 : vector<80x1xf32>
    %271 = vector.broadcast %270 : vector<80x1xf32> to vector<80x64xf32>
    %272 = arith.subf %264, %271 : vector<80x64xf32>
    %273 = arith.mulf %272, %272 : vector<80x64xf32>
    %cst_126 = arith.constant dense<0.000000e+00> : vector<80xf32>
    %274 = vector.multi_reduction <add>, %273, %cst_126 [1] : vector<80x64xf32> to vector<80xf32>
    %275 = vector.shape_cast %274 : vector<80xf32> to vector<80x1xf32>
    %cst_127 = arith.constant 6.400000e+01 : f32
    %276 = vector.broadcast %cst_127 : f32 to vector<80x1xf32>
    %277 = arith.divf %275, %276 : vector<80x1xf32>
    %cst_128 = arith.constant 9.99999974E-6 : f32
    %278 = vector.broadcast %cst_128 : f32 to vector<80x1xf32>
    %279 = arith.addf %277, %278 : vector<80x1xf32>
    %280 = math.rsqrt %279 : vector<80x1xf32>
    %281 = vector.broadcast %280 : vector<80x1xf32> to vector<80x64xf32>
    %282 = arith.mulf %272, %281 : vector<80x64xf32>
    %283 = vector.broadcast %265 : vector<1x64xf32> to vector<80x64xf32>
    %284 = arith.mulf %282, %283 : vector<80x64xf32>
    %285 = vector.broadcast %266 : vector<1x64xf32> to vector<80x64xf32>
    %286 = arith.addf %284, %285 : vector<80x64xf32>
    %287 = arith.truncf %286 : vector<80x64xf32> to vector<80x64xbf16>
    %c0_129 = arith.constant 0 : index
    %c0_130 = arith.constant 0 : index
    %288 = vector.load %arg11[%c0_129, %c0_130] : memref<64x128xbf16, #tpu.memory_space<vmem>>, vector<64x128xbf16>
    %cst_131 = arith.constant dense<0.000000e+00> : vector<80x128xf32>
    %289 = tpu.matmul %287, %288, %cst_131 {dimension_numbers = #tpu.dot_dimension_numbers<[1], [0], [0], [1], [0, 0, 1, 1], [], []>} : vector<80x64xbf16>, vector<64x128xbf16>, vector<80x128xf32> -> vector<80x128xf32>
    %c0_132 = arith.constant 0 : index
    %c0_133 = arith.constant 0 : index
    %290 = vector.load %arg12[%c0_132, %c0_133] : memref<1x128xf32, #tpu.memory_space<vmem>>, vector<1x128xf32>
    %291 = vector.broadcast %290 : vector<1x128xf32> to vector<80x128xf32>
    %292 = arith.addf %289, %291 : vector<80x128xf32>
    %c0_134 = arith.constant 0 : index
    %c0_135 = arith.constant 0 : index
    %293 = vector.load %arg13[%c0_134, %c0_135] : memref<80x128xf32, #tpu.memory_space<vmem>>, vector<80x128xf32>
    tpu.vector_store %arg13[%c0_134, %c0_135], %292 {strides = array<i32>} : memref<80x128xf32, #tpu.memory_space<vmem>>, vector<80x128xf32>,
    return
  }
  func.func @transform_0(%arg0: i32) -> (i32, i32) {
    %c0_i32 = arith.constant 0 : i32
    %c0_i32_0 = arith.constant 0 : i32
    return %arg0, %c0_i32 : i32, i32
  }
  func.func @transform_1(%arg0: i32) -> (i32, i32) {
    %c0_i32 = arith.constant 0 : i32
    %c0_i32_0 = arith.constant 0 : i32
    %c0_i32_1 = arith.constant 0 : i32
    return %c0_i32, %c0_i32_0 : i32, i32
  }
  func.func @transform_2(%arg0: i32) -> (i32, i32) {
    %c0_i32 = arith.constant 0 : i32
    %c0_i32_0 = arith.constant 0 : i32
    %c0_i32_1 = arith.constant 0 : i32
    return %c0_i32, %c0_i32_0 : i32, i32
  }
  func.func @transform_3(%arg0: i32) -> (i32, i32, i32) {
    %c0_i32 = arith.constant 0 : i32
    %c0_i32_0 = arith.constant 0 : i32
    %c0_i32_1 = arith.constant 0 : i32
    %c0_i32_2 = arith.constant 0 : i32
    return %c0_i32, %c0_i32_0, %c0_i32_1 : i32, i32, i32
  }
  func.func @transform_4(%arg0: i32) -> (i32, i32, i32) {
    %c0_i32 = arith.constant 0 : i32
    %c0_i32_0 = arith.constant 0 : i32
    %c0_i32_1 = arith.constant 0 : i32
    %c0_i32_2 = arith.constant 0 : i32
    return %c0_i32, %c0_i32_0, %c0_i32_1 : i32, i32, i32
  }
  func.func @transform_5(%arg0: i32) -> (i32, i32, i32) {
    %c0_i32 = arith.constant 0 : i32
    %c0_i32_0 = arith.constant 0 : i32
    %c0_i32_1 = arith.constant 0 : i32
    %c0_i32_2 = arith.constant 0 : i32
    return %c0_i32, %c0_i32_0, %c0_i32_1 : i32, i32, i32
  }
  func.func @transform_6(%arg0: i32) -> (i32, i32, i32) {
    %c0_i32 = arith.constant 0 : i32
    %c0_i32_0 = arith.constant 0 : i32
    %c0_i32_1 = arith.constant 0 : i32
    %c0_i32_2 = arith.constant 0 : i32
    return %c0_i32, %c0_i32_0, %c0_i32_1 : i32, i32, i32
  }
  func.func @transform_7(%arg0: i32) -> (i32, i32, i32) {
    %c0_i32 = arith.constant 0 : i32
    %c0_i32_0 = arith.constant 0 : i32
    %c0_i32_1 = arith.constant 0 : i32
    %c0_i32_2 = arith.constant 0 : i32
    return %c0_i32, %c0_i32_0, %c0_i32_1 : i32, i32, i32
  }
  func.func @transform_8(%arg0: i32) -> (i32, i32, i32) {
    %c0_i32 = arith.constant 0 : i32
    %c0_i32_0 = arith.constant 0 : i32
    %c0_i32_1 = arith.constant 0 : i32
    %c0_i32_2 = arith.constant 0 : i32
    return %c0_i32, %c0_i32_0, %c0_i32_1 : i32, i32, i32
  }
  func.func @transform_9(%arg0: i32) -> (i32, i32, i32) {
    %c0_i32 = arith.constant 0 : i32
    %c0_i32_0 = arith.constant 0 : i32
    %c0_i32_1 = arith.constant 0 : i32
    %c0_i32_2 = arith.constant 0 : i32
    return %c0_i32, %c0_i32_0, %c0_i32_1 : i32, i32, i32
  }
  func.func @transform_10(%arg0: i32) -> (i32, i32) {
    %c0_i32 = arith.constant 0 : i32
    %c0_i32_0 = arith.constant 0 : i32
    %c0_i32_1 = arith.constant 0 : i32
    return %c0_i32, %c0_i32_0 : i32, i32
  }
  func.func @transform_11(%arg0: i32) -> (i32, i32) {
    %c0_i32 = arith.constant 0 : i32
    %c0_i32_0 = arith.constant 0 : i32
    %c0_i32_1 = arith.constant 0 : i32
    return %c0_i32, %c0_i32_0 : i32, i32
  }
  func.func @transform_12(%arg0: i32) -> (i32, i32) {
    %c0_i32 = arith.constant 0 : i32
    %c0_i32_0 = arith.constant 0 : i32
    return %arg0, %c0_i32 : i32, i32
  }
}

</mosaic_0001>

<llo_original>
// kernel: wave_transformer.1
$region0: #{wave_transformer.1}
  #allocation0 [shape = 'u32[]', space=smem, size = 0x4, offset = 0x4, fixed_abs, tag = 'smem constant byte address 0x4 - core index']
  #allocation1 [shape = 'u32[72,128]{1,0:T(1,128)}', space=vmem, size = 0x9000, scoped, tag = 'internal scratch']
  %s0 = inlined_call_operand.vmem [shape: f32[320,10], index: 0, kind: input, shape index: {}]
  %s1 = inlined_call_operand.vmem [shape: bf16[10,64], index: 1, kind: input, shape index: {}]
  %s2 = inlined_call_operand.vmem [shape: f32[1,64], index: 2, kind: input, shape index: {}]
  %s3 = inlined_call_operand.vmem [shape: bf16[3,64,192], index: 3, kind: input, shape index: {}]
  %s4 = inlined_call_operand.vmem [shape: f32[3,1,192], index: 4, kind: input, shape index: {}]
  %s5 = inlined_call_operand.vmem [shape: bf16[3,64,64], index: 5, kind: input, shape index: {}]
  %s6 = inlined_call_operand.vmem [shape: f32[3,8,64], index: 6, kind: input, shape index: {}]
  %s7 = inlined_call_operand.vmem [shape: bf16[3,64,2048], index: 7, kind: input, shape index: {}]
  %s8 = inlined_call_operand.vmem [shape: f32[3,1,2048], index: 8, kind: input, shape index: {}]
  %s9 = inlined_call_operand.vmem [shape: bf16[3,2048,64], index: 9, kind: input, shape index: {}]
  %s10 = inlined_call_operand.vmem [shape: bf16[64,128], index: 10, kind: input, shape index: {}]
  %s11 = inlined_call_operand.vmem [shape: f32[1,128], index: 11, kind: input, shape index: {}]
  %s12 = inlined_call_operand.vmem [shape: f32[320,128], index: 12, kind: output, shape index: {}]
  %s13 = sld [smem:[#allocation0]]
  $region102: #{wave_transformer.1} parent=0
    _
  %s15 = ssub.s32 1, %s13
  %s16 = scalar_select 0, %s15, %s13
  loop: start=0, step=1, limit=6
  $region2: #{wave_transformer.1} parent=0 // loop_pre_header
    _
  $region3: #{wave_transformer.1} parent=0 // loop_header
    %s18 = sphi 0, %s22
    %p19 = scmp.ge.s32.totalorder %s18, 6
    %s28 = sphi 0, %s30
    %s31 = sphi 0, %s28
    %s32 = sphi 0, %s31
    %s48 = sphi 0, %s32
    %s52 = sphi 0, %s52
    %s54 = sphi 0, %s52
    %s55 = sphi 0, %s54
    %s69 = sphi 0, %s55
    %s73 = sphi 0, %s73
    %s75 = sphi 0, %s73
    %s76 = sphi 0, %s75
    %s90 = sphi 0, %s76
    %s94 = sphi 0, %s94
    %s96 = sphi 0, %s94
    %s97 = sphi 0, %s96
    %s111 = sphi 0, %s97
    %s115 = sphi 0, %s115
    %s117 = sphi 0, %s115
    %s118 = sphi 0, %s117
    %s132 = sphi 0, %s118
    %s136 = sphi 0, %s136
    %s138 = sphi 0, %s136
    %s139 = sphi 0, %s138
    %s153 = sphi 0, %s139
    %s157 = sphi 0, %s157
    %s159 = sphi 0, %s157
    %s160 = sphi 0, %s159
    %s174 = sphi 0, %s160
    %s178 = sphi 0, %s178
    %s180 = sphi 0, %s178
    %s181 = sphi 0, %s180
    %s195 = sphi 0, %s181
    %s199 = sphi 0, %s199
    %s201 = sphi 0, %s199
    %s202 = sphi 0, %s201
    %s216 = sphi 0, %s202
    %s220 = sphi 0, %s220
    %s222 = sphi 0, %s220
    %s223 = sphi 0, %s222
    %s237 = sphi 0, %s223
    %s241 = sphi 0, %s241
    %s243 = sphi 0, %s241
    %s244 = sphi 0, %s243
    %s258 = sphi 0, %s244
    %s262 = sphi 0, %s262
    %s264 = sphi 0, %s262
    %s265 = sphi 0, %s264
    %s279 = sphi 0, %s265
    %s285 = sphi 0, %s287
    %s288 = sphi 0, %s285
    %s289 = sphi 0, %s288
    %s305 = sphi 0, %s289
  $region4: #{wave_transformer.1} parent=0 // loop_header_branch
    %21 = sbr.rel (%p19) target = $region8
  $region5: #{wave_transformer.1} parent=0 // loop_body
    %s23 = ssub.s32 %s18, 1
    %s24 = ssub.s32 %s18, 2
    %s25 = sadd.s32 %s18, 1
    %s26 = ssub.s32 %s18, %s25
    %p27 = scmp.eq.s32.totalorder %s26, 0
    %s29 = sadd.s32 %s28, 1
    %s30 = scalar_select %p27, %s28, %s29
    %p33 = pneg %p27
    %p34 = scmp.eq.s32.totalorder %s18, 3
    %p35 = por %p33, %p34
    %p36 = scmp.ne.s32.totalorder %s28, %s31
    %p37 = scmp.eq.s32.totalorder %s18, 0
    %p38 = por %p36, %p37
    %p39 = scmp.ne.s32.totalorder %s28, %s31
    %p40 = scmp.eq.s32.totalorder %s23, 3
    %p41 = por %p39, %p40
    %p42 = scmp.ne.s32.totalorder %s31, %s32
    %p43 = scmp.eq.s32.totalorder %s23, 0
    %p44 = por %p42, %p43
    %p45 = scmp.ne.s32.totalorder %s31, %s32
    %p46 = scmp.eq.s32.totalorder %s24, 3
    %p47 = por %p45, %p46
    %p49 = scmp.ne.s32.totalorder %s32, %s48
    %p50 = scmp.eq.s32.totalorder %s24, 0
    %p51 = por %p49, %p50
    %s53 = sadd.s32 %s52, 1
    %p56 = scmp.eq.s32.totalorder %s18, 3
    %p57 = scmp.ne.s32.totalorder %s52, %s54
    %p58 = scmp.eq.s32.totalorder %s18, 0
    %p59 = por %p57, %p58
    %p60 = scmp.ne.s32.totalorder %s52, %s54
    %p61 = scmp.eq.s32.totalorder %s23, 3
    %p62 = por %p60, %p61
    %p63 = scmp.ne.s32.totalorder %s54, %s55
    %p64 = scmp.eq.s32.totalorder %s23, 0
    %p65 = por %p63, %p64
    %p66 = scmp.ne.s32.totalorder %s54, %s55
    %p67 = scmp.eq.s32.totalorder %s24, 3
    %p68 = por %p66, %p67
    %p70 = scmp.ne.s32.totalorder %s55, %s69
    %p71 = scmp.eq.s32.totalorder %s24, 0
    %p72 = por %p70, %p71
    %s74 = sadd.s32 %s73, 1
    %p77 = scmp.eq.s32.totalorder %s18, 3
    %p78 = scmp.ne.s32.totalorder %s73, %s75
    %p79 = scmp.eq.s32.totalorder %s18, 0
    %p80 = por %p78, %p79
    %p81 = scmp.ne.s32.totalorder %s73, %s75
    %p82 = scmp.eq.s32.totalorder %s23, 3
    %p83 = por %p81, %p82
    %p84 = scmp.ne.s32.totalorder %s75, %s76
    %p85 = scmp.eq.s32.totalorder %s23, 0
    %p86 = por %p84, %p85
    %p87 = scmp.ne.s32.totalorder %s75, %s76
    %p88 = scmp.eq.s32.totalorder %s24, 3
    %p89 = por %p87, %p88
    %p91 = scmp.ne.s32.totalorder %s76, %s90
    %p92 = scmp.eq.s32.totalorder %s24, 0
    %p93 = por %p91, %p92
    %s95 = sadd.s32 %s94, 1
    %p98 = scmp.eq.s32.totalorder %s18, 3
    %p99 = scmp.ne.s32.totalorder %s94, %s96
    %p100 = scmp.eq.s32.totalorder %s18, 0
    %p101 = por %p99, %p100
    %p102 = scmp.ne.s32.totalorder %s94, %s96
    %p103 = scmp.eq.s32.totalorder %s23, 3
    %p104 = por %p102, %p103
    %p105 = scmp.ne.s32.totalorder %s96, %s97
    %p106 = scmp.eq.s32.totalorder %s23, 0
    %p107 = por %p105, %p106
    %p108 = scmp.ne.s32.totalorder %s96, %s97
    %p109 = scmp.eq.s32.totalorder %s24, 3
    %p110 = por %p108, %p109
    %p112 = scmp.ne.s32.totalorder %s97, %s111
    %p113 = scmp.eq.s32.totalorder %s24, 0
    %p114 = por %p112, %p113
    %s116 = sadd.s32 %s115, 1
    %p119 = scmp.eq.s32.totalorder %s18, 3
    %p120 = scmp.ne.s32.totalorder %s115, %s117
    %p121 = scmp.eq.s32.totalorder %s18, 0
    %p122 = por %p120, %p121
    %p123 = scmp.ne.s32.totalorder %s115, %s117
    %p124 = scmp.eq.s32.totalorder %s23, 3
    %p125 = por %p123, %p124
    %p126 = scmp.ne.s32.totalorder %s117, %s118
    %p127 = scmp.eq.s32.totalorder %s23, 0
    %p128 = por %p126, %p127
    %p129 = scmp.ne.s32.totalorder %s117, %s118
    %p130 = scmp.eq.s32.totalorder %s24, 3
    %p131 = por %p129, %p130
    %p133 = scmp.ne.s32.totalorder %s118, %s132
    %p134 = scmp.eq.s32.totalorder %s24, 0
    %p135 = por %p133, %p134
    %s137 = sadd.s32 %s136, 1
    %p140 = scmp.eq.s32.totalorder %s18, 3
    %p141 = scmp.ne.s32.totalorder %s136, %s138
    %p142 = scmp.eq.s32.totalorder %s18, 0
    %p143 = por %p141, %p142
    %p144 = scmp.ne.s32.totalorder %s136, %s138
    %p145 = scmp.eq.s32.totalorder %s23, 3
    %p146 = por %p144, %p145
    %p147 = scmp.ne.s32.totalorder %s138, %s139
    %p148 = scmp.eq.s32.totalorder %s23, 0
    %p149 = por %p147, %p148
    %p150 = scmp.ne.s32.totalorder %s138, %s139
    %p151 = scmp.eq.s32.totalorder %s24, 3
    %p152 = por %p150, %p151
    %p154 = scmp.ne.s32.totalorder %s139, %s153
    %p155 = scmp.eq.s32.totalorder %s24, 0
    %p156 = por %p154, %p155
    %s158 = sadd.s32 %s157, 1
    %p161 = scmp.eq.s32.totalorder %s18, 3
    %p162 = scmp.ne.s32.totalorder %s157, %s159
    %p163 = scmp.eq.s32.totalorder %s18, 0
    %p164 = por %p162, %p163
    %p165 = scmp.ne.s32.totalorder %s157, %s159
    %p166 = scmp.eq.s32.totalorder %s23, 3
    %p167 = por %p165, %p166
    %p168 = scmp.ne.s32.totalorder %s159, %s160
    %p169 = scmp.eq.s32.totalorder %s23, 0
    %p170 = por %p168, %p169
    %p171 = scmp.ne.s32.totalorder %s159, %s160
    %p172 = scmp.eq.s32.totalorder %s24, 3
    %p173 = por %p171, %p172
    %p175 = scmp.ne.s32.totalorder %s160, %s174
    %p176 = scmp.eq.s32.totalorder %s24, 0
    %p177 = por %p175, %p176
    %s179 = sadd.s32 %s178, 1
    %p182 = scmp.eq.s32.totalorder %s18, 3
    %p183 = scmp.ne.s32.totalorder %s178, %s180
    %p184 = scmp.eq.s32.totalorder %s18, 0
    %p185 = por %p183, %p184
    %p186 = scmp.ne.s32.totalorder %s178, %s180
    %p187 = scmp.eq.s32.totalorder %s23, 3
    %p188 = por %p186, %p187
    %p189 = scmp.ne.s32.totalorder %s180, %s181
    %p190 = scmp.eq.s32.totalorder %s23, 0
    %p191 = por %p189, %p190
    %p192 = scmp.ne.s32.totalorder %s180, %s181
    %p193 = scmp.eq.s32.totalorder %s24, 3
    %p194 = por %p192, %p193
    %p196 = scmp.ne.s32.totalorder %s181, %s195
    %p197 = scmp.eq.s32.totalorder %s24, 0
    %p198 = por %p196, %p197
    %s200 = sadd.s32 %s199, 1
    %p203 = scmp.eq.s32.totalorder %s18, 3
    %p204 = scmp.ne.s32.totalorder %s199, %s201
    %p205 = scmp.eq.s32.totalorder %s18, 0
    %p206 = por %p204, %p205
    %p207 = scmp.ne.s32.totalorder %s199, %s201
    %p208 = scmp.eq.s32.totalorder %s23, 3
    %p209 = por %p207, %p208
    %p210 = scmp.ne.s32.totalorder %s201, %s202
    %p211 = scmp.eq.s32.totalorder %s23, 0
    %p212 = por %p210, %p211
    %p213 = scmp.ne.s32.totalorder %s201, %s202
    %p214 = scmp.eq.s32.totalorder %s24, 3
    %p215 = por %p213, %p214
    %p217 = scmp.ne.s32.totalorder %s202, %s216
    %p218 = scmp.eq.s32.totalorder %s24, 0
    %p219 = por %p217, %p218
    %s221 = sadd.s32 %s220, 1
    %p224 = scmp.eq.s32.totalorder %s18, 3
    %p225 = scmp.ne.s32.totalorder %s220, %s222
    %p226 = scmp.eq.s32.totalorder %s18, 0
    %p227 = por %p225, %p226
    %p228 = scmp.ne.s32.totalorder %s220, %s222
    %p229 = scmp.eq.s32.totalorder %s23, 3
    %p230 = por %p228, %p229
    %p231 = scmp.ne.s32.totalorder %s222, %s223
    %p232 = scmp.eq.s32.totalorder %s23, 0
    %p233 = por %p231, %p232
    %p234 = scmp.ne.s32.totalorder %s222, %s223
    %p235 = scmp.eq.s32.totalorder %s24, 3
    %p236 = por %p234, %p235
    %p238 = scmp.ne.s32.totalorder %s223, %s237
    %p239 = scmp.eq.s32.totalorder %s24, 0
    %p240 = por %p238, %p239
    %s242 = sadd.s32 %s241, 1
    %p245 = scmp.eq.s32.totalorder %s18, 3
    %p246 = scmp.ne.s32.totalorder %s241, %s243
    %p247 = scmp.eq.s32.totalorder %s18, 0
    %p248 = por %p246, %p247
    %p249 = scmp.ne.s32.totalorder %s241, %s243
    %p250 = scmp.eq.s32.totalorder %s23, 3
    %p251 = por %p249, %p250
    %p252 = scmp.ne.s32.totalorder %s243, %s244
    %p253 = scmp.eq.s32.totalorder %s23, 0
    %p254 = por %p252, %p253
    %p255 = scmp.ne.s32.totalorder %s243, %s244
    %p256 = scmp.eq.s32.totalorder %s24, 3
    %p257 = por %p255, %p256
    %p259 = scmp.ne.s32.totalorder %s244, %s258
    %p260 = scmp.eq.s32.totalorder %s24, 0
    %p261 = por %p259, %p260
    %s263 = sadd.s32 %s262, 1
    %p266 = scmp.eq.s32.totalorder %s18, 3
    %p267 = scmp.ne.s32.totalorder %s262, %s264
    %p268 = scmp.eq.s32.totalorder %s18, 0
    %p269 = por %p267, %p268
    %p270 = scmp.ne.s32.totalorder %s262, %s264
    %p271 = scmp.eq.s32.totalorder %s23, 3
    %p272 = por %p270, %p271
    %p273 = scmp.ne.s32.totalorder %s264, %s265
    %p274 = scmp.eq.s32.totalorder %s23, 0
    %p275 = por %p273, %p274
    %p276 = scmp.ne.s32.totalorder %s264, %s265
    %p277 = scmp.eq.s32.totalorder %s24, 3
    %p278 = por %p276, %p277
    %p280 = scmp.ne.s32.totalorder %s265, %s279
    %p281 = scmp.eq.s32.totalorder %s24, 0
    %p282 = por %p280, %p281
    %s283 = ssub.s32 %s18, %s25
    %p284 = scmp.eq.s32.totalorder %s283, 0
    %s286 = sadd.s32 %s285, 1
    %s287 = scalar_select %p284, %s285, %s286
    %p290 = pneg %p284
    %p291 = scmp.eq.s32.totalorder %s18, 3
    %p292 = por %p290, %p291
    %p293 = scmp.ne.s32.totalorder %s285, %s288
    %p294 = scmp.eq.s32.totalorder %s18, 0
    %p295 = por %p293, %p294
    %p296 = scmp.ne.s32.totalorder %s285, %s288
    %p297 = scmp.eq.s32.totalorder %s23, 3
    %p298 = por %p296, %p297
    %p299 = scmp.ne.s32.totalorder %s288, %s289
    %p300 = scmp.eq.s32.totalorder %s23, 0
    %p301 = por %p299, %p300
    %p302 = scmp.ne.s32.totalorder %s288, %s289
    %p303 = scmp.eq.s32.totalorder %s24, 3
    %p304 = por %p302, %p303
    %p306 = scmp.ne.s32.totalorder %s289, %s305
    %p307 = scmp.eq.s32.totalorder %s24, 0
    %p308 = por %p306, %p307
    %p309 = scmp.le.s32.totalorder 1, %s18
    %p310 = scmp.lt.s32.totalorder %s18, 5
    %p311 = pnand %p309, %p310
    %p312 = pneg %p311
    // Predicated region
    $region9: #{wave_transformer.1} parent=5 // pred_check
      _
    $region10: #{wave_transformer.1} parent=5 // pred_check_branch
      %314 = sbr.rel (%p311) target = $region12
    $region11: #{wave_transformer.1} parent=5 // pred_region
      %s315 = ssub.s32 %s18, 1
      // Predicated region
      $region13: #{wave_transformer.1} parent=11 // pred_check
        %p316 = pneg %p65
      $region14: #{wave_transformer.1} parent=11 // pred_check_branch
        %318 = sbr.rel (%p316) target = $region16
      $region15: #{wave_transformer.1} parent=11 // pred_region
        _
      $region16: #{wave_transformer.1} parent=11 // pred_fallthru
        _
      // Predicated region
      $region17: #{wave_transformer.1} parent=11 // pred_check
        %p319 = pneg %p86
      $region18: #{wave_transformer.1} parent=11 // pred_check_branch
        %321 = sbr.rel (%p319) target = $region20
      $region19: #{wave_transformer.1} parent=11 // pred_region
        _
      $region20: #{wave_transformer.1} parent=11 // pred_fallthru
        _
      // Predicated region
      $region21: #{wave_transformer.1} parent=11 // pred_check
        %p322 = pneg %p107
      $region22: #{wave_transformer.1} parent=11 // pred_check_branch
        %324 = sbr.rel (%p322) target = $region24
      $region23: #{wave_transformer.1} parent=11 // pred_region
        _
      $region24: #{wave_transformer.1} parent=11 // pred_fallthru
        _
      // Predicated region
      $region25: #{wave_transformer.1} parent=11 // pred_check
        %p325 = pneg %p128
      $region26: #{wave_transformer.1} parent=11 // pred_check_branch
        %327 = sbr.rel (%p325) target = $region28
      $region27: #{wave_transformer.1} parent=11 // pred_region
        _
      $region28: #{wave_transformer.1} parent=11 // pred_fallthru
        _
      // Predicated region
      $region29: #{wave_transformer.1} parent=11 // pred_check
        %p328 = pneg %p149
      $region30: #{wave_transformer.1} parent=11 // pred_check_branch
        %330 = sbr.rel (%p328) target = $region32
      $region31: #{wave_transformer.1} parent=11 // pred_region
        _
      $region32: #{wave_transformer.1} parent=11 // pred_fallthru
        _
      // Predicated region
      $region33: #{wave_transformer.1} parent=11 // pred_check
        %p331 = pneg %p170
      $region34: #{wave_transformer.1} parent=11 // pred_check_branch
        %333 = sbr.rel (%p331) target = $region36
      $region35: #{wave_transformer.1} parent=11 // pred_region
        _
      $region36: #{wave_transformer.1} parent=11 // pred_fallthru
        _
      // Predicated region
      $region37: #{wave_transformer.1} parent=11 // pred_check
        %p334 = pneg %p191
      $region38: #{wave_transformer.1} parent=11 // pred_check_branch
        %336 = sbr.rel (%p334) target = $region40
      $region39: #{wave_transformer.1} parent=11 // pred_region
        _
      $region40: #{wave_transformer.1} parent=11 // pred_fallthru
        _
      // Predicated region
      $region41: #{wave_transformer.1} parent=11 // pred_check
        %p337 = pneg %p212
      $region42: #{wave_transformer.1} parent=11 // pred_check_branch
        %339 = sbr.rel (%p337) target = $region44
      $region43: #{wave_transformer.1} parent=11 // pred_region
        _
      $region44: #{wave_transformer.1} parent=11 // pred_fallthru
        _
      // Predicated region
      $region45: #{wave_transformer.1} parent=11 // pred_check
        %p340 = pneg %p233
      $region46: #{wave_transformer.1} parent=11 // pred_check_branch
        %342 = sbr.rel (%p340) target = $region48
      $region47: #{wave_transformer.1} parent=11 // pred_region
        _
      $region48: #{wave_transformer.1} parent=11 // pred_fallthru
        _
      // Predicated region
      $region49: #{wave_transformer.1} parent=11 // pred_check
        %p343 = pneg %p254
      $region50: #{wave_transformer.1} parent=11 // pred_check_branch
        %345 = sbr.rel (%p343) target = $region52
      $region51: #{wave_transformer.1} parent=11 // pred_region
        _
      $region52: #{wave_transformer.1} parent=11 // pred_fallthru
        _
      // Predicated region
      $region53: #{wave_transformer.1} parent=11 // pred_check
        %p346 = pneg %p275
      $region54: #{wave_transformer.1} parent=11 // pred_check_branch
        %348 = sbr.rel (%p346) target = $region56
      $region55: #{wave_transformer.1} parent=11 // pred_region
        _
      $region56: #{wave_transformer.1} parent=11 // pred_fallthru
        _
    $region12: #{wave_transformer.1} parent=5 // pred_fallthru
      _
    %p349 = scmp.lt.s32.totalorder %s18, 4
    // Predicated region
    $region57: #{wave_transformer.1} parent=5 // pred_check
      %p350 = pneg %p349
    $region58: #{wave_transformer.1} parent=5 // pred_check_branch
      %352 = sbr.rel (%p350) target = $region60
    $region59: #{wave_transformer.1} parent=5 // pred_region
      // Predicated region
      $region61: #{wave_transformer.1} parent=59 // pred_check
        %p353 = pneg %p38
      $region62: #{wave_transformer.1} parent=59 // pred_check_branch
        %355 = sbr.rel (%p353) target = $region64
      $region63: #{wave_transformer.1} parent=59 // pred_region
        %s356 = smul.u32 10, %s18
        %p357 = scmp.lt.s32.totalorder %s356, 39
        %s358 = scalar_select %p357, %s356, 39
        %s359 = smul.addr %s358, 8
        %s360 = scalar_lea.vmem %s0, %s359
        %s361 = smul.u32 10, %s18
      $region64: #{wave_transformer.1} parent=59 // pred_fallthru
        _
    $region60: #{wave_transformer.1} parent=5 // pred_fallthru
      _
    %p362 = scmp.le.s32.totalorder 1, %s18
    %p363 = scmp.lt.s32.totalorder %s18, 5
    %p364 = pnand %p362, %p363
    %p365 = pneg %p364
    // Predicated region
    $region65: #{wave_transformer.1} parent=5 // pred_check
      _
    $region66: #{wave_transformer.1} parent=5 // pred_check_branch
      %367 = sbr.rel (%p364) target = $region68
    $region67: #{wave_transformer.1} parent=5 // pred_region
      %s368 = ssub.s32 %s18, 1
      %s369 = smul.u32 10, %s23
      %p370 = scmp.lt.s32.totalorder %s369, 39
      %s371 = scalar_select %p370, %s369, 39
      %s372 = smul.addr %s371, 8
      %s373 = scalar_lea.vmem %s0, %s372
      %p374 = pneg %p44
      %p375 = pneg %p41
      %p376 = pneg %p65
      %p377 = pneg %p62
      %p378 = pneg %p86
      %p379 = pneg %p83
      %p380 = pneg %p107
      %p381 = pneg %p104
      %p382 = pneg %p128
      %p383 = pneg %p125
      %p384 = pneg %p149
      %p385 = pneg %p146
      %p386 = pneg %p170
      %p387 = pneg %p167
      %p388 = pneg %p191
      %p389 = pneg %p188
      %p390 = pneg %p212
      %p391 = pneg %p209
      %p392 = pneg %p233
      %p393 = pneg %p230
      %p394 = pneg %p254
      %p395 = pneg %p251
      %p396 = pneg %p275
      %p397 = pneg %p272
      %p398 = pneg %p301
      %p399 = pneg %p298
      %s400 = smul.u32 10, %s23
      %p401 = scmp.lt.s32.totalorder %s400, 39
      %s402 = scalar_select %p401, %s400, 39
      %s403 = smul.addr %s402, 8
      %s404 = scalar_lea.vmem %s12, %s403
      %s405 = smul.u32 10, %s23
      %p406 = scmp.lt.s32.totalorder %s405, 39
      %s407 = scalar_select %p406, %s405, 39
      %s408 = smul.addr %s407, 8
      %s409 = scalar_lea.vmem %s0, %s408
      %s410 = smul.u32 10, %s23
      %s411 = smul.u32 10, %s23
      %p412 = scmp.lt.s32.totalorder %s411, 39
      %s413 = scalar_select %p412, %s411, 39
      %s414 = smul.addr %s413, 8
      %s415 = scalar_lea.vmem %s12, %s414
      %s416 = smul.u32 10, %s23
      %v418 = vlaneseq
      %v419 = vshrl.u32 %v418, 7
      %v420 = vadd.s32 %v419, 8
      %v421 = vadd.s32 %v419, 16
      %v422 = vadd.s32 %v419, 24
      %v423 = vadd.s32 %v419, 32
      %v424 = vadd.s32 %v419, 40
      %v425 = vadd.s32 %v419, 48
      %v426 = vadd.s32 %v419, 56
      %v427 = vadd.s32 %v419, 64
      %v428 = vadd.s32 %v419, 72
      %v429 = vcvt.s32.f32 %v419
      %v430 = vcvt.s32.f32 %v420
      %v431 = vcvt.s32.f32 %v421
      %v432 = vcvt.s32.f32 %v422
      %v433 = vcvt.s32.f32 %v423
      %v434 = vcvt.s32.f32 %v424
      %v435 = vcvt.s32.f32 %v425
      %v436 = vcvt.s32.f32 %v426
      %v437 = vcvt.s32.f32 %v427
      %v438 = vcvt.s32.f32 %v428
      %v439 = vlaneseq
      %v440 = vand.u32 %v439, 127
      %v441 = vcvt.s32.f32 %v440
      %v442 = vadd.f32 %v429, 0.5
      %v443 = vadd.f32 %v430, 0.5
      %v444 = vadd.f32 %v431, 0.5
      %v445 = vadd.f32 %v432, 0.5
      %v446 = vadd.f32 %v433, 0.5
      %v447 = vadd.f32 %v434, 0.5
      %v448 = vadd.f32 %v435, 0.5
      %v449 = vadd.f32 %v436, 0.5
      %v450 = vadd.f32 %v437, 0.5
      %v451 = vadd.f32 %v438, 0.5
      %v452 = vmul.f32 %v442, 0.1
      %v453 = vmul.f32 %v443, 0.1
      %v454 = vmul.f32 %v444, 0.1
      %v455 = vmul.f32 %v445, 0.1
      %v456 = vmul.f32 %v446, 0.1
      %v457 = vmul.f32 %v447, 0.1
      %v458 = vmul.f32 %v448, 0.1
      %v459 = vmul.f32 %v449, 0.1
      %v460 = vmul.f32 %v450, 0.1
      %v461 = vmul.f32 %v451, 0.1
      %v462 = vfloor.f32 %v452
      %v463 = vfloor.f32 %v453
      %v464 = vfloor.f32 %v454
      %v465 = vfloor.f32 %v455
      %v466 = vfloor.f32 %v456
      %v467 = vfloor.f32 %v457
      %v468 = vfloor.f32 %v458
      %v469 = vfloor.f32 %v459
      %v470 = vfloor.f32 %v460
      %v471 = vfloor.f32 %v461
      %v472 = vadd.f32 %v441, 0.5
      %v473 = vmul.f32 %v472, 0.1
      %v474 = vfloor.f32 %v473
      %vm475 = vcmp.eq.f32.partialorder %v462, %v474
      %vm476 = vcmp.eq.f32.partialorder %v463, %v474
      %vm477 = vcmp.eq.f32.partialorder %v464, %v474
      %vm478 = vcmp.eq.f32.partialorder %v465, %v474
      %vm479 = vcmp.eq.f32.partialorder %v466, %v474
      %vm480 = vcmp.eq.f32.partialorder %v467, %v474
      %vm481 = vcmp.eq.f32.partialorder %v468, %v474
      %vm482 = vcmp.eq.f32.partialorder %v469, %v474
      %vm483 = vcmp.eq.f32.partialorder %v470, %v474
      %vm484 = vcmp.eq.f32.partialorder %v471, %v474
      %v485 = vsel %vm475, 0.0, -1e+09
      %v486 = vsel %vm476, 0.0, -1e+09
      %v487 = vsel %vm477, 0.0, -1e+09
      %v488 = vsel %vm478, 0.0, -1e+09
      %v489 = vsel %vm479, 0.0, -1e+09
      %v490 = vsel %vm480, 0.0, -1e+09
      %v491 = vsel %vm481, 0.0, -1e+09
      %v492 = vsel %vm482, 0.0, -1e+09
      %v493 = vsel %vm483, 0.0, -1e+09
      %v494 = vsel %vm484, 0.0, -1e+09
      %v495 = vld [vmem:[%s409] sm:$0xff]
      %v496 = vld [vmem:[%s409 + $0x8] sm:$0xff]
      %v497 = vld [vmem:[%s409 + $0x10] sm:$0xff]
      %v498 = vld [vmem:[%s409 + $0x18] sm:$0xff]
      %v499 = vld [vmem:[%s409 + $0x20] sm:$0xff]
      %v500 = vld [vmem:[%s409 + $0x28] sm:$0xff]
      %v501 = vld [vmem:[%s409 + $0x30] sm:$0xff]
      %v502 = vld [vmem:[%s409 + $0x38] sm:$0xff]
      %v503 = vld [vmem:[%s409 + $0x40] sm:$0xff]
      %v504 = vld [vmem:[%s409 + $0x48] sm:$0xff]
      %v505 = vpack.c.bf16 %v496, %v495
      %v506 = vpack.c.bf16 %v498, %v497
      %v507 = vpack.c.bf16 %v500, %v499
      %v508 = vpack.c.bf16 %v502, %v501
      %v509 = vpack.c.bf16 %v504, %v503
      %v510 = vld [vmem:[%s1] sm:$0xf]
      %v511 = vld [vmem:[%s1 + $0x4] sm:$0x1]
      %v512 = vld [vmem:[%s2] sm:$0x1]
      %v514 = vperm.slane %v512, 0
      %v518 = vunpack.c.l.b16 %v510
      %v519 = vunpack.c.l.b16 %v511
      %v520 = vpack.c.b16 %v519, %v518
      %vm521 = vcmask 80896
      %v523 = vsel %vm521, %v505, 0
      %v526 = vsel %vm521, %v506, 0
      %v529 = vsel %vm521, %v507, 0
      %v532 = vsel %vm521, %v508, 0
      %v535 = vsel %vm521, %v509, 0
      %vm537 = vcmask 1044480
      %v539 = vsel %vm537, %v520, 0
      %541 = vmatpush.bf16.msra.mxu0 0
      %542 = vmatpush.bf16.msra.mxu0 0
      %543 = vmatpush.bf16.msra.mxu0 0
      %544 = vmatpush.bf16.msra.mxu0 0
      %545 = vmatpush.bf16.msra.mxu0 0
      %546 = vmatpush.bf16.msra.mxu0 0
      %547 = vmatpush.bf16.msra.mxu0 0
      %548 = vmatpush.bf16.msra.mxu0 %v539
      %549 = vmatmul.bf16.gmra.mxu0 %v523
      %v550 = vpop.f32.mrf.mxu0
      %v551 = vadd.f32 %v514, %v550
      %v552 = vpop.f32.mrf.mxu0
      %v553 = vadd.f32 %v514, %v552
      %554 = vmatmul.bf16.gmra.mxu0 %v526
      %v555 = vpop.f32.mrf.mxu0
      %v556 = vadd.f32 %v514, %v555
      %v557 = vpop.f32.mrf.mxu0
      %v558 = vadd.f32 %v514, %v557
      %559 = vmatmul.bf16.gmra.mxu0 %v529
      %v560 = vpop.f32.mrf.mxu0
      %v561 = vadd.f32 %v514, %v560
      %v562 = vpop.f32.mrf.mxu0
      %v563 = vadd.f32 %v514, %v562
      %564 = vmatmul.bf16.gmra.mxu0 %v532
      %v565 = vpop.f32.mrf.mxu0
      %v566 = vadd.f32 %v514, %v565
      %v567 = vpop.f32.mrf.mxu0
      %v568 = vadd.f32 %v514, %v567
      %569 = vmatmul.bf16.gmra.mxu0 %v535
      %v570 = vpop.f32.mrf.mxu0
      %v571 = vadd.f32 %v514, %v570
      %v572 = vpop.f32.mrf.mxu0
      %v573 = vadd.f32 %v514, %v572
      %574 = vdwg.mxu0
      %v575 = vld [vmem:[%s6] sm:$0xff]
      %v576 = vpack.c.bf16 %v553, %v551
      %v577 = vpack.c.bf16 %v558, %v556
      %v578 = vpack.c.bf16 %v563, %v561
      %v579 = vpack.c.bf16 %v568, %v566
      %v580 = vpack.c.bf16 %v573, %v571
      %v581 = vld [vmem:[%s3] sm:$0xff]
      %v582 = vld [vmem:[%s3 + $0x8] sm:$0xff]
      %v583 = vld [vmem:[%s3 + $0x10] sm:$0xff]
      %v584 = vld [vmem:[%s3 + $0x18] sm:$0xff]
      %v585 = vld [vmem:[%s3 + $0x20] sm:$0xff]
      %v586 = vld [vmem:[%s3 + $0x28] sm:$0xff]
      %v587 = vld [vmem:[%s3 + $0x30] sm:$0xff]
      %v588 = vld [vmem:[%s3 + $0x38] sm:$0xff]
      %v589 = vld [vmem:[%s4] sm:$0x3]
      %v591 = vperm.slane %v589, 0
      %v592 = vperm.slane %v589, 1
      %v603 = vunpack.c.l.b16 %v581
      %v604 = vunpack.c.h.b16 %v581
      %v605 = vunpack.c.l.b16 %v582
      %v606 = vunpack.c.h.b16 %v582
      %v607 = vunpack.c.l.b16 %v583
      %v608 = vunpack.c.h.b16 %v583
      %v609 = vunpack.c.l.b16 %v584
      %v610 = vunpack.c.h.b16 %v584
      %v611 = vunpack.c.l.b16 %v585
      %v612 = vunpack.c.h.b16 %v585
      %v613 = vunpack.c.l.b16 %v586
      %v614 = vunpack.c.h.b16 %v586
      %v615 = vunpack.c.l.b16 %v587
      %v616 = vunpack.c.h.b16 %v587
      %v617 = vunpack.c.l.b16 %v588
      %v618 = vunpack.c.h.b16 %v588
      %v619 = vpack.c.b16 %v605, %v603
      %v620 = vpack.c.b16 %v606, %v604
      %v621 = vpack.c.b16 %v609, %v607
      %v622 = vpack.c.b16 %v610, %v608
      %v623 = vpack.c.b16 %v613, %v611
      %v624 = vpack.c.b16 %v614, %v612
      %v625 = vpack.c.b16 %v617, %v615
      %v626 = vpack.c.b16 %v618, %v616
      %vm635 = vcmask 523264
      %v637 = vsel %vm635, %v576, 0
      %v640 = vsel %vm635, %v577, 0
      %v643 = vsel %vm635, %v578, 0
      %v646 = vsel %vm635, %v579, 0
      %v649 = vsel %vm635, %v580, 0
      %651 = vmatpush.bf16.msra.mxu0 0
      %652 = vmatpush.bf16.msra.mxu0 0
      %653 = vmatpush.bf16.msra.mxu0 0
      %654 = vmatpush.bf16.msra.mxu0 0
      %655 = vmatpush.bf16.msra.mxu0 %v625
      %656 = vmatpush.bf16.msra.mxu0 %v623
      %657 = vmatpush.bf16.msra.mxu0 %v621
      %658 = vmatpush.bf16.msra.mxu0 %v619
      %659 = vmatmul.bf16.gmra.mxu0 %v637
      %v660 = vpop.f32.mrf.mxu0
      %v661 = vadd.f32 %v591, %v660
      %v662 = vpop.f32.mrf.mxu0
      %v663 = vadd.f32 %v591, %v662
      %664 = vmatmul.bf16.gmra.mxu0 %v640
      %v665 = vpop.f32.mrf.mxu0
      %v666 = vadd.f32 %v591, %v665
      %v667 = vpop.f32.mrf.mxu0
      %v668 = vadd.f32 %v591, %v667
      %669 = vmatmul.bf16.gmra.mxu0 %v643
      %v670 = vpop.f32.mrf.mxu0
      %v671 = vadd.f32 %v591, %v670
      %v672 = vpop.f32.mrf.mxu0
      %v673 = vadd.f32 %v591, %v672
      %674 = vmatmul.bf16.gmra.mxu0 %v646
      %v675 = vpop.f32.mrf.mxu0
      %v676 = vadd.f32 %v591, %v675
      %v677 = vpop.f32.mrf.mxu0
      %v678 = vadd.f32 %v591, %v677
      %679 = vmatmul.bf16.gmra.mxu0 %v649
      %v680 = vpop.f32.mrf.mxu0
      %v681 = vadd.f32 %v591, %v680
      %v682 = vpop.f32.mrf.mxu0
      %v683 = vadd.f32 %v591, %v682
      %684 = vdwg.mxu0
      %685 = vmatpush.bf16.msra.mxu0 0
      %686 = vmatpush.bf16.msra.mxu0 0
      %687 = vmatpush.bf16.msra.mxu0 0
      %688 = vmatpush.bf16.msra.mxu0 0
      %689 = vmatpush.bf16.msra.mxu0 %v626
      %690 = vmatpush.bf16.msra.mxu0 %v624
      %691 = vmatpush.bf16.msra.mxu0 %v622
      %692 = vmatpush.bf16.msra.mxu0 %v620
      %693 = vmatmul.bf16.gmra.mxu0 %v637
      %v694 = vpop.f32.mrf.mxu0
      %v695 = vadd.f32 %v592, %v694
      %v696 = vpop.f32.mrf.mxu0
      %v697 = vadd.f32 %v592, %v696
      %698 = vmatmul.bf16.gmra.mxu0 %v640
      %v699 = vpop.f32.mrf.mxu0
      %v700 = vadd.f32 %v592, %v699
      %v701 = vpop.f32.mrf.mxu0
      %v702 = vadd.f32 %v592, %v701
      %703 = vmatmul.bf16.gmra.mxu0 %v643
      %v704 = vpop.f32.mrf.mxu0
      %v705 = vadd.f32 %v592, %v704
      %v706 = vpop.f32.mrf.mxu0
      %v707 = vadd.f32 %v592, %v706
      %708 = vmatmul.bf16.gmra.mxu0 %v646
      %v709 = vpop.f32.mrf.mxu0
      %v710 = vadd.f32 %v592, %v709
      %v711 = vpop.f32.mrf.mxu0
      %v712 = vadd.f32 %v592, %v711
      %713 = vmatmul.bf16.gmra.mxu0 %v649
      %v714 = vpop.f32.mrf.mxu0
      %v715 = vadd.f32 %v592, %v714
      %v716 = vpop.f32.mrf.mxu0
      %v717 = vadd.f32 %v592, %v716
      %718 = vdwg.mxu0
      %v719 = vpack.c.bf16 %v663, %v661
      %v720 = vpack.c.bf16 %v668, %v666
      %v721 = vpack.c.bf16 %v673, %v671
      %v722 = vpack.c.bf16 %v678, %v676
      %v723 = vpack.c.bf16 %v683, %v681
      loop: start=0, step=1, limit=4
      $region69: #{wave_transformer.1} parent=67 // loop_pre_header
        _
      $region70: #{wave_transformer.1} parent=67 // loop_header
        %s725 = sphi 0, %s729
        %p726 = scmp.ge.s32.totalorder %s725, 4
        %v730 = vphi 0.0, %v1044
        %v731 = vphi 0.0, %v1045
        %v732 = vphi 0.0, %v1046
        %v733 = vphi 0.0, %v1047
        %v734 = vphi 0.0, %v1048
        %v735 = vphi 0.0, %v1049
        %v736 = vphi 0.0, %v1050
        %v737 = vphi 0.0, %v1051
        %v738 = vphi 0.0, %v1052
        %v739 = vphi 0.0, %v1053
      $region71: #{wave_transformer.1} parent=67 // loop_header_branch
        %728 = sbr.rel (%p726) target = $region75
      $region72: #{wave_transformer.1} parent=67 // loop_body
        %s740 = smul.u32 %s725, 16
        %v741 = vstv %s740
        %vm742 = vcmp.ge.s32.totalorder %v440, %v741
        %s743 = sadd.s32 %s725, 1
        %s744 = smul.u32 %s743, 16
        %v745 = vstv %s744
        %vm746 = vcmp.lt.s32.totalorder %v440, %v745
        %vm747 = vmand %vm742, %vm746
        %v748 = vsel %vm747, 1, 0
        %v749 = vcvt.s32.f32 %v748
        %v750 = vmul.f32 %v661, %v749
        %v751 = vmul.f32 %v663, %v749
        %v752 = vmul.f32 %v666, %v749
        %v753 = vmul.f32 %v668, %v749
        %v754 = vmul.f32 %v671, %v749
        %v755 = vmul.f32 %v673, %v749
        %v756 = vmul.f32 %v676, %v749
        %v757 = vmul.f32 %v678, %v749
        %v758 = vmul.f32 %v681, %v749
        %v759 = vmul.f32 %v683, %v749
        %v760 = vpack.c.bf16 %v751, %v750
        %v761 = vpack.c.bf16 %v753, %v752
        %v762 = vpack.c.bf16 %v755, %v754
        %v763 = vpack.c.bf16 %v757, %v756
        %v764 = vpack.c.bf16 %v759, %v758
        %770 = vrot.lane.b32.xlu0 %v719, 64
        %v771 = vpop.permute.xlu0 %770
        %772 = vrot.lane.b32.xlu0 %v720, 64
        %v773 = vpop.permute.xlu0 %772
        %774 = vrot.lane.b32.xlu0 %v721, 64
        %v775 = vpop.permute.xlu0 %774
        %776 = vrot.lane.b32.xlu0 %v722, 64
        %v777 = vpop.permute.xlu0 %776
        %778 = vrot.lane.b32.xlu0 %v723, 64
        %v779 = vpop.permute.xlu0 %778
        %v781 = vsel %vm635, %v760, 0
        %v784 = vsel %vm635, %v761, 0
        %v787 = vsel %vm635, %v762, 0
        %v790 = vsel %vm635, %v763, 0
        %v793 = vsel %vm635, %v764, 0
        %v796 = vsel %vm635, %v771, 0
        %v799 = vsel %vm635, %v773, 0
        %v802 = vsel %vm635, %v775, 0
        %v805 = vsel %vm635, %v777, 0
        %v808 = vsel %vm635, %v779, 0
        %810 = vmatpush.bf16.xpose.msra.mxu0 0
        %811 = vmatpush.bf16.xpose.msra.mxu0 0
        %812 = vmatpush.bf16.xpose.msra.mxu0 0
        %813 = vmatpush.bf16.xpose.msra.mxu0 %v808
        %814 = vmatpush.bf16.xpose.msra.mxu0 %v805
        %815 = vmatpush.bf16.xpose.msra.mxu0 %v802
        %816 = vmatpush.bf16.xpose.msra.mxu0 %v799
        %817 = vmatpush.bf16.xpose.msra.mxu0 %v796
        %818 = vmatmul.bf16.gmra.mxu0 %v781
        %v819 = vpop.f32.mrf.mxu0
        %v820 = vadd.f32 0.0, %v819
        %v821 = vpop.f32.mrf.mxu0
        %v822 = vadd.f32 0.0, %v821
        %823 = vmatmul.bf16.gmra.mxu0 %v784
        %v824 = vpop.f32.mrf.mxu0
        %v825 = vadd.f32 0.0, %v824
        %v826 = vpop.f32.mrf.mxu0
        %v827 = vadd.f32 0.0, %v826
        %828 = vmatmul.bf16.gmra.mxu0 %v787
        %v829 = vpop.f32.mrf.mxu0
        %v830 = vadd.f32 0.0, %v829
        %v831 = vpop.f32.mrf.mxu0
        %v832 = vadd.f32 0.0, %v831
        %833 = vmatmul.bf16.gmra.mxu0 %v790
        %v834 = vpop.f32.mrf.mxu0
        %v835 = vadd.f32 0.0, %v834
        %v836 = vpop.f32.mrf.mxu0
        %v837 = vadd.f32 0.0, %v836
        %838 = vmatmul.bf16.gmra.mxu0 %v793
        %v839 = vpop.f32.mrf.mxu0
        %v840 = vadd.f32 0.0, %v839
        %v841 = vpop.f32.mrf.mxu0
        %v842 = vadd.f32 0.0, %v841
        %843 = vdwg.mxu0
        %v844 = vmul.f32 %v820, 0.25
        %v845 = vmul.f32 %v822, 0.25
        %v846 = vmul.f32 %v825, 0.25
        %v847 = vmul.f32 %v827, 0.25
        %v848 = vmul.f32 %v830, 0.25
        %v849 = vmul.f32 %v832, 0.25
        %v850 = vmul.f32 %v835, 0.25
        %v851 = vmul.f32 %v837, 0.25
        %v852 = vmul.f32 %v840, 0.25
        %v853 = vmul.f32 %v842, 0.25
        %v854 = vadd.f32 %v844, %v485
        %v855 = vadd.f32 %v845, %v486
        %v856 = vadd.f32 %v846, %v487
        %v857 = vadd.f32 %v847, %v488
        %v858 = vadd.f32 %v848, %v489
        %v859 = vadd.f32 %v849, %v490
        %v860 = vadd.f32 %v850, %v491
        %v861 = vadd.f32 %v851, %v492
        %v862 = vadd.f32 %v852, %v493
        %v863 = vadd.f32 %v853, %v494
        %vm864 = vcmask 654336
        %v865 = vsel %vm864, %v854, -inf
        %866 = vmax.xlane.f32.xlu0 %v865
        %v867 = vpop.xlane.xlu0 %866
        %v868 = vsel %vm864, %v855, -inf
        %869 = vmax.xlane.f32.xlu0 %v868
        %v870 = vpop.xlane.xlu0 %869
        %v871 = vsel %vm864, %v856, -inf
        %872 = vmax.xlane.f32.xlu0 %v871
        %v873 = vpop.xlane.xlu0 %872
        %v874 = vsel %vm864, %v857, -inf
        %875 = vmax.xlane.f32.xlu0 %v874
        %v876 = vpop.xlane.xlu0 %875
        %v877 = vsel %vm864, %v858, -inf
        %878 = vmax.xlane.f32.xlu0 %v877
        %v879 = vpop.xlane.xlu0 %878
        %v880 = vsel %vm864, %v859, -inf
        %881 = vmax.xlane.f32.xlu0 %v880
        %v882 = vpop.xlane.xlu0 %881
        %v883 = vsel %vm864, %v860, -inf
        %884 = vmax.xlane.f32.xlu0 %v883
        %v885 = vpop.xlane.xlu0 %884
        %v886 = vsel %vm864, %v861, -inf
        %887 = vmax.xlane.f32.xlu0 %v886
        %v888 = vpop.xlane.xlu0 %887
        %v889 = vsel %vm864, %v862, -inf
        %890 = vmax.xlane.f32.xlu0 %v889
        %v891 = vpop.xlane.xlu0 %890
        %v892 = vsel %vm864, %v863, -inf
        %893 = vmax.xlane.f32.xlu0 %v892
        %v894 = vpop.xlane.xlu0 %893
        %v895 = vsub.f32 %v854, %v867
        %v896 = vsub.f32 %v855, %v870
        %v897 = vsub.f32 %v856, %v873
        %v898 = vsub.f32 %v857, %v876
        %v899 = vsub.f32 %v858, %v879
        %v900 = vsub.f32 %v859, %v882
        %v901 = vsub.f32 %v860, %v885
        %v902 = vsub.f32 %v861, %v888
        %v903 = vsub.f32 %v862, %v891
        %v904 = vsub.f32 %v863, %v894
        %v905 = vmul.f32 %v895, 1.442695
        %v906 = vpow.pop %v905
        %v907 = vmul.f32 %v896, 1.442695
        %v908 = vpow.pop %v907
        %v909 = vmul.f32 %v897, 1.442695
        %v910 = vpow.pop %v909
        %v911 = vmul.f32 %v898, 1.442695
        %v912 = vpow.pop %v911
        %v913 = vmul.f32 %v899, 1.442695
        %v914 = vpow.pop %v913
        %v915 = vmul.f32 %v900, 1.442695
        %v916 = vpow.pop %v915
        %v917 = vmul.f32 %v901, 1.442695
        %v918 = vpow.pop %v917
        %v919 = vmul.f32 %v902, 1.442695
        %v920 = vpow.pop %v919
        %v921 = vmul.f32 %v903, 1.442695
        %v922 = vpow.pop %v921
        %v923 = vmul.f32 %v904, 1.442695
        %v924 = vpow.pop %v923
        %v925 = vsel %vm864, %v906, 0.0
        %926 = vadd.xlane.f32.xlu0 %v925
        %v927 = vpop.xlane.xlu0 %926
        %v928 = vsel %vm864, %v908, 0.0
        %929 = vadd.xlane.f32.xlu0 %v928
        %v930 = vpop.xlane.xlu0 %929
        %v931 = vsel %vm864, %v910, 0.0
        %932 = vadd.xlane.f32.xlu0 %v931
        %v933 = vpop.xlane.xlu0 %932
        %v934 = vsel %vm864, %v912, 0.0
        %935 = vadd.xlane.f32.xlu0 %v934
        %v936 = vpop.xlane.xlu0 %935
        %v937 = vsel %vm864, %v914, 0.0
        %938 = vadd.xlane.f32.xlu0 %v937
        %v939 = vpop.xlane.xlu0 %938
        %v940 = vsel %vm864, %v916, 0.0
        %941 = vadd.xlane.f32.xlu0 %v940
        %v942 = vpop.xlane.xlu0 %941
        %v943 = vsel %vm864, %v918, 0.0
        %944 = vadd.xlane.f32.xlu0 %v943
        %v945 = vpop.xlane.xlu0 %944
        %v946 = vsel %vm864, %v920, 0.0
        %947 = vadd.xlane.f32.xlu0 %v946
        %v948 = vpop.xlane.xlu0 %947
        %v949 = vsel %vm864, %v922, 0.0
        %950 = vadd.xlane.f32.xlu0 %v949
        %v951 = vpop.xlane.xlu0 %950
        %v952 = vsel %vm864, %v924, 0.0
        %953 = vadd.xlane.f32.xlu0 %v952
        %v954 = vpop.xlane.xlu0 %953
        %v955 = vrcp.pop %v927
        %v956 = vrcp.pop %v930
        %v957 = vrcp.pop %v933
        %v958 = vrcp.pop %v936
        %v959 = vrcp.pop %v939
        %v960 = vrcp.pop %v942
        %v961 = vrcp.pop %v945
        %v962 = vrcp.pop %v948
        %v963 = vrcp.pop %v951
        %v964 = vrcp.pop %v954
        %v965 = vmul.f32 %v906, %v955
        %v966 = vmul.f32 %v908, %v956
        %v967 = vmul.f32 %v910, %v957
        %v968 = vmul.f32 %v912, %v958
        %v969 = vmul.f32 %v914, %v959
        %v970 = vmul.f32 %v916, %v960
        %v971 = vmul.f32 %v918, %v961
        %v972 = vmul.f32 %v920, %v962
        %v973 = vmul.f32 %v922, %v963
        %v974 = vmul.f32 %v924, %v964
        %v975 = vpack.c.bf16 %v966, %v965
        %v976 = vpack.c.bf16 %v968, %v967
        %v977 = vpack.c.bf16 %v970, %v969
        %v978 = vpack.c.bf16 %v972, %v971
        %v979 = vpack.c.bf16 %v974, %v973
        %v980 = vmul.f32 %v695, %v749
        %v981 = vmul.f32 %v697, %v749
        %v982 = vmul.f32 %v700, %v749
        %v983 = vmul.f32 %v702, %v749
        %v984 = vmul.f32 %v705, %v749
        %v985 = vmul.f32 %v707, %v749
        %v986 = vmul.f32 %v710, %v749
        %v987 = vmul.f32 %v712, %v749
        %v988 = vmul.f32 %v715, %v749
        %v989 = vmul.f32 %v717, %v749
        %v990 = vpack.c.bf16 %v981, %v980
        %v991 = vpack.c.bf16 %v983, %v982
        %v992 = vpack.c.bf16 %v985, %v984
        %v993 = vpack.c.bf16 %v987, %v986
        %v994 = vpack.c.bf16 %v989, %v988
        %v996 = vsel %vm864, %v975, 0
        %v999 = vsel %vm864, %v976, 0
        %v1002 = vsel %vm864, %v977, 0
        %v1005 = vsel %vm864, %v978, 0
        %v1008 = vsel %vm864, %v979, 0
        %1010 = vmatpush.bf16.msra.mxu0 0
        %1011 = vmatpush.bf16.msra.mxu0 0
        %1012 = vmatpush.bf16.msra.mxu0 0
        %1013 = vmatpush.bf16.msra.mxu0 %v994
        %1014 = vmatpush.bf16.msra.mxu0 %v993
        %1015 = vmatpush.bf16.msra.mxu0 %v992
        %1016 = vmatpush.bf16.msra.mxu0 %v991
        %1017 = vmatpush.bf16.msra.mxu0 %v990
        %1018 = vmatmul.bf16.gmra.mxu0 %v996
        %v1019 = vpop.f32.mrf.mxu0
        %v1020 = vadd.f32 0.0, %v1019
        %v1021 = vpop.f32.mrf.mxu0
        %v1022 = vadd.f32 0.0, %v1021
        %1023 = vmatmul.bf16.gmra.mxu0 %v999
        %v1024 = vpop.f32.mrf.mxu0
        %v1025 = vadd.f32 0.0, %v1024
        %v1026 = vpop.f32.mrf.mxu0
        %v1027 = vadd.f32 0.0, %v1026
        %1028 = vmatmul.bf16.gmra.mxu0 %v1002
        %v1029 = vpop.f32.mrf.mxu0
        %v1030 = vadd.f32 0.0, %v1029
        %v1031 = vpop.f32.mrf.mxu0
        %v1032 = vadd.f32 0.0, %v1031
        %1033 = vmatmul.bf16.gmra.mxu0 %v1005
        %v1034 = vpop.f32.mrf.mxu0
        %v1035 = vadd.f32 0.0, %v1034
        %v1036 = vpop.f32.mrf.mxu0
        %v1037 = vadd.f32 0.0, %v1036
        %1038 = vmatmul.bf16.gmra.mxu0 %v1008
        %v1039 = vpop.f32.mrf.mxu0
        %v1040 = vadd.f32 0.0, %v1039
        %v1041 = vpop.f32.mrf.mxu0
        %v1042 = vadd.f32 0.0, %v1041
        %1043 = vdwg.mxu0
        %v1044 = vadd.f32 %v730, %v1020
        %v1045 = vadd.f32 %v731, %v1022
        %v1046 = vadd.f32 %v732, %v1025
        %v1047 = vadd.f32 %v733, %v1027
        %v1048 = vadd.f32 %v734, %v1030
        %v1049 = vadd.f32 %v735, %v1032
        %v1050 = vadd.f32 %v736, %v1035
        %v1051 = vadd.f32 %v737, %v1037
        %v1052 = vadd.f32 %v738, %v1040
        %v1053 = vadd.f32 %v739, %v1042
      $region73: #{wave_transformer.1} parent=67 // loop_footer
        %s729 = sadd.s32 1, %s725
      $region74: #{wave_transformer.1} parent=67 // loop_footer_branch
        %724 = sbr.rel target = $region70
      $region75: #{wave_transformer.1} parent=67 // loop_exit
        _
      %v1054 = vpack.c.bf16 %v731, %v730
      %v1055 = vpack.c.bf16 %v733, %v732
      %v1056 = vpack.c.bf16 %v735, %v734
      %v1057 = vpack.c.bf16 %v737, %v736
      %v1058 = vpack.c.bf16 %v739, %v738
      %v1059 = vld [vmem:[%s5] sm:$0xf]
      %v1060 = vld [vmem:[%s5 + $0x4] sm:$0xf]
      %v1061 = vld [vmem:[%s5 + $0x8] sm:$0xf]
      %v1062 = vld [vmem:[%s5 + $0xc] sm:$0xf]
      %v1063 = vld [vmem:[%s5 + $0x10] sm:$0xf]
      %v1064 = vld [vmem:[%s5 + $0x14] sm:$0xf]
      %v1065 = vld [vmem:[%s5 + $0x18] sm:$0xf]
      %v1066 = vld [vmem:[%s5 + $0x1c] sm:$0xf]
      %v1067 = vperm.slane %v575, 0
      %v1076 = vunpack.c.l.b16 %v1059
      %v1077 = vunpack.c.l.b16 %v1060
      %v1078 = vunpack.c.l.b16 %v1061
      %v1079 = vunpack.c.l.b16 %v1062
      %v1080 = vunpack.c.l.b16 %v1063
      %v1081 = vunpack.c.l.b16 %v1064
      %v1082 = vunpack.c.l.b16 %v1065
      %v1083 = vunpack.c.l.b16 %v1066
      %v1084 = vpack.c.b16 %v1077, %v1076
      %v1085 = vpack.c.b16 %v1079, %v1078
      %v1086 = vpack.c.b16 %v1081, %v1080
      %v1087 = vpack.c.b16 %v1083, %v1082
      %v1093 = vsel %vm635, %v1054, 0
      %v1096 = vsel %vm635, %v1055, 0
      %v1099 = vsel %vm635, %v1056, 0
      %v1102 = vsel %vm635, %v1057, 0
      %v1105 = vsel %vm635, %v1058, 0
      %1107 = vmatpush.bf16.msra.mxu0 0
      %1108 = vmatpush.bf16.msra.mxu0 0
      %1109 = vmatpush.bf16.msra.mxu0 0
      %1110 = vmatpush.bf16.msra.mxu0 0
      %1111 = vmatpush.bf16.msra.mxu0 %v1087
      %1112 = vmatpush.bf16.msra.mxu0 %v1086
      %1113 = vmatpush.bf16.msra.mxu0 %v1085
      %1114 = vmatpush.bf16.msra.mxu0 %v1084
      %1115 = vmatmul.bf16.gmra.mxu0 %v1093
      %v1116 = vpop.f32.mrf.mxu0
      %v1117 = vadd.f32 %v1067, %v1116
      %v1118 = vpop.f32.mrf.mxu0
      %v1119 = vadd.f32 %v1067, %v1118
      %1120 = vmatmul.bf16.gmra.mxu0 %v1096
      %v1121 = vpop.f32.mrf.mxu0
      %v1122 = vadd.f32 %v1067, %v1121
      %v1123 = vpop.f32.mrf.mxu0
      %v1124 = vadd.f32 %v1067, %v1123
      %1125 = vmatmul.bf16.gmra.mxu0 %v1099
      %v1126 = vpop.f32.mrf.mxu0
      %v1127 = vadd.f32 %v1067, %v1126
      %v1128 = vpop.f32.mrf.mxu0
      %v1129 = vadd.f32 %v1067, %v1128
      %1130 = vmatmul.bf16.gmra.mxu0 %v1102
      %v1131 = vpop.f32.mrf.mxu0
      %v1132 = vadd.f32 %v1067, %v1131
      %v1133 = vpop.f32.mrf.mxu0
      %v1134 = vadd.f32 %v1067, %v1133
      %1135 = vmatmul.bf16.gmra.mxu0 %v1105
      %v1136 = vpop.f32.mrf.mxu0
      %v1137 = vadd.f32 %v1067, %v1136
      %v1138 = vpop.f32.mrf.mxu0
      %v1139 = vadd.f32 %v1067, %v1138
      %1140 = vdwg.mxu0
      %v1141 = vadd.f32 %v551, %v1117
      %v1142 = vadd.f32 %v553, %v1119
      %v1143 = vadd.f32 %v556, %v1122
      %v1144 = vadd.f32 %v558, %v1124
      %v1145 = vadd.f32 %v561, %v1127
      %v1146 = vadd.f32 %v563, %v1129
      %v1147 = vadd.f32 %v566, %v1132
      %v1148 = vadd.f32 %v568, %v1134
      %v1149 = vadd.f32 %v571, %v1137
      %v1150 = vadd.f32 %v573, %v1139
      %v1151 = vsel %vm635, %v1141, 0.0
      %1152 = vadd.xlane.f32.xlu0 %v1151
      %v1153 = vpop.xlane.xlu0 %1152
      %v1154 = vsel %vm635, %v1142, 0.0
      %1155 = vadd.xlane.f32.xlu0 %v1154
      %v1156 = vpop.xlane.xlu0 %1155
      %v1157 = vsel %vm635, %v1143, 0.0
      %1158 = vadd.xlane.f32.xlu0 %v1157
      %v1159 = vpop.xlane.xlu0 %1158
      %v1160 = vsel %vm635, %v1144, 0.0
      %1161 = vadd.xlane.f32.xlu0 %v1160
      %v1162 = vpop.xlane.xlu0 %1161
      %v1163 = vsel %vm635, %v1145, 0.0
      %1164 = vadd.xlane.f32.xlu0 %v1163
      %v1165 = vpop.xlane.xlu0 %1164
      %v1166 = vsel %vm635, %v1146, 0.0
      %1167 = vadd.xlane.f32.xlu0 %v1166
      %v1168 = vpop.xlane.xlu0 %1167
      %v1169 = vsel %vm635, %v1147, 0.0
      %1170 = vadd.xlane.f32.xlu0 %v1169
      %v1171 = vpop.xlane.xlu0 %1170
      %v1172 = vsel %vm635, %v1148, 0.0
      %1173 = vadd.xlane.f32.xlu0 %v1172
      %v1174 = vpop.xlane.xlu0 %1173
      %v1175 = vsel %vm635, %v1149, 0.0
      %1176 = vadd.xlane.f32.xlu0 %v1175
      %v1177 = vpop.xlane.xlu0 %1176
      %v1178 = vsel %vm635, %v1150, 0.0
      %1179 = vadd.xlane.f32.xlu0 %v1178
      %v1180 = vpop.xlane.xlu0 %1179
      %v1181 = vrcp.pop 64.0
      %v1182 = vmul.f32 64.0, %v1181
      %v1183 = vsub.f32 1.0, %v1182
      %v1184 = vmul.f32 %v1181, %v1183
      %v1185 = vadd.f32 %v1181, %v1184
      %vm1186 = vweird.f32 %v1181
      %v1187 = vsel %vm1186, %v1181, %v1185
      %v1188 = vmul.f32 %v1153, %v1187
      %v1189 = vmul.f32 %v1156, %v1187
      %v1190 = vmul.f32 %v1159, %v1187
      %v1191 = vmul.f32 %v1162, %v1187
      %v1192 = vmul.f32 %v1165, %v1187
      %v1193 = vmul.f32 %v1168, %v1187
      %v1194 = vmul.f32 %v1171, %v1187
      %v1195 = vmul.f32 %v1174, %v1187
      %v1196 = vmul.f32 %v1177, %v1187
      %v1197 = vmul.f32 %v1180, %v1187
      %v1198 = vsub.f32 %v1141, %v1188
      %v1199 = vsub.f32 %v1142, %v1189
      %v1200 = vsub.f32 %v1143, %v1190
      %v1201 = vsub.f32 %v1144, %v1191
      %v1202 = vsub.f32 %v1145, %v1192
      %v1203 = vsub.f32 %v1146, %v1193
      %v1204 = vsub.f32 %v1147, %v1194
      %v1205 = vsub.f32 %v1148, %v1195
      %v1206 = vsub.f32 %v1149, %v1196
      %v1207 = vsub.f32 %v1150, %v1197
      %v1208 = vmul.f32 %v1198, %v1198
      %v1209 = vmul.f32 %v1199, %v1199
      %v1210 = vmul.f32 %v1200, %v1200
      %v1211 = vmul.f32 %v1201, %v1201
      %v1212 = vmul.f32 %v1202, %v1202
      %v1213 = vmul.f32 %v1203, %v1203
      %v1214 = vmul.f32 %v1204, %v1204
      %v1215 = vmul.f32 %v1205, %v1205
      %v1216 = vmul.f32 %v1206, %v1206
      %v1217 = vmul.f32 %v1207, %v1207
      %v1218 = vsel %vm635, %v1208, 0.0
      %1219 = vadd.xlane.f32.xlu0 %v1218
      %v1220 = vpop.xlane.xlu0 %1219
      %v1221 = vsel %vm635, %v1209, 0.0
      %1222 = vadd.xlane.f32.xlu0 %v1221
      %v1223 = vpop.xlane.xlu0 %1222
      %v1224 = vsel %vm635, %v1210, 0.0
      %1225 = vadd.xlane.f32.xlu0 %v1224
      %v1226 = vpop.xlane.xlu0 %1225
      %v1227 = vsel %vm635, %v1211, 0.0
      %1228 = vadd.xlane.f32.xlu0 %v1227
      %v1229 = vpop.xlane.xlu0 %1228
      %v1230 = vsel %vm635, %v1212, 0.0
      %1231 = vadd.xlane.f32.xlu0 %v1230
      %v1232 = vpop.xlane.xlu0 %1231
      %v1233 = vsel %vm635, %v1213, 0.0
      %1234 = vadd.xlane.f32.xlu0 %v1233
      %v1235 = vpop.xlane.xlu0 %1234
      %v1236 = vsel %vm635, %v1214, 0.0
      %1237 = vadd.xlane.f32.xlu0 %v1236
      %v1238 = vpop.xlane.xlu0 %1237
      %v1239 = vsel %vm635, %v1215, 0.0
      %1240 = vadd.xlane.f32.xlu0 %v1239
      %v1241 = vpop.xlane.xlu0 %1240
      %v1242 = vsel %vm635, %v1216, 0.0
      %1243 = vadd.xlane.f32.xlu0 %v1242
      %v1244 = vpop.xlane.xlu0 %1243
      %v1245 = vsel %vm635, %v1217, 0.0
      %1246 = vadd.xlane.f32.xlu0 %v1245
      %v1247 = vpop.xlane.xlu0 %1246
      %v1248 = vmul.f32 %v1220, %v1187
      %v1249 = vmul.f32 %v1223, %v1187
      %v1250 = vmul.f32 %v1226, %v1187
      %v1251 = vmul.f32 %v1229, %v1187
      %v1252 = vmul.f32 %v1232, %v1187
      %v1253 = vmul.f32 %v1235, %v1187
      %v1254 = vmul.f32 %v1238, %v1187
      %v1255 = vmul.f32 %v1241, %v1187
      %v1256 = vmul.f32 %v1244, %v1187
      %v1257 = vmul.f32 %v1247, %v1187
      %v1258 = vadd.f32 %v1248, 1e-05
      %v1259 = vadd.f32 %v1249, 1e-05
      %v1260 = vadd.f32 %v1250, 1e-05
      %v1261 = vadd.f32 %v1251, 1e-05
      %v1262 = vadd.f32 %v1252, 1e-05
      %v1263 = vadd.f32 %v1253, 1e-05
      %v1264 = vadd.f32 %v1254, 1e-05
      %v1265 = vadd.f32 %v1255, 1e-05
      %v1266 = vadd.f32 %v1256, 1e-05
      %v1267 = vadd.f32 %v1257, 1e-05
      %v1268 = vrsqrt.pop %v1258
      %v1269 = vmul.f32 %v1268, %v1258
      %v1270 = vmul.f32 %v1269, %v1268
      %v1271 = vmul.f32 0.5, %v1270
      %v1272 = vsub.f32 1.5, %v1271
      %v1273 = vmul.f32 %v1268, %v1272
      %vm1274 = vweird.f32 %v1258
      %vm1275 = vweird.f32 %v1268
      %vm1276 = vmor %vm1274, %vm1275
      %v1277 = vsel %vm1276, %v1268, %v1273
      %v1278 = vrsqrt.pop %v1259
      %v1279 = vmul.f32 %v1278, %v1259
      %v1280 = vmul.f32 %v1279, %v1278
      %v1281 = vmul.f32 0.5, %v1280
      %v1282 = vsub.f32 1.5, %v1281
      %v1283 = vmul.f32 %v1278, %v1282
      %vm1284 = vweird.f32 %v1259
      %vm1285 = vweird.f32 %v1278
      %vm1286 = vmor %vm1284, %vm1285
      %v1287 = vsel %vm1286, %v1278, %v1283
      %v1288 = vrsqrt.pop %v1260
      %v1289 = vmul.f32 %v1288, %v1260
      %v1290 = vmul.f32 %v1289, %v1288
      %v1291 = vmul.f32 0.5, %v1290
      %v1292 = vsub.f32 1.5, %v1291
      %v1293 = vmul.f32 %v1288, %v1292
      %vm1294 = vweird.f32 %v1260
      %vm1295 = vweird.f32 %v1288
      %vm1296 = vmor %vm1294, %vm1295
      %v1297 = vsel %vm1296, %v1288, %v1293
      %v1298 = vrsqrt.pop %v1261
      %v1299 = vmul.f32 %v1298, %v1261
      %v1300 = vmul.f32 %v1299, %v1298
      %v1301 = vmul.f32 0.5, %v1300
      %v1302 = vsub.f32 1.5, %v1301
      %v1303 = vmul.f32 %v1298, %v1302
      %vm1304 = vweird.f32 %v1261
      %vm1305 = vweird.f32 %v1298
      %vm1306 = vmor %vm1304, %vm1305
      %v1307 = vsel %vm1306, %v1298, %v1303
      %v1308 = vrsqrt.pop %v1262
      %v1309 = vmul.f32 %v1308, %v1262
      %v1310 = vmul.f32 %v1309, %v1308
      %v1311 = vmul.f32 0.5, %v1310
      %v1312 = vsub.f32 1.5, %v1311
      %v1313 = vmul.f32 %v1308, %v1312
      %vm1314 = vweird.f32 %v1262
      %vm1315 = vweird.f32 %v1308
      %vm1316 = vmor %vm1314, %vm1315
      %v1317 = vsel %vm1316, %v1308, %v1313
      %v1318 = vrsqrt.pop %v1263
      %v1319 = vmul.f32 %v1318, %v1263
      %v1320 = vmul.f32 %v1319, %v1318
      %v1321 = vmul.f32 0.5, %v1320
      %v1322 = vsub.f32 1.5, %v1321
      %v1323 = vmul.f32 %v1318, %v1322
      %vm1324 = vweird.f32 %v1263
      %vm1325 = vweird.f32 %v1318
      %vm1326 = vmor %vm1324, %vm1325
      %v1327 = vsel %vm1326, %v1318, %v1323
      %v1328 = vrsqrt.pop %v1264
      %v1329 = vmul.f32 %v1328, %v1264
      %v1330 = vmul.f32 %v1329, %v1328
      %v1331 = vmul.f32 0.5, %v1330
      %v1332 = vsub.f32 1.5, %v1331
      %v1333 = vmul.f32 %v1328, %v1332
      %vm1334 = vweird.f32 %v1264
      %vm1335 = vweird.f32 %v1328
      %vm1336 = vmor %vm1334, %vm1335
      %v1337 = vsel %vm1336, %v1328, %v1333
      %v1338 = vrsqrt.pop %v1265
      %v1339 = vmul.f32 %v1338, %v1265
      %v1340 = vmul.f32 %v1339, %v1338
      %v1341 = vmul.f32 0.5, %v1340
      %v1342 = vsub.f32 1.5, %v1341
      %v1343 = vmul.f32 %v1338, %v1342
      %vm1344 = vweird.f32 %v1265
      %vm1345 = vweird.f32 %v1338
      %vm1346 = vmor %vm1344, %vm1345
      %v1347 = vsel %vm1346, %v1338, %v1343
      %v1348 = vrsqrt.pop %v1266
      %v1349 = vmul.f32 %v1348, %v1266
      %v1350 = vmul.f32 %v1349, %v1348
      %v1351 = vmul.f32 0.5, %v1350
      %v1352 = vsub.f32 1.5, %v1351
      %v1353 = vmul.f32 %v1348, %v1352
      %vm1354 = vweird.f32 %v1266
      %vm1355 = vweird.f32 %v1348
      %vm1356 = vmor %vm1354, %vm1355
      %v1357 = vsel %vm1356, %v1348, %v1353
      %v1358 = vrsqrt.pop %v1267
      %v1359 = vmul.f32 %v1358, %v1267
      %v1360 = vmul.f32 %v1359, %v1358
      %v1361 = vmul.f32 0.5, %v1360
      %v1362 = vsub.f32 1.5, %v1361
      %v1363 = vmul.f32 %v1358, %v1362
      %vm1364 = vweird.f32 %v1267
      %vm1365 = vweird.f32 %v1358
      %vm1366 = vmor %vm1364, %vm1365
      %v1367 = vsel %vm1366, %v1358, %v1363
      %v1368 = vmul.f32 %v1198, %v1277
      %v1369 = vmul.f32 %v1199, %v1287
      %v1370 = vmul.f32 %v1200, %v1297
      %v1371 = vmul.f32 %v1201, %v1307
      %v1372 = vmul.f32 %v1202, %v1317
      %v1373 = vmul.f32 %v1203, %v1327
      %v1374 = vmul.f32 %v1204, %v1337
      %v1375 = vmul.f32 %v1205, %v1347
      %v1376 = vmul.f32 %v1206, %v1357
      %v1377 = vmul.f32 %v1207, %v1367
      %v1378 = vperm.slane %v575, 1
      %v1379 = vmul.f32 %v1368, %v1378
      %v1380 = vmul.f32 %v1369, %v1378
      %v1381 = vmul.f32 %v1370, %v1378
      %v1382 = vmul.f32 %v1371, %v1378
      %v1383 = vmul.f32 %v1372, %v1378
      %v1384 = vmul.f32 %v1373, %v1378
      %v1385 = vmul.f32 %v1374, %v1378
      %v1386 = vmul.f32 %v1375, %v1378
      %v1387 = vmul.f32 %v1376, %v1378
      %v1388 = vmul.f32 %v1377, %v1378
      %v1389 = vperm.slane %v575, 2
      %v1390 = vadd.f32 %v1379, %v1389
      %v1391 = vadd.f32 %v1380, %v1389
      %v1392 = vadd.f32 %v1381, %v1389
      %v1393 = vadd.f32 %v1382, %v1389
      %v1394 = vadd.f32 %v1383, %v1389
      %v1395 = vadd.f32 %v1384, %v1389
      %v1396 = vadd.f32 %v1385, %v1389
      %v1397 = vadd.f32 %v1386, %v1389
      %v1398 = vadd.f32 %v1387, %v1389
      %v1399 = vadd.f32 %v1388, %v1389
      %v1400 = vpack.c.bf16 %v1391, %v1390
      %v1401 = vpack.c.bf16 %v1393, %v1392
      %v1402 = vpack.c.bf16 %v1395, %v1394
      %v1403 = vpack.c.bf16 %v1397, %v1396
      %v1404 = vpack.c.bf16 %v1399, %v1398
      %v1405 = vld [vmem:[%s7] sm:$0xff]
      %v1406 = vld [vmem:[%s7 + $0x8] sm:$0xff]
      %v1407 = vld [vmem:[%s7 + $0x10] sm:$0xff]
      %v1408 = vld [vmem:[%s7 + $0x18] sm:$0xff]
      %v1409 = vld [vmem:[%s7 + $0x20] sm:$0xff]
      %v1410 = vld [vmem:[%s7 + $0x28] sm:$0xff]
      %v1411 = vld [vmem:[%s7 + $0x30] sm:$0xff]
      %v1412 = vld [vmem:[%s7 + $0x38] sm:$0xff]
      %v1413 = vld [vmem:[%s7 + $0x40] sm:$0xff]
      %v1414 = vld [vmem:[%s7 + $0x48] sm:$0xff]
      %v1415 = vld [vmem:[%s7 + $0x50] sm:$0xff]
      %v1416 = vld [vmem:[%s7 + $0x58] sm:$0xff]
      %v1417 = vld [vmem:[%s7 + $0x60] sm:$0xff]
      %v1418 = vld [vmem:[%s7 + $0x68] sm:$0xff]
      %v1419 = vld [vmem:[%s7 + $0x70] sm:$0xff]
      %v1420 = vld [vmem:[%s7 + $0x78] sm:$0xff]
      %v1421 = vld [vmem:[%s7 + $0x80] sm:$0xff]
      %v1422 = vld [vmem:[%s7 + $0x88] sm:$0xff]
      %v1423 = vld [vmem:[%s7 + $0x90] sm:$0xff]
      %v1424 = vld [vmem:[%s7 + $0x98] sm:$0xff]
      %v1425 = vld [vmem:[%s7 + $0xa0] sm:$0xff]
      %v1426 = vld [vmem:[%s7 + $0xa8] sm:$0xff]
      %v1427 = vld [vmem:[%s7 + $0xb0] sm:$0xff]
      %v1428 = vld [vmem:[%s7 + $0xb8] sm:$0xff]
      %v1429 = vld [vmem:[%s7 + $0xc0] sm:$0xff]
      %v1430 = vld [vmem:[%s7 + $0xc8] sm:$0xff]
      %v1431 = vld [vmem:[%s7 + $0xd0] sm:$0xff]
      %v1432 = vld [vmem:[%s7 + $0xd8] sm:$0xff]
      %v1433 = vld [vmem:[%s7 + $0xe0] sm:$0xff]
      %v1434 = vld [vmem:[%s7 + $0xe8] sm:$0xff]
      %v1435 = vld [vmem:[%s7 + $0xf0] sm:$0xff]
      %v1436 = vld [vmem:[%s7 + $0xf8] sm:$0xff]
      %v1437 = vld [vmem:[%s7 + $0x100] sm:$0xff]
      %v1438 = vld [vmem:[%s7 + $0x108] sm:$0xff]
      %v1439 = vld [vmem:[%s7 + $0x110] sm:$0xff]
      %v1440 = vld [vmem:[%s7 + $0x118] sm:$0xff]
      %v1441 = vld [vmem:[%s7 + $0x120] sm:$0xff]
      %v1442 = vld [vmem:[%s7 + $0x128] sm:$0xff]
      %v1443 = vld [vmem:[%s7 + $0x130] sm:$0xff]
      %v1444 = vld [vmem:[%s7 + $0x138] sm:$0xff]
      %v1445 = vld [vmem:[%s7 + $0x140] sm:$0xff]
      %v1446 = vld [vmem:[%s7 + $0x148] sm:$0xff]
      %v1447 = vld [vmem:[%s7 + $0x150] sm:$0xff]
      %v1448 = vld [vmem:[%s7 + $0x158] sm:$0xff]
      %v1449 = vld [vmem:[%s7 + $0x160] sm:$0xff]
      %v1450 = vld [vmem:[%s7 + $0x168] sm:$0xff]
      %v1451 = vld [vmem:[%s7 + $0x170] sm:$0xff]
      %v1452 = vld [vmem:[%s7 + $0x178] sm:$0xff]
      %v1453 = vld [vmem:[%s7 + $0x180] sm:$0xff]
      %v1454 = vld [vmem:[%s7 + $0x188] sm:$0xff]
      %v1455 = vld [vmem:[%s7 + $0x190] sm:$0xff]
      %v1456 = vld [vmem:[%s7 + $0x198] sm:$0xff]
      %v1457 = vld [vmem:[%s7 + $0x1a0] sm:$0xff]
      %v1458 = vld [vmem:[%s7 + $0x1a8] sm:$0xff]
      %v1459 = vld [vmem:[%s7 + $0x1b0] sm:$0xff]
      %v1460 = vld [vmem:[%s7 + $0x1b8] sm:$0xff]
      %v1461 = vld [vmem:[%s7 + $0x1c0] sm:$0xff]
      %v1462 = vld [vmem:[%s7 + $0x1c8] sm:$0xff]
      %v1463 = vld [vmem:[%s7 + $0x1d0] sm:$0xff]
      %v1464 = vld [vmem:[%s7 + $0x1d8] sm:$0xff]
      %v1465 = vld [vmem:[%s7 + $0x1e0] sm:$0xff]
      %v1466 = vld [vmem:[%s7 + $0x1e8] sm:$0xff]
      %v1467 = vld [vmem:[%s7 + $0x1f0] sm:$0xff]
      %v1468 = vld [vmem:[%s7 + $0x1f8] sm:$0xff]
      %v1469 = vld [vmem:[%s8] sm:$0xff]
      %v1470 = vld [vmem:[%s8 + $0x8] sm:$0xff]
      %v1473 = vperm.slane %v1469, 0
      %v1474 = vperm.slane %v1469, 1
      %v1475 = vperm.slane %v1469, 2
      %v1476 = vperm.slane %v1469, 3
      %v1477 = vperm.slane %v1469, 4
      %v1478 = vperm.slane %v1469, 5
      %v1479 = vperm.slane %v1469, 6
      %v1480 = vperm.slane %v1469, 7
      %v1481 = vperm.slane %v1470, 0
      %v1482 = vperm.slane %v1470, 1
      %v1483 = vperm.slane %v1470, 2
      %v1484 = vperm.slane %v1470, 3
      %v1485 = vperm.slane %v1470, 4
      %v1486 = vperm.slane %v1470, 5
      %v1487 = vperm.slane %v1470, 6
      %v1488 = vperm.slane %v1470, 7
      %v1569 = vunpack.c.l.b16 %v1405
      %v1570 = vunpack.c.h.b16 %v1405
      %v1571 = vunpack.c.l.b16 %v1406
      %v1572 = vunpack.c.h.b16 %v1406
      %v1573 = vunpack.c.l.b16 %v1407
      %v1574 = vunpack.c.h.b16 %v1407
      %v1575 = vunpack.c.l.b16 %v1408
      %v1576 = vunpack.c.h.b16 %v1408
      %v1577 = vunpack.c.l.b16 %v1409
      %v1578 = vunpack.c.h.b16 %v1409
      %v1579 = vunpack.c.l.b16 %v1410
      %v1580 = vunpack.c.h.b16 %v1410
      %v1581 = vunpack.c.l.b16 %v1411
      %v1582 = vunpack.c.h.b16 %v1411
      %v1583 = vunpack.c.l.b16 %v1412
      %v1584 = vunpack.c.h.b16 %v1412
      %v1585 = vunpack.c.l.b16 %v1413
      %v1586 = vunpack.c.h.b16 %v1413
      %v1587 = vunpack.c.l.b16 %v1414
      %v1588 = vunpack.c.h.b16 %v1414
      %v1589 = vunpack.c.l.b16 %v1415
      %v1590 = vunpack.c.h.b16 %v1415
      %v1591 = vunpack.c.l.b16 %v1416
      %v1592 = vunpack.c.h.b16 %v1416
      %v1593 = vunpack.c.l.b16 %v1417
      %v1594 = vunpack.c.h.b16 %v1417
      %v1595 = vunpack.c.l.b16 %v1418
      %v1596 = vunpack.c.h.b16 %v1418
      %v1597 = vunpack.c.l.b16 %v1419
      %v1598 = vunpack.c.h.b16 %v1419
      %v1599 = vunpack.c.l.b16 %v1420
      %v1600 = vunpack.c.h.b16 %v1420
      %v1601 = vunpack.c.l.b16 %v1421
      %v1602 = vunpack.c.h.b16 %v1421
      %v1603 = vunpack.c.l.b16 %v1422
      %v1604 = vunpack.c.h.b16 %v1422
      %v1605 = vunpack.c.l.b16 %v1423
      %v1606 = vunpack.c.h.b16 %v1423
      %v1607 = vunpack.c.l.b16 %v1424
      %v1608 = vunpack.c.h.b16 %v1424
      %v1609 = vunpack.c.l.b16 %v1425
      %v1610 = vunpack.c.h.b16 %v1425
      %v1611 = vunpack.c.l.b16 %v1426
      %v1612 = vunpack.c.h.b16 %v1426
      %v1613 = vunpack.c.l.b16 %v1427
      %v1614 = vunpack.c.h.b16 %v1427
      %v1615 = vunpack.c.l.b16 %v1428
      %v1616 = vunpack.c.h.b16 %v1428
      %v1617 = vunpack.c.l.b16 %v1429
      %v1618 = vunpack.c.h.b16 %v1429
      %v1619 = vunpack.c.l.b16 %v1430
      %v1620 = vunpack.c.h.b16 %v1430
      %v1621 = vunpack.c.l.b16 %v1431
      %v1622 = vunpack.c.h.b16 %v1431
      %v1623 = vunpack.c.l.b16 %v1432
      %v1624 = vunpack.c.h.b16 %v1432
      %v1625 = vunpack.c.l.b16 %v1433
      %v1626 = vunpack.c.h.b16 %v1433
      %v1627 = vunpack.c.l.b16 %v1434
      %v1628 = vunpack.c.h.b16 %v1434
      %v1629 = vunpack.c.l.b16 %v1435
      %v1630 = vunpack.c.h.b16 %v1435
      %v1631 = vunpack.c.l.b16 %v1436
      %v1632 = vunpack.c.h.b16 %v1436
      %v1633 = vunpack.c.l.b16 %v1437
      %v1634 = vunpack.c.h.b16 %v1437
      %v1635 = vunpack.c.l.b16 %v1438
      %v1636 = vunpack.c.h.b16 %v1438
      %v1637 = vunpack.c.l.b16 %v1439
      %v1638 = vunpack.c.h.b16 %v1439
      %v1639 = vunpack.c.l.b16 %v1440
      %v1640 = vunpack.c.h.b16 %v1440
      %v1641 = vunpack.c.l.b16 %v1441
      %v1642 = vunpack.c.h.b16 %v1441
      %v1643 = vunpack.c.l.b16 %v1442
      %v1644 = vunpack.c.h.b16 %v1442
      %v1645 = vunpack.c.l.b16 %v1443
      %v1646 = vunpack.c.h.b16 %v1443
      %v1647 = vunpack.c.l.b16 %v1444
      %v1648 = vunpack.c.h.b16 %v1444
      %v1649 = vunpack.c.l.b16 %v1445
      %v1650 = vunpack.c.h.b16 %v1445
      %v1651 = vunpack.c.l.b16 %v1446
      %v1652 = vunpack.c.h.b16 %v1446
      %v1653 = vunpack.c.l.b16 %v1447
      %v1654 = vunpack.c.h.b16 %v1447
      %v1655 = vunpack.c.l.b16 %v1448
      %v1656 = vunpack.c.h.b16 %v1448
      %v1657 = vunpack.c.l.b16 %v1449
      %v1658 = vunpack.c.h.b16 %v1449
      %v1659 = vunpack.c.l.b16 %v1450
      %v1660 = vunpack.c.h.b16 %v1450
      %v1661 = vunpack.c.l.b16 %v1451
      %v1662 = vunpack.c.h.b16 %v1451
      %v1663 = vunpack.c.l.b16 %v1452
      %v1664 = vunpack.c.h.b16 %v1452
      %v1665 = vunpack.c.l.b16 %v1453
      %v1666 = vunpack.c.h.b16 %v1453
      %v1667 = vunpack.c.l.b16 %v1454
      %v1668 = vunpack.c.h.b16 %v1454
      %v1669 = vunpack.c.l.b16 %v1455
      %v1670 = vunpack.c.h.b16 %v1455
      %v1671 = vunpack.c.l.b16 %v1456
      %v1672 = vunpack.c.h.b16 %v1456
      %v1673 = vunpack.c.l.b16 %v1457
      %v1674 = vunpack.c.h.b16 %v1457
      %v1675 = vunpack.c.l.b16 %v1458
      %v1676 = vunpack.c.h.b16 %v1458
      %v1677 = vunpack.c.l.b16 %v1459
      %v1678 = vunpack.c.h.b16 %v1459
      %v1679 = vunpack.c.l.b16 %v1460
      %v1680 = vunpack.c.h.b16 %v1460
      %v1681 = vunpack.c.l.b16 %v1461
      %v1682 = vunpack.c.h.b16 %v1461
      %v1683 = vunpack.c.l.b16 %v1462
      %v1684 = vunpack.c.h.b16 %v1462
      %v1685 = vunpack.c.l.b16 %v1463
      %v1686 = vunpack.c.h.b16 %v1463
      %v1687 = vunpack.c.l.b16 %v1464
      %v1688 = vunpack.c.h.b16 %v1464
      %v1689 = vunpack.c.l.b16 %v1465
      %v1690 = vunpack.c.h.b16 %v1465
      %v1691 = vunpack.c.l.b16 %v1466
      %v1692 = vunpack.c.h.b16 %v1466
      %v1693 = vunpack.c.l.b16 %v1467
      %v1694 = vunpack.c.h.b16 %v1467
      %v1695 = vunpack.c.l.b16 %v1468
      %v1696 = vunpack.c.h.b16 %v1468
      %v1697 = vpack.c.b16 %v1585, %v1569
      %v1698 = vpack.c.b16 %v1586, %v1570
      %v1699 = vpack.c.b16 %v1587, %v1571
      %v1700 = vpack.c.b16 %v1588, %v1572
      %v1701 = vpack.c.b16 %v1589, %v1573
      %v1702 = vpack.c.b16 %v1590, %v1574
      %v1703 = vpack.c.b16 %v1591, %v1575
      %v1704 = vpack.c.b16 %v1592, %v1576
      %v1705 = vpack.c.b16 %v1593, %v1577
      %v1706 = vpack.c.b16 %v1594, %v1578
      %v1707 = vpack.c.b16 %v1595, %v1579
      %v1708 = vpack.c.b16 %v1596, %v1580
      %v1709 = vpack.c.b16 %v1597, %v1581
      %v1710 = vpack.c.b16 %v1598, %v1582
      %v1711 = vpack.c.b16 %v1599, %v1583
      %v1712 = vpack.c.b16 %v1600, %v1584
      %v1713 = vpack.c.b16 %v1617, %v1601
      %v1714 = vpack.c.b16 %v1618, %v1602
      %v1715 = vpack.c.b16 %v1619, %v1603
      %v1716 = vpack.c.b16 %v1620, %v1604
      %v1717 = vpack.c.b16 %v1621, %v1605
      %v1718 = vpack.c.b16 %v1622, %v1606
      %v1719 = vpack.c.b16 %v1623, %v1607
      %v1720 = vpack.c.b16 %v1624, %v1608
      %v1721 = vpack.c.b16 %v1625, %v1609
      %v1722 = vpack.c.b16 %v1626, %v1610
      %v1723 = vpack.c.b16 %v1627, %v1611
      %v1724 = vpack.c.b16 %v1628, %v1612
      %v1725 = vpack.c.b16 %v1629, %v1613
      %v1726 = vpack.c.b16 %v1630, %v1614
      %v1727 = vpack.c.b16 %v1631, %v1615
      %v1728 = vpack.c.b16 %v1632, %v1616
      %v1729 = vpack.c.b16 %v1649, %v1633
      %v1730 = vpack.c.b16 %v1650, %v1634
      %v1731 = vpack.c.b16 %v1651, %v1635
      %v1732 = vpack.c.b16 %v1652, %v1636
      %v1733 = vpack.c.b16 %v1653, %v1637
      %v1734 = vpack.c.b16 %v1654, %v1638
      %v1735 = vpack.c.b16 %v1655, %v1639
      %v1736 = vpack.c.b16 %v1656, %v1640
      %v1737 = vpack.c.b16 %v1657, %v1641
      %v1738 = vpack.c.b16 %v1658, %v1642
      %v1739 = vpack.c.b16 %v1659, %v1643
      %v1740 = vpack.c.b16 %v1660, %v1644
      %v1741 = vpack.c.b16 %v1661, %v1645
      %v1742 = vpack.c.b16 %v1662, %v1646
      %v1743 = vpack.c.b16 %v1663, %v1647
      %v1744 = vpack.c.b16 %v1664, %v1648
      %v1745 = vpack.c.b16 %v1681, %v1665
      %v1746 = vpack.c.b16 %v1682, %v1666
      %v1747 = vpack.c.b16 %v1683, %v1667
      %v1748 = vpack.c.b16 %v1684, %v1668
      %v1749 = vpack.c.b16 %v1685, %v1669
      %v1750 = vpack.c.b16 %v1686, %v1670
      %v1751 = vpack.c.b16 %v1687, %v1671
      %v1752 = vpack.c.b16 %v1688, %v1672
      %v1753 = vpack.c.b16 %v1689, %v1673
      %v1754 = vpack.c.b16 %v1690, %v1674
      %v1755 = vpack.c.b16 %v1691, %v1675
      %v1756 = vpack.c.b16 %v1692, %v1676
      %v1757 = vpack.c.b16 %v1693, %v1677
      %v1758 = vpack.c.b16 %v1694, %v1678
      %v1759 = vpack.c.b16 %v1695, %v1679
      %v1760 = vpack.c.b16 %v1696, %v1680
      %v1826 = vsel %vm635, %v1400, 0
      %v1829 = vsel %vm635, %v1401, 0
      %v1832 = vsel %vm635, %v1402, 0
      %v1835 = vsel %vm635, %v1403, 0
      %v1838 = vsel %vm635, %v1404, 0
      %1840 = vmatpush.bf16.msra.mxu0 0
      %1841 = vmatpush.bf16.msra.mxu0 0
      %1842 = vmatpush.bf16.msra.mxu0 0
      %1843 = vmatpush.bf16.msra.mxu0 0
      %1844 = vmatpush.bf16.msra.mxu0 %v1745
      %1845 = vmatpush.bf16.msra.mxu0 %v1729
      %1846 = vmatpush.bf16.msra.mxu0 %v1713
      %1847 = vmatpush.bf16.msra.mxu0 %v1697
      %1848 = vmatmul.bf16.gmra.mxu0 %v1826
      %v1849 = vpop.f32.mrf.mxu0
      %v1850 = vadd.f32 %v1473, %v1849
      %v1851 = vpop.f32.mrf.mxu0
      %v1852 = vadd.f32 %v1473, %v1851
      %1853 = vmatmul.bf16.gmra.mxu0 %v1829
      %v1854 = vpop.f32.mrf.mxu0
      %v1855 = vadd.f32 %v1473, %v1854
      %v1856 = vpop.f32.mrf.mxu0
      %v1857 = vadd.f32 %v1473, %v1856
      %1858 = vmatmul.bf16.gmra.mxu0 %v1832
      %v1859 = vpop.f32.mrf.mxu0
      %v1860 = vadd.f32 %v1473, %v1859
      %v1861 = vpop.f32.mrf.mxu0
      %v1862 = vadd.f32 %v1473, %v1861
      %1863 = vmatmul.bf16.gmra.mxu0 %v1835
      %v1864 = vpop.f32.mrf.mxu0
      %v1865 = vadd.f32 %v1473, %v1864
      %v1866 = vpop.f32.mrf.mxu0
      %v1867 = vadd.f32 %v1473, %v1866
      %1868 = vmatmul.bf16.gmra.mxu0 %v1838
      %v1869 = vpop.f32.mrf.mxu0
      %v1870 = vadd.f32 %v1473, %v1869
      %v1871 = vpop.f32.mrf.mxu0
      %v1872 = vadd.f32 %v1473, %v1871
      %1873 = vdwg.mxu0
      %1874 = vmatpush.bf16.msra.mxu0 0
      %1875 = vmatpush.bf16.msra.mxu0 0
      %1876 = vmatpush.bf16.msra.mxu0 0
      %1877 = vmatpush.bf16.msra.mxu0 0
      %1878 = vmatpush.bf16.msra.mxu0 %v1746
      %1879 = vmatpush.bf16.msra.mxu0 %v1730
      %1880 = vmatpush.bf16.msra.mxu0 %v1714
      %1881 = vmatpush.bf16.msra.mxu0 %v1698
      %1882 = vmatmul.bf16.gmra.mxu0 %v1826
      %v1883 = vpop.f32.mrf.mxu0
      %v1884 = vadd.f32 %v1474, %v1883
      %v1885 = vpop.f32.mrf.mxu0
      %v1886 = vadd.f32 %v1474, %v1885
      %1887 = vmatmul.bf16.gmra.mxu0 %v1829
      %v1888 = vpop.f32.mrf.mxu0
      %v1889 = vadd.f32 %v1474, %v1888
      %v1890 = vpop.f32.mrf.mxu0
      %v1891 = vadd.f32 %v1474, %v1890
      %1892 = vmatmul.bf16.gmra.mxu0 %v1832
      %v1893 = vpop.f32.mrf.mxu0
      %v1894 = vadd.f32 %v1474, %v1893
      %v1895 = vpop.f32.mrf.mxu0
      %v1896 = vadd.f32 %v1474, %v1895
      %1897 = vmatmul.bf16.gmra.mxu0 %v1835
      %v1898 = vpop.f32.mrf.mxu0
      %v1899 = vadd.f32 %v1474, %v1898
      %v1900 = vpop.f32.mrf.mxu0
      %v1901 = vadd.f32 %v1474, %v1900
      %1902 = vmatmul.bf16.gmra.mxu0 %v1838
      %v1903 = vpop.f32.mrf.mxu0
      %v1904 = vadd.f32 %v1474, %v1903
      %v1905 = vpop.f32.mrf.mxu0
      %v1906 = vadd.f32 %v1474, %v1905
      %1907 = vdwg.mxu0
      %1908 = vmatpush.bf16.msra.mxu0 0
      %1909 = vmatpush.bf16.msra.mxu0 0
      %1910 = vmatpush.bf16.msra.mxu0 0
      %1911 = vmatpush.bf16.msra.mxu0 0
      %1912 = vmatpush.bf16.msra.mxu0 %v1747
      %1913 = vmatpush.bf16.msra.mxu0 %v1731
      %1914 = vmatpush.bf16.msra.mxu0 %v1715
      %1915 = vmatpush.bf16.msra.mxu0 %v1699
      %1916 = vmatmul.bf16.gmra.mxu0 %v1826
      %v1917 = vpop.f32.mrf.mxu0
      %v1918 = vadd.f32 %v1475, %v1917
      %v1919 = vpop.f32.mrf.mxu0
      %v1920 = vadd.f32 %v1475, %v1919
      %1921 = vmatmul.bf16.gmra.mxu0 %v1829
      %v1922 = vpop.f32.mrf.mxu0
      %v1923 = vadd.f32 %v1475, %v1922
      %v1924 = vpop.f32.mrf.mxu0
      %v1925 = vadd.f32 %v1475, %v1924
      %1926 = vmatmul.bf16.gmra.mxu0 %v1832
      %v1927 = vpop.f32.mrf.mxu0
      %v1928 = vadd.f32 %v1475, %v1927
      %v1929 = vpop.f32.mrf.mxu0
      %v1930 = vadd.f32 %v1475, %v1929
      %1931 = vmatmul.bf16.gmra.mxu0 %v1835
      %v1932 = vpop.f32.mrf.mxu0
      %v1933 = vadd.f32 %v1475, %v1932
      %v1934 = vpop.f32.mrf.mxu0
      %v1935 = vadd.f32 %v1475, %v1934
      %1936 = vmatmul.bf16.gmra.mxu0 %v1838
      %v1937 = vpop.f32.mrf.mxu0
      %v1938 = vadd.f32 %v1475, %v1937
      %v1939 = vpop.f32.mrf.mxu0
      %v1940 = vadd.f32 %v1475, %v1939
      %1941 = vdwg.mxu0
      %1942 = vmatpush.bf16.msra.mxu0 0
      %1943 = vmatpush.bf16.msra.mxu0 0
      %1944 = vmatpush.bf16.msra.mxu0 0
      %1945 = vmatpush.bf16.msra.mxu0 0
      %1946 = vmatpush.bf16.msra.mxu0 %v1748
      %1947 = vmatpush.bf16.msra.mxu0 %v1732
      %1948 = vmatpush.bf16.msra.mxu0 %v1716
      %1949 = vmatpush.bf16.msra.mxu0 %v1700
      %1950 = vmatmul.bf16.gmra.mxu0 %v1826
      %v1951 = vpop.f32.mrf.mxu0
      %v1952 = vadd.f32 %v1476, %v1951
      %v1953 = vpop.f32.mrf.mxu0
      %v1954 = vadd.f32 %v1476, %v1953
      %1955 = vmatmul.bf16.gmra.mxu0 %v1829
      %v1956 = vpop.f32.mrf.mxu0
      %v1957 = vadd.f32 %v1476, %v1956
      %v1958 = vpop.f32.mrf.mxu0
      %v1959 = vadd.f32 %v1476, %v1958
      %1960 = vmatmul.bf16.gmra.mxu0 %v1832
      %v1961 = vpop.f32.mrf.mxu0
      %v1962 = vadd.f32 %v1476, %v1961
      %v1963 = vpop.f32.mrf.mxu0
      %v1964 = vadd.f32 %v1476, %v1963
      %1965 = vmatmul.bf16.gmra.mxu0 %v1835
      %v1966 = vpop.f32.mrf.mxu0
      %v1967 = vadd.f32 %v1476, %v1966
      %v1968 = vpop.f32.mrf.mxu0
      %v1969 = vadd.f32 %v1476, %v1968
      %1970 = vmatmul.bf16.gmra.mxu0 %v1838
      %v1971 = vpop.f32.mrf.mxu0
      %v1972 = vadd.f32 %v1476, %v1971
      %v1973 = vpop.f32.mrf.mxu0
      %v1974 = vadd.f32 %v1476, %v1973
      %1975 = vdwg.mxu0
      %1976 = vmatpush.bf16.msra.mxu0 0
      %1977 = vmatpush.bf16.msra.mxu0 0
      %1978 = vmatpush.bf16.msra.mxu0 0
      %1979 = vmatpush.bf16.msra.mxu0 0
      %1980 = vmatpush.bf16.msra.mxu0 %v1749
      %1981 = vmatpush.bf16.msra.mxu0 %v1733
      %1982 = vmatpush.bf16.msra.mxu0 %v1717
      %1983 = vmatpush.bf16.msra.mxu0 %v1701
      %1984 = vmatmul.bf16.gmra.mxu0 %v1826
      %v1985 = vpop.f32.mrf.mxu0
      %v1986 = vadd.f32 %v1477, %v1985
      %v1987 = vpop.f32.mrf.mxu0
      %v1988 = vadd.f32 %v1477, %v1987
      %1989 = vmatmul.bf16.gmra.mxu0 %v1829
      %v1990 = vpop.f32.mrf.mxu0
      %v1991 = vadd.f32 %v1477, %v1990
      %v1992 = vpop.f32.mrf.mxu0
      %v1993 = vadd.f32 %v1477, %v1992
      %1994 = vmatmul.bf16.gmra.mxu0 %v1832
      %v1995 = vpop.f32.mrf.mxu0
      %v1996 = vadd.f32 %v1477, %v1995
      %v1997 = vpop.f32.mrf.mxu0
      %v1998 = vadd.f32 %v1477, %v1997
      %1999 = vmatmul.bf16.gmra.mxu0 %v1835
      %v2000 = vpop.f32.mrf.mxu0
      %v2001 = vadd.f32 %v1477, %v2000
      %v2002 = vpop.f32.mrf.mxu0
      %v2003 = vadd.f32 %v1477, %v2002
      %2004 = vmatmul.bf16.gmra.mxu0 %v1838
      %v2005 = vpop.f32.mrf.mxu0
      %v2006 = vadd.f32 %v1477, %v2005
      %v2007 = vpop.f32.mrf.mxu0
      %v2008 = vadd.f32 %v1477, %v2007
      %2009 = vdwg.mxu0
      %2010 = vmatpush.bf16.msra.mxu0 0
      %2011 = vmatpush.bf16.msra.mxu0 0
      %2012 = vmatpush.bf16.msra.mxu0 0
      %2013 = vmatpush.bf16.msra.mxu0 0
      %2014 = vmatpush.bf16.msra.mxu0 %v1750
      %2015 = vmatpush.bf16.msra.mxu0 %v1734
      %2016 = vmatpush.bf16.msra.mxu0 %v1718
      %2017 = vmatpush.bf16.msra.mxu0 %v1702
      %2018 = vmatmul.bf16.gmra.mxu0 %v1826
      %v2019 = vpop.f32.mrf.mxu0
      %v2020 = vadd.f32 %v1478, %v2019
      %v2021 = vpop.f32.mrf.mxu0
      %v2022 = vadd.f32 %v1478, %v2021
      %2023 = vmatmul.bf16.gmra.mxu0 %v1829
      %v2024 = vpop.f32.mrf.mxu0
      %v2025 = vadd.f32 %v1478, %v2024
      %v2026 = vpop.f32.mrf.mxu0
      %v2027 = vadd.f32 %v1478, %v2026
      %2028 = vmatmul.bf16.gmra.mxu0 %v1832
      %v2029 = vpop.f32.mrf.mxu0
      %v2030 = vadd.f32 %v1478, %v2029
      %v2031 = vpop.f32.mrf.mxu0
      %v2032 = vadd.f32 %v1478, %v2031
      %2033 = vmatmul.bf16.gmra.mxu0 %v1835
      %v2034 = vpop.f32.mrf.mxu0
      %v2035 = vadd.f32 %v1478, %v2034
      %v2036 = vpop.f32.mrf.mxu0
      %v2037 = vadd.f32 %v1478, %v2036
      %2038 = vmatmul.bf16.gmra.mxu0 %v1838
      %v2039 = vpop.f32.mrf.mxu0
      %v2040 = vadd.f32 %v1478, %v2039
      %v2041 = vpop.f32.mrf.mxu0
      %v2042 = vadd.f32 %v1478, %v2041
      %2043 = vdwg.mxu0
      %2044 = vmatpush.bf16.msra.mxu0 0
      %2045 = vmatpush.bf16.msra.mxu0 0
      %2046 = vmatpush.bf16.msra.mxu0 0
      %2047 = vmatpush.bf16.msra.mxu0 0
      %2048 = vmatpush.bf16.msra.mxu0 %v1751
      %2049 = vmatpush.bf16.msra.mxu0 %v1735
      %2050 = vmatpush.bf16.msra.mxu0 %v1719
      %2051 = vmatpush.bf16.msra.mxu0 %v1703
      %2052 = vmatmul.bf16.gmra.mxu0 %v1826
      %v2053 = vpop.f32.mrf.mxu0
      %v2054 = vadd.f32 %v1479, %v2053
      %v2055 = vpop.f32.mrf.mxu0
      %v2056 = vadd.f32 %v1479, %v2055
      %2057 = vmatmul.bf16.gmra.mxu0 %v1829
      %v2058 = vpop.f32.mrf.mxu0
      %v2059 = vadd.f32 %v1479, %v2058
      %v2060 = vpop.f32.mrf.mxu0
      %v2061 = vadd.f32 %v1479, %v2060
      %2062 = vmatmul.bf16.gmra.mxu0 %v1832
      %v2063 = vpop.f32.mrf.mxu0
      %v2064 = vadd.f32 %v1479, %v2063
      %v2065 = vpop.f32.mrf.mxu0
      %v2066 = vadd.f32 %v1479, %v2065
      %2067 = vmatmul.bf16.gmra.mxu0 %v1835
      %v2068 = vpop.f32.mrf.mxu0
      %v2069 = vadd.f32 %v1479, %v2068
      %v2070 = vpop.f32.mrf.mxu0
      %v2071 = vadd.f32 %v1479, %v2070
      %2072 = vmatmul.bf16.gmra.mxu0 %v1838
      %v2073 = vpop.f32.mrf.mxu0
      %v2074 = vadd.f32 %v1479, %v2073
      %v2075 = vpop.f32.mrf.mxu0
      %v2076 = vadd.f32 %v1479, %v2075
      %2077 = vdwg.mxu0
      %2078 = vmatpush.bf16.msra.mxu0 0
      %2079 = vmatpush.bf16.msra.mxu0 0
      %2080 = vmatpush.bf16.msra.mxu0 0
      %2081 = vmatpush.bf16.msra.mxu0 0
      %2082 = vmatpush.bf16.msra.mxu0 %v1752
      %2083 = vmatpush.bf16.msra.mxu0 %v1736
      %2084 = vmatpush.bf16.msra.mxu0 %v1720
      %2085 = vmatpush.bf16.msra.mxu0 %v1704
      %2086 = vmatmul.bf16.gmra.mxu0 %v1826
      %v2087 = vpop.f32.mrf.mxu0
      %v2088 = vadd.f32 %v1480, %v2087
      %v2089 = vpop.f32.mrf.mxu0
      %v2090 = vadd.f32 %v1480, %v2089
      %2091 = vmatmul.bf16.gmra.mxu0 %v1829
      %v2092 = vpop.f32.mrf.mxu0
      %v2093 = vadd.f32 %v1480, %v2092
      %v2094 = vpop.f32.mrf.mxu0
      %v2095 = vadd.f32 %v1480, %v2094
      %2096 = vmatmul.bf16.gmra.mxu0 %v1832
      %v2097 = vpop.f32.mrf.mxu0
      %v2098 = vadd.f32 %v1480, %v2097
      %v2099 = vpop.f32.mrf.mxu0
      %v2100 = vadd.f32 %v1480, %v2099
      %2101 = vmatmul.bf16.gmra.mxu0 %v1835
      %v2102 = vpop.f32.mrf.mxu0
      %v2103 = vadd.f32 %v1480, %v2102
      %v2104 = vpop.f32.mrf.mxu0
      %v2105 = vadd.f32 %v1480, %v2104
      %2106 = vmatmul.bf16.gmra.mxu0 %v1838
      %v2107 = vpop.f32.mrf.mxu0
      %v2108 = vadd.f32 %v1480, %v2107
      %v2109 = vpop.f32.mrf.mxu0
      %v2110 = vadd.f32 %v1480, %v2109
      %2111 = vdwg.mxu0
      %2112 = vmatpush.bf16.msra.mxu0 0
      %2113 = vmatpush.bf16.msra.mxu0 0
      %2114 = vmatpush.bf16.msra.mxu0 0
      %2115 = vmatpush.bf16.msra.mxu0 0
      %2116 = vmatpush.bf16.msra.mxu0 %v1753
      %2117 = vmatpush.bf16.msra.mxu0 %v1737
      %2118 = vmatpush.bf16.msra.mxu0 %v1721
      %2119 = vmatpush.bf16.msra.mxu0 %v1705
      %2120 = vmatmul.bf16.gmra.mxu0 %v1826
      %v2121 = vpop.f32.mrf.mxu0
      %v2122 = vadd.f32 %v1481, %v2121
      %v2123 = vpop.f32.mrf.mxu0
      %v2124 = vadd.f32 %v1481, %v2123
      %2125 = vmatmul.bf16.gmra.mxu0 %v1829
      %v2126 = vpop.f32.mrf.mxu0
      %v2127 = vadd.f32 %v1481, %v2126
      %v2128 = vpop.f32.mrf.mxu0
      %v2129 = vadd.f32 %v1481, %v2128
      %2130 = vmatmul.bf16.gmra.mxu0 %v1832
      %v2131 = vpop.f32.mrf.mxu0
      %v2132 = vadd.f32 %v1481, %v2131
      %v2133 = vpop.f32.mrf.mxu0
      %v2134 = vadd.f32 %v1481, %v2133
      %2135 = vmatmul.bf16.gmra.mxu0 %v1835
      %v2136 = vpop.f32.mrf.mxu0
      %v2137 = vadd.f32 %v1481, %v2136
      %v2138 = vpop.f32.mrf.mxu0
      %v2139 = vadd.f32 %v1481, %v2138
      %2140 = vmatmul.bf16.gmra.mxu0 %v1838
      %v2141 = vpop.f32.mrf.mxu0
      %v2142 = vadd.f32 %v1481, %v2141
      %v2143 = vpop.f32.mrf.mxu0
      %v2144 = vadd.f32 %v1481, %v2143
      %2145 = vdwg.mxu0
      %2146 = vmatpush.bf16.msra.mxu0 0
      %2147 = vmatpush.bf16.msra.mxu0 0
      %2148 = vmatpush.bf16.msra.mxu0 0
      %2149 = vmatpush.bf16.msra.mxu0 0
      %2150 = vmatpush.bf16.msra.mxu0 %v1754
      %2151 = vmatpush.bf16.msra.mxu0 %v1738
      %2152 = vmatpush.bf16.msra.mxu0 %v1722
      %2153 = vmatpush.bf16.msra.mxu0 %v1706
      %2154 = vmatmul.bf16.gmra.mxu0 %v1826
      %v2155 = vpop.f32.mrf.mxu0
      %v2156 = vadd.f32 %v1482, %v2155
      %v2157 = vpop.f32.mrf.mxu0
      %v2158 = vadd.f32 %v1482, %v2157
      %2159 = vmatmul.bf16.gmra.mxu0 %v1829
      %v2160 = vpop.f32.mrf.mxu0
      %v2161 = vadd.f32 %v1482, %v2160
      %v2162 = vpop.f32.mrf.mxu0
      %v2163 = vadd.f32 %v1482, %v2162
      %2164 = vmatmul.bf16.gmra.mxu0 %v1832
      %v2165 = vpop.f32.mrf.mxu0
      %v2166 = vadd.f32 %v1482, %v2165
      %v2167 = vpop.f32.mrf.mxu0
      %v2168 = vadd.f32 %v1482, %v2167
      %2169 = vmatmul.bf16.gmra.mxu0 %v1835
      %v2170 = vpop.f32.mrf.mxu0
      %v2171 = vadd.f32 %v1482, %v2170
      %v2172 = vpop.f32.mrf.mxu0
      %v2173 = vadd.f32 %v1482, %v2172
      %2174 = vmatmul.bf16.gmra.mxu0 %v1838
      %v2175 = vpop.f32.mrf.mxu0
      %v2176 = vadd.f32 %v1482, %v2175
      %v2177 = vpop.f32.mrf.mxu0
      %v2178 = vadd.f32 %v1482, %v2177
      %2179 = vdwg.mxu0
      %2180 = vmatpush.bf16.msra.mxu0 0
      %2181 = vmatpush.bf16.msra.mxu0 0
      %2182 = vmatpush.bf16.msra.mxu0 0
      %2183 = vmatpush.bf16.msra.mxu0 0
      %2184 = vmatpush.bf16.msra.mxu0 %v1755
      %2185 = vmatpush.bf16.msra.mxu0 %v1739
      %2186 = vmatpush.bf16.msra.mxu0 %v1723
      %2187 = vmatpush.bf16.msra.mxu0 %v1707
      %2188 = vmatmul.bf16.gmra.mxu0 %v1826
      %v2189 = vpop.f32.mrf.mxu0
      %v2190 = vadd.f32 %v1483, %v2189
      %v2191 = vpop.f32.mrf.mxu0
      %v2192 = vadd.f32 %v1483, %v2191
      %2193 = vmatmul.bf16.gmra.mxu0 %v1829
      %v2194 = vpop.f32.mrf.mxu0
      %v2195 = vadd.f32 %v1483, %v2194
      %v2196 = vpop.f32.mrf.mxu0
      %v2197 = vadd.f32 %v1483, %v2196
      %2198 = vmatmul.bf16.gmra.mxu0 %v1832
      %v2199 = vpop.f32.mrf.mxu0
      %v2200 = vadd.f32 %v1483, %v2199
      %v2201 = vpop.f32.mrf.mxu0
      %v2202 = vadd.f32 %v1483, %v2201
      %2203 = vmatmul.bf16.gmra.mxu0 %v1835
      %v2204 = vpop.f32.mrf.mxu0
      %v2205 = vadd.f32 %v1483, %v2204
      %v2206 = vpop.f32.mrf.mxu0
      %v2207 = vadd.f32 %v1483, %v2206
      %2208 = vmatmul.bf16.gmra.mxu0 %v1838
      %v2209 = vpop.f32.mrf.mxu0
      %v2210 = vadd.f32 %v1483, %v2209
      %v2211 = vpop.f32.mrf.mxu0
      %v2212 = vadd.f32 %v1483, %v2211
      %2213 = vdwg.mxu0
      %2214 = vmatpush.bf16.msra.mxu0 0
      %2215 = vmatpush.bf16.msra.mxu0 0
      %2216 = vmatpush.bf16.msra.mxu0 0
      %2217 = vmatpush.bf16.msra.mxu0 0
      %2218 = vmatpush.bf16.msra.mxu0 %v1756
      %2219 = vmatpush.bf16.msra.mxu0 %v1740
      %2220 = vmatpush.bf16.msra.mxu0 %v1724
      %2221 = vmatpush.bf16.msra.mxu0 %v1708
      %2222 = vmatmul.bf16.gmra.mxu0 %v1826
      %v2223 = vpop.f32.mrf.mxu0
      %v2224 = vadd.f32 %v1484, %v2223
      %v2225 = vpop.f32.mrf.mxu0
      %v2226 = vadd.f32 %v1484, %v2225
      %2227 = vmatmul.bf16.gmra.mxu0 %v1829
      %v2228 = vpop.f32.mrf.mxu0
      %v2229 = vadd.f32 %v1484, %v2228
      %v2230 = vpop.f32.mrf.mxu0
      %v2231 = vadd.f32 %v1484, %v2230
      %2232 = vmatmul.bf16.gmra.mxu0 %v1832
      %v2233 = vpop.f32.mrf.mxu0
      %v2234 = vadd.f32 %v1484, %v2233
      %v2235 = vpop.f32.mrf.mxu0
      %v2236 = vadd.f32 %v1484, %v2235
      %2237 = vmatmul.bf16.gmra.mxu0 %v1835
      %v2238 = vpop.f32.mrf.mxu0
      %v2239 = vadd.f32 %v1484, %v2238
      %v2240 = vpop.f32.mrf.mxu0
      %v2241 = vadd.f32 %v1484, %v2240
      %2242 = vmatmul.bf16.gmra.mxu0 %v1838
      %v2243 = vpop.f32.mrf.mxu0
      %v2244 = vadd.f32 %v1484, %v2243
      %v2245 = vpop.f32.mrf.mxu0
      %v2246 = vadd.f32 %v1484, %v2245
      %2247 = vdwg.mxu0
      %2248 = vmatpush.bf16.msra.mxu0 0
      %2249 = vmatpush.bf16.msra.mxu0 0
      %2250 = vmatpush.bf16.msra.mxu0 0
      %2251 = vmatpush.bf16.msra.mxu0 0
      %2252 = vmatpush.bf16.msra.mxu0 %v1757
      %2253 = vmatpush.bf16.msra.mxu0 %v1741
      %2254 = vmatpush.bf16.msra.mxu0 %v1725
      %2255 = vmatpush.bf16.msra.mxu0 %v1709
      %2256 = vmatmul.bf16.gmra.mxu0 %v1826
      %v2257 = vpop.f32.mrf.mxu0
      %v2258 = vadd.f32 %v1485, %v2257
      %v2259 = vpop.f32.mrf.mxu0
      %v2260 = vadd.f32 %v1485, %v2259
      %2261 = vmatmul.bf16.gmra.mxu0 %v1829
      %v2262 = vpop.f32.mrf.mxu0
      %v2263 = vadd.f32 %v1485, %v2262
      %v2264 = vpop.f32.mrf.mxu0
      %v2265 = vadd.f32 %v1485, %v2264
      %2266 = vmatmul.bf16.gmra.mxu0 %v1832
      %v2267 = vpop.f32.mrf.mxu0
      %v2268 = vadd.f32 %v1485, %v2267
      %v2269 = vpop.f32.mrf.mxu0
      %v2270 = vadd.f32 %v1485, %v2269
      %2271 = vmatmul.bf16.gmra.mxu0 %v1835
      %v2272 = vpop.f32.mrf.mxu0
      %v2273 = vadd.f32 %v1485, %v2272
      %v2274 = vpop.f32.mrf.mxu0
      %v2275 = vadd.f32 %v1485, %v2274
      %2276 = vmatmul.bf16.gmra.mxu0 %v1838
      %v2277 = vpop.f32.mrf.mxu0
      %v2278 = vadd.f32 %v1485, %v2277
      %v2279 = vpop.f32.mrf.mxu0
      %v2280 = vadd.f32 %v1485, %v2279
      %2281 = vdwg.mxu0
      %2282 = vmatpush.bf16.msra.mxu0 0
      %2283 = vmatpush.bf16.msra.mxu0 0
      %2284 = vmatpush.bf16.msra.mxu0 0
      %2285 = vmatpush.bf16.msra.mxu0 0
      %2286 = vmatpush.bf16.msra.mxu0 %v1758
      %2287 = vmatpush.bf16.msra.mxu0 %v1742
      %2288 = vmatpush.bf16.msra.mxu0 %v1726
      %2289 = vmatpush.bf16.msra.mxu0 %v1710
      %2290 = vmatmul.bf16.gmra.mxu0 %v1826
      %v2291 = vpop.f32.mrf.mxu0
      %v2292 = vadd.f32 %v1486, %v2291
      %v2293 = vpop.f32.mrf.mxu0
      %v2294 = vadd.f32 %v1486, %v2293
      %2295 = vmatmul.bf16.gmra.mxu0 %v1829
      %v2296 = vpop.f32.mrf.mxu0
      %v2297 = vadd.f32 %v1486, %v2296
      %v2298 = vpop.f32.mrf.mxu0
      %v2299 = vadd.f32 %v1486, %v2298
      %2300 = vmatmul.bf16.gmra.mxu0 %v1832
      %v2301 = vpop.f32.mrf.mxu0
      %v2302 = vadd.f32 %v1486, %v2301
      %v2303 = vpop.f32.mrf.mxu0
      %v2304 = vadd.f32 %v1486, %v2303
      %2305 = vmatmul.bf16.gmra.mxu0 %v1835
      %v2306 = vpop.f32.mrf.mxu0
      %v2307 = vadd.f32 %v1486, %v2306
      %v2308 = vpop.f32.mrf.mxu0
      %v2309 = vadd.f32 %v1486, %v2308
      %2310 = vmatmul.bf16.gmra.mxu0 %v1838
      %v2311 = vpop.f32.mrf.mxu0
      %v2312 = vadd.f32 %v1486, %v2311
      %v2313 = vpop.f32.mrf.mxu0
      %v2314 = vadd.f32 %v1486, %v2313
      %2315 = vdwg.mxu0
      %2316 = vmatpush.bf16.msra.mxu0 0
      %2317 = vmatpush.bf16.msra.mxu0 0
      %2318 = vmatpush.bf16.msra.mxu0 0
      %2319 = vmatpush.bf16.msra.mxu0 0
      %2320 = vmatpush.bf16.msra.mxu0 %v1759
      %2321 = vmatpush.bf16.msra.mxu0 %v1743
      %2322 = vmatpush.bf16.msra.mxu0 %v1727
      %2323 = vmatpush.bf16.msra.mxu0 %v1711
      %2324 = vmatmul.bf16.gmra.mxu0 %v1826
      %v2325 = vpop.f32.mrf.mxu0
      %v2326 = vadd.f32 %v1487, %v2325
      %v2327 = vpop.f32.mrf.mxu0
      %v2328 = vadd.f32 %v1487, %v2327
      %2329 = vmatmul.bf16.gmra.mxu0 %v1829
      %v2330 = vpop.f32.mrf.mxu0
      %v2331 = vadd.f32 %v1487, %v2330
      %v2332 = vpop.f32.mrf.mxu0
      %v2333 = vadd.f32 %v1487, %v2332
      %2334 = vmatmul.bf16.gmra.mxu0 %v1832
      %v2335 = vpop.f32.mrf.mxu0
      %v2336 = vadd.f32 %v1487, %v2335
      %v2337 = vpop.f32.mrf.mxu0
      %v2338 = vadd.f32 %v1487, %v2337
      %2339 = vmatmul.bf16.gmra.mxu0 %v1835
      %v2340 = vpop.f32.mrf.mxu0
      %v2341 = vadd.f32 %v1487, %v2340
      %v2342 = vpop.f32.mrf.mxu0
      %v2343 = vadd.f32 %v1487, %v2342
      %2344 = vmatmul.bf16.gmra.mxu0 %v1838
      %v2345 = vpop.f32.mrf.mxu0
      %v2346 = vadd.f32 %v1487, %v2345
      %v2347 = vpop.f32.mrf.mxu0
      %v2348 = vadd.f32 %v1487, %v2347
      %2349 = vdwg.mxu0
      %2350 = vmatpush.bf16.msra.mxu0 0
      %2351 = vmatpush.bf16.msra.mxu0 0
      %2352 = vmatpush.bf16.msra.mxu0 0
      %2353 = vmatpush.bf16.msra.mxu0 0
      %2354 = vmatpush.bf16.msra.mxu0 %v1760
      %2355 = vmatpush.bf16.msra.mxu0 %v1744
      %2356 = vmatpush.bf16.msra.mxu0 %v1728
      %2357 = vmatpush.bf16.msra.mxu0 %v1712
      %2358 = vmatmul.bf16.gmra.mxu0 %v1826
      %v2359 = vpop.f32.mrf.mxu0
      %v2360 = vadd.f32 %v1488, %v2359
      %v2361 = vpop.f32.mrf.mxu0
      %v2362 = vadd.f32 %v1488, %v2361
      %2363 = vmatmul.bf16.gmra.mxu0 %v1829
      %v2364 = vpop.f32.mrf.mxu0
      %v2365 = vadd.f32 %v1488, %v2364
      %v2366 = vpop.f32.mrf.mxu0
      %v2367 = vadd.f32 %v1488, %v2366
      %2368 = vmatmul.bf16.gmra.mxu0 %v1832
      %v2369 = vpop.f32.mrf.mxu0
      %v2370 = vadd.f32 %v1488, %v2369
      %v2371 = vpop.f32.mrf.mxu0
      %v2372 = vadd.f32 %v1488, %v2371
      %2373 = vmatmul.bf16.gmra.mxu0 %v1835
      %v2374 = vpop.f32.mrf.mxu0
      %v2375 = vadd.f32 %v1488, %v2374
      %v2376 = vpop.f32.mrf.mxu0
      %v2377 = vadd.f32 %v1488, %v2376
      %2378 = vmatmul.bf16.gmra.mxu0 %v1838
      %v2379 = vpop.f32.mrf.mxu0
      %v2380 = vadd.f32 %v1488, %v2379
      %v2381 = vpop.f32.mrf.mxu0
      %v2382 = vadd.f32 %v1488, %v2381
      %2383 = vdwg.mxu0
      %v2384 = vmax.f32 %v1850, 0.0
      %v2385 = vmax.f32 %v1884, 0.0
      %v2386 = vmax.f32 %v1918, 0.0
      %v2387 = vmax.f32 %v1952, 0.0
      %v2388 = vmax.f32 %v1986, 0.0
      %v2389 = vmax.f32 %v2020, 0.0
      %v2390 = vmax.f32 %v2054, 0.0
      %v2391 = vmax.f32 %v2088, 0.0
      %v2392 = vmax.f32 %v2122, 0.0
      %v2393 = vmax.f32 %v2156, 0.0
      %v2394 = vmax.f32 %v2190, 0.0
      %v2395 = vmax.f32 %v2224, 0.0
      %v2396 = vmax.f32 %v2258, 0.0
      %v2397 = vmax.f32 %v2292, 0.0
      %v2398 = vmax.f32 %v2326, 0.0
      %v2399 = vmax.f32 %v2360, 0.0
      %v2400 = vmax.f32 %v1852, 0.0
      %v2401 = vmax.f32 %v1886, 0.0
      %v2402 = vmax.f32 %v1920, 0.0
      %v2403 = vmax.f32 %v1954, 0.0
      %v2404 = vmax.f32 %v1988, 0.0
      %v2405 = vmax.f32 %v2022, 0.0
      %v2406 = vmax.f32 %v2056, 0.0
      %v2407 = vmax.f32 %v2090, 0.0
      %v2408 = vmax.f32 %v2124, 0.0
      %v2409 = vmax.f32 %v2158, 0.0
      %v2410 = vmax.f32 %v2192, 0.0
      %v2411 = vmax.f32 %v2226, 0.0
      %v2412 = vmax.f32 %v2260, 0.0
      %v2413 = vmax.f32 %v2294, 0.0
      %v2414 = vmax.f32 %v2328, 0.0
      %v2415 = vmax.f32 %v2362, 0.0
      %v2416 = vmax.f32 %v1855, 0.0
      %v2417 = vmax.f32 %v1889, 0.0
      %v2418 = vmax.f32 %v1923, 0.0
      %v2419 = vmax.f32 %v1957, 0.0
      %v2420 = vmax.f32 %v1991, 0.0
      %v2421 = vmax.f32 %v2025, 0.0
      %v2422 = vmax.f32 %v2059, 0.0
      %v2423 = vmax.f32 %v2093, 0.0
      %v2424 = vmax.f32 %v2127, 0.0
      %v2425 = vmax.f32 %v2161, 0.0
      %v2426 = vmax.f32 %v2195, 0.0
      %v2427 = vmax.f32 %v2229, 0.0
      %v2428 = vmax.f32 %v2263, 0.0
      %v2429 = vmax.f32 %v2297, 0.0
      %v2430 = vmax.f32 %v2331, 0.0
      %v2431 = vmax.f32 %v2365, 0.0
      %v2432 = vmax.f32 %v1857, 0.0
      %v2433 = vmax.f32 %v1891, 0.0
      %v2434 = vmax.f32 %v1925, 0.0
      %v2435 = vmax.f32 %v1959, 0.0
      %v2436 = vmax.f32 %v1993, 0.0
      %v2437 = vmax.f32 %v2027, 0.0
      %v2438 = vmax.f32 %v2061, 0.0
      %v2439 = vmax.f32 %v2095, 0.0
      %v2440 = vmax.f32 %v2129, 0.0
      %v2441 = vmax.f32 %v2163, 0.0
      %v2442 = vmax.f32 %v2197, 0.0
      %v2443 = vmax.f32 %v2231, 0.0
      %v2444 = vmax.f32 %v2265, 0.0
      %v2445 = vmax.f32 %v2299, 0.0
      %v2446 = vmax.f32 %v2333, 0.0
      %v2447 = vmax.f32 %v2367, 0.0
      %v2448 = vmax.f32 %v1860, 0.0
      %v2449 = vmax.f32 %v1894, 0.0
      %v2450 = vmax.f32 %v1928, 0.0
      %v2451 = vmax.f32 %v1962, 0.0
      %v2452 = vmax.f32 %v1996, 0.0
      %v2453 = vmax.f32 %v2030, 0.0
      %v2454 = vmax.f32 %v2064, 0.0
      %v2455 = vmax.f32 %v2098, 0.0
      %v2456 = vmax.f32 %v2132, 0.0
      %v2457 = vmax.f32 %v2166, 0.0
      %v2458 = vmax.f32 %v2200, 0.0
      %v2459 = vmax.f32 %v2234, 0.0
      %v2460 = vmax.f32 %v2268, 0.0
      %v2461 = vmax.f32 %v2302, 0.0
      %v2462 = vmax.f32 %v2336, 0.0
      %v2463 = vmax.f32 %v2370, 0.0
      %v2464 = vmax.f32 %v1862, 0.0
      %v2465 = vmax.f32 %v1896, 0.0
      %v2466 = vmax.f32 %v1930, 0.0
      %v2467 = vmax.f32 %v1964, 0.0
      %v2468 = vmax.f32 %v1998, 0.0
      %v2469 = vmax.f32 %v2032, 0.0
      %v2470 = vmax.f32 %v2066, 0.0
      %v2471 = vmax.f32 %v2100, 0.0
      %v2472 = vmax.f32 %v2134, 0.0
      %v2473 = vmax.f32 %v2168, 0.0
      %v2474 = vmax.f32 %v2202, 0.0
      %v2475 = vmax.f32 %v2236, 0.0
      %v2476 = vmax.f32 %v2270, 0.0
      %v2477 = vmax.f32 %v2304, 0.0
      %v2478 = vmax.f32 %v2338, 0.0
      %v2479 = vmax.f32 %v2372, 0.0
      %v2480 = vmax.f32 %v1865, 0.0
      %v2481 = vmax.f32 %v1899, 0.0
      %v2482 = vmax.f32 %v1933, 0.0
      %v2483 = vmax.f32 %v1967, 0.0
      %v2484 = vmax.f32 %v2001, 0.0
      %v2485 = vmax.f32 %v2035, 0.0
      %v2486 = vmax.f32 %v2069, 0.0
      %v2487 = vmax.f32 %v2103, 0.0
      %v2488 = vmax.f32 %v2137, 0.0
      %v2489 = vmax.f32 %v2171, 0.0
      %v2490 = vmax.f32 %v2205, 0.0
      %v2491 = vmax.f32 %v2239, 0.0
      %v2492 = vmax.f32 %v2273, 0.0
      %v2493 = vmax.f32 %v2307, 0.0
      %v2494 = vmax.f32 %v2341, 0.0
      %v2495 = vmax.f32 %v2375, 0.0
      %v2496 = vmax.f32 %v1867, 0.0
      %v2497 = vmax.f32 %v1901, 0.0
      %v2498 = vmax.f32 %v1935, 0.0
      %v2499 = vmax.f32 %v1969, 0.0
      %v2500 = vmax.f32 %v2003, 0.0
      %v2501 = vmax.f32 %v2037, 0.0
      %v2502 = vmax.f32 %v2071, 0.0
      %v2503 = vmax.f32 %v2105, 0.0
      %v2504 = vmax.f32 %v2139, 0.0
      %v2505 = vmax.f32 %v2173, 0.0
      %v2506 = vmax.f32 %v2207, 0.0
      %v2507 = vmax.f32 %v2241, 0.0
      %v2508 = vmax.f32 %v2275, 0.0
      %v2509 = vmax.f32 %v2309, 0.0
      %v2510 = vmax.f32 %v2343, 0.0
      %v2511 = vmax.f32 %v2377, 0.0
      %v2512 = vmax.f32 %v1870, 0.0
      %v2513 = vmax.f32 %v1904, 0.0
      %v2514 = vmax.f32 %v1938, 0.0
      %v2515 = vmax.f32 %v1972, 0.0
      %v2516 = vmax.f32 %v2006, 0.0
      %v2517 = vmax.f32 %v2040, 0.0
      %v2518 = vmax.f32 %v2074, 0.0
      %v2519 = vmax.f32 %v2108, 0.0
      %v2520 = vmax.f32 %v2142, 0.0
      %v2521 = vmax.f32 %v2176, 0.0
      %v2522 = vmax.f32 %v2210, 0.0
      %v2523 = vmax.f32 %v2244, 0.0
      %v2524 = vmax.f32 %v2278, 0.0
      %v2525 = vmax.f32 %v2312, 0.0
      %v2526 = vmax.f32 %v2346, 0.0
      %v2527 = vmax.f32 %v2380, 0.0
      %v2528 = vmax.f32 %v1872, 0.0
      %v2529 = vmax.f32 %v1906, 0.0
      %v2530 = vmax.f32 %v1940, 0.0
      %v2531 = vmax.f32 %v1974, 0.0
      %v2532 = vmax.f32 %v2008, 0.0
      %v2533 = vmax.f32 %v2042, 0.0
      %v2534 = vmax.f32 %v2076, 0.0
      %v2535 = vmax.f32 %v2110, 0.0
      %v2536 = vmax.f32 %v2144, 0.0
      %v2537 = vmax.f32 %v2178, 0.0
      %v2538 = vmax.f32 %v2212, 0.0
      %v2539 = vmax.f32 %v2246, 0.0
      %v2540 = vmax.f32 %v2280, 0.0
      %v2541 = vmax.f32 %v2314, 0.0
      %v2542 = vmax.f32 %v2348, 0.0
      %v2543 = vmax.f32 %v2382, 0.0
      %v2544 = vpack.c.bf16 %v2400, %v2384
      %v2545 = vpack.c.bf16 %v2401, %v2385
      %v2546 = vpack.c.bf16 %v2402, %v2386
      %v2547 = vpack.c.bf16 %v2403, %v2387
      %v2548 = vpack.c.bf16 %v2404, %v2388
      %v2549 = vpack.c.bf16 %v2405, %v2389
      %v2550 = vpack.c.bf16 %v2406, %v2390
      %v2551 = vpack.c.bf16 %v2407, %v2391
      %v2552 = vpack.c.bf16 %v2408, %v2392
      %v2553 = vpack.c.bf16 %v2409, %v2393
      %v2554 = vpack.c.bf16 %v2410, %v2394
      %v2555 = vpack.c.bf16 %v2411, %v2395
      %v2556 = vpack.c.bf16 %v2412, %v2396
      %v2557 = vpack.c.bf16 %v2413, %v2397
      %v2558 = vpack.c.bf16 %v2414, %v2398
      %v2559 = vpack.c.bf16 %v2415, %v2399
      %v2560 = vpack.c.bf16 %v2432, %v2416
      %v2561 = vpack.c.bf16 %v2433, %v2417
      %v2562 = vpack.c.bf16 %v2434, %v2418
      %v2563 = vpack.c.bf16 %v2435, %v2419
      %v2564 = vpack.c.bf16 %v2436, %v2420
      %v2565 = vpack.c.bf16 %v2437, %v2421
      %v2566 = vpack.c.bf16 %v2438, %v2422
      %v2567 = vpack.c.bf16 %v2439, %v2423
      %v2568 = vpack.c.bf16 %v2440, %v2424
      %v2569 = vpack.c.bf16 %v2441, %v2425
      %v2570 = vpack.c.bf16 %v2442, %v2426
      %v2571 = vpack.c.bf16 %v2443, %v2427
      %v2572 = vpack.c.bf16 %v2444, %v2428
      %v2573 = vpack.c.bf16 %v2445, %v2429
      %v2574 = vpack.c.bf16 %v2446, %v2430
      %v2575 = vpack.c.bf16 %v2447, %v2431
      %v2576 = vpack.c.bf16 %v2464, %v2448
      %v2577 = vpack.c.bf16 %v2465, %v2449
      %v2578 = vpack.c.bf16 %v2466, %v2450
      %v2579 = vpack.c.bf16 %v2467, %v2451
      %v2580 = vpack.c.bf16 %v2468, %v2452
      %v2581 = vpack.c.bf16 %v2469, %v2453
      %v2582 = vpack.c.bf16 %v2470, %v2454
      %v2583 = vpack.c.bf16 %v2471, %v2455
      %v2584 = vpack.c.bf16 %v2472, %v2456
      %v2585 = vpack.c.bf16 %v2473, %v2457
      %v2586 = vpack.c.bf16 %v2474, %v2458
      %v2587 = vpack.c.bf16 %v2475, %v2459
      %v2588 = vpack.c.bf16 %v2476, %v2460
      %v2589 = vpack.c.bf16 %v2477, %v2461
      %v2590 = vpack.c.bf16 %v2478, %v2462
      %v2591 = vpack.c.bf16 %v2479, %v2463
      %v2592 = vpack.c.bf16 %v2496, %v2480
      %v2593 = vpack.c.bf16 %v2497, %v2481
      %v2594 = vpack.c.bf16 %v2498, %v2482
      %v2595 = vpack.c.bf16 %v2499, %v2483
      %v2596 = vpack.c.bf16 %v2500, %v2484
      %v2597 = vpack.c.bf16 %v2501, %v2485
      %v2598 = vpack.c.bf16 %v2502, %v2486
      %v2599 = vpack.c.bf16 %v2503, %v2487
      %v2600 = vpack.c.bf16 %v2504, %v2488
      %v2601 = vpack.c.bf16 %v2505, %v2489
      %v2602 = vpack.c.bf16 %v2506, %v2490
      %v2603 = vpack.c.bf16 %v2507, %v2491
      %v2604 = vpack.c.bf16 %v2508, %v2492
      %v2605 = vpack.c.bf16 %v2509, %v2493
      %v2606 = vpack.c.bf16 %v2510, %v2494
      %v2607 = vpack.c.bf16 %v2511, %v2495
      %v2608 = vpack.c.bf16 %v2528, %v2512
      %v2609 = vpack.c.bf16 %v2529, %v2513
      %v2610 = vpack.c.bf16 %v2530, %v2514
      %v2611 = vpack.c.bf16 %v2531, %v2515
      %v2612 = vpack.c.bf16 %v2532, %v2516
      %v2613 = vpack.c.bf16 %v2533, %v2517
      %v2614 = vpack.c.bf16 %v2534, %v2518
      %v2615 = vpack.c.bf16 %v2535, %v2519
      %v2616 = vpack.c.bf16 %v2536, %v2520
      %v2617 = vpack.c.bf16 %v2537, %v2521
      %v2618 = vpack.c.bf16 %v2538, %v2522
      %v2619 = vpack.c.bf16 %v2539, %v2523
      %v2620 = vpack.c.bf16 %v2540, %v2524
      %v2621 = vpack.c.bf16 %v2541, %v2525
      %v2622 = vpack.c.bf16 %v2542, %v2526
      %v2623 = vpack.c.bf16 %v2543, %v2527
      %v2624 = vld [vmem:[%s9] sm:$0xf]
      %v2625 = vld [vmem:[%s9 + $0x4] sm:$0xf]
      %v2626 = vld [vmem:[%s9 + $0x8] sm:$0xf]
      %v2627 = vld [vmem:[%s9 + $0xc] sm:$0xf]
      %v2628 = vld [vmem:[%s9 + $0x10] sm:$0xf]
      %v2629 = vld [vmem:[%s9 + $0x14] sm:$0xf]
      %v2630 = vld [vmem:[%s9 + $0x18] sm:$0xf]
      %v2631 = vld [vmem:[%s9 + $0x1c] sm:$0xf]
      %v2632 = vld [vmem:[%s9 + $0x20] sm:$0xf]
      %v2633 = vld [vmem:[%s9 + $0x24] sm:$0xf]
      %v2634 = vld [vmem:[%s9 + $0x28] sm:$0xf]
      %v2635 = vld [vmem:[%s9 + $0x2c] sm:$0xf]
      %v2636 = vld [vmem:[%s9 + $0x30] sm:$0xf]
      %v2637 = vld [vmem:[%s9 + $0x34] sm:$0xf]
      %v2638 = vld [vmem:[%s9 + $0x38] sm:$0xf]
      %v2639 = vld [vmem:[%s9 + $0x3c] sm:$0xf]
      %v2640 = vld [vmem:[%s9 + $0x40] sm:$0xf]
      %v2641 = vld [vmem:[%s9 + $0x44] sm:$0xf]
      %v2642 = vld [vmem:[%s9 + $0x48] sm:$0xf]
      %v2643 = vld [vmem:[%s9 + $0x4c] sm:$0xf]
      %v2644 = vld [vmem:[%s9 + $0x50] sm:$0xf]
      %v2645 = vld [vmem:[%s9 + $0x54] sm:$0xf]
      %v2646 = vld [vmem:[%s9 + $0x58] sm:$0xf]
      %v2647 = vld [vmem:[%s9 + $0x5c] sm:$0xf]
      %v2648 = vld [vmem:[%s9 + $0x60] sm:$0xf]
      %v2649 = vld [vmem:[%s9 + $0x64] sm:$0xf]
      %v2650 = vld [vmem:[%s9 + $0x68] sm:$0xf]
      %v2651 = vld [vmem:[%s9 + $0x6c] sm:$0xf]
      %v2652 = vld [vmem:[%s9 + $0x70] sm:$0xf]
      %v2653 = vld [vmem:[%s9 + $0x74] sm:$0xf]
      %v2654 = vld [vmem:[%s9 + $0x78] sm:$0xf]
      %v2655 = vld [vmem:[%s9 + $0x7c] sm:$0xf]
      %v2656 = vld [vmem:[%s9 + $0x80] sm:$0xf]
      %v2657 = vld [vmem:[%s9 + $0x84] sm:$0xf]
      %v2658 = vld [vmem:[%s9 + $0x88] sm:$0xf]
      %v2659 = vld [vmem:[%s9 + $0x8c] sm:$0xf]
      %v2660 = vld [vmem:[%s9 + $0x90] sm:$0xf]
      %v2661 = vld [vmem:[%s9 + $0x94] sm:$0xf]
      %v2662 = vld [vmem:[%s9 + $0x98] sm:$0xf]
      %v2663 = vld [vmem:[%s9 + $0x9c] sm:$0xf]
      %v2664 = vld [vmem:[%s9 + $0xa0] sm:$0xf]
      %v2665 = vld [vmem:[%s9 + $0xa4] sm:$0xf]
      %v2666 = vld [vmem:[%s9 + $0xa8] sm:$0xf]
      %v2667 = vld [vmem:[%s9 + $0xac] sm:$0xf]
      %v2668 = vld [vmem:[%s9 + $0xb0] sm:$0xf]
      %v2669 = vld [vmem:[%s9 + $0xb4] sm:$0xf]
      %v2670 = vld [vmem:[%s9 + $0xb8] sm:$0xf]
      %v2671 = vld [vmem:[%s9 + $0xbc] sm:$0xf]
      %v2672 = vld [vmem:[%s9 + $0xc0] sm:$0xf]
      %v2673 = vld [vmem:[%s9 + $0xc4] sm:$0xf]
      %v2674 = vld [vmem:[%s9 + $0xc8] sm:$0xf]
      %v2675 = vld [vmem:[%s9 + $0xcc] sm:$0xf]
      %v2676 = vld [vmem:[%s9 + $0xd0] sm:$0xf]
      %v2677 = vld [vmem:[%s9 + $0xd4] sm:$0xf]
      %v2678 = vld [vmem:[%s9 + $0xd8] sm:$0xf]
      %v2679 = vld [vmem:[%s9 + $0xdc] sm:$0xf]
      %v2680 = vld [vmem:[%s9 + $0xe0] sm:$0xf]
      %v2681 = vld [vmem:[%s9 + $0xe4] sm:$0xf]
      %v2682 = vld [vmem:[%s9 + $0xe8] sm:$0xf]
      %v2683 = vld [vmem:[%s9 + $0xec] sm:$0xf]
      %v2684 = vld [vmem:[%s9 + $0xf0] sm:$0xf]
      %v2685 = vld [vmem:[%s9 + $0xf4] sm:$0xf]
      %v2686 = vld [vmem:[%s9 + $0xf8] sm:$0xf]
      %v2687 = vld [vmem:[%s9 + $0xfc] sm:$0xf]
      %v2688 = vld [vmem:[%s9 + $0x100] sm:$0xf]
      %v2689 = vld [vmem:[%s9 + $0x104] sm:$0xf]
      %v2690 = vld [vmem:[%s9 + $0x108] sm:$0xf]
      %v2691 = vld [vmem:[%s9 + $0x10c] sm:$0xf]
      %v2692 = vld [vmem:[%s9 + $0x110] sm:$0xf]
      %v2693 = vld [vmem:[%s9 + $0x114] sm:$0xf]
      %v2694 = vld [vmem:[%s9 + $0x118] sm:$0xf]
      %v2695 = vld [vmem:[%s9 + $0x11c] sm:$0xf]
      %v2696 = vld [vmem:[%s9 + $0x120] sm:$0xf]
      %v2697 = vld [vmem:[%s9 + $0x124] sm:$0xf]
      %v2698 = vld [vmem:[%s9 + $0x128] sm:$0xf]
      %v2699 = vld [vmem:[%s9 + $0x12c] sm:$0xf]
      %v2700 = vld [vmem:[%s9 + $0x130] sm:$0xf]
      %v2701 = vld [vmem:[%s9 + $0x134] sm:$0xf]
      %v2702 = vld [vmem:[%s9 + $0x138] sm:$0xf]
      %v2703 = vld [vmem:[%s9 + $0x13c] sm:$0xf]
      %v2704 = vld [vmem:[%s9 + $0x140] sm:$0xf]
      %v2705 = vld [vmem:[%s9 + $0x144] sm:$0xf]
      %v2706 = vld [vmem:[%s9 + $0x148] sm:$0xf]
      %v2707 = vld [vmem:[%s9 + $0x14c] sm:$0xf]
      %v2708 = vld [vmem:[%s9 + $0x150] sm:$0xf]
      %v2709 = vld [vmem:[%s9 + $0x154] sm:$0xf]
      %v2710 = vld [vmem:[%s9 + $0x158] sm:$0xf]
      %v2711 = vld [vmem:[%s9 + $0x15c] sm:$0xf]
      %v2712 = vld [vmem:[%s9 + $0x160] sm:$0xf]
      %v2713 = vld [vmem:[%s9 + $0x164] sm:$0xf]
      %v2714 = vld [vmem:[%s9 + $0x168] sm:$0xf]
      %v2715 = vld [vmem:[%s9 + $0x16c] sm:$0xf]
      %v2716 = vld [vmem:[%s9 + $0x170] sm:$0xf]
      %v2717 = vld [vmem:[%s9 + $0x174] sm:$0xf]
      %v2718 = vld [vmem:[%s9 + $0x178] sm:$0xf]
      %v2719 = vld [vmem:[%s9 + $0x17c] sm:$0xf]
      %v2720 = vld [vmem:[%s9 + $0x180] sm:$0xf]
      %v2721 = vld [vmem:[%s9 + $0x184] sm:$0xf]
      %v2722 = vld [vmem:[%s9 + $0x188] sm:$0xf]
      %v2723 = vld [vmem:[%s9 + $0x18c] sm:$0xf]
      %v2724 = vld [vmem:[%s9 + $0x190] sm:$0xf]
      %v2725 = vld [vmem:[%s9 + $0x194] sm:$0xf]
      %v2726 = vld [vmem:[%s9 + $0x198] sm:$0xf]
      %v2727 = vld [vmem:[%s9 + $0x19c] sm:$0xf]
      %v2728 = vld [vmem:[%s9 + $0x1a0] sm:$0xf]
      %v2729 = vld [vmem:[%s9 + $0x1a4] sm:$0xf]
      %v2730 = vld [vmem:[%s9 + $0x1a8] sm:$0xf]
      %v2731 = vld [vmem:[%s9 + $0x1ac] sm:$0xf]
      %v2732 = vld [vmem:[%s9 + $0x1b0] sm:$0xf]
      %v2733 = vld [vmem:[%s9 + $0x1b4] sm:$0xf]
      %v2734 = vld [vmem:[%s9 + $0x1b8] sm:$0xf]
      %v2735 = vld [vmem:[%s9 + $0x1bc] sm:$0xf]
      %v2736 = vld [vmem:[%s9 + $0x1c0] sm:$0xf]
      %v2737 = vld [vmem:[%s9 + $0x1c4] sm:$0xf]
      %v2738 = vld [vmem:[%s9 + $0x1c8] sm:$0xf]
      %v2739 = vld [vmem:[%s9 + $0x1cc] sm:$0xf]
      %v2740 = vld [vmem:[%s9 + $0x1d0] sm:$0xf]
      %v2741 = vld [vmem:[%s9 + $0x1d4] sm:$0xf]
      %v2742 = vld [vmem:[%s9 + $0x1d8] sm:$0xf]
      %v2743 = vld [vmem:[%s9 + $0x1dc] sm:$0xf]
      %v2744 = vld [vmem:[%s9 + $0x1e0] sm:$0xf]
      %v2745 = vld [vmem:[%s9 + $0x1e4] sm:$0xf]
      %v2746 = vld [vmem:[%s9 + $0x1e8] sm:$0xf]
      %v2747 = vld [vmem:[%s9 + $0x1ec] sm:$0xf]
      %v2748 = vld [vmem:[%s9 + $0x1f0] sm:$0xf]
      %v2749 = vld [vmem:[%s9 + $0x1f4] sm:$0xf]
      %v2750 = vld [vmem:[%s9 + $0x1f8] sm:$0xf]
      %v2751 = vld [vmem:[%s9 + $0x1fc] sm:$0xf]
      %v2752 = vld [vmem:[%s9 + $0x200] sm:$0xf]
      %v2753 = vld [vmem:[%s9 + $0x204] sm:$0xf]
      %v2754 = vld [vmem:[%s9 + $0x208] sm:$0xf]
      %v2755 = vld [vmem:[%s9 + $0x20c] sm:$0xf]
      %v2756 = vld [vmem:[%s9 + $0x210] sm:$0xf]
      %v2757 = vld [vmem:[%s9 + $0x214] sm:$0xf]
      %v2758 = vld [vmem:[%s9 + $0x218] sm:$0xf]
      %v2759 = vld [vmem:[%s9 + $0x21c] sm:$0xf]
      %v2760 = vld [vmem:[%s9 + $0x220] sm:$0xf]
      %v2761 = vld [vmem:[%s9 + $0x224] sm:$0xf]
      %v2762 = vld [vmem:[%s9 + $0x228] sm:$0xf]
      %v2763 = vld [vmem:[%s9 + $0x22c] sm:$0xf]
      %v2764 = vld [vmem:[%s9 + $0x230] sm:$0xf]
      %v2765 = vld [vmem:[%s9 + $0x234] sm:$0xf]
      %v2766 = vld [vmem:[%s9 + $0x238] sm:$0xf]
      %v2767 = vld [vmem:[%s9 + $0x23c] sm:$0xf]
      %v2768 = vld [vmem:[%s9 + $0x240] sm:$0xf]
      %v2769 = vld [vmem:[%s9 + $0x244] sm:$0xf]
      %v2770 = vld [vmem:[%s9 + $0x248] sm:$0xf]
      %v2771 = vld [vmem:[%s9 + $0x24c] sm:$0xf]
      %v2772 = vld [vmem:[%s9 + $0x250] sm:$0xf]
      %v2773 = vld [vmem:[%s9 + $0x254] sm:$0xf]
      %v2774 = vld [vmem:[%s9 + $0x258] sm:$0xf]
      %v2775 = vld [vmem:[%s9 + $0x25c] sm:$0xf]
      %v2776 = vld [vmem:[%s9 + $0x260] sm:$0xf]
      %v2777 = vld [vmem:[%s9 + $0x264] sm:$0xf]
      %v2778 = vld [vmem:[%s9 + $0x268] sm:$0xf]
      %v2779 = vld [vmem:[%s9 + $0x26c] sm:$0xf]
      %v2780 = vld [vmem:[%s9 + $0x270] sm:$0xf]
      %v2781 = vld [vmem:[%s9 + $0x274] sm:$0xf]
      %v2782 = vld [vmem:[%s9 + $0x278] sm:$0xf]
      %v2783 = vld [vmem:[%s9 + $0x27c] sm:$0xf]
      %v2784 = vld [vmem:[%s9 + $0x280] sm:$0xf]
      %v2785 = vld [vmem:[%s9 + $0x284] sm:$0xf]
      %v2786 = vld [vmem:[%s9 + $0x288] sm:$0xf]
      %v2787 = vld [vmem:[%s9 + $0x28c] sm:$0xf]
      %v2788 = vld [vmem:[%s9 + $0x290] sm:$0xf]
      %v2789 = vld [vmem:[%s9 + $0x294] sm:$0xf]
      %v2790 = vld [vmem:[%s9 + $0x298] sm:$0xf]
      %v2791 = vld [vmem:[%s9 + $0x29c] sm:$0xf]
      %v2792 = vld [vmem:[%s9 + $0x2a0] sm:$0xf]
      %v2793 = vld [vmem:[%s9 + $0x2a4] sm:$0xf]
      %v2794 = vld [vmem:[%s9 + $0x2a8] sm:$0xf]
      %v2795 = vld [vmem:[%s9 + $0x2ac] sm:$0xf]
      %v2796 = vld [vmem:[%s9 + $0x2b0] sm:$0xf]
      %v2797 = vld [vmem:[%s9 + $0x2b4] sm:$0xf]
      %v2798 = vld [vmem:[%s9 + $0x2b8] sm:$0xf]
      %v2799 = vld [vmem:[%s9 + $0x2bc] sm:$0xf]
      %v2800 = vld [vmem:[%s9 + $0x2c0] sm:$0xf]
      %v2801 = vld [vmem:[%s9 + $0x2c4] sm:$0xf]
      %v2802 = vld [vmem:[%s9 + $0x2c8] sm:$0xf]
      %v2803 = vld [vmem:[%s9 + $0x2cc] sm:$0xf]
      %v2804 = vld [vmem:[%s9 + $0x2d0] sm:$0xf]
      %v2805 = vld [vmem:[%s9 + $0x2d4] sm:$0xf]
      %v2806 = vld [vmem:[%s9 + $0x2d8] sm:$0xf]
      %v2807 = vld [vmem:[%s9 + $0x2dc] sm:$0xf]
      %v2808 = vld [vmem:[%s9 + $0x2e0] sm:$0xf]
      %v2809 = vld [vmem:[%s9 + $0x2e4] sm:$0xf]
      %v2810 = vld [vmem:[%s9 + $0x2e8] sm:$0xf]
      %v2811 = vld [vmem:[%s9 + $0x2ec] sm:$0xf]
      %v2812 = vld [vmem:[%s9 + $0x2f0] sm:$0xf]
      %v2813 = vld [vmem:[%s9 + $0x2f4] sm:$0xf]
      %v2814 = vld [vmem:[%s9 + $0x2f8] sm:$0xf]
      %v2815 = vld [vmem:[%s9 + $0x2fc] sm:$0xf]
      %v2816 = vld [vmem:[%s9 + $0x300] sm:$0xf]
      %v2817 = vld [vmem:[%s9 + $0x304] sm:$0xf]
      %v2818 = vld [vmem:[%s9 + $0x308] sm:$0xf]
      %v2819 = vld [vmem:[%s9 + $0x30c] sm:$0xf]
      %v2820 = vld [vmem:[%s9 + $0x310] sm:$0xf]
      %v2821 = vld [vmem:[%s9 + $0x314] sm:$0xf]
      %v2822 = vld [vmem:[%s9 + $0x318] sm:$0xf]
      %v2823 = vld [vmem:[%s9 + $0x31c] sm:$0xf]
      %v2824 = vld [vmem:[%s9 + $0x320] sm:$0xf]
      %v2825 = vld [vmem:[%s9 + $0x324] sm:$0xf]
      %v2826 = vld [vmem:[%s9 + $0x328] sm:$0xf]
      %v2827 = vld [vmem:[%s9 + $0x32c] sm:$0xf]
      %v2828 = vld [vmem:[%s9 + $0x330] sm:$0xf]
      %v2829 = vld [vmem:[%s9 + $0x334] sm:$0xf]
      %v2830 = vld [vmem:[%s9 + $0x338] sm:$0xf]
      %v2831 = vld [vmem:[%s9 + $0x33c] sm:$0xf]
      %v2832 = vld [vmem:[%s9 + $0x340] sm:$0xf]
      %v2833 = vld [vmem:[%s9 + $0x344] sm:$0xf]
      %v2834 = vld [vmem:[%s9 + $0x348] sm:$0xf]
      %v2835 = vld [vmem:[%s9 + $0x34c] sm:$0xf]
      %v2836 = vld [vmem:[%s9 + $0x350] sm:$0xf]
      %v2837 = vld [vmem:[%s9 + $0x354] sm:$0xf]
      %v2838 = vld [vmem:[%s9 + $0x358] sm:$0xf]
      %v2839 = vld [vmem:[%s9 + $0x35c] sm:$0xf]
      %v2840 = vld [vmem:[%s9 + $0x360] sm:$0xf]
      %v2841 = vld [vmem:[%s9 + $0x364] sm:$0xf]
      %v2842 = vld [vmem:[%s9 + $0x368] sm:$0xf]
      %v2843 = vld [vmem:[%s9 + $0x36c] sm:$0xf]
      %v2844 = vld [vmem:[%s9 + $0x370] sm:$0xf]
      %v2845 = vld [vmem:[%s9 + $0x374] sm:$0xf]
      %v2846 = vld [vmem:[%s9 + $0x378] sm:$0xf]
      %v2847 = vld [vmem:[%s9 + $0x37c] sm:$0xf]
      %v2848 = vld [vmem:[%s9 + $0x380] sm:$0xf]
      %v2849 = vld [vmem:[%s9 + $0x384] sm:$0xf]
      %v2850 = vld [vmem:[%s9 + $0x388] sm:$0xf]
      %v2851 = vld [vmem:[%s9 + $0x38c] sm:$0xf]
      %v2852 = vld [vmem:[%s9 + $0x390] sm:$0xf]
      %v2853 = vld [vmem:[%s9 + $0x394] sm:$0xf]
      %v2854 = vld [vmem:[%s9 + $0x398] sm:$0xf]
      %v2855 = vld [vmem:[%s9 + $0x39c] sm:$0xf]
      %v2856 = vld [vmem:[%s9 + $0x3a0] sm:$0xf]
      %v2857 = vld [vmem:[%s9 + $0x3a4] sm:$0xf]
      %v2858 = vld [vmem:[%s9 + $0x3a8] sm:$0xf]
      %v2859 = vld [vmem:[%s9 + $0x3ac] sm:$0xf]
      %v2860 = vld [vmem:[%s9 + $0x3b0] sm:$0xf]
      %v2861 = vld [vmem:[%s9 + $0x3b4] sm:$0xf]
      %v2862 = vld [vmem:[%s9 + $0x3b8] sm:$0xf]
      %v2863 = vld [vmem:[%s9 + $0x3bc] sm:$0xf]
      %v2864 = vld [vmem:[%s9 + $0x3c0] sm:$0xf]
      %v2865 = vld [vmem:[%s9 + $0x3c4] sm:$0xf]
      %v2866 = vld [vmem:[%s9 + $0x3c8] sm:$0xf]
      %v2867 = vld [vmem:[%s9 + $0x3cc] sm:$0xf]
      %v2868 = vld [vmem:[%s9 + $0x3d0] sm:$0xf]
      %v2869 = vld [vmem:[%s9 + $0x3d4] sm:$0xf]
      %v2870 = vld [vmem:[%s9 + $0x3d8] sm:$0xf]
      %v2871 = vld [vmem:[%s9 + $0x3dc] sm:$0xf]
      %v2872 = vld [vmem:[%s9 + $0x3e0] sm:$0xf]
      %v2873 = vld [vmem:[%s9 + $0x3e4] sm:$0xf]
      %v2874 = vld [vmem:[%s9 + $0x3e8] sm:$0xf]
      %v2875 = vld [vmem:[%s9 + $0x3ec] sm:$0xf]
      %v2876 = vld [vmem:[%s9 + $0x3f0] sm:$0xf]
      %v2877 = vld [vmem:[%s9 + $0x3f4] sm:$0xf]
      %v2878 = vld [vmem:[%s9 + $0x3f8] sm:$0xf]
      %v2879 = vld [vmem:[%s9 + $0x3fc] sm:$0xf]
      %v2880 = vperm.slane %v575, 3
      %v3137 = vunpack.c.l.b16 %v2624
      %v3138 = vunpack.c.l.b16 %v2625
      %v3139 = vunpack.c.l.b16 %v2626
      %v3140 = vunpack.c.l.b16 %v2627
      %v3141 = vunpack.c.l.b16 %v2628
      %v3142 = vunpack.c.l.b16 %v2629
      %v3143 = vunpack.c.l.b16 %v2630
      %v3144 = vunpack.c.l.b16 %v2631
      %v3145 = vunpack.c.l.b16 %v2632
      %v3146 = vunpack.c.l.b16 %v2633
      %v3147 = vunpack.c.l.b16 %v2634
      %v3148 = vunpack.c.l.b16 %v2635
      %v3149 = vunpack.c.l.b16 %v2636
      %v3150 = vunpack.c.l.b16 %v2637
      %v3151 = vunpack.c.l.b16 %v2638
      %v3152 = vunpack.c.l.b16 %v2639
      %v3153 = vunpack.c.l.b16 %v2640
      %v3154 = vunpack.c.l.b16 %v2641
      %v3155 = vunpack.c.l.b16 %v2642
      %v3156 = vunpack.c.l.b16 %v2643
      %v3157 = vunpack.c.l.b16 %v2644
      %v3158 = vunpack.c.l.b16 %v2645
      %v3159 = vunpack.c.l.b16 %v2646
      %v3160 = vunpack.c.l.b16 %v2647
      %v3161 = vunpack.c.l.b16 %v2648
      %v3162 = vunpack.c.l.b16 %v2649
      %v3163 = vunpack.c.l.b16 %v2650
      %v3164 = vunpack.c.l.b16 %v2651
      %v3165 = vunpack.c.l.b16 %v2652
      %v3166 = vunpack.c.l.b16 %v2653
      %v3167 = vunpack.c.l.b16 %v2654
      %v3168 = vunpack.c.l.b16 %v2655
      %v3169 = vunpack.c.l.b16 %v2656
      %v3170 = vunpack.c.l.b16 %v2657
      %v3171 = vunpack.c.l.b16 %v2658
      %v3172 = vunpack.c.l.b16 %v2659
      %v3173 = vunpack.c.l.b16 %v2660
      %v3174 = vunpack.c.l.b16 %v2661
      %v3175 = vunpack.c.l.b16 %v2662
      %v3176 = vunpack.c.l.b16 %v2663
      %v3177 = vunpack.c.l.b16 %v2664
      %v3178 = vunpack.c.l.b16 %v2665
      %v3179 = vunpack.c.l.b16 %v2666
      %v3180 = vunpack.c.l.b16 %v2667
      %v3181 = vunpack.c.l.b16 %v2668
      %v3182 = vunpack.c.l.b16 %v2669
      %v3183 = vunpack.c.l.b16 %v2670
      %v3184 = vunpack.c.l.b16 %v2671
      %v3185 = vunpack.c.l.b16 %v2672
      %v3186 = vunpack.c.l.b16 %v2673
      %v3187 = vunpack.c.l.b16 %v2674
      %v3188 = vunpack.c.l.b16 %v2675
      %v3189 = vunpack.c.l.b16 %v2676
      %v3190 = vunpack.c.l.b16 %v2677
      %v3191 = vunpack.c.l.b16 %v2678
      %v3192 = vunpack.c.l.b16 %v2679
      %v3193 = vunpack.c.l.b16 %v2680
      %v3194 = vunpack.c.l.b16 %v2681
      %v3195 = vunpack.c.l.b16 %v2682
      %v3196 = vunpack.c.l.b16 %v2683
      %v3197 = vunpack.c.l.b16 %v2684
      %v3198 = vunpack.c.l.b16 %v2685
      %v3199 = vunpack.c.l.b16 %v2686
      %v3200 = vunpack.c.l.b16 %v2687
      %v3201 = vunpack.c.l.b16 %v2688
      %v3202 = vunpack.c.l.b16 %v2689
      %v3203 = vunpack.c.l.b16 %v2690
      %v3204 = vunpack.c.l.b16 %v2691
      %v3205 = vunpack.c.l.b16 %v2692
      %v3206 = vunpack.c.l.b16 %v2693
      %v3207 = vunpack.c.l.b16 %v2694
      %v3208 = vunpack.c.l.b16 %v2695
      %v3209 = vunpack.c.l.b16 %v2696
      %v3210 = vunpack.c.l.b16 %v2697
      %v3211 = vunpack.c.l.b16 %v2698
      %v3212 = vunpack.c.l.b16 %v2699
      %v3213 = vunpack.c.l.b16 %v2700
      %v3214 = vunpack.c.l.b16 %v2701
      %v3215 = vunpack.c.l.b16 %v2702
      %v3216 = vunpack.c.l.b16 %v2703
      %v3217 = vunpack.c.l.b16 %v2704
      %v3218 = vunpack.c.l.b16 %v2705
      %v3219 = vunpack.c.l.b16 %v2706
      %v3220 = vunpack.c.l.b16 %v2707
      %v3221 = vunpack.c.l.b16 %v2708
      %v3222 = vunpack.c.l.b16 %v2709
      %v3223 = vunpack.c.l.b16 %v2710
      %v3224 = vunpack.c.l.b16 %v2711
      %v3225 = vunpack.c.l.b16 %v2712
      %v3226 = vunpack.c.l.b16 %v2713
      %v3227 = vunpack.c.l.b16 %v2714
      %v3228 = vunpack.c.l.b16 %v2715
      %v3229 = vunpack.c.l.b16 %v2716
      %v3230 = vunpack.c.l.b16 %v2717
      %v3231 = vunpack.c.l.b16 %v2718
      %v3232 = vunpack.c.l.b16 %v2719
      %v3233 = vunpack.c.l.b16 %v2720
      %v3234 = vunpack.c.l.b16 %v2721
      %v3235 = vunpack.c.l.b16 %v2722
      %v3236 = vunpack.c.l.b16 %v2723
      %v3237 = vunpack.c.l.b16 %v2724
      %v3238 = vunpack.c.l.b16 %v2725
      %v3239 = vunpack.c.l.b16 %v2726
      %v3240 = vunpack.c.l.b16 %v2727
      %v3241 = vunpack.c.l.b16 %v2728
      %v3242 = vunpack.c.l.b16 %v2729
      %v3243 = vunpack.c.l.b16 %v2730
      %v3244 = vunpack.c.l.b16 %v2731
      %v3245 = vunpack.c.l.b16 %v2732
      %v3246 = vunpack.c.l.b16 %v2733
      %v3247 = vunpack.c.l.b16 %v2734
      %v3248 = vunpack.c.l.b16 %v2735
      %v3249 = vunpack.c.l.b16 %v2736
      %v3250 = vunpack.c.l.b16 %v2737
      %v3251 = vunpack.c.l.b16 %v2738
      %v3252 = vunpack.c.l.b16 %v2739
      %v3253 = vunpack.c.l.b16 %v2740
      %v3254 = vunpack.c.l.b16 %v2741
      %v3255 = vunpack.c.l.b16 %v2742
      %v3256 = vunpack.c.l.b16 %v2743
      %v3257 = vunpack.c.l.b16 %v2744
      %v3258 = vunpack.c.l.b16 %v2745
      %v3259 = vunpack.c.l.b16 %v2746
      %v3260 = vunpack.c.l.b16 %v2747
      %v3261 = vunpack.c.l.b16 %v2748
      %v3262 = vunpack.c.l.b16 %v2749
      %v3263 = vunpack.c.l.b16 %v2750
      %v3264 = vunpack.c.l.b16 %v2751
      %v3265 = vunpack.c.l.b16 %v2752
      %v3266 = vunpack.c.l.b16 %v2753
      %v3267 = vunpack.c.l.b16 %v2754
      %v3268 = vunpack.c.l.b16 %v2755
      %v3269 = vunpack.c.l.b16 %v2756
      %v3270 = vunpack.c.l.b16 %v2757
      %v3271 = vunpack.c.l.b16 %v2758
      %v3272 = vunpack.c.l.b16 %v2759
      %v3273 = vunpack.c.l.b16 %v2760
      %v3274 = vunpack.c.l.b16 %v2761
      %v3275 = vunpack.c.l.b16 %v2762
      %v3276 = vunpack.c.l.b16 %v2763
      %v3277 = vunpack.c.l.b16 %v2764
      %v3278 = vunpack.c.l.b16 %v2765
      %v3279 = vunpack.c.l.b16 %v2766
      %v3280 = vunpack.c.l.b16 %v2767
      %v3281 = vunpack.c.l.b16 %v2768
      %v3282 = vunpack.c.l.b16 %v2769
      %v3283 = vunpack.c.l.b16 %v2770
      %v3284 = vunpack.c.l.b16 %v2771
      %v3285 = vunpack.c.l.b16 %v2772
      %v3286 = vunpack.c.l.b16 %v2773
      %v3287 = vunpack.c.l.b16 %v2774
      %v3288 = vunpack.c.l.b16 %v2775
      %v3289 = vunpack.c.l.b16 %v2776
      %v3290 = vunpack.c.l.b16 %v2777
      %v3291 = vunpack.c.l.b16 %v2778
      %v3292 = vunpack.c.l.b16 %v2779
      %v3293 = vunpack.c.l.b16 %v2780
      %v3294 = vunpack.c.l.b16 %v2781
      %v3295 = vunpack.c.l.b16 %v2782
      %v3296 = vunpack.c.l.b16 %v2783
      %v3297 = vunpack.c.l.b16 %v2784
      %v3298 = vunpack.c.l.b16 %v2785
      %v3299 = vunpack.c.l.b16 %v2786
      %v3300 = vunpack.c.l.b16 %v2787
      %v3301 = vunpack.c.l.b16 %v2788
      %v3302 = vunpack.c.l.b16 %v2789
      %v3303 = vunpack.c.l.b16 %v2790
      %v3304 = vunpack.c.l.b16 %v2791
      %v3305 = vunpack.c.l.b16 %v2792
      %v3306 = vunpack.c.l.b16 %v2793
      %v3307 = vunpack.c.l.b16 %v2794
      %v3308 = vunpack.c.l.b16 %v2795
      %v3309 = vunpack.c.l.b16 %v2796
      %v3310 = vunpack.c.l.b16 %v2797
      %v3311 = vunpack.c.l.b16 %v2798
      %v3312 = vunpack.c.l.b16 %v2799
      %v3313 = vunpack.c.l.b16 %v2800
      %v3314 = vunpack.c.l.b16 %v2801
      %v3315 = vunpack.c.l.b16 %v2802
      %v3316 = vunpack.c.l.b16 %v2803
      %v3317 = vunpack.c.l.b16 %v2804
      %v3318 = vunpack.c.l.b16 %v2805
      %v3319 = vunpack.c.l.b16 %v2806
      %v3320 = vunpack.c.l.b16 %v2807
      %v3321 = vunpack.c.l.b16 %v2808
      %v3322 = vunpack.c.l.b16 %v2809
      %v3323 = vunpack.c.l.b16 %v2810
      %v3324 = vunpack.c.l.b16 %v2811
      %v3325 = vunpack.c.l.b16 %v2812
      %v3326 = vunpack.c.l.b16 %v2813
      %v3327 = vunpack.c.l.b16 %v2814
      %v3328 = vunpack.c.l.b16 %v2815
      %v3329 = vunpack.c.l.b16 %v2816
      %v3330 = vunpack.c.l.b16 %v2817
      %v3331 = vunpack.c.l.b16 %v2818
      %v3332 = vunpack.c.l.b16 %v2819
      %v3333 = vunpack.c.l.b16 %v2820
      %v3334 = vunpack.c.l.b16 %v2821
      %v3335 = vunpack.c.l.b16 %v2822
      %v3336 = vunpack.c.l.b16 %v2823
      %v3337 = vunpack.c.l.b16 %v2824
      %v3338 = vunpack.c.l.b16 %v2825
      %v3339 = vunpack.c.l.b16 %v2826
      %v3340 = vunpack.c.l.b16 %v2827
      %v3341 = vunpack.c.l.b16 %v2828
      %v3342 = vunpack.c.l.b16 %v2829
      %v3343 = vunpack.c.l.b16 %v2830
      %v3344 = vunpack.c.l.b16 %v2831
      %v3345 = vunpack.c.l.b16 %v2832
      %v3346 = vunpack.c.l.b16 %v2833
      %v3347 = vunpack.c.l.b16 %v2834
      %v3348 = vunpack.c.l.b16 %v2835
      %v3349 = vunpack.c.l.b16 %v2836
      %v3350 = vunpack.c.l.b16 %v2837
      %v3351 = vunpack.c.l.b16 %v2838
      %v3352 = vunpack.c.l.b16 %v2839
      %v3353 = vunpack.c.l.b16 %v2840
      %v3354 = vunpack.c.l.b16 %v2841
      %v3355 = vunpack.c.l.b16 %v2842
      %v3356 = vunpack.c.l.b16 %v2843
      %v3357 = vunpack.c.l.b16 %v2844
      %v3358 = vunpack.c.l.b16 %v2845
      %v3359 = vunpack.c.l.b16 %v2846
      %v3360 = vunpack.c.l.b16 %v2847
      %v3361 = vunpack.c.l.b16 %v2848
      %v3362 = vunpack.c.l.b16 %v2849
      %v3363 = vunpack.c.l.b16 %v2850
      %v3364 = vunpack.c.l.b16 %v2851
      %v3365 = vunpack.c.l.b16 %v2852
      %v3366 = vunpack.c.l.b16 %v2853
      %v3367 = vunpack.c.l.b16 %v2854
      %v3368 = vunpack.c.l.b16 %v2855
      %v3369 = vunpack.c.l.b16 %v2856
      %v3370 = vunpack.c.l.b16 %v2857
      %v3371 = vunpack.c.l.b16 %v2858
      %v3372 = vunpack.c.l.b16 %v2859
      %v3373 = vunpack.c.l.b16 %v2860
      %v3374 = vunpack.c.l.b16 %v2861
      %v3375 = vunpack.c.l.b16 %v2862
      %v3376 = vunpack.c.l.b16 %v2863
      %v3377 = vunpack.c.l.b16 %v2864
      %v3378 = vunpack.c.l.b16 %v2865
      %v3379 = vunpack.c.l.b16 %v2866
      %v3380 = vunpack.c.l.b16 %v2867
      %v3381 = vunpack.c.l.b16 %v2868
      %v3382 = vunpack.c.l.b16 %v2869
      %v3383 = vunpack.c.l.b16 %v2870
      %v3384 = vunpack.c.l.b16 %v2871
      %v3385 = vunpack.c.l.b16 %v2872
      %v3386 = vunpack.c.l.b16 %v2873
      %v3387 = vunpack.c.l.b16 %v2874
      %v3388 = vunpack.c.l.b16 %v2875
      %v3389 = vunpack.c.l.b16 %v2876
      %v3390 = vunpack.c.l.b16 %v2877
      %v3391 = vunpack.c.l.b16 %v2878
      %v3392 = vunpack.c.l.b16 %v2879
      %v3393 = vpack.c.b16 %v3138, %v3137
      %v3394 = vpack.c.b16 %v3140, %v3139
      %v3395 = vpack.c.b16 %v3142, %v3141
      %v3396 = vpack.c.b16 %v3144, %v3143
      %v3397 = vpack.c.b16 %v3146, %v3145
      %v3398 = vpack.c.b16 %v3148, %v3147
      %v3399 = vpack.c.b16 %v3150, %v3149
      %v3400 = vpack.c.b16 %v3152, %v3151
      %v3401 = vpack.c.b16 %v3154, %v3153
      %v3402 = vpack.c.b16 %v3156, %v3155
      %v3403 = vpack.c.b16 %v3158, %v3157
      %v3404 = vpack.c.b16 %v3160, %v3159
      %v3405 = vpack.c.b16 %v3162, %v3161
      %v3406 = vpack.c.b16 %v3164, %v3163
      %v3407 = vpack.c.b16 %v3166, %v3165
      %v3408 = vpack.c.b16 %v3168, %v3167
      %v3409 = vpack.c.b16 %v3170, %v3169
      %v3410 = vpack.c.b16 %v3172, %v3171
      %v3411 = vpack.c.b16 %v3174, %v3173
      %v3412 = vpack.c.b16 %v3176, %v3175
      %v3413 = vpack.c.b16 %v3178, %v3177
      %v3414 = vpack.c.b16 %v3180, %v3179
      %v3415 = vpack.c.b16 %v3182, %v3181
      %v3416 = vpack.c.b16 %v3184, %v3183
      %v3417 = vpack.c.b16 %v3186, %v3185
      %v3418 = vpack.c.b16 %v3188, %v3187
      %v3419 = vpack.c.b16 %v3190, %v3189
      %v3420 = vpack.c.b16 %v3192, %v3191
      %v3421 = vpack.c.b16 %v3194, %v3193
      %v3422 = vpack.c.b16 %v3196, %v3195
      %v3423 = vpack.c.b16 %v3198, %v3197
      %v3424 = vpack.c.b16 %v3200, %v3199
      %v3425 = vpack.c.b16 %v3202, %v3201
      %v3426 = vpack.c.b16 %v3204, %v3203
      %v3427 = vpack.c.b16 %v3206, %v3205
      %v3428 = vpack.c.b16 %v3208, %v3207
      %v3429 = vpack.c.b16 %v3210, %v3209
      %v3430 = vpack.c.b16 %v3212, %v3211
      %v3431 = vpack.c.b16 %v3214, %v3213
      %v3432 = vpack.c.b16 %v3216, %v3215
      %v3433 = vpack.c.b16 %v3218, %v3217
      %v3434 = vpack.c.b16 %v3220, %v3219
      %v3435 = vpack.c.b16 %v3222, %v3221
      %v3436 = vpack.c.b16 %v3224, %v3223
      %v3437 = vpack.c.b16 %v3226, %v3225
      %v3438 = vpack.c.b16 %v3228, %v3227
      %v3439 = vpack.c.b16 %v3230, %v3229
      %v3440 = vpack.c.b16 %v3232, %v3231
      %v3441 = vpack.c.b16 %v3234, %v3233
      %v3442 = vpack.c.b16 %v3236, %v3235
      %v3443 = vpack.c.b16 %v3238, %v3237
      %v3444 = vpack.c.b16 %v3240, %v3239
      %v3445 = vpack.c.b16 %v3242, %v3241
      %v3446 = vpack.c.b16 %v3244, %v3243
      %v3447 = vpack.c.b16 %v3246, %v3245
      %v3448 = vpack.c.b16 %v3248, %v3247
      %v3449 = vpack.c.b16 %v3250, %v3249
      %v3450 = vpack.c.b16 %v3252, %v3251
      %v3451 = vpack.c.b16 %v3254, %v3253
      %v3452 = vpack.c.b16 %v3256, %v3255
      %v3453 = vpack.c.b16 %v3258, %v3257
      %v3454 = vpack.c.b16 %v3260, %v3259
      %v3455 = vpack.c.b16 %v3262, %v3261
      %v3456 = vpack.c.b16 %v3264, %v3263
      %v3457 = vpack.c.b16 %v3266, %v3265
      %v3458 = vpack.c.b16 %v3268, %v3267
      %v3459 = vpack.c.b16 %v3270, %v3269
      %v3460 = vpack.c.b16 %v3272, %v3271
      %v3461 = vpack.c.b16 %v3274, %v3273
      %v3462 = vpack.c.b16 %v3276, %v3275
      %v3463 = vpack.c.b16 %v3278, %v3277
      %v3464 = vpack.c.b16 %v3280, %v3279
      %v3465 = vpack.c.b16 %v3282, %v3281
      %v3466 = vpack.c.b16 %v3284, %v3283
      %v3467 = vpack.c.b16 %v3286, %v3285
      %v3468 = vpack.c.b16 %v3288, %v3287
      %v3469 = vpack.c.b16 %v3290, %v3289
      %v3470 = vpack.c.b16 %v3292, %v3291
      %v3471 = vpack.c.b16 %v3294, %v3293
      %v3472 = vpack.c.b16 %v3296, %v3295
      %v3473 = vpack.c.b16 %v3298, %v3297
      %v3474 = vpack.c.b16 %v3300, %v3299
      %v3475 = vpack.c.b16 %v3302, %v3301
      %v3476 = vpack.c.b16 %v3304, %v3303
      %v3477 = vpack.c.b16 %v3306, %v3305
      %v3478 = vpack.c.b16 %v3308, %v3307
      %v3479 = vpack.c.b16 %v3310, %v3309
      %v3480 = vpack.c.b16 %v3312, %v3311
      %v3481 = vpack.c.b16 %v3314, %v3313
      %v3482 = vpack.c.b16 %v3316, %v3315
      %v3483 = vpack.c.b16 %v3318, %v3317
      %v3484 = vpack.c.b16 %v3320, %v3319
      %v3485 = vpack.c.b16 %v3322, %v3321
      %v3486 = vpack.c.b16 %v3324, %v3323
      %v3487 = vpack.c.b16 %v3326, %v3325
      %v3488 = vpack.c.b16 %v3328, %v3327
      %v3489 = vpack.c.b16 %v3330, %v3329
      %v3490 = vpack.c.b16 %v3332, %v3331
      %v3491 = vpack.c.b16 %v3334, %v3333
      %v3492 = vpack.c.b16 %v3336, %v3335
      %v3493 = vpack.c.b16 %v3338, %v3337
      %v3494 = vpack.c.b16 %v3340, %v3339
      %v3495 = vpack.c.b16 %v3342, %v3341
      %v3496 = vpack.c.b16 %v3344, %v3343
      %v3497 = vpack.c.b16 %v3346, %v3345
      %v3498 = vpack.c.b16 %v3348, %v3347
      %v3499 = vpack.c.b16 %v3350, %v3349
      %v3500 = vpack.c.b16 %v3352, %v3351
      %v3501 = vpack.c.b16 %v3354, %v3353
      %v3502 = vpack.c.b16 %v3356, %v3355
      %v3503 = vpack.c.b16 %v3358, %v3357
      %v3504 = vpack.c.b16 %v3360, %v3359
      %v3505 = vpack.c.b16 %v3362, %v3361
      %v3506 = vpack.c.b16 %v3364, %v3363
      %v3507 = vpack.c.b16 %v3366, %v3365
      %v3508 = vpack.c.b16 %v3368, %v3367
      %v3509 = vpack.c.b16 %v3370, %v3369
      %v3510 = vpack.c.b16 %v3372, %v3371
      %v3511 = vpack.c.b16 %v3374, %v3373
      %v3512 = vpack.c.b16 %v3376, %v3375
      %v3513 = vpack.c.b16 %v3378, %v3377
      %v3514 = vpack.c.b16 %v3380, %v3379
      %v3515 = vpack.c.b16 %v3382, %v3381
      %v3516 = vpack.c.b16 %v3384, %v3383
      %v3517 = vpack.c.b16 %v3386, %v3385
      %v3518 = vpack.c.b16 %v3388, %v3387
      %v3519 = vpack.c.b16 %v3390, %v3389
      %v3520 = vpack.c.b16 %v3392, %v3391
      %3649 = vmatpush.bf16.msra.mxu0 %v3400
      %3650 = vmatpush.bf16.msra.mxu0 %v3399
      %3651 = vmatpush.bf16.msra.mxu0 %v3398
      %3652 = vmatpush.bf16.msra.mxu0 %v3397
      %3653 = vmatpush.bf16.msra.mxu0 %v3396
      %3654 = vmatpush.bf16.msra.mxu0 %v3395
      %3655 = vmatpush.bf16.msra.mxu0 %v3394
      %3656 = vmatpush.bf16.msra.mxu0 %v3393
      %3657 = vmatmul.bf16.gmra.mxu0 %v2544
      %v3658 = vpop.f32.mrf.mxu0
      %v3659 = vadd.f32 %v2880, %v3658
      %v3660 = vpop.f32.mrf.mxu0
      %v3661 = vadd.f32 %v2880, %v3660
      %3662 = vmatmul.bf16.gmra.mxu0 %v2560
      %v3663 = vpop.f32.mrf.mxu0
      %v3664 = vadd.f32 %v2880, %v3663
      %v3665 = vpop.f32.mrf.mxu0
      %v3666 = vadd.f32 %v2880, %v3665
      %3667 = vmatmul.bf16.gmra.mxu0 %v2576
      %v3668 = vpop.f32.mrf.mxu0
      %v3669 = vadd.f32 %v2880, %v3668
      %v3670 = vpop.f32.mrf.mxu0
      %v3671 = vadd.f32 %v2880, %v3670
      %3672 = vmatmul.bf16.gmra.mxu0 %v2592
      %v3673 = vpop.f32.mrf.mxu0
      %v3674 = vadd.f32 %v2880, %v3673
      %v3675 = vpop.f32.mrf.mxu0
      %v3676 = vadd.f32 %v2880, %v3675
      %3677 = vmatmul.bf16.gmra.mxu0 %v2608
      %v3678 = vpop.f32.mrf.mxu0
      %v3679 = vadd.f32 %v2880, %v3678
      %v3680 = vpop.f32.mrf.mxu0
      %v3681 = vadd.f32 %v2880, %v3680
      %3682 = vdwg.mxu0
      %3683 = vmatpush.bf16.msra.mxu0 %v3408
      %3684 = vmatpush.bf16.msra.mxu0 %v3407
      %3685 = vmatpush.bf16.msra.mxu0 %v3406
      %3686 = vmatpush.bf16.msra.mxu0 %v3405
      %3687 = vmatpush.bf16.msra.mxu0 %v3404
      %3688 = vmatpush.bf16.msra.mxu0 %v3403
      %3689 = vmatpush.bf16.msra.mxu0 %v3402
      %3690 = vmatpush.bf16.msra.mxu0 %v3401
      %3691 = vmatmul.bf16.gmra.mxu0 %v2545
      %v3692 = vpop.f32.mrf.mxu0
      %v3693 = vadd.f32 %v3659, %v3692
      %v3694 = vpop.f32.mrf.mxu0
      %v3695 = vadd.f32 %v3661, %v3694
      %3696 = vmatmul.bf16.gmra.mxu0 %v2561
      %v3697 = vpop.f32.mrf.mxu0
      %v3698 = vadd.f32 %v3664, %v3697
      %v3699 = vpop.f32.mrf.mxu0
      %v3700 = vadd.f32 %v3666, %v3699
      %3701 = vmatmul.bf16.gmra.mxu0 %v2577
      %v3702 = vpop.f32.mrf.mxu0
      %v3703 = vadd.f32 %v3669, %v3702
      %v3704 = vpop.f32.mrf.mxu0
      %v3705 = vadd.f32 %v3671, %v3704
      %3706 = vmatmul.bf16.gmra.mxu0 %v2593
      %v3707 = vpop.f32.mrf.mxu0
      %v3708 = vadd.f32 %v3674, %v3707
      %v3709 = vpop.f32.mrf.mxu0
      %v3710 = vadd.f32 %v3676, %v3709
      %3711 = vmatmul.bf16.gmra.mxu0 %v2609
      %v3712 = vpop.f32.mrf.mxu0
      %v3713 = vadd.f32 %v3679, %v3712
      %v3714 = vpop.f32.mrf.mxu0
      %v3715 = vadd.f32 %v3681, %v3714
      %3716 = vdwg.mxu0
      %3717 = vmatpush.bf16.msra.mxu0 %v3416
      %3718 = vmatpush.bf16.msra.mxu0 %v3415
      %3719 = vmatpush.bf16.msra.mxu0 %v3414
      %3720 = vmatpush.bf16.msra.mxu0 %v3413
      %3721 = vmatpush.bf16.msra.mxu0 %v3412
      %3722 = vmatpush.bf16.msra.mxu0 %v3411
      %3723 = vmatpush.bf16.msra.mxu0 %v3410
      %3724 = vmatpush.bf16.msra.mxu0 %v3409
      %3725 = vmatmul.bf16.gmra.mxu0 %v2546
      %v3726 = vpop.f32.mrf.mxu0
      %v3727 = vadd.f32 %v3693, %v3726
      %v3728 = vpop.f32.mrf.mxu0
      %v3729 = vadd.f32 %v3695, %v3728
      %3730 = vmatmul.bf16.gmra.mxu0 %v2562
      %v3731 = vpop.f32.mrf.mxu0
      %v3732 = vadd.f32 %v3698, %v3731
      %v3733 = vpop.f32.mrf.mxu0
      %v3734 = vadd.f32 %v3700, %v3733
      %3735 = vmatmul.bf16.gmra.mxu0 %v2578
      %v3736 = vpop.f32.mrf.mxu0
      %v3737 = vadd.f32 %v3703, %v3736
      %v3738 = vpop.f32.mrf.mxu0
      %v3739 = vadd.f32 %v3705, %v3738
      %3740 = vmatmul.bf16.gmra.mxu0 %v2594
      %v3741 = vpop.f32.mrf.mxu0
      %v3742 = vadd.f32 %v3708, %v3741
      %v3743 = vpop.f32.mrf.mxu0
      %v3744 = vadd.f32 %v3710, %v3743
      %3745 = vmatmul.bf16.gmra.mxu0 %v2610
      %v3746 = vpop.f32.mrf.mxu0
      %v3747 = vadd.f32 %v3713, %v3746
      %v3748 = vpop.f32.mrf.mxu0
      %v3749 = vadd.f32 %v3715, %v3748
      %3750 = vdwg.mxu0
      %3751 = vmatpush.bf16.msra.mxu0 %v3424
      %3752 = vmatpush.bf16.msra.mxu0 %v3423
      %3753 = vmatpush.bf16.msra.mxu0 %v3422
      %3754 = vmatpush.bf16.msra.mxu0 %v3421
      %3755 = vmatpush.bf16.msra.mxu0 %v3420
      %3756 = vmatpush.bf16.msra.mxu0 %v3419
      %3757 = vmatpush.bf16.msra.mxu0 %v3418
      %3758 = vmatpush.bf16.msra.mxu0 %v3417
      %3759 = vmatmul.bf16.gmra.mxu0 %v2547
      %v3760 = vpop.f32.mrf.mxu0
      %v3761 = vadd.f32 %v3727, %v3760
      %v3762 = vpop.f32.mrf.mxu0
      %v3763 = vadd.f32 %v3729, %v3762
      %3764 = vmatmul.bf16.gmra.mxu0 %v2563
      %v3765 = vpop.f32.mrf.mxu0
      %v3766 = vadd.f32 %v3732, %v3765
      %v3767 = vpop.f32.mrf.mxu0
      %v3768 = vadd.f32 %v3734, %v3767
      %3769 = vmatmul.bf16.gmra.mxu0 %v2579
      %v3770 = vpop.f32.mrf.mxu0
      %v3771 = vadd.f32 %v3737, %v3770
      %v3772 = vpop.f32.mrf.mxu0
      %v3773 = vadd.f32 %v3739, %v3772
      %3774 = vmatmul.bf16.gmra.mxu0 %v2595
      %v3775 = vpop.f32.mrf.mxu0
      %v3776 = vadd.f32 %v3742, %v3775
      %v3777 = vpop.f32.mrf.mxu0
      %v3778 = vadd.f32 %v3744, %v3777
      %3779 = vmatmul.bf16.gmra.mxu0 %v2611
      %v3780 = vpop.f32.mrf.mxu0
      %v3781 = vadd.f32 %v3747, %v3780
      %v3782 = vpop.f32.mrf.mxu0
      %v3783 = vadd.f32 %v3749, %v3782
      %3784 = vdwg.mxu0
      %3785 = vmatpush.bf16.msra.mxu0 %v3432
      %3786 = vmatpush.bf16.msra.mxu0 %v3431
      %3787 = vmatpush.bf16.msra.mxu0 %v3430
      %3788 = vmatpush.bf16.msra.mxu0 %v3429
      %3789 = vmatpush.bf16.msra.mxu0 %v3428
      %3790 = vmatpush.bf16.msra.mxu0 %v3427
      %3791 = vmatpush.bf16.msra.mxu0 %v3426
      %3792 = vmatpush.bf16.msra.mxu0 %v3425
      %3793 = vmatmul.bf16.gmra.mxu0 %v2548
      %v3794 = vpop.f32.mrf.mxu0
      %v3795 = vadd.f32 %v3761, %v3794
      %v3796 = vpop.f32.mrf.mxu0
      %v3797 = vadd.f32 %v3763, %v3796
      %3798 = vmatmul.bf16.gmra.mxu0 %v2564
      %v3799 = vpop.f32.mrf.mxu0
      %v3800 = vadd.f32 %v3766, %v3799
      %v3801 = vpop.f32.mrf.mxu0
      %v3802 = vadd.f32 %v3768, %v3801
      %3803 = vmatmul.bf16.gmra.mxu0 %v2580
      %v3804 = vpop.f32.mrf.mxu0
      %v3805 = vadd.f32 %v3771, %v3804
      %v3806 = vpop.f32.mrf.mxu0
      %v3807 = vadd.f32 %v3773, %v3806
      %3808 = vmatmul.bf16.gmra.mxu0 %v2596
      %v3809 = vpop.f32.mrf.mxu0
      %v3810 = vadd.f32 %v3776, %v3809
      %v3811 = vpop.f32.mrf.mxu0
      %v3812 = vadd.f32 %v3778, %v3811
      %3813 = vmatmul.bf16.gmra.mxu0 %v2612
      %v3814 = vpop.f32.mrf.mxu0
      %v3815 = vadd.f32 %v3781, %v3814
      %v3816 = vpop.f32.mrf.mxu0
      %v3817 = vadd.f32 %v3783, %v3816
      %3818 = vdwg.mxu0
      %3819 = vmatpush.bf16.msra.mxu0 %v3440
      %3820 = vmatpush.bf16.msra.mxu0 %v3439
      %3821 = vmatpush.bf16.msra.mxu0 %v3438
      %3822 = vmatpush.bf16.msra.mxu0 %v3437
      %3823 = vmatpush.bf16.msra.mxu0 %v3436
      %3824 = vmatpush.bf16.msra.mxu0 %v3435
      %3825 = vmatpush.bf16.msra.mxu0 %v3434
      %3826 = vmatpush.bf16.msra.mxu0 %v3433
      %3827 = vmatmul.bf16.gmra.mxu0 %v2549
      %v3828 = vpop.f32.mrf.mxu0
      %v3829 = vadd.f32 %v3795, %v3828
      %v3830 = vpop.f32.mrf.mxu0
      %v3831 = vadd.f32 %v3797, %v3830
      %3832 = vmatmul.bf16.gmra.mxu0 %v2565
      %v3833 = vpop.f32.mrf.mxu0
      %v3834 = vadd.f32 %v3800, %v3833
      %v3835 = vpop.f32.mrf.mxu0
      %v3836 = vadd.f32 %v3802, %v3835
      %3837 = vmatmul.bf16.gmra.mxu0 %v2581
      %v3838 = vpop.f32.mrf.mxu0
      %v3839 = vadd.f32 %v3805, %v3838
      %v3840 = vpop.f32.mrf.mxu0
      %v3841 = vadd.f32 %v3807, %v3840
      %3842 = vmatmul.bf16.gmra.mxu0 %v2597
      %v3843 = vpop.f32.mrf.mxu0
      %v3844 = vadd.f32 %v3810, %v3843
      %v3845 = vpop.f32.mrf.mxu0
      %v3846 = vadd.f32 %v3812, %v3845
      %3847 = vmatmul.bf16.gmra.mxu0 %v2613
      %v3848 = vpop.f32.mrf.mxu0
      %v3849 = vadd.f32 %v3815, %v3848
      %v3850 = vpop.f32.mrf.mxu0
      %v3851 = vadd.f32 %v3817, %v3850
      %3852 = vdwg.mxu0
      %3853 = vmatpush.bf16.msra.mxu0 %v3448
      %3854 = vmatpush.bf16.msra.mxu0 %v3447
      %3855 = vmatpush.bf16.msra.mxu0 %v3446
      %3856 = vmatpush.bf16.msra.mxu0 %v3445
      %3857 = vmatpush.bf16.msra.mxu0 %v3444
      %3858 = vmatpush.bf16.msra.mxu0 %v3443
      %3859 = vmatpush.bf16.msra.mxu0 %v3442
      %3860 = vmatpush.bf16.msra.mxu0 %v3441
      %3861 = vmatmul.bf16.gmra.mxu0 %v2550
      %v3862 = vpop.f32.mrf.mxu0
      %v3863 = vadd.f32 %v3829, %v3862
      %v3864 = vpop.f32.mrf.mxu0
      %v3865 = vadd.f32 %v3831, %v3864
      %3866 = vmatmul.bf16.gmra.mxu0 %v2566
      %v3867 = vpop.f32.mrf.mxu0
      %v3868 = vadd.f32 %v3834, %v3867
      %v3869 = vpop.f32.mrf.mxu0
      %v3870 = vadd.f32 %v3836, %v3869
      %3871 = vmatmul.bf16.gmra.mxu0 %v2582
      %v3872 = vpop.f32.mrf.mxu0
      %v3873 = vadd.f32 %v3839, %v3872
      %v3874 = vpop.f32.mrf.mxu0
      %v3875 = vadd.f32 %v3841, %v3874
      %3876 = vmatmul.bf16.gmra.mxu0 %v2598
      %v3877 = vpop.f32.mrf.mxu0
      %v3878 = vadd.f32 %v3844, %v3877
      %v3879 = vpop.f32.mrf.mxu0
      %v3880 = vadd.f32 %v3846, %v3879
      %3881 = vmatmul.bf16.gmra.mxu0 %v2614
      %v3882 = vpop.f32.mrf.mxu0
      %v3883 = vadd.f32 %v3849, %v3882
      %v3884 = vpop.f32.mrf.mxu0
      %v3885 = vadd.f32 %v3851, %v3884
      %3886 = vdwg.mxu0
      %3887 = vmatpush.bf16.msra.mxu0 %v3456
      %3888 = vmatpush.bf16.msra.mxu0 %v3455
      %3889 = vmatpush.bf16.msra.mxu0 %v3454
      %3890 = vmatpush.bf16.msra.mxu0 %v3453
      %3891 = vmatpush.bf16.msra.mxu0 %v3452
      %3892 = vmatpush.bf16.msra.mxu0 %v3451
      %3893 = vmatpush.bf16.msra.mxu0 %v3450
      %3894 = vmatpush.bf16.msra.mxu0 %v3449
      %3895 = vmatmul.bf16.gmra.mxu0 %v2551
      %v3896 = vpop.f32.mrf.mxu0
      %v3897 = vadd.f32 %v3863, %v3896
      %v3898 = vpop.f32.mrf.mxu0
      %v3899 = vadd.f32 %v3865, %v3898
      %3900 = vmatmul.bf16.gmra.mxu0 %v2567
      %v3901 = vpop.f32.mrf.mxu0
      %v3902 = vadd.f32 %v3868, %v3901
      %v3903 = vpop.f32.mrf.mxu0
      %v3904 = vadd.f32 %v3870, %v3903
      %3905 = vmatmul.bf16.gmra.mxu0 %v2583
      %v3906 = vpop.f32.mrf.mxu0
      %v3907 = vadd.f32 %v3873, %v3906
      %v3908 = vpop.f32.mrf.mxu0
      %v3909 = vadd.f32 %v3875, %v3908
      %3910 = vmatmul.bf16.gmra.mxu0 %v2599
      %v3911 = vpop.f32.mrf.mxu0
      %v3912 = vadd.f32 %v3878, %v3911
      %v3913 = vpop.f32.mrf.mxu0
      %v3914 = vadd.f32 %v3880, %v3913
      %3915 = vmatmul.bf16.gmra.mxu0 %v2615
      %v3916 = vpop.f32.mrf.mxu0
      %v3917 = vadd.f32 %v3883, %v3916
      %v3918 = vpop.f32.mrf.mxu0
      %v3919 = vadd.f32 %v3885, %v3918
      %3920 = vdwg.mxu0
      %3921 = vmatpush.bf16.msra.mxu0 %v3464
      %3922 = vmatpush.bf16.msra.mxu0 %v3463
      %3923 = vmatpush.bf16.msra.mxu0 %v3462
      %3924 = vmatpush.bf16.msra.mxu0 %v3461
      %3925 = vmatpush.bf16.msra.mxu0 %v3460
      %3926 = vmatpush.bf16.msra.mxu0 %v3459
      %3927 = vmatpush.bf16.msra.mxu0 %v3458
      %3928 = vmatpush.bf16.msra.mxu0 %v3457
      %3929 = vmatmul.bf16.gmra.mxu0 %v2552
      %v3930 = vpop.f32.mrf.mxu0
      %v3931 = vadd.f32 %v3897, %v3930
      %v3932 = vpop.f32.mrf.mxu0
      %v3933 = vadd.f32 %v3899, %v3932
      %3934 = vmatmul.bf16.gmra.mxu0 %v2568
      %v3935 = vpop.f32.mrf.mxu0
      %v3936 = vadd.f32 %v3902, %v3935
      %v3937 = vpop.f32.mrf.mxu0
      %v3938 = vadd.f32 %v3904, %v3937
      %3939 = vmatmul.bf16.gmra.mxu0 %v2584
      %v3940 = vpop.f32.mrf.mxu0
      %v3941 = vadd.f32 %v3907, %v3940
      %v3942 = vpop.f32.mrf.mxu0
      %v3943 = vadd.f32 %v3909, %v3942
      %3944 = vmatmul.bf16.gmra.mxu0 %v2600
      %v3945 = vpop.f32.mrf.mxu0
      %v3946 = vadd.f32 %v3912, %v3945
      %v3947 = vpop.f32.mrf.mxu0
      %v3948 = vadd.f32 %v3914, %v3947
      %3949 = vmatmul.bf16.gmra.mxu0 %v2616
      %v3950 = vpop.f32.mrf.mxu0
      %v3951 = vadd.f32 %v3917, %v3950
      %v3952 = vpop.f32.mrf.mxu0
      %v3953 = vadd.f32 %v3919, %v3952
      %3954 = vdwg.mxu0
      %3955 = vmatpush.bf16.msra.mxu0 %v3472
      %3956 = vmatpush.bf16.msra.mxu0 %v3471
      %3957 = vmatpush.bf16.msra.mxu0 %v3470
      %3958 = vmatpush.bf16.msra.mxu0 %v3469
      %3959 = vmatpush.bf16.msra.mxu0 %v3468
      %3960 = vmatpush.bf16.msra.mxu0 %v3467
      %3961 = vmatpush.bf16.msra.mxu0 %v3466
      %3962 = vmatpush.bf16.msra.mxu0 %v3465
      %3963 = vmatmul.bf16.gmra.mxu0 %v2553
      %v3964 = vpop.f32.mrf.mxu0
      %v3965 = vadd.f32 %v3931, %v3964
      %v3966 = vpop.f32.mrf.mxu0
      %v3967 = vadd.f32 %v3933, %v3966
      %3968 = vmatmul.bf16.gmra.mxu0 %v2569
      %v3969 = vpop.f32.mrf.mxu0
      %v3970 = vadd.f32 %v3936, %v3969
      %v3971 = vpop.f32.mrf.mxu0
      %v3972 = vadd.f32 %v3938, %v3971
      %3973 = vmatmul.bf16.gmra.mxu0 %v2585
      %v3974 = vpop.f32.mrf.mxu0
      %v3975 = vadd.f32 %v3941, %v3974
      %v3976 = vpop.f32.mrf.mxu0
      %v3977 = vadd.f32 %v3943, %v3976
      %3978 = vmatmul.bf16.gmra.mxu0 %v2601
      %v3979 = vpop.f32.mrf.mxu0
      %v3980 = vadd.f32 %v3946, %v3979
      %v3981 = vpop.f32.mrf.mxu0
      %v3982 = vadd.f32 %v3948, %v3981
      %3983 = vmatmul.bf16.gmra.mxu0 %v2617
      %v3984 = vpop.f32.mrf.mxu0
      %v3985 = vadd.f32 %v3951, %v3984
      %v3986 = vpop.f32.mrf.mxu0
      %v3987 = vadd.f32 %v3953, %v3986
      %3988 = vdwg.mxu0
      %3989 = vmatpush.bf16.msra.mxu0 %v3480
      %3990 = vmatpush.bf16.msra.mxu0 %v3479
      %3991 = vmatpush.bf16.msra.mxu0 %v3478
      %3992 = vmatpush.bf16.msra.mxu0 %v3477
      %3993 = vmatpush.bf16.msra.mxu0 %v3476
      %3994 = vmatpush.bf16.msra.mxu0 %v3475
      %3995 = vmatpush.bf16.msra.mxu0 %v3474
      %3996 = vmatpush.bf16.msra.mxu0 %v3473
      %3997 = vmatmul.bf16.gmra.mxu0 %v2554
      %v3998 = vpop.f32.mrf.mxu0
      %v3999 = vadd.f32 %v3965, %v3998
      %v4000 = vpop.f32.mrf.mxu0
      %v4001 = vadd.f32 %v3967, %v4000
      %4002 = vmatmul.bf16.gmra.mxu0 %v2570
      %v4003 = vpop.f32.mrf.mxu0
      %v4004 = vadd.f32 %v3970, %v4003
      %v4005 = vpop.f32.mrf.mxu0
      %v4006 = vadd.f32 %v3972, %v4005
      %4007 = vmatmul.bf16.gmra.mxu0 %v2586
      %v4008 = vpop.f32.mrf.mxu0
      %v4009 = vadd.f32 %v3975, %v4008
      %v4010 = vpop.f32.mrf.mxu0
      %v4011 = vadd.f32 %v3977, %v4010
      %4012 = vmatmul.bf16.gmra.mxu0 %v2602
      %v4013 = vpop.f32.mrf.mxu0
      %v4014 = vadd.f32 %v3980, %v4013
      %v4015 = vpop.f32.mrf.mxu0
      %v4016 = vadd.f32 %v3982, %v4015
      %4017 = vmatmul.bf16.gmra.mxu0 %v2618
      %v4018 = vpop.f32.mrf.mxu0
      %v4019 = vadd.f32 %v3985, %v4018
      %v4020 = vpop.f32.mrf.mxu0
      %v4021 = vadd.f32 %v3987, %v4020
      %4022 = vdwg.mxu0
      %4023 = vmatpush.bf16.msra.mxu0 %v3488
      %4024 = vmatpush.bf16.msra.mxu0 %v3487
      %4025 = vmatpush.bf16.msra.mxu0 %v3486
      %4026 = vmatpush.bf16.msra.mxu0 %v3485
      %4027 = vmatpush.bf16.msra.mxu0 %v3484
      %4028 = vmatpush.bf16.msra.mxu0 %v3483
      %4029 = vmatpush.bf16.msra.mxu0 %v3482
      %4030 = vmatpush.bf16.msra.mxu0 %v3481
      %4031 = vmatmul.bf16.gmra.mxu0 %v2555
      %v4032 = vpop.f32.mrf.mxu0
      %v4033 = vadd.f32 %v3999, %v4032
      %v4034 = vpop.f32.mrf.mxu0
      %v4035 = vadd.f32 %v4001, %v4034
      %4036 = vmatmul.bf16.gmra.mxu0 %v2571
      %v4037 = vpop.f32.mrf.mxu0
      %v4038 = vadd.f32 %v4004, %v4037
      %v4039 = vpop.f32.mrf.mxu0
      %v4040 = vadd.f32 %v4006, %v4039
      %4041 = vmatmul.bf16.gmra.mxu0 %v2587
      %v4042 = vpop.f32.mrf.mxu0
      %v4043 = vadd.f32 %v4009, %v4042
      %v4044 = vpop.f32.mrf.mxu0
      %v4045 = vadd.f32 %v4011, %v4044
      %4046 = vmatmul.bf16.gmra.mxu0 %v2603
      %v4047 = vpop.f32.mrf.mxu0
      %v4048 = vadd.f32 %v4014, %v4047
      %v4049 = vpop.f32.mrf.mxu0
      %v4050 = vadd.f32 %v4016, %v4049
      %4051 = vmatmul.bf16.gmra.mxu0 %v2619
      %v4052 = vpop.f32.mrf.mxu0
      %v4053 = vadd.f32 %v4019, %v4052
      %v4054 = vpop.f32.mrf.mxu0
      %v4055 = vadd.f32 %v4021, %v4054
      %4056 = vdwg.mxu0
      %4057 = vmatpush.bf16.msra.mxu0 %v3496
      %4058 = vmatpush.bf16.msra.mxu0 %v3495
      %4059 = vmatpush.bf16.msra.mxu0 %v3494
      %4060 = vmatpush.bf16.msra.mxu0 %v3493
      %4061 = vmatpush.bf16.msra.mxu0 %v3492
      %4062 = vmatpush.bf16.msra.mxu0 %v3491
      %4063 = vmatpush.bf16.msra.mxu0 %v3490
      %4064 = vmatpush.bf16.msra.mxu0 %v3489
      %4065 = vmatmul.bf16.gmra.mxu0 %v2556
      %v4066 = vpop.f32.mrf.mxu0
      %v4067 = vadd.f32 %v4033, %v4066
      %v4068 = vpop.f32.mrf.mxu0
      %v4069 = vadd.f32 %v4035, %v4068
      %4070 = vmatmul.bf16.gmra.mxu0 %v2572
      %v4071 = vpop.f32.mrf.mxu0
      %v4072 = vadd.f32 %v4038, %v4071
      %v4073 = vpop.f32.mrf.mxu0
      %v4074 = vadd.f32 %v4040, %v4073
      %4075 = vmatmul.bf16.gmra.mxu0 %v2588
      %v4076 = vpop.f32.mrf.mxu0
      %v4077 = vadd.f32 %v4043, %v4076
      %v4078 = vpop.f32.mrf.mxu0
      %v4079 = vadd.f32 %v4045, %v4078
      %4080 = vmatmul.bf16.gmra.mxu0 %v2604
      %v4081 = vpop.f32.mrf.mxu0
      %v4082 = vadd.f32 %v4048, %v4081
      %v4083 = vpop.f32.mrf.mxu0
      %v4084 = vadd.f32 %v4050, %v4083
      %4085 = vmatmul.bf16.gmra.mxu0 %v2620
      %v4086 = vpop.f32.mrf.mxu0
      %v4087 = vadd.f32 %v4053, %v4086
      %v4088 = vpop.f32.mrf.mxu0
      %v4089 = vadd.f32 %v4055, %v4088
      %4090 = vdwg.mxu0
      %4091 = vmatpush.bf16.msra.mxu0 %v3504
      %4092 = vmatpush.bf16.msra.mxu0 %v3503
      %4093 = vmatpush.bf16.msra.mxu0 %v3502
      %4094 = vmatpush.bf16.msra.mxu0 %v3501
      %4095 = vmatpush.bf16.msra.mxu0 %v3500
      %4096 = vmatpush.bf16.msra.mxu0 %v3499
      %4097 = vmatpush.bf16.msra.mxu0 %v3498
      %4098 = vmatpush.bf16.msra.mxu0 %v3497
      %4099 = vmatmul.bf16.gmra.mxu0 %v2557
      %v4100 = vpop.f32.mrf.mxu0
      %v4101 = vadd.f32 %v4067, %v4100
      %v4102 = vpop.f32.mrf.mxu0
      %v4103 = vadd.f32 %v4069, %v4102
      %4104 = vmatmul.bf16.gmra.mxu0 %v2573
      %v4105 = vpop.f32.mrf.mxu0
      %v4106 = vadd.f32 %v4072, %v4105
      %v4107 = vpop.f32.mrf.mxu0
      %v4108 = vadd.f32 %v4074, %v4107
      %4109 = vmatmul.bf16.gmra.mxu0 %v2589
      %v4110 = vpop.f32.mrf.mxu0
      %v4111 = vadd.f32 %v4077, %v4110
      %v4112 = vpop.f32.mrf.mxu0
      %v4113 = vadd.f32 %v4079, %v4112
      %4114 = vmatmul.bf16.gmra.mxu0 %v2605
      %v4115 = vpop.f32.mrf.mxu0
      %v4116 = vadd.f32 %v4082, %v4115
      %v4117 = vpop.f32.mrf.mxu0
      %v4118 = vadd.f32 %v4084, %v4117
      %4119 = vmatmul.bf16.gmra.mxu0 %v2621
      %v4120 = vpop.f32.mrf.mxu0
      %v4121 = vadd.f32 %v4087, %v4120
      %v4122 = vpop.f32.mrf.mxu0
      %v4123 = vadd.f32 %v4089, %v4122
      %4124 = vdwg.mxu0
      %4125 = vmatpush.bf16.msra.mxu0 %v3512
      %4126 = vmatpush.bf16.msra.mxu0 %v3511
      %4127 = vmatpush.bf16.msra.mxu0 %v3510
      %4128 = vmatpush.bf16.msra.mxu0 %v3509
      %4129 = vmatpush.bf16.msra.mxu0 %v3508
      %4130 = vmatpush.bf16.msra.mxu0 %v3507
      %4131 = vmatpush.bf16.msra.mxu0 %v3506
      %4132 = vmatpush.bf16.msra.mxu0 %v3505
      %4133 = vmatmul.bf16.gmra.mxu0 %v2558
      %v4134 = vpop.f32.mrf.mxu0
      %v4135 = vadd.f32 %v4101, %v4134
      %v4136 = vpop.f32.mrf.mxu0
      %v4137 = vadd.f32 %v4103, %v4136
      %4138 = vmatmul.bf16.gmra.mxu0 %v2574
      %v4139 = vpop.f32.mrf.mxu0
      %v4140 = vadd.f32 %v4106, %v4139
      %v4141 = vpop.f32.mrf.mxu0
      %v4142 = vadd.f32 %v4108, %v4141
      %4143 = vmatmul.bf16.gmra.mxu0 %v2590
      %v4144 = vpop.f32.mrf.mxu0
      %v4145 = vadd.f32 %v4111, %v4144
      %v4146 = vpop.f32.mrf.mxu0
      %v4147 = vadd.f32 %v4113, %v4146
      %4148 = vmatmul.bf16.gmra.mxu0 %v2606
      %v4149 = vpop.f32.mrf.mxu0
      %v4150 = vadd.f32 %v4116, %v4149
      %v4151 = vpop.f32.mrf.mxu0
      %v4152 = vadd.f32 %v4118, %v4151
      %4153 = vmatmul.bf16.gmra.mxu0 %v2622
      %v4154 = vpop.f32.mrf.mxu0
      %v4155 = vadd.f32 %v4121, %v4154
      %v4156 = vpop.f32.mrf.mxu0
      %v4157 = vadd.f32 %v4123, %v4156
      %4158 = vdwg.mxu0
      %4159 = vmatpush.bf16.msra.mxu0 %v3520
      %4160 = vmatpush.bf16.msra.mxu0 %v3519
      %4161 = vmatpush.bf16.msra.mxu0 %v3518
      %4162 = vmatpush.bf16.msra.mxu0 %v3517
      %4163 = vmatpush.bf16.msra.mxu0 %v3516
      %4164 = vmatpush.bf16.msra.mxu0 %v3515
      %4165 = vmatpush.bf16.msra.mxu0 %v3514
      %4166 = vmatpush.bf16.msra.mxu0 %v3513
      %4167 = vmatmul.bf16.gmra.mxu0 %v2559
      %v4168 = vpop.f32.mrf.mxu0
      %v4169 = vadd.f32 %v4135, %v4168
      %v4170 = vpop.f32.mrf.mxu0
      %v4171 = vadd.f32 %v4137, %v4170
      %4172 = vmatmul.bf16.gmra.mxu0 %v2575
      %v4173 = vpop.f32.mrf.mxu0
      %v4174 = vadd.f32 %v4140, %v4173
      %v4175 = vpop.f32.mrf.mxu0
      %v4176 = vadd.f32 %v4142, %v4175
      %4177 = vmatmul.bf16.gmra.mxu0 %v2591
      %v4178 = vpop.f32.mrf.mxu0
      %v4179 = vadd.f32 %v4145, %v4178
      %v4180 = vpop.f32.mrf.mxu0
      %v4181 = vadd.f32 %v4147, %v4180
      %4182 = vmatmul.bf16.gmra.mxu0 %v2607
      %v4183 = vpop.f32.mrf.mxu0
      %v4184 = vadd.f32 %v4150, %v4183
      %v4185 = vpop.f32.mrf.mxu0
      %v4186 = vadd.f32 %v4152, %v4185
      %4187 = vmatmul.bf16.gmra.mxu0 %v2623
      %v4188 = vpop.f32.mrf.mxu0
      %v4189 = vadd.f32 %v4155, %v4188
      %v4190 = vpop.f32.mrf.mxu0
      %v4191 = vadd.f32 %v4157, %v4190
      %4192 = vdwg.mxu0
      %v4193 = vadd.f32 %v1390, %v4169
      %v4194 = vadd.f32 %v1391, %v4171
      %v4195 = vadd.f32 %v1392, %v4174
      %v4196 = vadd.f32 %v1393, %v4176
      %v4197 = vadd.f32 %v1394, %v4179
      %v4198 = vadd.f32 %v1395, %v4181
      %v4199 = vadd.f32 %v1396, %v4184
      %v4200 = vadd.f32 %v1397, %v4186
      %v4201 = vadd.f32 %v1398, %v4189
      %v4202 = vadd.f32 %v1399, %v4191
      %v4203 = vsel %vm635, %v4193, 0.0
      %4204 = vadd.xlane.f32.xlu0 %v4203
      %v4205 = vpop.xlane.xlu0 %4204
      %v4206 = vsel %vm635, %v4194, 0.0
      %4207 = vadd.xlane.f32.xlu0 %v4206
      %v4208 = vpop.xlane.xlu0 %4207
      %v4209 = vsel %vm635, %v4195, 0.0
      %4210 = vadd.xlane.f32.xlu0 %v4209
      %v4211 = vpop.xlane.xlu0 %4210
      %v4212 = vsel %vm635, %v4196, 0.0
      %4213 = vadd.xlane.f32.xlu0 %v4212
      %v4214 = vpop.xlane.xlu0 %4213
      %v4215 = vsel %vm635, %v4197, 0.0
      %4216 = vadd.xlane.f32.xlu0 %v4215
      %v4217 = vpop.xlane.xlu0 %4216
      %v4218 = vsel %vm635, %v4198, 0.0
      %4219 = vadd.xlane.f32.xlu0 %v4218
      %v4220 = vpop.xlane.xlu0 %4219
      %v4221 = vsel %vm635, %v4199, 0.0
      %4222 = vadd.xlane.f32.xlu0 %v4221
      %v4223 = vpop.xlane.xlu0 %4222
      %v4224 = vsel %vm635, %v4200, 0.0
      %4225 = vadd.xlane.f32.xlu0 %v4224
      %v4226 = vpop.xlane.xlu0 %4225
      %v4227 = vsel %vm635, %v4201, 0.0
      %4228 = vadd.xlane.f32.xlu0 %v4227
      %v4229 = vpop.xlane.xlu0 %4228
      %v4230 = vsel %vm635, %v4202, 0.0
      %4231 = vadd.xlane.f32.xlu0 %v4230
      %v4232 = vpop.xlane.xlu0 %4231
      %v4233 = vmul.f32 %v4205, %v1187
      %v4234 = vmul.f32 %v4208, %v1187
      %v4235 = vmul.f32 %v4211, %v1187
      %v4236 = vmul.f32 %v4214, %v1187
      %v4237 = vmul.f32 %v4217, %v1187
      %v4238 = vmul.f32 %v4220, %v1187
      %v4239 = vmul.f32 %v4223, %v1187
      %v4240 = vmul.f32 %v4226, %v1187
      %v4241 = vmul.f32 %v4229, %v1187
      %v4242 = vmul.f32 %v4232, %v1187
      %v4243 = vsub.f32 %v4193, %v4233
      %v4244 = vsub.f32 %v4194, %v4234
      %v4245 = vsub.f32 %v4195, %v4235
      %v4246 = vsub.f32 %v4196, %v4236
      %v4247 = vsub.f32 %v4197, %v4237
      %v4248 = vsub.f32 %v4198, %v4238
      %v4249 = vsub.f32 %v4199, %v4239
      %v4250 = vsub.f32 %v4200, %v4240
      %v4251 = vsub.f32 %v4201, %v4241
      %v4252 = vsub.f32 %v4202, %v4242
      %v4253 = vmul.f32 %v4243, %v4243
      %v4254 = vmul.f32 %v4244, %v4244
      %v4255 = vmul.f32 %v4245, %v4245
      %v4256 = vmul.f32 %v4246, %v4246
      %v4257 = vmul.f32 %v4247, %v4247
      %v4258 = vmul.f32 %v4248, %v4248
      %v4259 = vmul.f32 %v4249, %v4249
      %v4260 = vmul.f32 %v4250, %v4250
      %v4261 = vmul.f32 %v4251, %v4251
      %v4262 = vmul.f32 %v4252, %v4252
      %v4263 = vsel %vm635, %v4253, 0.0
      %4264 = vadd.xlane.f32.xlu0 %v4263
      %v4265 = vpop.xlane.xlu0 %4264
      %v4266 = vsel %vm635, %v4254, 0.0
      %4267 = vadd.xlane.f32.xlu0 %v4266
      %v4268 = vpop.xlane.xlu0 %4267
      %v4269 = vsel %vm635, %v4255, 0.0
      %4270 = vadd.xlane.f32.xlu0 %v4269
      %v4271 = vpop.xlane.xlu0 %4270
      %v4272 = vsel %vm635, %v4256, 0.0
      %4273 = vadd.xlane.f32.xlu0 %v4272
      %v4274 = vpop.xlane.xlu0 %4273
      %v4275 = vsel %vm635, %v4257, 0.0
      %4276 = vadd.xlane.f32.xlu0 %v4275
      %v4277 = vpop.xlane.xlu0 %4276
      %v4278 = vsel %vm635, %v4258, 0.0
      %4279 = vadd.xlane.f32.xlu0 %v4278
      %v4280 = vpop.xlane.xlu0 %4279
      %v4281 = vsel %vm635, %v4259, 0.0
      %4282 = vadd.xlane.f32.xlu0 %v4281
      %v4283 = vpop.xlane.xlu0 %4282
      %v4284 = vsel %vm635, %v4260, 0.0
      %4285 = vadd.xlane.f32.xlu0 %v4284
      %v4286 = vpop.xlane.xlu0 %4285
      %v4287 = vsel %vm635, %v4261, 0.0
      %4288 = vadd.xlane.f32.xlu0 %v4287
      %v4289 = vpop.xlane.xlu0 %4288
      %v4290 = vsel %vm635, %v4262, 0.0
      %4291 = vadd.xlane.f32.xlu0 %v4290
      %v4292 = vpop.xlane.xlu0 %4291
      %v4293 = vmul.f32 %v4265, %v1187
      %v4294 = vmul.f32 %v4268, %v1187
      %v4295 = vmul.f32 %v4271, %v1187
      %v4296 = vmul.f32 %v4274, %v1187
      %v4297 = vmul.f32 %v4277, %v1187
      %v4298 = vmul.f32 %v4280, %v1187
      %v4299 = vmul.f32 %v4283, %v1187
      %v4300 = vmul.f32 %v4286, %v1187
      %v4301 = vmul.f32 %v4289, %v1187
      %v4302 = vmul.f32 %v4292, %v1187
      %v4303 = vadd.f32 %v4293, 1e-05
      %v4304 = vadd.f32 %v4294, 1e-05
      %v4305 = vadd.f32 %v4295, 1e-05
      %v4306 = vadd.f32 %v4296, 1e-05
      %v4307 = vadd.f32 %v4297, 1e-05
      %v4308 = vadd.f32 %v4298, 1e-05
      %v4309 = vadd.f32 %v4299, 1e-05
      %v4310 = vadd.f32 %v4300, 1e-05
      %v4311 = vadd.f32 %v4301, 1e-05
      %v4312 = vadd.f32 %v4302, 1e-05
      %v4313 = vrsqrt.pop %v4303
      %v4314 = vmul.f32 %v4313, %v4303
      %v4315 = vmul.f32 %v4314, %v4313
      %v4316 = vmul.f32 0.5, %v4315
      %v4317 = vsub.f32 1.5, %v4316
      %v4318 = vmul.f32 %v4313, %v4317
      %vm4319 = vweird.f32 %v4303
      %vm4320 = vweird.f32 %v4313
      %vm4321 = vmor %vm4319, %vm4320
      %v4322 = vsel %vm4321, %v4313, %v4318
      %v4323 = vrsqrt.pop %v4304
      %v4324 = vmul.f32 %v4323, %v4304
      %v4325 = vmul.f32 %v4324, %v4323
      %v4326 = vmul.f32 0.5, %v4325
      %v4327 = vsub.f32 1.5, %v4326
      %v4328 = vmul.f32 %v4323, %v4327
      %vm4329 = vweird.f32 %v4304
      %vm4330 = vweird.f32 %v4323
      %vm4331 = vmor %vm4329, %vm4330
      %v4332 = vsel %vm4331, %v4323, %v4328
      %v4333 = vrsqrt.pop %v4305
      %v4334 = vmul.f32 %v4333, %v4305
      %v4335 = vmul.f32 %v4334, %v4333
      %v4336 = vmul.f32 0.5, %v4335
      %v4337 = vsub.f32 1.5, %v4336
      %v4338 = vmul.f32 %v4333, %v4337
      %vm4339 = vweird.f32 %v4305
      %vm4340 = vweird.f32 %v4333
      %vm4341 = vmor %vm4339, %vm4340
      %v4342 = vsel %vm4341, %v4333, %v4338
      %v4343 = vrsqrt.pop %v4306
      %v4344 = vmul.f32 %v4343, %v4306
      %v4345 = vmul.f32 %v4344, %v4343
      %v4346 = vmul.f32 0.5, %v4345
      %v4347 = vsub.f32 1.5, %v4346
      %v4348 = vmul.f32 %v4343, %v4347
      %vm4349 = vweird.f32 %v4306
      %vm4350 = vweird.f32 %v4343
      %vm4351 = vmor %vm4349, %vm4350
      %v4352 = vsel %vm4351, %v4343, %v4348
      %v4353 = vrsqrt.pop %v4307
      %v4354 = vmul.f32 %v4353, %v4307
      %v4355 = vmul.f32 %v4354, %v4353
      %v4356 = vmul.f32 0.5, %v4355
      %v4357 = vsub.f32 1.5, %v4356
      %v4358 = vmul.f32 %v4353, %v4357
      %vm4359 = vweird.f32 %v4307
      %vm4360 = vweird.f32 %v4353
      %vm4361 = vmor %vm4359, %vm4360
      %v4362 = vsel %vm4361, %v4353, %v4358
      %v4363 = vrsqrt.pop %v4308
      %v4364 = vmul.f32 %v4363, %v4308
      %v4365 = vmul.f32 %v4364, %v4363
      %v4366 = vmul.f32 0.5, %v4365
      %v4367 = vsub.f32 1.5, %v4366
      %v4368 = vmul.f32 %v4363, %v4367
      %vm4369 = vweird.f32 %v4308
      %vm4370 = vweird.f32 %v4363
      %vm4371 = vmor %vm4369, %vm4370
      %v4372 = vsel %vm4371, %v4363, %v4368
      %v4373 = vrsqrt.pop %v4309
      %v4374 = vmul.f32 %v4373, %v4309
      %v4375 = vmul.f32 %v4374, %v4373
      %v4376 = vmul.f32 0.5, %v4375
      %v4377 = vsub.f32 1.5, %v4376
      %v4378 = vmul.f32 %v4373, %v4377
      %vm4379 = vweird.f32 %v4309
      %vm4380 = vweird.f32 %v4373
      %vm4381 = vmor %vm4379, %vm4380
      %v4382 = vsel %vm4381, %v4373, %v4378
      %v4383 = vrsqrt.pop %v4310
      %v4384 = vmul.f32 %v4383, %v4310
      %v4385 = vmul.f32 %v4384, %v4383
      %v4386 = vmul.f32 0.5, %v4385
      %v4387 = vsub.f32 1.5, %v4386
      %v4388 = vmul.f32 %v4383, %v4387
      %vm4389 = vweird.f32 %v4310
      %vm4390 = vweird.f32 %v4383
      %vm4391 = vmor %vm4389, %vm4390
      %v4392 = vsel %vm4391, %v4383, %v4388
      %v4393 = vrsqrt.pop %v4311
      %v4394 = vmul.f32 %v4393, %v4311
      %v4395 = vmul.f32 %v4394, %v4393
      %v4396 = vmul.f32 0.5, %v4395
      %v4397 = vsub.f32 1.5, %v4396
      %v4398 = vmul.f32 %v4393, %v4397
      %vm4399 = vweird.f32 %v4311
      %vm4400 = vweird.f32 %v4393
      %vm4401 = vmor %vm4399, %vm4400
      %v4402 = vsel %vm4401, %v4393, %v4398
      %v4403 = vrsqrt.pop %v4312
      %v4404 = vmul.f32 %v4403, %v4312
      %v4405 = vmul.f32 %v4404, %v4403
      %v4406 = vmul.f32 0.5, %v4405
      %v4407 = vsub.f32 1.5, %v4406
      %v4408 = vmul.f32 %v4403, %v4407
      %vm4409 = vweird.f32 %v4312
      %vm4410 = vweird.f32 %v4403
      %vm4411 = vmor %vm4409, %vm4410
      %v4412 = vsel %vm4411, %v4403, %v4408
      %v4413 = vmul.f32 %v4243, %v4322
      %v4414 = vmul.f32 %v4244, %v4332
      %v4415 = vmul.f32 %v4245, %v4342
      %v4416 = vmul.f32 %v4246, %v4352
      %v4417 = vmul.f32 %v4247, %v4362
      %v4418 = vmul.f32 %v4248, %v4372
      %v4419 = vmul.f32 %v4249, %v4382
      %v4420 = vmul.f32 %v4250, %v4392
      %v4421 = vmul.f32 %v4251, %v4402
      %v4422 = vmul.f32 %v4252, %v4412
      %v4423 = vperm.slane %v575, 4
      %v4424 = vmul.f32 %v4413, %v4423
      %v4425 = vmul.f32 %v4414, %v4423
      %v4426 = vmul.f32 %v4415, %v4423
      %v4427 = vmul.f32 %v4416, %v4423
      %v4428 = vmul.f32 %v4417, %v4423
      %v4429 = vmul.f32 %v4418, %v4423
      %v4430 = vmul.f32 %v4419, %v4423
      %v4431 = vmul.f32 %v4420, %v4423
      %v4432 = vmul.f32 %v4421, %v4423
      %v4433 = vmul.f32 %v4422, %v4423
      %v4434 = vperm.slane %v575, 5
      %v4435 = vadd.f32 %v4424, %v4434
      %v4436 = vadd.f32 %v4425, %v4434
      %v4437 = vadd.f32 %v4426, %v4434
      %v4438 = vadd.f32 %v4427, %v4434
      %v4439 = vadd.f32 %v4428, %v4434
      %v4440 = vadd.f32 %v4429, %v4434
      %v4441 = vadd.f32 %v4430, %v4434
      %v4442 = vadd.f32 %v4431, %v4434
      %v4443 = vadd.f32 %v4432, %v4434
      %v4444 = vadd.f32 %v4433, %v4434
      %s4445 = scalar_lea.vmem %s6, 8
      %v4446 = vld [vmem:[%s4445] sm:$0xff]
      %v4447 = vpack.c.bf16 %v4436, %v4435
      %v4448 = vpack.c.bf16 %v4438, %v4437
      %v4449 = vpack.c.bf16 %v4440, %v4439
      %v4450 = vpack.c.bf16 %v4442, %v4441
      %v4451 = vpack.c.bf16 %v4444, %v4443
      %s4452 = scalar_lea.vmem %s3, 64
      %v4453 = vld [vmem:[%s4452] sm:$0xff]
      %v4454 = vld [vmem:[%s4452 + $0x8] sm:$0xff]
      %v4455 = vld [vmem:[%s4452 + $0x10] sm:$0xff]
      %v4456 = vld [vmem:[%s4452 + $0x18] sm:$0xff]
      %v4457 = vld [vmem:[%s4452 + $0x20] sm:$0xff]
      %v4458 = vld [vmem:[%s4452 + $0x28] sm:$0xff]
      %v4459 = vld [vmem:[%s4452 + $0x30] sm:$0xff]
      %v4460 = vld [vmem:[%s4452 + $0x38] sm:$0xff]
      %s4461 = scalar_lea.vmem %s4, 2
      %v4462 = vld [vmem:[%s4461] sm:$0x3]
      %v4464 = vperm.slane %v4462, 0
      %v4465 = vperm.slane %v4462, 1
      %v4476 = vunpack.c.l.b16 %v4453
      %v4477 = vunpack.c.h.b16 %v4453
      %v4478 = vunpack.c.l.b16 %v4454
      %v4479 = vunpack.c.h.b16 %v4454
      %v4480 = vunpack.c.l.b16 %v4455
      %v4481 = vunpack.c.h.b16 %v4455
      %v4482 = vunpack.c.l.b16 %v4456
      %v4483 = vunpack.c.h.b16 %v4456
      %v4484 = vunpack.c.l.b16 %v4457
      %v4485 = vunpack.c.h.b16 %v4457
      %v4486 = vunpack.c.l.b16 %v4458
      %v4487 = vunpack.c.h.b16 %v4458
      %v4488 = vunpack.c.l.b16 %v4459
      %v4489 = vunpack.c.h.b16 %v4459
      %v4490 = vunpack.c.l.b16 %v4460
      %v4491 = vunpack.c.h.b16 %v4460
      %v4492 = vpack.c.b16 %v4478, %v4476
      %v4493 = vpack.c.b16 %v4479, %v4477
      %v4494 = vpack.c.b16 %v4482, %v4480
      %v4495 = vpack.c.b16 %v4483, %v4481
      %v4496 = vpack.c.b16 %v4486, %v4484
      %v4497 = vpack.c.b16 %v4487, %v4485
      %v4498 = vpack.c.b16 %v4490, %v4488
      %v4499 = vpack.c.b16 %v4491, %v4489
      %v4509 = vsel %vm635, %v4447, 0
      %v4512 = vsel %vm635, %v4448, 0
      %v4515 = vsel %vm635, %v4449, 0
      %v4518 = vsel %vm635, %v4450, 0
      %v4521 = vsel %vm635, %v4451, 0
      %4523 = vmatpush.bf16.msra.mxu0 0
      %4524 = vmatpush.bf16.msra.mxu0 0
      %4525 = vmatpush.bf16.msra.mxu0 0
      %4526 = vmatpush.bf16.msra.mxu0 0
      %4527 = vmatpush.bf16.msra.mxu0 %v4498
      %4528 = vmatpush.bf16.msra.mxu0 %v4496
      %4529 = vmatpush.bf16.msra.mxu0 %v4494
      %4530 = vmatpush.bf16.msra.mxu0 %v4492
      %4531 = vmatmul.bf16.gmra.mxu0 %v4509
      %v4532 = vpop.f32.mrf.mxu0
      %v4533 = vadd.f32 %v4464, %v4532
      %v4534 = vpop.f32.mrf.mxu0
      %v4535 = vadd.f32 %v4464, %v4534
      %4536 = vmatmul.bf16.gmra.mxu0 %v4512
      %v4537 = vpop.f32.mrf.mxu0
      %v4538 = vadd.f32 %v4464, %v4537
      %v4539 = vpop.f32.mrf.mxu0
      %v4540 = vadd.f32 %v4464, %v4539
      %4541 = vmatmul.bf16.gmra.mxu0 %v4515
      %v4542 = vpop.f32.mrf.mxu0
      %v4543 = vadd.f32 %v4464, %v4542
      %v4544 = vpop.f32.mrf.mxu0
      %v4545 = vadd.f32 %v4464, %v4544
      %4546 = vmatmul.bf16.gmra.mxu0 %v4518
      %v4547 = vpop.f32.mrf.mxu0
      %v4548 = vadd.f32 %v4464, %v4547
      %v4549 = vpop.f32.mrf.mxu0
      %v4550 = vadd.f32 %v4464, %v4549
      %4551 = vmatmul.bf16.gmra.mxu0 %v4521
      %v4552 = vpop.f32.mrf.mxu0
      %v4553 = vadd.f32 %v4464, %v4552
      %v4554 = vpop.f32.mrf.mxu0
      %v4555 = vadd.f32 %v4464, %v4554
      %4556 = vdwg.mxu0
      %4557 = vmatpush.bf16.msra.mxu0 0
      %4558 = vmatpush.bf16.msra.mxu0 0
      %4559 = vmatpush.bf16.msra.mxu0 0
      %4560 = vmatpush.bf16.msra.mxu0 0
      %4561 = vmatpush.bf16.msra.mxu0 %v4499
      %4562 = vmatpush.bf16.msra.mxu0 %v4497
      %4563 = vmatpush.bf16.msra.mxu0 %v4495
      %4564 = vmatpush.bf16.msra.mxu0 %v4493
      %4565 = vmatmul.bf16.gmra.mxu0 %v4509
      %v4566 = vpop.f32.mrf.mxu0
      %v4567 = vadd.f32 %v4465, %v4566
      %v4568 = vpop.f32.mrf.mxu0
      %v4569 = vadd.f32 %v4465, %v4568
      %4570 = vmatmul.bf16.gmra.mxu0 %v4512
      %v4571 = vpop.f32.mrf.mxu0
      %v4572 = vadd.f32 %v4465, %v4571
      %v4573 = vpop.f32.mrf.mxu0
      %v4574 = vadd.f32 %v4465, %v4573
      %4575 = vmatmul.bf16.gmra.mxu0 %v4515
      %v4576 = vpop.f32.mrf.mxu0
      %v4577 = vadd.f32 %v4465, %v4576
      %v4578 = vpop.f32.mrf.mxu0
      %v4579 = vadd.f32 %v4465, %v4578
      %4580 = vmatmul.bf16.gmra.mxu0 %v4518
      %v4581 = vpop.f32.mrf.mxu0
      %v4582 = vadd.f32 %v4465, %v4581
      %v4583 = vpop.f32.mrf.mxu0
      %v4584 = vadd.f32 %v4465, %v4583
      %4585 = vmatmul.bf16.gmra.mxu0 %v4521
      %v4586 = vpop.f32.mrf.mxu0
      %v4587 = vadd.f32 %v4465, %v4586
      %v4588 = vpop.f32.mrf.mxu0
      %v4589 = vadd.f32 %v4465, %v4588
      %4590 = vdwg.mxu0
      %v4591 = vpack.c.bf16 %v4535, %v4533
      %v4592 = vpack.c.bf16 %v4540, %v4538
      %v4593 = vpack.c.bf16 %v4545, %v4543
      %v4594 = vpack.c.bf16 %v4550, %v4548
      %v4595 = vpack.c.bf16 %v4555, %v4553
      loop: start=0, step=1, limit=4
      $region76: #{wave_transformer.1} parent=67 // loop_pre_header
        _
      $region77: #{wave_transformer.1} parent=67 // loop_header
        %s4597 = sphi 0, %s4601
        %p4598 = scmp.ge.s32.totalorder %s4597, 4
        %v4602 = vphi 0.0, %v4916
        %v4603 = vphi 0.0, %v4917
        %v4604 = vphi 0.0, %v4918
        %v4605 = vphi 0.0, %v4919
        %v4606 = vphi 0.0, %v4920
        %v4607 = vphi 0.0, %v4921
        %v4608 = vphi 0.0, %v4922
        %v4609 = vphi 0.0, %v4923
        %v4610 = vphi 0.0, %v4924
        %v4611 = vphi 0.0, %v4925
      $region78: #{wave_transformer.1} parent=67 // loop_header_branch
        %4600 = sbr.rel (%p4598) target = $region82
      $region79: #{wave_transformer.1} parent=67 // loop_body
        %s4612 = smul.u32 %s4597, 16
        %v4613 = vstv %s4612
        %vm4614 = vcmp.ge.s32.totalorder %v440, %v4613
        %s4615 = sadd.s32 %s4597, 1
        %s4616 = smul.u32 %s4615, 16
        %v4617 = vstv %s4616
        %vm4618 = vcmp.lt.s32.totalorder %v440, %v4617
        %vm4619 = vmand %vm4614, %vm4618
        %v4620 = vsel %vm4619, 1, 0
        %v4621 = vcvt.s32.f32 %v4620
        %v4622 = vmul.f32 %v4533, %v4621
        %v4623 = vmul.f32 %v4535, %v4621
        %v4624 = vmul.f32 %v4538, %v4621
        %v4625 = vmul.f32 %v4540, %v4621
        %v4626 = vmul.f32 %v4543, %v4621
        %v4627 = vmul.f32 %v4545, %v4621
        %v4628 = vmul.f32 %v4548, %v4621
        %v4629 = vmul.f32 %v4550, %v4621
        %v4630 = vmul.f32 %v4553, %v4621
        %v4631 = vmul.f32 %v4555, %v4621
        %v4632 = vpack.c.bf16 %v4623, %v4622
        %v4633 = vpack.c.bf16 %v4625, %v4624
        %v4634 = vpack.c.bf16 %v4627, %v4626
        %v4635 = vpack.c.bf16 %v4629, %v4628
        %v4636 = vpack.c.bf16 %v4631, %v4630
        %4642 = vrot.lane.b32.xlu0 %v4591, 64
        %v4643 = vpop.permute.xlu0 %4642
        %4644 = vrot.lane.b32.xlu0 %v4592, 64
        %v4645 = vpop.permute.xlu0 %4644
        %4646 = vrot.lane.b32.xlu0 %v4593, 64
        %v4647 = vpop.permute.xlu0 %4646
        %4648 = vrot.lane.b32.xlu0 %v4594, 64
        %v4649 = vpop.permute.xlu0 %4648
        %4650 = vrot.lane.b32.xlu0 %v4595, 64
        %v4651 = vpop.permute.xlu0 %4650
        %v4653 = vsel %vm635, %v4632, 0
        %v4656 = vsel %vm635, %v4633, 0
        %v4659 = vsel %vm635, %v4634, 0
        %v4662 = vsel %vm635, %v4635, 0
        %v4665 = vsel %vm635, %v4636, 0
        %v4668 = vsel %vm635, %v4643, 0
        %v4671 = vsel %vm635, %v4645, 0
        %v4674 = vsel %vm635, %v4647, 0
        %v4677 = vsel %vm635, %v4649, 0
        %v4680 = vsel %vm635, %v4651, 0
        %4682 = vmatpush.bf16.xpose.msra.mxu0 0
        %4683 = vmatpush.bf16.xpose.msra.mxu0 0
        %4684 = vmatpush.bf16.xpose.msra.mxu0 0
        %4685 = vmatpush.bf16.xpose.msra.mxu0 %v4680
        %4686 = vmatpush.bf16.xpose.msra.mxu0 %v4677
        %4687 = vmatpush.bf16.xpose.msra.mxu0 %v4674
        %4688 = vmatpush.bf16.xpose.msra.mxu0 %v4671
        %4689 = vmatpush.bf16.xpose.msra.mxu0 %v4668
        %4690 = vmatmul.bf16.gmra.mxu0 %v4653
        %v4691 = vpop.f32.mrf.mxu0
        %v4692 = vadd.f32 0.0, %v4691
        %v4693 = vpop.f32.mrf.mxu0
        %v4694 = vadd.f32 0.0, %v4693
        %4695 = vmatmul.bf16.gmra.mxu0 %v4656
        %v4696 = vpop.f32.mrf.mxu0
        %v4697 = vadd.f32 0.0, %v4696
        %v4698 = vpop.f32.mrf.mxu0
        %v4699 = vadd.f32 0.0, %v4698
        %4700 = vmatmul.bf16.gmra.mxu0 %v4659
        %v4701 = vpop.f32.mrf.mxu0
        %v4702 = vadd.f32 0.0, %v4701
        %v4703 = vpop.f32.mrf.mxu0
        %v4704 = vadd.f32 0.0, %v4703
        %4705 = vmatmul.bf16.gmra.mxu0 %v4662
        %v4706 = vpop.f32.mrf.mxu0
        %v4707 = vadd.f32 0.0, %v4706
        %v4708 = vpop.f32.mrf.mxu0
        %v4709 = vadd.f32 0.0, %v4708
        %4710 = vmatmul.bf16.gmra.mxu0 %v4665
        %v4711 = vpop.f32.mrf.mxu0
        %v4712 = vadd.f32 0.0, %v4711
        %v4713 = vpop.f32.mrf.mxu0
        %v4714 = vadd.f32 0.0, %v4713
        %4715 = vdwg.mxu0
        %v4716 = vmul.f32 %v4692, 0.25
        %v4717 = vmul.f32 %v4694, 0.25
        %v4718 = vmul.f32 %v4697, 0.25
        %v4719 = vmul.f32 %v4699, 0.25
        %v4720 = vmul.f32 %v4702, 0.25
        %v4721 = vmul.f32 %v4704, 0.25
        %v4722 = vmul.f32 %v4707, 0.25
        %v4723 = vmul.f32 %v4709, 0.25
        %v4724 = vmul.f32 %v4712, 0.25
        %v4725 = vmul.f32 %v4714, 0.25
        %v4726 = vadd.f32 %v4716, %v485
        %v4727 = vadd.f32 %v4717, %v486
        %v4728 = vadd.f32 %v4718, %v487
        %v4729 = vadd.f32 %v4719, %v488
        %v4730 = vadd.f32 %v4720, %v489
        %v4731 = vadd.f32 %v4721, %v490
        %v4732 = vadd.f32 %v4722, %v491
        %v4733 = vadd.f32 %v4723, %v492
        %v4734 = vadd.f32 %v4724, %v493
        %v4735 = vadd.f32 %v4725, %v494
        %vm4736 = vcmask 654336
        %v4737 = vsel %vm4736, %v4726, -inf
        %4738 = vmax.xlane.f32.xlu0 %v4737
        %v4739 = vpop.xlane.xlu0 %4738
        %v4740 = vsel %vm4736, %v4727, -inf
        %4741 = vmax.xlane.f32.xlu0 %v4740
        %v4742 = vpop.xlane.xlu0 %4741
        %v4743 = vsel %vm4736, %v4728, -inf
        %4744 = vmax.xlane.f32.xlu0 %v4743
        %v4745 = vpop.xlane.xlu0 %4744
        %v4746 = vsel %vm4736, %v4729, -inf
        %4747 = vmax.xlane.f32.xlu0 %v4746
        %v4748 = vpop.xlane.xlu0 %4747
        %v4749 = vsel %vm4736, %v4730, -inf
        %4750 = vmax.xlane.f32.xlu0 %v4749
        %v4751 = vpop.xlane.xlu0 %4750
        %v4752 = vsel %vm4736, %v4731, -inf
        %4753 = vmax.xlane.f32.xlu0 %v4752
        %v4754 = vpop.xlane.xlu0 %4753
        %v4755 = vsel %vm4736, %v4732, -inf
        %4756 = vmax.xlane.f32.xlu0 %v4755
        %v4757 = vpop.xlane.xlu0 %4756
        %v4758 = vsel %vm4736, %v4733, -inf
        %4759 = vmax.xlane.f32.xlu0 %v4758
        %v4760 = vpop.xlane.xlu0 %4759
        %v4761 = vsel %vm4736, %v4734, -inf
        %4762 = vmax.xlane.f32.xlu0 %v4761
        %v4763 = vpop.xlane.xlu0 %4762
        %v4764 = vsel %vm4736, %v4735, -inf
        %4765 = vmax.xlane.f32.xlu0 %v4764
        %v4766 = vpop.xlane.xlu0 %4765
        %v4767 = vsub.f32 %v4726, %v4739
        %v4768 = vsub.f32 %v4727, %v4742
        %v4769 = vsub.f32 %v4728, %v4745
        %v4770 = vsub.f32 %v4729, %v4748
        %v4771 = vsub.f32 %v4730, %v4751
        %v4772 = vsub.f32 %v4731, %v4754
        %v4773 = vsub.f32 %v4732, %v4757
        %v4774 = vsub.f32 %v4733, %v4760
        %v4775 = vsub.f32 %v4734, %v4763
        %v4776 = vsub.f32 %v4735, %v4766
        %v4777 = vmul.f32 %v4767, 1.442695
        %v4778 = vpow.pop %v4777
        %v4779 = vmul.f32 %v4768, 1.442695
        %v4780 = vpow.pop %v4779
        %v4781 = vmul.f32 %v4769, 1.442695
        %v4782 = vpow.pop %v4781
        %v4783 = vmul.f32 %v4770, 1.442695
        %v4784 = vpow.pop %v4783
        %v4785 = vmul.f32 %v4771, 1.442695
        %v4786 = vpow.pop %v4785
        %v4787 = vmul.f32 %v4772, 1.442695
        %v4788 = vpow.pop %v4787
        %v4789 = vmul.f32 %v4773, 1.442695
        %v4790 = vpow.pop %v4789
        %v4791 = vmul.f32 %v4774, 1.442695
        %v4792 = vpow.pop %v4791
        %v4793 = vmul.f32 %v4775, 1.442695
        %v4794 = vpow.pop %v4793
        %v4795 = vmul.f32 %v4776, 1.442695
        %v4796 = vpow.pop %v4795
        %v4797 = vsel %vm4736, %v4778, 0.0
        %4798 = vadd.xlane.f32.xlu0 %v4797
        %v4799 = vpop.xlane.xlu0 %4798
        %v4800 = vsel %vm4736, %v4780, 0.0
        %4801 = vadd.xlane.f32.xlu0 %v4800
        %v4802 = vpop.xlane.xlu0 %4801
        %v4803 = vsel %vm4736, %v4782, 0.0
        %4804 = vadd.xlane.f32.xlu0 %v4803
        %v4805 = vpop.xlane.xlu0 %4804
        %v4806 = vsel %vm4736, %v4784, 0.0
        %4807 = vadd.xlane.f32.xlu0 %v4806
        %v4808 = vpop.xlane.xlu0 %4807
        %v4809 = vsel %vm4736, %v4786, 0.0
        %4810 = vadd.xlane.f32.xlu0 %v4809
        %v4811 = vpop.xlane.xlu0 %4810
        %v4812 = vsel %vm4736, %v4788, 0.0
        %4813 = vadd.xlane.f32.xlu0 %v4812
        %v4814 = vpop.xlane.xlu0 %4813
        %v4815 = vsel %vm4736, %v4790, 0.0
        %4816 = vadd.xlane.f32.xlu0 %v4815
        %v4817 = vpop.xlane.xlu0 %4816
        %v4818 = vsel %vm4736, %v4792, 0.0
        %4819 = vadd.xlane.f32.xlu0 %v4818
        %v4820 = vpop.xlane.xlu0 %4819
        %v4821 = vsel %vm4736, %v4794, 0.0
        %4822 = vadd.xlane.f32.xlu0 %v4821
        %v4823 = vpop.xlane.xlu0 %4822
        %v4824 = vsel %vm4736, %v4796, 0.0
        %4825 = vadd.xlane.f32.xlu0 %v4824
        %v4826 = vpop.xlane.xlu0 %4825
        %v4827 = vrcp.pop %v4799
        %v4828 = vrcp.pop %v4802
        %v4829 = vrcp.pop %v4805
        %v4830 = vrcp.pop %v4808
        %v4831 = vrcp.pop %v4811
        %v4832 = vrcp.pop %v4814
        %v4833 = vrcp.pop %v4817
        %v4834 = vrcp.pop %v4820
        %v4835 = vrcp.pop %v4823
        %v4836 = vrcp.pop %v4826
        %v4837 = vmul.f32 %v4778, %v4827
        %v4838 = vmul.f32 %v4780, %v4828
        %v4839 = vmul.f32 %v4782, %v4829
        %v4840 = vmul.f32 %v4784, %v4830
        %v4841 = vmul.f32 %v4786, %v4831
        %v4842 = vmul.f32 %v4788, %v4832
        %v4843 = vmul.f32 %v4790, %v4833
        %v4844 = vmul.f32 %v4792, %v4834
        %v4845 = vmul.f32 %v4794, %v4835
        %v4846 = vmul.f32 %v4796, %v4836
        %v4847 = vpack.c.bf16 %v4838, %v4837
        %v4848 = vpack.c.bf16 %v4840, %v4839
        %v4849 = vpack.c.bf16 %v4842, %v4841
        %v4850 = vpack.c.bf16 %v4844, %v4843
        %v4851 = vpack.c.bf16 %v4846, %v4845
        %v4852 = vmul.f32 %v4567, %v4621
        %v4853 = vmul.f32 %v4569, %v4621
        %v4854 = vmul.f32 %v4572, %v4621
        %v4855 = vmul.f32 %v4574, %v4621
        %v4856 = vmul.f32 %v4577, %v4621
        %v4857 = vmul.f32 %v4579, %v4621
        %v4858 = vmul.f32 %v4582, %v4621
        %v4859 = vmul.f32 %v4584, %v4621
        %v4860 = vmul.f32 %v4587, %v4621
        %v4861 = vmul.f32 %v4589, %v4621
        %v4862 = vpack.c.bf16 %v4853, %v4852
        %v4863 = vpack.c.bf16 %v4855, %v4854
        %v4864 = vpack.c.bf16 %v4857, %v4856
        %v4865 = vpack.c.bf16 %v4859, %v4858
        %v4866 = vpack.c.bf16 %v4861, %v4860
        %v4868 = vsel %vm4736, %v4847, 0
        %v4871 = vsel %vm4736, %v4848, 0
        %v4874 = vsel %vm4736, %v4849, 0
        %v4877 = vsel %vm4736, %v4850, 0
        %v4880 = vsel %vm4736, %v4851, 0
        %4882 = vmatpush.bf16.msra.mxu0 0
        %4883 = vmatpush.bf16.msra.mxu0 0
        %4884 = vmatpush.bf16.msra.mxu0 0
        %4885 = vmatpush.bf16.msra.mxu0 %v4866
        %4886 = vmatpush.bf16.msra.mxu0 %v4865
        %4887 = vmatpush.bf16.msra.mxu0 %v4864
        %4888 = vmatpush.bf16.msra.mxu0 %v4863
        %4889 = vmatpush.bf16.msra.mxu0 %v4862
        %4890 = vmatmul.bf16.gmra.mxu0 %v4868
        %v4891 = vpop.f32.mrf.mxu0
        %v4892 = vadd.f32 0.0, %v4891
        %v4893 = vpop.f32.mrf.mxu0
        %v4894 = vadd.f32 0.0, %v4893
        %4895 = vmatmul.bf16.gmra.mxu0 %v4871
        %v4896 = vpop.f32.mrf.mxu0
        %v4897 = vadd.f32 0.0, %v4896
        %v4898 = vpop.f32.mrf.mxu0
        %v4899 = vadd.f32 0.0, %v4898
        %4900 = vmatmul.bf16.gmra.mxu0 %v4874
        %v4901 = vpop.f32.mrf.mxu0
        %v4902 = vadd.f32 0.0, %v4901
        %v4903 = vpop.f32.mrf.mxu0
        %v4904 = vadd.f32 0.0, %v4903
        %4905 = vmatmul.bf16.gmra.mxu0 %v4877
        %v4906 = vpop.f32.mrf.mxu0
        %v4907 = vadd.f32 0.0, %v4906
        %v4908 = vpop.f32.mrf.mxu0
        %v4909 = vadd.f32 0.0, %v4908
        %4910 = vmatmul.bf16.gmra.mxu0 %v4880
        %v4911 = vpop.f32.mrf.mxu0
        %v4912 = vadd.f32 0.0, %v4911
        %v4913 = vpop.f32.mrf.mxu0
        %v4914 = vadd.f32 0.0, %v4913
        %4915 = vdwg.mxu0
        %v4916 = vadd.f32 %v4602, %v4892
        %v4917 = vadd.f32 %v4603, %v4894
        %v4918 = vadd.f32 %v4604, %v4897
        %v4919 = vadd.f32 %v4605, %v4899
        %v4920 = vadd.f32 %v4606, %v4902
        %v4921 = vadd.f32 %v4607, %v4904
        %v4922 = vadd.f32 %v4608, %v4907
        %v4923 = vadd.f32 %v4609, %v4909
        %v4924 = vadd.f32 %v4610, %v4912
        %v4925 = vadd.f32 %v4611, %v4914
      $region80: #{wave_transformer.1} parent=67 // loop_footer
        %s4601 = sadd.s32 1, %s4597
      $region81: #{wave_transformer.1} parent=67 // loop_footer_branch
        %4596 = sbr.rel target = $region77
      $region82: #{wave_transformer.1} parent=67 // loop_exit
        _
      %v4926 = vpack.c.bf16 %v4603, %v4602
      %v4927 = vpack.c.bf16 %v4605, %v4604
      %v4928 = vpack.c.bf16 %v4607, %v4606
      %v4929 = vpack.c.bf16 %v4609, %v4608
      %v4930 = vpack.c.bf16 %v4611, %v4610
      %s4931 = scalar_lea.vmem %s5, 32
      %v4932 = vld [vmem:[%s4931] sm:$0xf]
      %v4933 = vld [vmem:[%s4931 + $0x4] sm:$0xf]
      %v4934 = vld [vmem:[%s4931 + $0x8] sm:$0xf]
      %v4935 = vld [vmem:[%s4931 + $0xc] sm:$0xf]
      %v4936 = vld [vmem:[%s4931 + $0x10] sm:$0xf]
      %v4937 = vld [vmem:[%s4931 + $0x14] sm:$0xf]
      %v4938 = vld [vmem:[%s4931 + $0x18] sm:$0xf]
      %v4939 = vld [vmem:[%s4931 + $0x1c] sm:$0xf]
      %v4940 = vperm.slane %v4446, 0
      %v4949 = vunpack.c.l.b16 %v4932
      %v4950 = vunpack.c.l.b16 %v4933
      %v4951 = vunpack.c.l.b16 %v4934
      %v4952 = vunpack.c.l.b16 %v4935
      %v4953 = vunpack.c.l.b16 %v4936
      %v4954 = vunpack.c.l.b16 %v4937
      %v4955 = vunpack.c.l.b16 %v4938
      %v4956 = vunpack.c.l.b16 %v4939
      %v4957 = vpack.c.b16 %v4950, %v4949
      %v4958 = vpack.c.b16 %v4952, %v4951
      %v4959 = vpack.c.b16 %v4954, %v4953
      %v4960 = vpack.c.b16 %v4956, %v4955
      %v4966 = vsel %vm635, %v4926, 0
      %v4969 = vsel %vm635, %v4927, 0
      %v4972 = vsel %vm635, %v4928, 0
      %v4975 = vsel %vm635, %v4929, 0
      %v4978 = vsel %vm635, %v4930, 0
      %4980 = vmatpush.bf16.msra.mxu0 0
      %4981 = vmatpush.bf16.msra.mxu0 0
      %4982 = vmatpush.bf16.msra.mxu0 0
      %4983 = vmatpush.bf16.msra.mxu0 0
      %4984 = vmatpush.bf16.msra.mxu0 %v4960
      %4985 = vmatpush.bf16.msra.mxu0 %v4959
      %4986 = vmatpush.bf16.msra.mxu0 %v4958
      %4987 = vmatpush.bf16.msra.mxu0 %v4957
      %4988 = vmatmul.bf16.gmra.mxu0 %v4966
      %v4989 = vpop.f32.mrf.mxu0
      %v4990 = vadd.f32 %v4940, %v4989
      %v4991 = vpop.f32.mrf.mxu0
      %v4992 = vadd.f32 %v4940, %v4991
      %4993 = vmatmul.bf16.gmra.mxu0 %v4969
      %v4994 = vpop.f32.mrf.mxu0
      %v4995 = vadd.f32 %v4940, %v4994
      %v4996 = vpop.f32.mrf.mxu0
      %v4997 = vadd.f32 %v4940, %v4996
      %4998 = vmatmul.bf16.gmra.mxu0 %v4972
      %v4999 = vpop.f32.mrf.mxu0
      %v5000 = vadd.f32 %v4940, %v4999
      %v5001 = vpop.f32.mrf.mxu0
      %v5002 = vadd.f32 %v4940, %v5001
      %5003 = vmatmul.bf16.gmra.mxu0 %v4975
      %v5004 = vpop.f32.mrf.mxu0
      %v5005 = vadd.f32 %v4940, %v5004
      %v5006 = vpop.f32.mrf.mxu0
      %v5007 = vadd.f32 %v4940, %v5006
      %5008 = vmatmul.bf16.gmra.mxu0 %v4978
      %v5009 = vpop.f32.mrf.mxu0
      %v5010 = vadd.f32 %v4940, %v5009
      %v5011 = vpop.f32.mrf.mxu0
      %v5012 = vadd.f32 %v4940, %v5011
      %5013 = vdwg.mxu0
      %v5014 = vadd.f32 %v4435, %v4990
      %v5015 = vadd.f32 %v4436, %v4992
      %v5016 = vadd.f32 %v4437, %v4995
      %v5017 = vadd.f32 %v4438, %v4997
      %v5018 = vadd.f32 %v4439, %v5000
      %v5019 = vadd.f32 %v4440, %v5002
      %v5020 = vadd.f32 %v4441, %v5005
      %v5021 = vadd.f32 %v4442, %v5007
      %v5022 = vadd.f32 %v4443, %v5010
      %v5023 = vadd.f32 %v4444, %v5012
      %v5024 = vsel %vm635, %v5014, 0.0
      %5025 = vadd.xlane.f32.xlu0 %v5024
      %v5026 = vpop.xlane.xlu0 %5025
      %v5027 = vsel %vm635, %v5015, 0.0
      %5028 = vadd.xlane.f32.xlu0 %v5027
      %v5029 = vpop.xlane.xlu0 %5028
      %v5030 = vsel %vm635, %v5016, 0.0
      %5031 = vadd.xlane.f32.xlu0 %v5030
      %v5032 = vpop.xlane.xlu0 %5031
      %v5033 = vsel %vm635, %v5017, 0.0
      %5034 = vadd.xlane.f32.xlu0 %v5033
      %v5035 = vpop.xlane.xlu0 %5034
      %v5036 = vsel %vm635, %v5018, 0.0
      %5037 = vadd.xlane.f32.xlu0 %v5036
      %v5038 = vpop.xlane.xlu0 %5037
      %v5039 = vsel %vm635, %v5019, 0.0
      %5040 = vadd.xlane.f32.xlu0 %v5039
      %v5041 = vpop.xlane.xlu0 %5040
      %v5042 = vsel %vm635, %v5020, 0.0
      %5043 = vadd.xlane.f32.xlu0 %v5042
      %v5044 = vpop.xlane.xlu0 %5043
      %v5045 = vsel %vm635, %v5021, 0.0
      %5046 = vadd.xlane.f32.xlu0 %v5045
      %v5047 = vpop.xlane.xlu0 %5046
      %v5048 = vsel %vm635, %v5022, 0.0
      %5049 = vadd.xlane.f32.xlu0 %v5048
      %v5050 = vpop.xlane.xlu0 %5049
      %v5051 = vsel %vm635, %v5023, 0.0
      %5052 = vadd.xlane.f32.xlu0 %v5051
      %v5053 = vpop.xlane.xlu0 %5052
      %v5054 = vmul.f32 %v5026, %v1187
      %v5055 = vmul.f32 %v5029, %v1187
      %v5056 = vmul.f32 %v5032, %v1187
      %v5057 = vmul.f32 %v5035, %v1187
      %v5058 = vmul.f32 %v5038, %v1187
      %v5059 = vmul.f32 %v5041, %v1187
      %v5060 = vmul.f32 %v5044, %v1187
      %v5061 = vmul.f32 %v5047, %v1187
      %v5062 = vmul.f32 %v5050, %v1187
      %v5063 = vmul.f32 %v5053, %v1187
      %v5064 = vsub.f32 %v5014, %v5054
      %v5065 = vsub.f32 %v5015, %v5055
      %v5066 = vsub.f32 %v5016, %v5056
      %v5067 = vsub.f32 %v5017, %v5057
      %v5068 = vsub.f32 %v5018, %v5058
      %v5069 = vsub.f32 %v5019, %v5059
      %v5070 = vsub.f32 %v5020, %v5060
      %v5071 = vsub.f32 %v5021, %v5061
      %v5072 = vsub.f32 %v5022, %v5062
      %v5073 = vsub.f32 %v5023, %v5063
      %v5074 = vmul.f32 %v5064, %v5064
      %v5075 = vmul.f32 %v5065, %v5065
      %v5076 = vmul.f32 %v5066, %v5066
      %v5077 = vmul.f32 %v5067, %v5067
      %v5078 = vmul.f32 %v5068, %v5068
      %v5079 = vmul.f32 %v5069, %v5069
      %v5080 = vmul.f32 %v5070, %v5070
      %v5081 = vmul.f32 %v5071, %v5071
      %v5082 = vmul.f32 %v5072, %v5072
      %v5083 = vmul.f32 %v5073, %v5073
      %v5084 = vsel %vm635, %v5074, 0.0
      %5085 = vadd.xlane.f32.xlu0 %v5084
      %v5086 = vpop.xlane.xlu0 %5085
      %v5087 = vsel %vm635, %v5075, 0.0
      %5088 = vadd.xlane.f32.xlu0 %v5087
      %v5089 = vpop.xlane.xlu0 %5088
      %v5090 = vsel %vm635, %v5076, 0.0
      %5091 = vadd.xlane.f32.xlu0 %v5090
      %v5092 = vpop.xlane.xlu0 %5091
      %v5093 = vsel %vm635, %v5077, 0.0
      %5094 = vadd.xlane.f32.xlu0 %v5093
      %v5095 = vpop.xlane.xlu0 %5094
      %v5096 = vsel %vm635, %v5078, 0.0
      %5097 = vadd.xlane.f32.xlu0 %v5096
      %v5098 = vpop.xlane.xlu0 %5097
      %v5099 = vsel %vm635, %v5079, 0.0
      %5100 = vadd.xlane.f32.xlu0 %v5099
      %v5101 = vpop.xlane.xlu0 %5100
      %v5102 = vsel %vm635, %v5080, 0.0
      %5103 = vadd.xlane.f32.xlu0 %v5102
      %v5104 = vpop.xlane.xlu0 %5103
      %v5105 = vsel %vm635, %v5081, 0.0
      %5106 = vadd.xlane.f32.xlu0 %v5105
      %v5107 = vpop.xlane.xlu0 %5106
      %v5108 = vsel %vm635, %v5082, 0.0
      %5109 = vadd.xlane.f32.xlu0 %v5108
      %v5110 = vpop.xlane.xlu0 %5109
      %v5111 = vsel %vm635, %v5083, 0.0
      %5112 = vadd.xlane.f32.xlu0 %v5111
      %v5113 = vpop.xlane.xlu0 %5112
      %v5114 = vmul.f32 %v5086, %v1187
      %v5115 = vmul.f32 %v5089, %v1187
      %v5116 = vmul.f32 %v5092, %v1187
      %v5117 = vmul.f32 %v5095, %v1187
      %v5118 = vmul.f32 %v5098, %v1187
      %v5119 = vmul.f32 %v5101, %v1187
      %v5120 = vmul.f32 %v5104, %v1187
      %v5121 = vmul.f32 %v5107, %v1187
      %v5122 = vmul.f32 %v5110, %v1187
      %v5123 = vmul.f32 %v5113, %v1187
      %v5124 = vadd.f32 %v5114, 1e-05
      %v5125 = vadd.f32 %v5115, 1e-05
      %v5126 = vadd.f32 %v5116, 1e-05
      %v5127 = vadd.f32 %v5117, 1e-05
      %v5128 = vadd.f32 %v5118, 1e-05
      %v5129 = vadd.f32 %v5119, 1e-05
      %v5130 = vadd.f32 %v5120, 1e-05
      %v5131 = vadd.f32 %v5121, 1e-05
      %v5132 = vadd.f32 %v5122, 1e-05
      %v5133 = vadd.f32 %v5123, 1e-05
      %v5134 = vrsqrt.pop %v5124
      %v5135 = vmul.f32 %v5134, %v5124
      %v5136 = vmul.f32 %v5135, %v5134
      %v5137 = vmul.f32 0.5, %v5136
      %v5138 = vsub.f32 1.5, %v5137
      %v5139 = vmul.f32 %v5134, %v5138
      %vm5140 = vweird.f32 %v5124
      %vm5141 = vweird.f32 %v5134
      %vm5142 = vmor %vm5140, %vm5141
      %v5143 = vsel %vm5142, %v5134, %v5139
      %v5144 = vrsqrt.pop %v5125
      %v5145 = vmul.f32 %v5144, %v5125
      %v5146 = vmul.f32 %v5145, %v5144
      %v5147 = vmul.f32 0.5, %v5146
      %v5148 = vsub.f32 1.5, %v5147
      %v5149 = vmul.f32 %v5144, %v5148
      %vm5150 = vweird.f32 %v5125
      %vm5151 = vweird.f32 %v5144
      %vm5152 = vmor %vm5150, %vm5151
      %v5153 = vsel %vm5152, %v5144, %v5149
      %v5154 = vrsqrt.pop %v5126
      %v5155 = vmul.f32 %v5154, %v5126
      %v5156 = vmul.f32 %v5155, %v5154
      %v5157 = vmul.f32 0.5, %v5156
      %v5158 = vsub.f32 1.5, %v5157
      %v5159 = vmul.f32 %v5154, %v5158
      %vm5160 = vweird.f32 %v5126
      %vm5161 = vweird.f32 %v5154
      %vm5162 = vmor %vm5160, %vm5161
      %v5163 = vsel %vm5162, %v5154, %v5159
      %v5164 = vrsqrt.pop %v5127
      %v5165 = vmul.f32 %v5164, %v5127
      %v5166 = vmul.f32 %v5165, %v5164
      %v5167 = vmul.f32 0.5, %v5166
      %v5168 = vsub.f32 1.5, %v5167
      %v5169 = vmul.f32 %v5164, %v5168
      %vm5170 = vweird.f32 %v5127
      %vm5171 = vweird.f32 %v5164
      %vm5172 = vmor %vm5170, %vm5171
      %v5173 = vsel %vm5172, %v5164, %v5169
      %v5174 = vrsqrt.pop %v5128
      %v5175 = vmul.f32 %v5174, %v5128
      %v5176 = vmul.f32 %v5175, %v5174
      %v5177 = vmul.f32 0.5, %v5176
      %v5178 = vsub.f32 1.5, %v5177
      %v5179 = vmul.f32 %v5174, %v5178
      %vm5180 = vweird.f32 %v5128
      %vm5181 = vweird.f32 %v5174
      %vm5182 = vmor %vm5180, %vm5181
      %v5183 = vsel %vm5182, %v5174, %v5179
      %v5184 = vrsqrt.pop %v5129
      %v5185 = vmul.f32 %v5184, %v5129
      %v5186 = vmul.f32 %v5185, %v5184
      %v5187 = vmul.f32 0.5, %v5186
      %v5188 = vsub.f32 1.5, %v5187
      %v5189 = vmul.f32 %v5184, %v5188
      %vm5190 = vweird.f32 %v5129
      %vm5191 = vweird.f32 %v5184
      %vm5192 = vmor %vm5190, %vm5191
      %v5193 = vsel %vm5192, %v5184, %v5189
      %v5194 = vrsqrt.pop %v5130
      %v5195 = vmul.f32 %v5194, %v5130
      %v5196 = vmul.f32 %v5195, %v5194
      %v5197 = vmul.f32 0.5, %v5196
      %v5198 = vsub.f32 1.5, %v5197
      %v5199 = vmul.f32 %v5194, %v5198
      %vm5200 = vweird.f32 %v5130
      %vm5201 = vweird.f32 %v5194
      %vm5202 = vmor %vm5200, %vm5201
      %v5203 = vsel %vm5202, %v5194, %v5199
      %v5204 = vrsqrt.pop %v5131
      %v5205 = vmul.f32 %v5204, %v5131
      %v5206 = vmul.f32 %v5205, %v5204
      %v5207 = vmul.f32 0.5, %v5206
      %v5208 = vsub.f32 1.5, %v5207
      %v5209 = vmul.f32 %v5204, %v5208
      %vm5210 = vweird.f32 %v5131
      %vm5211 = vweird.f32 %v5204
      %vm5212 = vmor %vm5210, %vm5211
      %v5213 = vsel %vm5212, %v5204, %v5209
      %v5214 = vrsqrt.pop %v5132
      %v5215 = vmul.f32 %v5214, %v5132
      %v5216 = vmul.f32 %v5215, %v5214
      %v5217 = vmul.f32 0.5, %v5216
      %v5218 = vsub.f32 1.5, %v5217
      %v5219 = vmul.f32 %v5214, %v5218
      %vm5220 = vweird.f32 %v5132
      %vm5221 = vweird.f32 %v5214
      %vm5222 = vmor %vm5220, %vm5221
      %v5223 = vsel %vm5222, %v5214, %v5219
      %v5224 = vrsqrt.pop %v5133
      %v5225 = vmul.f32 %v5224, %v5133
      %v5226 = vmul.f32 %v5225, %v5224
      %v5227 = vmul.f32 0.5, %v5226
      %v5228 = vsub.f32 1.5, %v5227
      %v5229 = vmul.f32 %v5224, %v5228
      %vm5230 = vweird.f32 %v5133
      %vm5231 = vweird.f32 %v5224
      %vm5232 = vmor %vm5230, %vm5231
      %v5233 = vsel %vm5232, %v5224, %v5229
      %v5234 = vmul.f32 %v5064, %v5143
      %v5235 = vmul.f32 %v5065, %v5153
      %v5236 = vmul.f32 %v5066, %v5163
      %v5237 = vmul.f32 %v5067, %v5173
      %v5238 = vmul.f32 %v5068, %v5183
      %v5239 = vmul.f32 %v5069, %v5193
      %v5240 = vmul.f32 %v5070, %v5203
      %v5241 = vmul.f32 %v5071, %v5213
      %v5242 = vmul.f32 %v5072, %v5223
      %v5243 = vmul.f32 %v5073, %v5233
      %v5244 = vperm.slane %v4446, 1
      %v5245 = vmul.f32 %v5234, %v5244
      %v5246 = vmul.f32 %v5235, %v5244
      %v5247 = vmul.f32 %v5236, %v5244
      %v5248 = vmul.f32 %v5237, %v5244
      %v5249 = vmul.f32 %v5238, %v5244
      %v5250 = vmul.f32 %v5239, %v5244
      %v5251 = vmul.f32 %v5240, %v5244
      %v5252 = vmul.f32 %v5241, %v5244
      %v5253 = vmul.f32 %v5242, %v5244
      %v5254 = vmul.f32 %v5243, %v5244
      %v5255 = vperm.slane %v4446, 2
      %v5256 = vadd.f32 %v5245, %v5255
      %v5257 = vadd.f32 %v5246, %v5255
      %v5258 = vadd.f32 %v5247, %v5255
      %v5259 = vadd.f32 %v5248, %v5255
      %v5260 = vadd.f32 %v5249, %v5255
      %v5261 = vadd.f32 %v5250, %v5255
      %v5262 = vadd.f32 %v5251, %v5255
      %v5263 = vadd.f32 %v5252, %v5255
      %v5264 = vadd.f32 %v5253, %v5255
      %v5265 = vadd.f32 %v5254, %v5255
      %v5266 = vpack.c.bf16 %v5257, %v5256
      %v5267 = vpack.c.bf16 %v5259, %v5258
      %v5268 = vpack.c.bf16 %v5261, %v5260
      %v5269 = vpack.c.bf16 %v5263, %v5262
      %v5270 = vpack.c.bf16 %v5265, %v5264
      %s5271 = scalar_lea.vmem %s7, 512
      %v5272 = vld [vmem:[%s5271] sm:$0xff]
      %v5273 = vld [vmem:[%s5271 + $0x8] sm:$0xff]
      %v5274 = vld [vmem:[%s5271 + $0x10] sm:$0xff]
      %v5275 = vld [vmem:[%s5271 + $0x18] sm:$0xff]
      %v5276 = vld [vmem:[%s5271 + $0x20] sm:$0xff]
      %v5277 = vld [vmem:[%s5271 + $0x28] sm:$0xff]
      %v5278 = vld [vmem:[%s5271 + $0x30] sm:$0xff]
      %v5279 = vld [vmem:[%s5271 + $0x38] sm:$0xff]
      %v5280 = vld [vmem:[%s5271 + $0x40] sm:$0xff]
      %v5281 = vld [vmem:[%s5271 + $0x48] sm:$0xff]
      %v5282 = vld [vmem:[%s5271 + $0x50] sm:$0xff]
      %v5283 = vld [vmem:[%s5271 + $0x58] sm:$0xff]
      %v5284 = vld [vmem:[%s5271 + $0x60] sm:$0xff]
      %v5285 = vld [vmem:[%s5271 + $0x68] sm:$0xff]
      %v5286 = vld [vmem:[%s5271 + $0x70] sm:$0xff]
      %v5287 = vld [vmem:[%s5271 + $0x78] sm:$0xff]
      %v5288 = vld [vmem:[%s5271 + $0x80] sm:$0xff]
      %v5289 = vld [vmem:[%s5271 + $0x88] sm:$0xff]
      %v5290 = vld [vmem:[%s5271 + $0x90] sm:$0xff]
      %v5291 = vld [vmem:[%s5271 + $0x98] sm:$0xff]
      %v5292 = vld [vmem:[%s5271 + $0xa0] sm:$0xff]
      %v5293 = vld [vmem:[%s5271 + $0xa8] sm:$0xff]
      %v5294 = vld [vmem:[%s5271 + $0xb0] sm:$0xff]
      %v5295 = vld [vmem:[%s5271 + $0xb8] sm:$0xff]
      %v5296 = vld [vmem:[%s5271 + $0xc0] sm:$0xff]
      %v5297 = vld [vmem:[%s5271 + $0xc8] sm:$0xff]
      %v5298 = vld [vmem:[%s5271 + $0xd0] sm:$0xff]
      %v5299 = vld [vmem:[%s5271 + $0xd8] sm:$0xff]
      %v5300 = vld [vmem:[%s5271 + $0xe0] sm:$0xff]
      %v5301 = vld [vmem:[%s5271 + $0xe8] sm:$0xff]
      %v5302 = vld [vmem:[%s5271 + $0xf0] sm:$0xff]
      %v5303 = vld [vmem:[%s5271 + $0xf8] sm:$0xff]
      %v5304 = vld [vmem:[%s5271 + $0x100] sm:$0xff]
      %v5305 = vld [vmem:[%s5271 + $0x108] sm:$0xff]
      %v5306 = vld [vmem:[%s5271 + $0x110] sm:$0xff]
      %v5307 = vld [vmem:[%s5271 + $0x118] sm:$0xff]
      %v5308 = vld [vmem:[%s5271 + $0x120] sm:$0xff]
      %v5309 = vld [vmem:[%s5271 + $0x128] sm:$0xff]
      %v5310 = vld [vmem:[%s5271 + $0x130] sm:$0xff]
      %v5311 = vld [vmem:[%s5271 + $0x138] sm:$0xff]
      %v5312 = vld [vmem:[%s5271 + $0x140] sm:$0xff]
      %v5313 = vld [vmem:[%s5271 + $0x148] sm:$0xff]
      %v5314 = vld [vmem:[%s5271 + $0x150] sm:$0xff]
      %v5315 = vld [vmem:[%s5271 + $0x158] sm:$0xff]
      %v5316 = vld [vmem:[%s5271 + $0x160] sm:$0xff]
      %v5317 = vld [vmem:[%s5271 + $0x168] sm:$0xff]
      %v5318 = vld [vmem:[%s5271 + $0x170] sm:$0xff]
      %v5319 = vld [vmem:[%s5271 + $0x178] sm:$0xff]
      %v5320 = vld [vmem:[%s5271 + $0x180] sm:$0xff]
      %v5321 = vld [vmem:[%s5271 + $0x188] sm:$0xff]
      %v5322 = vld [vmem:[%s5271 + $0x190] sm:$0xff]
      %v5323 = vld [vmem:[%s5271 + $0x198] sm:$0xff]
      %v5324 = vld [vmem:[%s5271 + $0x1a0] sm:$0xff]
      %v5325 = vld [vmem:[%s5271 + $0x1a8] sm:$0xff]
      %v5326 = vld [vmem:[%s5271 + $0x1b0] sm:$0xff]
      %v5327 = vld [vmem:[%s5271 + $0x1b8] sm:$0xff]
      %v5328 = vld [vmem:[%s5271 + $0x1c0] sm:$0xff]
      %v5329 = vld [vmem:[%s5271 + $0x1c8] sm:$0xff]
      %v5330 = vld [vmem:[%s5271 + $0x1d0] sm:$0xff]
      %v5331 = vld [vmem:[%s5271 + $0x1d8] sm:$0xff]
      %v5332 = vld [vmem:[%s5271 + $0x1e0] sm:$0xff]
      %v5333 = vld [vmem:[%s5271 + $0x1e8] sm:$0xff]
      %v5334 = vld [vmem:[%s5271 + $0x1f0] sm:$0xff]
      %v5335 = vld [vmem:[%s5271 + $0x1f8] sm:$0xff]
      %s5336 = scalar_lea.vmem %s8, 16
      %v5337 = vld [vmem:[%s5336] sm:$0xff]
      %v5338 = vld [vmem:[%s5336 + $0x8] sm:$0xff]
      %v5341 = vperm.slane %v5337, 0
      %v5342 = vperm.slane %v5337, 1
      %v5343 = vperm.slane %v5337, 2
      %v5344 = vperm.slane %v5337, 3
      %v5345 = vperm.slane %v5337, 4
      %v5346 = vperm.slane %v5337, 5
      %v5347 = vperm.slane %v5337, 6
      %v5348 = vperm.slane %v5337, 7
      %v5349 = vperm.slane %v5338, 0
      %v5350 = vperm.slane %v5338, 1
      %v5351 = vperm.slane %v5338, 2
      %v5352 = vperm.slane %v5338, 3
      %v5353 = vperm.slane %v5338, 4
      %v5354 = vperm.slane %v5338, 5
      %v5355 = vperm.slane %v5338, 6
      %v5356 = vperm.slane %v5338, 7
      %v5437 = vunpack.c.l.b16 %v5272
      %v5438 = vunpack.c.h.b16 %v5272
      %v5439 = vunpack.c.l.b16 %v5273
      %v5440 = vunpack.c.h.b16 %v5273
      %v5441 = vunpack.c.l.b16 %v5274
      %v5442 = vunpack.c.h.b16 %v5274
      %v5443 = vunpack.c.l.b16 %v5275
      %v5444 = vunpack.c.h.b16 %v5275
      %v5445 = vunpack.c.l.b16 %v5276
      %v5446 = vunpack.c.h.b16 %v5276
      %v5447 = vunpack.c.l.b16 %v5277
      %v5448 = vunpack.c.h.b16 %v5277
      %v5449 = vunpack.c.l.b16 %v5278
      %v5450 = vunpack.c.h.b16 %v5278
      %v5451 = vunpack.c.l.b16 %v5279
      %v5452 = vunpack.c.h.b16 %v5279
      %v5453 = vunpack.c.l.b16 %v5280
      %v5454 = vunpack.c.h.b16 %v5280
      %v5455 = vunpack.c.l.b16 %v5281
      %v5456 = vunpack.c.h.b16 %v5281
      %v5457 = vunpack.c.l.b16 %v5282
      %v5458 = vunpack.c.h.b16 %v5282
      %v5459 = vunpack.c.l.b16 %v5283
      %v5460 = vunpack.c.h.b16 %v5283
      %v5461 = vunpack.c.l.b16 %v5284
      %v5462 = vunpack.c.h.b16 %v5284
      %v5463 = vunpack.c.l.b16 %v5285
      %v5464 = vunpack.c.h.b16 %v5285
      %v5465 = vunpack.c.l.b16 %v5286
      %v5466 = vunpack.c.h.b16 %v5286
      %v5467 = vunpack.c.l.b16 %v5287
      %v5468 = vunpack.c.h.b16 %v5287
      %v5469 = vunpack.c.l.b16 %v5288
      %v5470 = vunpack.c.h.b16 %v5288
      %v5471 = vunpack.c.l.b16 %v5289
      %v5472 = vunpack.c.h.b16 %v5289
      %v5473 = vunpack.c.l.b16 %v5290
      %v5474 = vunpack.c.h.b16 %v5290
      %v5475 = vunpack.c.l.b16 %v5291
      %v5476 = vunpack.c.h.b16 %v5291
      %v5477 = vunpack.c.l.b16 %v5292
      %v5478 = vunpack.c.h.b16 %v5292
      %v5479 = vunpack.c.l.b16 %v5293
      %v5480 = vunpack.c.h.b16 %v5293
      %v5481 = vunpack.c.l.b16 %v5294
      %v5482 = vunpack.c.h.b16 %v5294
      %v5483 = vunpack.c.l.b16 %v5295
      %v5484 = vunpack.c.h.b16 %v5295
      %v5485 = vunpack.c.l.b16 %v5296
      %v5486 = vunpack.c.h.b16 %v5296
      %v5487 = vunpack.c.l.b16 %v5297
      %v5488 = vunpack.c.h.b16 %v5297
      %v5489 = vunpack.c.l.b16 %v5298
      %v5490 = vunpack.c.h.b16 %v5298
      %v5491 = vunpack.c.l.b16 %v5299
      %v5492 = vunpack.c.h.b16 %v5299
      %v5493 = vunpack.c.l.b16 %v5300
      %v5494 = vunpack.c.h.b16 %v5300
      %v5495 = vunpack.c.l.b16 %v5301
      %v5496 = vunpack.c.h.b16 %v5301
      %v5497 = vunpack.c.l.b16 %v5302
      %v5498 = vunpack.c.h.b16 %v5302
      %v5499 = vunpack.c.l.b16 %v5303
      %v5500 = vunpack.c.h.b16 %v5303
      %v5501 = vunpack.c.l.b16 %v5304
      %v5502 = vunpack.c.h.b16 %v5304
      %v5503 = vunpack.c.l.b16 %v5305
      %v5504 = vunpack.c.h.b16 %v5305
      %v5505 = vunpack.c.l.b16 %v5306
      %v5506 = vunpack.c.h.b16 %v5306
      %v5507 = vunpack.c.l.b16 %v5307
      %v5508 = vunpack.c.h.b16 %v5307
      %v5509 = vunpack.c.l.b16 %v5308
      %v5510 = vunpack.c.h.b16 %v5308
      %v5511 = vunpack.c.l.b16 %v5309
      %v5512 = vunpack.c.h.b16 %v5309
      %v5513 = vunpack.c.l.b16 %v5310
      %v5514 = vunpack.c.h.b16 %v5310
      %v5515 = vunpack.c.l.b16 %v5311
      %v5516 = vunpack.c.h.b16 %v5311
      %v5517 = vunpack.c.l.b16 %v5312
      %v5518 = vunpack.c.h.b16 %v5312
      %v5519 = vunpack.c.l.b16 %v5313
      %v5520 = vunpack.c.h.b16 %v5313
      %v5521 = vunpack.c.l.b16 %v5314
      %v5522 = vunpack.c.h.b16 %v5314
      %v5523 = vunpack.c.l.b16 %v5315
      %v5524 = vunpack.c.h.b16 %v5315
      %v5525 = vunpack.c.l.b16 %v5316
      %v5526 = vunpack.c.h.b16 %v5316
      %v5527 = vunpack.c.l.b16 %v5317
      %v5528 = vunpack.c.h.b16 %v5317
      %v5529 = vunpack.c.l.b16 %v5318
      %v5530 = vunpack.c.h.b16 %v5318
      %v5531 = vunpack.c.l.b16 %v5319
      %v5532 = vunpack.c.h.b16 %v5319
      %v5533 = vunpack.c.l.b16 %v5320
      %v5534 = vunpack.c.h.b16 %v5320
      %v5535 = vunpack.c.l.b16 %v5321
      %v5536 = vunpack.c.h.b16 %v5321
      %v5537 = vunpack.c.l.b16 %v5322
      %v5538 = vunpack.c.h.b16 %v5322
      %v5539 = vunpack.c.l.b16 %v5323
      %v5540 = vunpack.c.h.b16 %v5323
      %v5541 = vunpack.c.l.b16 %v5324
      %v5542 = vunpack.c.h.b16 %v5324
      %v5543 = vunpack.c.l.b16 %v5325
      %v5544 = vunpack.c.h.b16 %v5325
      %v5545 = vunpack.c.l.b16 %v5326
      %v5546 = vunpack.c.h.b16 %v5326
      %v5547 = vunpack.c.l.b16 %v5327
      %v5548 = vunpack.c.h.b16 %v5327
      %v5549 = vunpack.c.l.b16 %v5328
      %v5550 = vunpack.c.h.b16 %v5328
      %v5551 = vunpack.c.l.b16 %v5329
      %v5552 = vunpack.c.h.b16 %v5329
      %v5553 = vunpack.c.l.b16 %v5330
      %v5554 = vunpack.c.h.b16 %v5330
      %v5555 = vunpack.c.l.b16 %v5331
      %v5556 = vunpack.c.h.b16 %v5331
      %v5557 = vunpack.c.l.b16 %v5332
      %v5558 = vunpack.c.h.b16 %v5332
      %v5559 = vunpack.c.l.b16 %v5333
      %v5560 = vunpack.c.h.b16 %v5333
      %v5561 = vunpack.c.l.b16 %v5334
      %v5562 = vunpack.c.h.b16 %v5334
      %v5563 = vunpack.c.l.b16 %v5335
      %v5564 = vunpack.c.h.b16 %v5335
      %v5565 = vpack.c.b16 %v5453, %v5437
      %v5566 = vpack.c.b16 %v5454, %v5438
      %v5567 = vpack.c.b16 %v5455, %v5439
      %v5568 = vpack.c.b16 %v5456, %v5440
      %v5569 = vpack.c.b16 %v5457, %v5441
      %v5570 = vpack.c.b16 %v5458, %v5442
      %v5571 = vpack.c.b16 %v5459, %v5443
      %v5572 = vpack.c.b16 %v5460, %v5444
      %v5573 = vpack.c.b16 %v5461, %v5445
      %v5574 = vpack.c.b16 %v5462, %v5446
      %v5575 = vpack.c.b16 %v5463, %v5447
      %v5576 = vpack.c.b16 %v5464, %v5448
      %v5577 = vpack.c.b16 %v5465, %v5449
      %v5578 = vpack.c.b16 %v5466, %v5450
      %v5579 = vpack.c.b16 %v5467, %v5451
      %v5580 = vpack.c.b16 %v5468, %v5452
      %v5581 = vpack.c.b16 %v5485, %v5469
      %v5582 = vpack.c.b16 %v5486, %v5470
      %v5583 = vpack.c.b16 %v5487, %v5471
      %v5584 = vpack.c.b16 %v5488, %v5472
      %v5585 = vpack.c.b16 %v5489, %v5473
      %v5586 = vpack.c.b16 %v5490, %v5474
      %v5587 = vpack.c.b16 %v5491, %v5475
      %v5588 = vpack.c.b16 %v5492, %v5476
      %v5589 = vpack.c.b16 %v5493, %v5477
      %v5590 = vpack.c.b16 %v5494, %v5478
      %v5591 = vpack.c.b16 %v5495, %v5479
      %v5592 = vpack.c.b16 %v5496, %v5480
      %v5593 = vpack.c.b16 %v5497, %v5481
      %v5594 = vpack.c.b16 %v5498, %v5482
      %v5595 = vpack.c.b16 %v5499, %v5483
      %v5596 = vpack.c.b16 %v5500, %v5484
      %v5597 = vpack.c.b16 %v5517, %v5501
      %v5598 = vpack.c.b16 %v5518, %v5502
      %v5599 = vpack.c.b16 %v5519, %v5503
      %v5600 = vpack.c.b16 %v5520, %v5504
      %v5601 = vpack.c.b16 %v5521, %v5505
      %v5602 = vpack.c.b16 %v5522, %v5506
      %v5603 = vpack.c.b16 %v5523, %v5507
      %v5604 = vpack.c.b16 %v5524, %v5508
      %v5605 = vpack.c.b16 %v5525, %v5509
      %v5606 = vpack.c.b16 %v5526, %v5510
      %v5607 = vpack.c.b16 %v5527, %v5511
      %v5608 = vpack.c.b16 %v5528, %v5512
      %v5609 = vpack.c.b16 %v5529, %v5513
      %v5610 = vpack.c.b16 %v5530, %v5514
      %v5611 = vpack.c.b16 %v5531, %v5515
      %v5612 = vpack.c.b16 %v5532, %v5516
      %v5613 = vpack.c.b16 %v5549, %v5533
      %v5614 = vpack.c.b16 %v5550, %v5534
      %v5615 = vpack.c.b16 %v5551, %v5535
      %v5616 = vpack.c.b16 %v5552, %v5536
      %v5617 = vpack.c.b16 %v5553, %v5537
      %v5618 = vpack.c.b16 %v5554, %v5538
      %v5619 = vpack.c.b16 %v5555, %v5539
      %v5620 = vpack.c.b16 %v5556, %v5540
      %v5621 = vpack.c.b16 %v5557, %v5541
      %v5622 = vpack.c.b16 %v5558, %v5542
      %v5623 = vpack.c.b16 %v5559, %v5543
      %v5624 = vpack.c.b16 %v5560, %v5544
      %v5625 = vpack.c.b16 %v5561, %v5545
      %v5626 = vpack.c.b16 %v5562, %v5546
      %v5627 = vpack.c.b16 %v5563, %v5547
      %v5628 = vpack.c.b16 %v5564, %v5548
      %v5694 = vsel %vm635, %v5266, 0
      %v5697 = vsel %vm635, %v5267, 0
      %v5700 = vsel %vm635, %v5268, 0
      %v5703 = vsel %vm635, %v5269, 0
      %v5706 = vsel %vm635, %v5270, 0
      %5708 = vmatpush.bf16.msra.mxu0 0
      %5709 = vmatpush.bf16.msra.mxu0 0
      %5710 = vmatpush.bf16.msra.mxu0 0
      %5711 = vmatpush.bf16.msra.mxu0 0
      %5712 = vmatpush.bf16.msra.mxu0 %v5613
      %5713 = vmatpush.bf16.msra.mxu0 %v5597
      %5714 = vmatpush.bf16.msra.mxu0 %v5581
      %5715 = vmatpush.bf16.msra.mxu0 %v5565
      %5716 = vmatmul.bf16.gmra.mxu0 %v5694
      %v5717 = vpop.f32.mrf.mxu0
      %v5718 = vadd.f32 %v5341, %v5717
      %v5719 = vpop.f32.mrf.mxu0
      %v5720 = vadd.f32 %v5341, %v5719
      %5721 = vmatmul.bf16.gmra.mxu0 %v5697
      %v5722 = vpop.f32.mrf.mxu0
      %v5723 = vadd.f32 %v5341, %v5722
      %v5724 = vpop.f32.mrf.mxu0
      %v5725 = vadd.f32 %v5341, %v5724
      %5726 = vmatmul.bf16.gmra.mxu0 %v5700
      %v5727 = vpop.f32.mrf.mxu0
      %v5728 = vadd.f32 %v5341, %v5727
      %v5729 = vpop.f32.mrf.mxu0
      %v5730 = vadd.f32 %v5341, %v5729
      %5731 = vmatmul.bf16.gmra.mxu0 %v5703
      %v5732 = vpop.f32.mrf.mxu0
      %v5733 = vadd.f32 %v5341, %v5732
      %v5734 = vpop.f32.mrf.mxu0
      %v5735 = vadd.f32 %v5341, %v5734
      %5736 = vmatmul.bf16.gmra.mxu0 %v5706
      %v5737 = vpop.f32.mrf.mxu0
      %v5738 = vadd.f32 %v5341, %v5737
      %v5739 = vpop.f32.mrf.mxu0
      %v5740 = vadd.f32 %v5341, %v5739
      %5741 = vdwg.mxu0
      %5742 = vmatpush.bf16.msra.mxu0 0
      %5743 = vmatpush.bf16.msra.mxu0 0
      %5744 = vmatpush.bf16.msra.mxu0 0
      %5745 = vmatpush.bf16.msra.mxu0 0
      %5746 = vmatpush.bf16.msra.mxu0 %v5614
      %5747 = vmatpush.bf16.msra.mxu0 %v5598
      %5748 = vmatpush.bf16.msra.mxu0 %v5582
      %5749 = vmatpush.bf16.msra.mxu0 %v5566
      %5750 = vmatmul.bf16.gmra.mxu0 %v5694
      %v5751 = vpop.f32.mrf.mxu0
      %v5752 = vadd.f32 %v5342, %v5751
      %v5753 = vpop.f32.mrf.mxu0
      %v5754 = vadd.f32 %v5342, %v5753
      %5755 = vmatmul.bf16.gmra.mxu0 %v5697
      %v5756 = vpop.f32.mrf.mxu0
      %v5757 = vadd.f32 %v5342, %v5756
      %v5758 = vpop.f32.mrf.mxu0
      %v5759 = vadd.f32 %v5342, %v5758
      %5760 = vmatmul.bf16.gmra.mxu0 %v5700
      %v5761 = vpop.f32.mrf.mxu0
      %v5762 = vadd.f32 %v5342, %v5761
      %v5763 = vpop.f32.mrf.mxu0
      %v5764 = vadd.f32 %v5342, %v5763
      %5765 = vmatmul.bf16.gmra.mxu0 %v5703
      %v5766 = vpop.f32.mrf.mxu0
      %v5767 = vadd.f32 %v5342, %v5766
      %v5768 = vpop.f32.mrf.mxu0
      %v5769 = vadd.f32 %v5342, %v5768
      %5770 = vmatmul.bf16.gmra.mxu0 %v5706
      %v5771 = vpop.f32.mrf.mxu0
      %v5772 = vadd.f32 %v5342, %v5771
      %v5773 = vpop.f32.mrf.mxu0
      %v5774 = vadd.f32 %v5342, %v5773
      %5775 = vdwg.mxu0
      %5776 = vmatpush.bf16.msra.mxu0 0
      %5777 = vmatpush.bf16.msra.mxu0 0
      %5778 = vmatpush.bf16.msra.mxu0 0
      %5779 = vmatpush.bf16.msra.mxu0 0
      %5780 = vmatpush.bf16.msra.mxu0 %v5615
      %5781 = vmatpush.bf16.msra.mxu0 %v5599
      %5782 = vmatpush.bf16.msra.mxu0 %v5583
      %5783 = vmatpush.bf16.msra.mxu0 %v5567
      %5784 = vmatmul.bf16.gmra.mxu0 %v5694
      %v5785 = vpop.f32.mrf.mxu0
      %v5786 = vadd.f32 %v5343, %v5785
      %v5787 = vpop.f32.mrf.mxu0
      %v5788 = vadd.f32 %v5343, %v5787
      %5789 = vmatmul.bf16.gmra.mxu0 %v5697
      %v5790 = vpop.f32.mrf.mxu0
      %v5791 = vadd.f32 %v5343, %v5790
      %v5792 = vpop.f32.mrf.mxu0
      %v5793 = vadd.f32 %v5343, %v5792
      %5794 = vmatmul.bf16.gmra.mxu0 %v5700
      %v5795 = vpop.f32.mrf.mxu0
      %v5796 = vadd.f32 %v5343, %v5795
      %v5797 = vpop.f32.mrf.mxu0
      %v5798 = vadd.f32 %v5343, %v5797
      %5799 = vmatmul.bf16.gmra.mxu0 %v5703
      %v5800 = vpop.f32.mrf.mxu0
      %v5801 = vadd.f32 %v5343, %v5800
      %v5802 = vpop.f32.mrf.mxu0
      %v5803 = vadd.f32 %v5343, %v5802
      %5804 = vmatmul.bf16.gmra.mxu0 %v5706
      %v5805 = vpop.f32.mrf.mxu0
      %v5806 = vadd.f32 %v5343, %v5805
      %v5807 = vpop.f32.mrf.mxu0
      %v5808 = vadd.f32 %v5343, %v5807
      %5809 = vdwg.mxu0
      %5810 = vmatpush.bf16.msra.mxu0 0
      %5811 = vmatpush.bf16.msra.mxu0 0
      %5812 = vmatpush.bf16.msra.mxu0 0
      %5813 = vmatpush.bf16.msra.mxu0 0
      %5814 = vmatpush.bf16.msra.mxu0 %v5616
      %5815 = vmatpush.bf16.msra.mxu0 %v5600
      %5816 = vmatpush.bf16.msra.mxu0 %v5584
      %5817 = vmatpush.bf16.msra.mxu0 %v5568
      %5818 = vmatmul.bf16.gmra.mxu0 %v5694
      %v5819 = vpop.f32.mrf.mxu0
      %v5820 = vadd.f32 %v5344, %v5819
      %v5821 = vpop.f32.mrf.mxu0
      %v5822 = vadd.f32 %v5344, %v5821
      %5823 = vmatmul.bf16.gmra.mxu0 %v5697
      %v5824 = vpop.f32.mrf.mxu0
      %v5825 = vadd.f32 %v5344, %v5824
      %v5826 = vpop.f32.mrf.mxu0
      %v5827 = vadd.f32 %v5344, %v5826
      %5828 = vmatmul.bf16.gmra.mxu0 %v5700
      %v5829 = vpop.f32.mrf.mxu0
      %v5830 = vadd.f32 %v5344, %v5829
      %v5831 = vpop.f32.mrf.mxu0
      %v5832 = vadd.f32 %v5344, %v5831
      %5833 = vmatmul.bf16.gmra.mxu0 %v5703
      %v5834 = vpop.f32.mrf.mxu0
      %v5835 = vadd.f32 %v5344, %v5834
      %v5836 = vpop.f32.mrf.mxu0
      %v5837 = vadd.f32 %v5344, %v5836
      %5838 = vmatmul.bf16.gmra.mxu0 %v5706
      %v5839 = vpop.f32.mrf.mxu0
      %v5840 = vadd.f32 %v5344, %v5839
      %v5841 = vpop.f32.mrf.mxu0
      %v5842 = vadd.f32 %v5344, %v5841
      %5843 = vdwg.mxu0
      %5844 = vmatpush.bf16.msra.mxu0 0
      %5845 = vmatpush.bf16.msra.mxu0 0
      %5846 = vmatpush.bf16.msra.mxu0 0
      %5847 = vmatpush.bf16.msra.mxu0 0
      %5848 = vmatpush.bf16.msra.mxu0 %v5617
      %5849 = vmatpush.bf16.msra.mxu0 %v5601
      %5850 = vmatpush.bf16.msra.mxu0 %v5585
      %5851 = vmatpush.bf16.msra.mxu0 %v5569
      %5852 = vmatmul.bf16.gmra.mxu0 %v5694
      %v5853 = vpop.f32.mrf.mxu0
      %v5854 = vadd.f32 %v5345, %v5853
      %v5855 = vpop.f32.mrf.mxu0
      %v5856 = vadd.f32 %v5345, %v5855
      %5857 = vmatmul.bf16.gmra.mxu0 %v5697
      %v5858 = vpop.f32.mrf.mxu0
      %v5859 = vadd.f32 %v5345, %v5858
      %v5860 = vpop.f32.mrf.mxu0
      %v5861 = vadd.f32 %v5345, %v5860
      %5862 = vmatmul.bf16.gmra.mxu0 %v5700
      %v5863 = vpop.f32.mrf.mxu0
      %v5864 = vadd.f32 %v5345, %v5863
      %v5865 = vpop.f32.mrf.mxu0
      %v5866 = vadd.f32 %v5345, %v5865
      %5867 = vmatmul.bf16.gmra.mxu0 %v5703
      %v5868 = vpop.f32.mrf.mxu0
      %v5869 = vadd.f32 %v5345, %v5868
      %v5870 = vpop.f32.mrf.mxu0
      %v5871 = vadd.f32 %v5345, %v5870
      %5872 = vmatmul.bf16.gmra.mxu0 %v5706
      %v5873 = vpop.f32.mrf.mxu0
      %v5874 = vadd.f32 %v5345, %v5873
      %v5875 = vpop.f32.mrf.mxu0
      %v5876 = vadd.f32 %v5345, %v5875
      %5877 = vdwg.mxu0
      %5878 = vmatpush.bf16.msra.mxu0 0
      %5879 = vmatpush.bf16.msra.mxu0 0
      %5880 = vmatpush.bf16.msra.mxu0 0
      %5881 = vmatpush.bf16.msra.mxu0 0
      %5882 = vmatpush.bf16.msra.mxu0 %v5618
      %5883 = vmatpush.bf16.msra.mxu0 %v5602
      %5884 = vmatpush.bf16.msra.mxu0 %v5586
      %5885 = vmatpush.bf16.msra.mxu0 %v5570
      %5886 = vmatmul.bf16.gmra.mxu0 %v5694
      %v5887 = vpop.f32.mrf.mxu0
      %v5888 = vadd.f32 %v5346, %v5887
      %v5889 = vpop.f32.mrf.mxu0
      %v5890 = vadd.f32 %v5346, %v5889
      %5891 = vmatmul.bf16.gmra.mxu0 %v5697
      %v5892 = vpop.f32.mrf.mxu0
      %v5893 = vadd.f32 %v5346, %v5892
      %v5894 = vpop.f32.mrf.mxu0
      %v5895 = vadd.f32 %v5346, %v5894
      %5896 = vmatmul.bf16.gmra.mxu0 %v5700
      %v5897 = vpop.f32.mrf.mxu0
      %v5898 = vadd.f32 %v5346, %v5897
      %v5899 = vpop.f32.mrf.mxu0
      %v5900 = vadd.f32 %v5346, %v5899
      %5901 = vmatmul.bf16.gmra.mxu0 %v5703
      %v5902 = vpop.f32.mrf.mxu0
      %v5903 = vadd.f32 %v5346, %v5902
      %v5904 = vpop.f32.mrf.mxu0
      %v5905 = vadd.f32 %v5346, %v5904
      %5906 = vmatmul.bf16.gmra.mxu0 %v5706
      %v5907 = vpop.f32.mrf.mxu0
      %v5908 = vadd.f32 %v5346, %v5907
      %v5909 = vpop.f32.mrf.mxu0
      %v5910 = vadd.f32 %v5346, %v5909
      %5911 = vdwg.mxu0
      %5912 = vmatpush.bf16.msra.mxu0 0
      %5913 = vmatpush.bf16.msra.mxu0 0
      %5914 = vmatpush.bf16.msra.mxu0 0
      %5915 = vmatpush.bf16.msra.mxu0 0
      %5916 = vmatpush.bf16.msra.mxu0 %v5619
      %5917 = vmatpush.bf16.msra.mxu0 %v5603
      %5918 = vmatpush.bf16.msra.mxu0 %v5587
      %5919 = vmatpush.bf16.msra.mxu0 %v5571
      %5920 = vmatmul.bf16.gmra.mxu0 %v5694
      %v5921 = vpop.f32.mrf.mxu0
      %v5922 = vadd.f32 %v5347, %v5921
      %v5923 = vpop.f32.mrf.mxu0
      %v5924 = vadd.f32 %v5347, %v5923
      %5925 = vmatmul.bf16.gmra.mxu0 %v5697
      %v5926 = vpop.f32.mrf.mxu0
      %v5927 = vadd.f32 %v5347, %v5926
      %v5928 = vpop.f32.mrf.mxu0
      %v5929 = vadd.f32 %v5347, %v5928
      %5930 = vmatmul.bf16.gmra.mxu0 %v5700
      %v5931 = vpop.f32.mrf.mxu0
      %v5932 = vadd.f32 %v5347, %v5931
      %v5933 = vpop.f32.mrf.mxu0
      %v5934 = vadd.f32 %v5347, %v5933
      %5935 = vmatmul.bf16.gmra.mxu0 %v5703
      %v5936 = vpop.f32.mrf.mxu0
      %v5937 = vadd.f32 %v5347, %v5936
      %v5938 = vpop.f32.mrf.mxu0
      %v5939 = vadd.f32 %v5347, %v5938
      %5940 = vmatmul.bf16.gmra.mxu0 %v5706
      %v5941 = vpop.f32.mrf.mxu0
      %v5942 = vadd.f32 %v5347, %v5941
      %v5943 = vpop.f32.mrf.mxu0
      %v5944 = vadd.f32 %v5347, %v5943
      %5945 = vdwg.mxu0
      %5946 = vmatpush.bf16.msra.mxu0 0
      %5947 = vmatpush.bf16.msra.mxu0 0
      %5948 = vmatpush.bf16.msra.mxu0 0
      %5949 = vmatpush.bf16.msra.mxu0 0
      %5950 = vmatpush.bf16.msra.mxu0 %v5620
      %5951 = vmatpush.bf16.msra.mxu0 %v5604
      %5952 = vmatpush.bf16.msra.mxu0 %v5588
      %5953 = vmatpush.bf16.msra.mxu0 %v5572
      %5954 = vmatmul.bf16.gmra.mxu0 %v5694
      %v5955 = vpop.f32.mrf.mxu0
      %v5956 = vadd.f32 %v5348, %v5955
      %v5957 = vpop.f32.mrf.mxu0
      %v5958 = vadd.f32 %v5348, %v5957
      %5959 = vmatmul.bf16.gmra.mxu0 %v5697
      %v5960 = vpop.f32.mrf.mxu0
      %v5961 = vadd.f32 %v5348, %v5960
      %v5962 = vpop.f32.mrf.mxu0
      %v5963 = vadd.f32 %v5348, %v5962
      %5964 = vmatmul.bf16.gmra.mxu0 %v5700
      %v5965 = vpop.f32.mrf.mxu0
      %v5966 = vadd.f32 %v5348, %v5965
      %v5967 = vpop.f32.mrf.mxu0
      %v5968 = vadd.f32 %v5348, %v5967
      %5969 = vmatmul.bf16.gmra.mxu0 %v5703
      %v5970 = vpop.f32.mrf.mxu0
      %v5971 = vadd.f32 %v5348, %v5970
      %v5972 = vpop.f32.mrf.mxu0
      %v5973 = vadd.f32 %v5348, %v5972
      %5974 = vmatmul.bf16.gmra.mxu0 %v5706
      %v5975 = vpop.f32.mrf.mxu0
      %v5976 = vadd.f32 %v5348, %v5975
      %v5977 = vpop.f32.mrf.mxu0
      %v5978 = vadd.f32 %v5348, %v5977
      %5979 = vdwg.mxu0
      %5980 = vmatpush.bf16.msra.mxu0 0
      %5981 = vmatpush.bf16.msra.mxu0 0
      %5982 = vmatpush.bf16.msra.mxu0 0
      %5983 = vmatpush.bf16.msra.mxu0 0
      %5984 = vmatpush.bf16.msra.mxu0 %v5621
      %5985 = vmatpush.bf16.msra.mxu0 %v5605
      %5986 = vmatpush.bf16.msra.mxu0 %v5589
      %5987 = vmatpush.bf16.msra.mxu0 %v5573
      %5988 = vmatmul.bf16.gmra.mxu0 %v5694
      %v5989 = vpop.f32.mrf.mxu0
      %v5990 = vadd.f32 %v5349, %v5989
      %v5991 = vpop.f32.mrf.mxu0
      %v5992 = vadd.f32 %v5349, %v5991
      %5993 = vmatmul.bf16.gmra.mxu0 %v5697
      %v5994 = vpop.f32.mrf.mxu0
      %v5995 = vadd.f32 %v5349, %v5994
      %v5996 = vpop.f32.mrf.mxu0
      %v5997 = vadd.f32 %v5349, %v5996
      %5998 = vmatmul.bf16.gmra.mxu0 %v5700
      %v5999 = vpop.f32.mrf.mxu0
      %v6000 = vadd.f32 %v5349, %v5999
      %v6001 = vpop.f32.mrf.mxu0
      %v6002 = vadd.f32 %v5349, %v6001
      %6003 = vmatmul.bf16.gmra.mxu0 %v5703
      %v6004 = vpop.f32.mrf.mxu0
      %v6005 = vadd.f32 %v5349, %v6004
      %v6006 = vpop.f32.mrf.mxu0
      %v6007 = vadd.f32 %v5349, %v6006
      %6008 = vmatmul.bf16.gmra.mxu0 %v5706
      %v6009 = vpop.f32.mrf.mxu0
      %v6010 = vadd.f32 %v5349, %v6009
      %v6011 = vpop.f32.mrf.mxu0
      %v6012 = vadd.f32 %v5349, %v6011
      %6013 = vdwg.mxu0
      %6014 = vmatpush.bf16.msra.mxu0 0
      %6015 = vmatpush.bf16.msra.mxu0 0
      %6016 = vmatpush.bf16.msra.mxu0 0
      %6017 = vmatpush.bf16.msra.mxu0 0
      %6018 = vmatpush.bf16.msra.mxu0 %v5622
      %6019 = vmatpush.bf16.msra.mxu0 %v5606
      %6020 = vmatpush.bf16.msra.mxu0 %v5590
      %6021 = vmatpush.bf16.msra.mxu0 %v5574
      %6022 = vmatmul.bf16.gmra.mxu0 %v5694
      %v6023 = vpop.f32.mrf.mxu0
      %v6024 = vadd.f32 %v5350, %v6023
      %v6025 = vpop.f32.mrf.mxu0
      %v6026 = vadd.f32 %v5350, %v6025
      %6027 = vmatmul.bf16.gmra.mxu0 %v5697
      %v6028 = vpop.f32.mrf.mxu0
      %v6029 = vadd.f32 %v5350, %v6028
      %v6030 = vpop.f32.mrf.mxu0
      %v6031 = vadd.f32 %v5350, %v6030
      %6032 = vmatmul.bf16.gmra.mxu0 %v5700
      %v6033 = vpop.f32.mrf.mxu0
      %v6034 = vadd.f32 %v5350, %v6033
      %v6035 = vpop.f32.mrf.mxu0
      %v6036 = vadd.f32 %v5350, %v6035
      %6037 = vmatmul.bf16.gmra.mxu0 %v5703
      %v6038 = vpop.f32.mrf.mxu0
      %v6039 = vadd.f32 %v5350, %v6038
      %v6040 = vpop.f32.mrf.mxu0
      %v6041 = vadd.f32 %v5350, %v6040
      %6042 = vmatmul.bf16.gmra.mxu0 %v5706
      %v6043 = vpop.f32.mrf.mxu0
      %v6044 = vadd.f32 %v5350, %v6043
      %v6045 = vpop.f32.mrf.mxu0
      %v6046 = vadd.f32 %v5350, %v6045
      %6047 = vdwg.mxu0
      %6048 = vmatpush.bf16.msra.mxu0 0
      %6049 = vmatpush.bf16.msra.mxu0 0
      %6050 = vmatpush.bf16.msra.mxu0 0
      %6051 = vmatpush.bf16.msra.mxu0 0
      %6052 = vmatpush.bf16.msra.mxu0 %v5623
      %6053 = vmatpush.bf16.msra.mxu0 %v5607
      %6054 = vmatpush.bf16.msra.mxu0 %v5591
      %6055 = vmatpush.bf16.msra.mxu0 %v5575
      %6056 = vmatmul.bf16.gmra.mxu0 %v5694
      %v6057 = vpop.f32.mrf.mxu0
      %v6058 = vadd.f32 %v5351, %v6057
      %v6059 = vpop.f32.mrf.mxu0
      %v6060 = vadd.f32 %v5351, %v6059
      %6061 = vmatmul.bf16.gmra.mxu0 %v5697
      %v6062 = vpop.f32.mrf.mxu0
      %v6063 = vadd.f32 %v5351, %v6062
      %v6064 = vpop.f32.mrf.mxu0
      %v6065 = vadd.f32 %v5351, %v6064
      %6066 = vmatmul.bf16.gmra.mxu0 %v5700
      %v6067 = vpop.f32.mrf.mxu0
      %v6068 = vadd.f32 %v5351, %v6067
      %v6069 = vpop.f32.mrf.mxu0
      %v6070 = vadd.f32 %v5351, %v6069
      %6071 = vmatmul.bf16.gmra.mxu0 %v5703
      %v6072 = vpop.f32.mrf.mxu0
      %v6073 = vadd.f32 %v5351, %v6072
      %v6074 = vpop.f32.mrf.mxu0
      %v6075 = vadd.f32 %v5351, %v6074
      %6076 = vmatmul.bf16.gmra.mxu0 %v5706
      %v6077 = vpop.f32.mrf.mxu0
      %v6078 = vadd.f32 %v5351, %v6077
      %v6079 = vpop.f32.mrf.mxu0
      %v6080 = vadd.f32 %v5351, %v6079
      %6081 = vdwg.mxu0
      %6082 = vmatpush.bf16.msra.mxu0 0
      %6083 = vmatpush.bf16.msra.mxu0 0
      %6084 = vmatpush.bf16.msra.mxu0 0
      %6085 = vmatpush.bf16.msra.mxu0 0
      %6086 = vmatpush.bf16.msra.mxu0 %v5624
      %6087 = vmatpush.bf16.msra.mxu0 %v5608
      %6088 = vmatpush.bf16.msra.mxu0 %v5592
      %6089 = vmatpush.bf16.msra.mxu0 %v5576
      %6090 = vmatmul.bf16.gmra.mxu0 %v5694
      %v6091 = vpop.f32.mrf.mxu0
      %v6092 = vadd.f32 %v5352, %v6091
      %v6093 = vpop.f32.mrf.mxu0
      %v6094 = vadd.f32 %v5352, %v6093
      %6095 = vmatmul.bf16.gmra.mxu0 %v5697
      %v6096 = vpop.f32.mrf.mxu0
      %v6097 = vadd.f32 %v5352, %v6096
      %v6098 = vpop.f32.mrf.mxu0
      %v6099 = vadd.f32 %v5352, %v6098
      %6100 = vmatmul.bf16.gmra.mxu0 %v5700
      %v6101 = vpop.f32.mrf.mxu0
      %v6102 = vadd.f32 %v5352, %v6101
      %v6103 = vpop.f32.mrf.mxu0
      %v6104 = vadd.f32 %v5352, %v6103
      %6105 = vmatmul.bf16.gmra.mxu0 %v5703
      %v6106 = vpop.f32.mrf.mxu0
      %v6107 = vadd.f32 %v5352, %v6106
      %v6108 = vpop.f32.mrf.mxu0
      %v6109 = vadd.f32 %v5352, %v6108
      %6110 = vmatmul.bf16.gmra.mxu0 %v5706
      %v6111 = vpop.f32.mrf.mxu0
      %v6112 = vadd.f32 %v5352, %v6111
      %v6113 = vpop.f32.mrf.mxu0
      %v6114 = vadd.f32 %v5352, %v6113
      %6115 = vdwg.mxu0
      %6116 = vmatpush.bf16.msra.mxu0 0
      %6117 = vmatpush.bf16.msra.mxu0 0
      %6118 = vmatpush.bf16.msra.mxu0 0
      %6119 = vmatpush.bf16.msra.mxu0 0
      %6120 = vmatpush.bf16.msra.mxu0 %v5625
      %6121 = vmatpush.bf16.msra.mxu0 %v5609
      %6122 = vmatpush.bf16.msra.mxu0 %v5593
      %6123 = vmatpush.bf16.msra.mxu0 %v5577
      %6124 = vmatmul.bf16.gmra.mxu0 %v5694
      %v6125 = vpop.f32.mrf.mxu0
      %v6126 = vadd.f32 %v5353, %v6125
      %v6127 = vpop.f32.mrf.mxu0
      %v6128 = vadd.f32 %v5353, %v6127
      %6129 = vmatmul.bf16.gmra.mxu0 %v5697
      %v6130 = vpop.f32.mrf.mxu0
      %v6131 = vadd.f32 %v5353, %v6130
      %v6132 = vpop.f32.mrf.mxu0
      %v6133 = vadd.f32 %v5353, %v6132
      %6134 = vmatmul.bf16.gmra.mxu0 %v5700
      %v6135 = vpop.f32.mrf.mxu0
      %v6136 = vadd.f32 %v5353, %v6135
      %v6137 = vpop.f32.mrf.mxu0
      %v6138 = vadd.f32 %v5353, %v6137
      %6139 = vmatmul.bf16.gmra.mxu0 %v5703
      %v6140 = vpop.f32.mrf.mxu0
      %v6141 = vadd.f32 %v5353, %v6140
      %v6142 = vpop.f32.mrf.mxu0
      %v6143 = vadd.f32 %v5353, %v6142
      %6144 = vmatmul.bf16.gmra.mxu0 %v5706
      %v6145 = vpop.f32.mrf.mxu0
      %v6146 = vadd.f32 %v5353, %v6145
      %v6147 = vpop.f32.mrf.mxu0
      %v6148 = vadd.f32 %v5353, %v6147
      %6149 = vdwg.mxu0
      %6150 = vmatpush.bf16.msra.mxu0 0
      %6151 = vmatpush.bf16.msra.mxu0 0
      %6152 = vmatpush.bf16.msra.mxu0 0
      %6153 = vmatpush.bf16.msra.mxu0 0
      %6154 = vmatpush.bf16.msra.mxu0 %v5626
      %6155 = vmatpush.bf16.msra.mxu0 %v5610
      %6156 = vmatpush.bf16.msra.mxu0 %v5594
      %6157 = vmatpush.bf16.msra.mxu0 %v5578
      %6158 = vmatmul.bf16.gmra.mxu0 %v5694
      %v6159 = vpop.f32.mrf.mxu0
      %v6160 = vadd.f32 %v5354, %v6159
      %v6161 = vpop.f32.mrf.mxu0
      %v6162 = vadd.f32 %v5354, %v6161
      %6163 = vmatmul.bf16.gmra.mxu0 %v5697
      %v6164 = vpop.f32.mrf.mxu0
      %v6165 = vadd.f32 %v5354, %v6164
      %v6166 = vpop.f32.mrf.mxu0
      %v6167 = vadd.f32 %v5354, %v6166
      %6168 = vmatmul.bf16.gmra.mxu0 %v5700
      %v6169 = vpop.f32.mrf.mxu0
      %v6170 = vadd.f32 %v5354, %v6169
      %v6171 = vpop.f32.mrf.mxu0
      %v6172 = vadd.f32 %v5354, %v6171
      %6173 = vmatmul.bf16.gmra.mxu0 %v5703
      %v6174 = vpop.f32.mrf.mxu0
      %v6175 = vadd.f32 %v5354, %v6174
      %v6176 = vpop.f32.mrf.mxu0
      %v6177 = vadd.f32 %v5354, %v6176
      %6178 = vmatmul.bf16.gmra.mxu0 %v5706
      %v6179 = vpop.f32.mrf.mxu0
      %v6180 = vadd.f32 %v5354, %v6179
      %v6181 = vpop.f32.mrf.mxu0
      %v6182 = vadd.f32 %v5354, %v6181
      %6183 = vdwg.mxu0
      %6184 = vmatpush.bf16.msra.mxu0 0
      %6185 = vmatpush.bf16.msra.mxu0 0
      %6186 = vmatpush.bf16.msra.mxu0 0
      %6187 = vmatpush.bf16.msra.mxu0 0
      %6188 = vmatpush.bf16.msra.mxu0 %v5627
      %6189 = vmatpush.bf16.msra.mxu0 %v5611
      %6190 = vmatpush.bf16.msra.mxu0 %v5595
      %6191 = vmatpush.bf16.msra.mxu0 %v5579
      %6192 = vmatmul.bf16.gmra.mxu0 %v5694
      %v6193 = vpop.f32.mrf.mxu0
      %v6194 = vadd.f32 %v5355, %v6193
      %v6195 = vpop.f32.mrf.mxu0
      %v6196 = vadd.f32 %v5355, %v6195
      %6197 = vmatmul.bf16.gmra.mxu0 %v5697
      %v6198 = vpop.f32.mrf.mxu0
      %v6199 = vadd.f32 %v5355, %v6198
      %v6200 = vpop.f32.mrf.mxu0
      %v6201 = vadd.f32 %v5355, %v6200
      %6202 = vmatmul.bf16.gmra.mxu0 %v5700
      %v6203 = vpop.f32.mrf.mxu0
      %v6204 = vadd.f32 %v5355, %v6203
      %v6205 = vpop.f32.mrf.mxu0
      %v6206 = vadd.f32 %v5355, %v6205
      %6207 = vmatmul.bf16.gmra.mxu0 %v5703
      %v6208 = vpop.f32.mrf.mxu0
      %v6209 = vadd.f32 %v5355, %v6208
      %v6210 = vpop.f32.mrf.mxu0
      %v6211 = vadd.f32 %v5355, %v6210
      %6212 = vmatmul.bf16.gmra.mxu0 %v5706
      %v6213 = vpop.f32.mrf.mxu0
      %v6214 = vadd.f32 %v5355, %v6213
      %v6215 = vpop.f32.mrf.mxu0
      %v6216 = vadd.f32 %v5355, %v6215
      %6217 = vdwg.mxu0
      %6218 = vmatpush.bf16.msra.mxu0 0
      %6219 = vmatpush.bf16.msra.mxu0 0
      %6220 = vmatpush.bf16.msra.mxu0 0
      %6221 = vmatpush.bf16.msra.mxu0 0
      %6222 = vmatpush.bf16.msra.mxu0 %v5628
      %6223 = vmatpush.bf16.msra.mxu0 %v5612
      %6224 = vmatpush.bf16.msra.mxu0 %v5596
      %6225 = vmatpush.bf16.msra.mxu0 %v5580
      %6226 = vmatmul.bf16.gmra.mxu0 %v5694
      %v6227 = vpop.f32.mrf.mxu0
      %v6228 = vadd.f32 %v5356, %v6227
      %v6229 = vpop.f32.mrf.mxu0
      %v6230 = vadd.f32 %v5356, %v6229
      %6231 = vmatmul.bf16.gmra.mxu0 %v5697
      %v6232 = vpop.f32.mrf.mxu0
      %v6233 = vadd.f32 %v5356, %v6232
      %v6234 = vpop.f32.mrf.mxu0
      %v6235 = vadd.f32 %v5356, %v6234
      %6236 = vmatmul.bf16.gmra.mxu0 %v5700
      %v6237 = vpop.f32.mrf.mxu0
      %v6238 = vadd.f32 %v5356, %v6237
      %v6239 = vpop.f32.mrf.mxu0
      %v6240 = vadd.f32 %v5356, %v6239
      %6241 = vmatmul.bf16.gmra.mxu0 %v5703
      %v6242 = vpop.f32.mrf.mxu0
      %v6243 = vadd.f32 %v5356, %v6242
      %v6244 = vpop.f32.mrf.mxu0
      %v6245 = vadd.f32 %v5356, %v6244
      %6246 = vmatmul.bf16.gmra.mxu0 %v5706
      %v6247 = vpop.f32.mrf.mxu0
      %v6248 = vadd.f32 %v5356, %v6247
      %v6249 = vpop.f32.mrf.mxu0
      %v6250 = vadd.f32 %v5356, %v6249
      %6251 = vdwg.mxu0
      %v6252 = vmax.f32 %v5718, 0.0
      %v6253 = vmax.f32 %v5752, 0.0
      %v6254 = vmax.f32 %v5786, 0.0
      %v6255 = vmax.f32 %v5820, 0.0
      %v6256 = vmax.f32 %v5854, 0.0
      %v6257 = vmax.f32 %v5888, 0.0
      %v6258 = vmax.f32 %v5922, 0.0
      %v6259 = vmax.f32 %v5956, 0.0
      %v6260 = vmax.f32 %v5990, 0.0
      %v6261 = vmax.f32 %v6024, 0.0
      %v6262 = vmax.f32 %v6058, 0.0
      %v6263 = vmax.f32 %v6092, 0.0
      %v6264 = vmax.f32 %v6126, 0.0
      %v6265 = vmax.f32 %v6160, 0.0
      %v6266 = vmax.f32 %v6194, 0.0
      %v6267 = vmax.f32 %v6228, 0.0
      %v6268 = vmax.f32 %v5720, 0.0
      %v6269 = vmax.f32 %v5754, 0.0
      %v6270 = vmax.f32 %v5788, 0.0
      %v6271 = vmax.f32 %v5822, 0.0
      %v6272 = vmax.f32 %v5856, 0.0
      %v6273 = vmax.f32 %v5890, 0.0
      %v6274 = vmax.f32 %v5924, 0.0
      %v6275 = vmax.f32 %v5958, 0.0
      %v6276 = vmax.f32 %v5992, 0.0
      %v6277 = vmax.f32 %v6026, 0.0
      %v6278 = vmax.f32 %v6060, 0.0
      %v6279 = vmax.f32 %v6094, 0.0
      %v6280 = vmax.f32 %v6128, 0.0
      %v6281 = vmax.f32 %v6162, 0.0
      %v6282 = vmax.f32 %v6196, 0.0
      %v6283 = vmax.f32 %v6230, 0.0
      %v6284 = vmax.f32 %v5723, 0.0
      %v6285 = vmax.f32 %v5757, 0.0
      %v6286 = vmax.f32 %v5791, 0.0
      %v6287 = vmax.f32 %v5825, 0.0
      %v6288 = vmax.f32 %v5859, 0.0
      %v6289 = vmax.f32 %v5893, 0.0
      %v6290 = vmax.f32 %v5927, 0.0
      %v6291 = vmax.f32 %v5961, 0.0
      %v6292 = vmax.f32 %v5995, 0.0
      %v6293 = vmax.f32 %v6029, 0.0
      %v6294 = vmax.f32 %v6063, 0.0
      %v6295 = vmax.f32 %v6097, 0.0
      %v6296 = vmax.f32 %v6131, 0.0
      %v6297 = vmax.f32 %v6165, 0.0
      %v6298 = vmax.f32 %v6199, 0.0
      %v6299 = vmax.f32 %v6233, 0.0
      %v6300 = vmax.f32 %v5725, 0.0
      %v6301 = vmax.f32 %v5759, 0.0
      %v6302 = vmax.f32 %v5793, 0.0
      %v6303 = vmax.f32 %v5827, 0.0
      %v6304 = vmax.f32 %v5861, 0.0
      %v6305 = vmax.f32 %v5895, 0.0
      %v6306 = vmax.f32 %v5929, 0.0
      %v6307 = vmax.f32 %v5963, 0.0
      %v6308 = vmax.f32 %v5997, 0.0
      %v6309 = vmax.f32 %v6031, 0.0
      %v6310 = vmax.f32 %v6065, 0.0
      %v6311 = vmax.f32 %v6099, 0.0
      %v6312 = vmax.f32 %v6133, 0.0
      %v6313 = vmax.f32 %v6167, 0.0
      %v6314 = vmax.f32 %v6201, 0.0
      %v6315 = vmax.f32 %v6235, 0.0
      %v6316 = vmax.f32 %v5728, 0.0
      %v6317 = vmax.f32 %v5762, 0.0
      %v6318 = vmax.f32 %v5796, 0.0
      %v6319 = vmax.f32 %v5830, 0.0
      %v6320 = vmax.f32 %v5864, 0.0
      %v6321 = vmax.f32 %v5898, 0.0
      %v6322 = vmax.f32 %v5932, 0.0
      %v6323 = vmax.f32 %v5966, 0.0
      %v6324 = vmax.f32 %v6000, 0.0
      %v6325 = vmax.f32 %v6034, 0.0
      %v6326 = vmax.f32 %v6068, 0.0
      %v6327 = vmax.f32 %v6102, 0.0
      %v6328 = vmax.f32 %v6136, 0.0
      %v6329 = vmax.f32 %v6170, 0.0
      %v6330 = vmax.f32 %v6204, 0.0
      %v6331 = vmax.f32 %v6238, 0.0
      %v6332 = vmax.f32 %v5730, 0.0
      %v6333 = vmax.f32 %v5764, 0.0
      %v6334 = vmax.f32 %v5798, 0.0
      %v6335 = vmax.f32 %v5832, 0.0
      %v6336 = vmax.f32 %v5866, 0.0
      %v6337 = vmax.f32 %v5900, 0.0
      %v6338 = vmax.f32 %v5934, 0.0
      %v6339 = vmax.f32 %v5968, 0.0
      %v6340 = vmax.f32 %v6002, 0.0
      %v6341 = vmax.f32 %v6036, 0.0
      %v6342 = vmax.f32 %v6070, 0.0
      %v6343 = vmax.f32 %v6104, 0.0
      %v6344 = vmax.f32 %v6138, 0.0
      %v6345 = vmax.f32 %v6172, 0.0
      %v6346 = vmax.f32 %v6206, 0.0
      %v6347 = vmax.f32 %v6240, 0.0
      %v6348 = vmax.f32 %v5733, 0.0
      %v6349 = vmax.f32 %v5767, 0.0
      %v6350 = vmax.f32 %v5801, 0.0
      %v6351 = vmax.f32 %v5835, 0.0
      %v6352 = vmax.f32 %v5869, 0.0
      %v6353 = vmax.f32 %v5903, 0.0
      %v6354 = vmax.f32 %v5937, 0.0
      %v6355 = vmax.f32 %v5971, 0.0
      %v6356 = vmax.f32 %v6005, 0.0
      %v6357 = vmax.f32 %v6039, 0.0
      %v6358 = vmax.f32 %v6073, 0.0
      %v6359 = vmax.f32 %v6107, 0.0
      %v6360 = vmax.f32 %v6141, 0.0
      %v6361 = vmax.f32 %v6175, 0.0
      %v6362 = vmax.f32 %v6209, 0.0
      %v6363 = vmax.f32 %v6243, 0.0
      %v6364 = vmax.f32 %v5735, 0.0
      %v6365 = vmax.f32 %v5769, 0.0
      %v6366 = vmax.f32 %v5803, 0.0
      %v6367 = vmax.f32 %v5837, 0.0
      %v6368 = vmax.f32 %v5871, 0.0
      %v6369 = vmax.f32 %v5905, 0.0
      %v6370 = vmax.f32 %v5939, 0.0
      %v6371 = vmax.f32 %v5973, 0.0
      %v6372 = vmax.f32 %v6007, 0.0
      %v6373 = vmax.f32 %v6041, 0.0
      %v6374 = vmax.f32 %v6075, 0.0
      %v6375 = vmax.f32 %v6109, 0.0
      %v6376 = vmax.f32 %v6143, 0.0
      %v6377 = vmax.f32 %v6177, 0.0
      %v6378 = vmax.f32 %v6211, 0.0
      %v6379 = vmax.f32 %v6245, 0.0
      %v6380 = vmax.f32 %v5738, 0.0
      %v6381 = vmax.f32 %v5772, 0.0
      %v6382 = vmax.f32 %v5806, 0.0
      %v6383 = vmax.f32 %v5840, 0.0
      %v6384 = vmax.f32 %v5874, 0.0
      %v6385 = vmax.f32 %v5908, 0.0
      %v6386 = vmax.f32 %v5942, 0.0
      %v6387 = vmax.f32 %v5976, 0.0
      %v6388 = vmax.f32 %v6010, 0.0
      %v6389 = vmax.f32 %v6044, 0.0
      %v6390 = vmax.f32 %v6078, 0.0
      %v6391 = vmax.f32 %v6112, 0.0
      %v6392 = vmax.f32 %v6146, 0.0
      %v6393 = vmax.f32 %v6180, 0.0
      %v6394 = vmax.f32 %v6214, 0.0
      %v6395 = vmax.f32 %v6248, 0.0
      %v6396 = vmax.f32 %v5740, 0.0
      %v6397 = vmax.f32 %v5774, 0.0
      %v6398 = vmax.f32 %v5808, 0.0
      %v6399 = vmax.f32 %v5842, 0.0
      %v6400 = vmax.f32 %v5876, 0.0
      %v6401 = vmax.f32 %v5910, 0.0
      %v6402 = vmax.f32 %v5944, 0.0
      %v6403 = vmax.f32 %v5978, 0.0
      %v6404 = vmax.f32 %v6012, 0.0
      %v6405 = vmax.f32 %v6046, 0.0
      %v6406 = vmax.f32 %v6080, 0.0
      %v6407 = vmax.f32 %v6114, 0.0
      %v6408 = vmax.f32 %v6148, 0.0
      %v6409 = vmax.f32 %v6182, 0.0
      %v6410 = vmax.f32 %v6216, 0.0
      %v6411 = vmax.f32 %v6250, 0.0
      %v6412 = vpack.c.bf16 %v6268, %v6252
      %v6413 = vpack.c.bf16 %v6269, %v6253
      %v6414 = vpack.c.bf16 %v6270, %v6254
      %v6415 = vpack.c.bf16 %v6271, %v6255
      %v6416 = vpack.c.bf16 %v6272, %v6256
      %v6417 = vpack.c.bf16 %v6273, %v6257
      %v6418 = vpack.c.bf16 %v6274, %v6258
      %v6419 = vpack.c.bf16 %v6275, %v6259
      %v6420 = vpack.c.bf16 %v6276, %v6260
      %v6421 = vpack.c.bf16 %v6277, %v6261
      %v6422 = vpack.c.bf16 %v6278, %v6262
      %v6423 = vpack.c.bf16 %v6279, %v6263
      %v6424 = vpack.c.bf16 %v6280, %v6264
      %v6425 = vpack.c.bf16 %v6281, %v6265
      %v6426 = vpack.c.bf16 %v6282, %v6266
      %v6427 = vpack.c.bf16 %v6283, %v6267
      %v6428 = vpack.c.bf16 %v6300, %v6284
      %v6429 = vpack.c.bf16 %v6301, %v6285
      %v6430 = vpack.c.bf16 %v6302, %v6286
      %v6431 = vpack.c.bf16 %v6303, %v6287
      %v6432 = vpack.c.bf16 %v6304, %v6288
      %v6433 = vpack.c.bf16 %v6305, %v6289
      %v6434 = vpack.c.bf16 %v6306, %v6290
      %v6435 = vpack.c.bf16 %v6307, %v6291
      %v6436 = vpack.c.bf16 %v6308, %v6292
      %v6437 = vpack.c.bf16 %v6309, %v6293
      %v6438 = vpack.c.bf16 %v6310, %v6294
      %v6439 = vpack.c.bf16 %v6311, %v6295
      %v6440 = vpack.c.bf16 %v6312, %v6296
      %v6441 = vpack.c.bf16 %v6313, %v6297
      %v6442 = vpack.c.bf16 %v6314, %v6298
      %v6443 = vpack.c.bf16 %v6315, %v6299
      %v6444 = vpack.c.bf16 %v6332, %v6316
      %v6445 = vpack.c.bf16 %v6333, %v6317
      %v6446 = vpack.c.bf16 %v6334, %v6318
      %v6447 = vpack.c.bf16 %v6335, %v6319
      %v6448 = vpack.c.bf16 %v6336, %v6320
      %v6449 = vpack.c.bf16 %v6337, %v6321
      %v6450 = vpack.c.bf16 %v6338, %v6322
      %v6451 = vpack.c.bf16 %v6339, %v6323
      %v6452 = vpack.c.bf16 %v6340, %v6324
      %v6453 = vpack.c.bf16 %v6341, %v6325
      %v6454 = vpack.c.bf16 %v6342, %v6326
      %v6455 = vpack.c.bf16 %v6343, %v6327
      %v6456 = vpack.c.bf16 %v6344, %v6328
      %v6457 = vpack.c.bf16 %v6345, %v6329
      %v6458 = vpack.c.bf16 %v6346, %v6330
      %v6459 = vpack.c.bf16 %v6347, %v6331
      %v6460 = vpack.c.bf16 %v6364, %v6348
      %v6461 = vpack.c.bf16 %v6365, %v6349
      %v6462 = vpack.c.bf16 %v6366, %v6350
      %v6463 = vpack.c.bf16 %v6367, %v6351
      %v6464 = vpack.c.bf16 %v6368, %v6352
      %v6465 = vpack.c.bf16 %v6369, %v6353
      %v6466 = vpack.c.bf16 %v6370, %v6354
      %v6467 = vpack.c.bf16 %v6371, %v6355
      %v6468 = vpack.c.bf16 %v6372, %v6356
      %v6469 = vpack.c.bf16 %v6373, %v6357
      %v6470 = vpack.c.bf16 %v6374, %v6358
      %v6471 = vpack.c.bf16 %v6375, %v6359
      %v6472 = vpack.c.bf16 %v6376, %v6360
      %v6473 = vpack.c.bf16 %v6377, %v6361
      %v6474 = vpack.c.bf16 %v6378, %v6362
      %v6475 = vpack.c.bf16 %v6379, %v6363
      %v6476 = vpack.c.bf16 %v6396, %v6380
      %v6477 = vpack.c.bf16 %v6397, %v6381
      %v6478 = vpack.c.bf16 %v6398, %v6382
      %v6479 = vpack.c.bf16 %v6399, %v6383
      %v6480 = vpack.c.bf16 %v6400, %v6384
      %v6481 = vpack.c.bf16 %v6401, %v6385
      %v6482 = vpack.c.bf16 %v6402, %v6386
      %v6483 = vpack.c.bf16 %v6403, %v6387
      %v6484 = vpack.c.bf16 %v6404, %v6388
      %v6485 = vpack.c.bf16 %v6405, %v6389
      %v6486 = vpack.c.bf16 %v6406, %v6390
      %v6487 = vpack.c.bf16 %v6407, %v6391
      %v6488 = vpack.c.bf16 %v6408, %v6392
      %v6489 = vpack.c.bf16 %v6409, %v6393
      %v6490 = vpack.c.bf16 %v6410, %v6394
      %v6491 = vpack.c.bf16 %v6411, %v6395
      %s6492 = scalar_lea.vmem %s9, 1024
      %v6493 = vld [vmem:[%s6492] sm:$0xf]
      %v6494 = vld [vmem:[%s6492 + $0x4] sm:$0xf]
      %v6495 = vld [vmem:[%s6492 + $0x8] sm:$0xf]
      %v6496 = vld [vmem:[%s6492 + $0xc] sm:$0xf]
      %v6497 = vld [vmem:[%s6492 + $0x10] sm:$0xf]
      %v6498 = vld [vmem:[%s6492 + $0x14] sm:$0xf]
      %v6499 = vld [vmem:[%s6492 + $0x18] sm:$0xf]
      %v6500 = vld [vmem:[%s6492 + $0x1c] sm:$0xf]
      %v6501 = vld [vmem:[%s6492 + $0x20] sm:$0xf]
      %v6502 = vld [vmem:[%s6492 + $0x24] sm:$0xf]
      %v6503 = vld [vmem:[%s6492 + $0x28] sm:$0xf]
      %v6504 = vld [vmem:[%s6492 + $0x2c] sm:$0xf]
      %v6505 = vld [vmem:[%s6492 + $0x30] sm:$0xf]
      %v6506 = vld [vmem:[%s6492 + $0x34] sm:$0xf]
      %v6507 = vld [vmem:[%s6492 + $0x38] sm:$0xf]
      %v6508 = vld [vmem:[%s6492 + $0x3c] sm:$0xf]
      %v6509 = vld [vmem:[%s6492 + $0x40] sm:$0xf]
      %v6510 = vld [vmem:[%s6492 + $0x44] sm:$0xf]
      %v6511 = vld [vmem:[%s6492 + $0x48] sm:$0xf]
      %v6512 = vld [vmem:[%s6492 + $0x4c] sm:$0xf]
      %v6513 = vld [vmem:[%s6492 + $0x50] sm:$0xf]
      %v6514 = vld [vmem:[%s6492 + $0x54] sm:$0xf]
      %v6515 = vld [vmem:[%s6492 + $0x58] sm:$0xf]
      %v6516 = vld [vmem:[%s6492 + $0x5c] sm:$0xf]
      %v6517 = vld [vmem:[%s6492 + $0x60] sm:$0xf]
      %v6518 = vld [vmem:[%s6492 + $0x64] sm:$0xf]
      %v6519 = vld [vmem:[%s6492 + $0x68] sm:$0xf]
      %v6520 = vld [vmem:[%s6492 + $0x6c] sm:$0xf]
      %v6521 = vld [vmem:[%s6492 + $0x70] sm:$0xf]
      %v6522 = vld [vmem:[%s6492 + $0x74] sm:$0xf]
      %v6523 = vld [vmem:[%s6492 + $0x78] sm:$0xf]
      %v6524 = vld [vmem:[%s6492 + $0x7c] sm:$0xf]
      %v6525 = vld [vmem:[%s6492 + $0x80] sm:$0xf]
      %v6526 = vld [vmem:[%s6492 + $0x84] sm:$0xf]
      %v6527 = vld [vmem:[%s6492 + $0x88] sm:$0xf]
      %v6528 = vld [vmem:[%s6492 + $0x8c] sm:$0xf]
      %v6529 = vld [vmem:[%s6492 + $0x90] sm:$0xf]
      %v6530 = vld [vmem:[%s6492 + $0x94] sm:$0xf]
      %v6531 = vld [vmem:[%s6492 + $0x98] sm:$0xf]
      %v6532 = vld [vmem:[%s6492 + $0x9c] sm:$0xf]
      %v6533 = vld [vmem:[%s6492 + $0xa0] sm:$0xf]
      %v6534 = vld [vmem:[%s6492 + $0xa4] sm:$0xf]
      %v6535 = vld [vmem:[%s6492 + $0xa8] sm:$0xf]
      %v6536 = vld [vmem:[%s6492 + $0xac] sm:$0xf]
      %v6537 = vld [vmem:[%s6492 + $0xb0] sm:$0xf]
      %v6538 = vld [vmem:[%s6492 + $0xb4] sm:$0xf]
      %v6539 = vld [vmem:[%s6492 + $0xb8] sm:$0xf]
      %v6540 = vld [vmem:[%s6492 + $0xbc] sm:$0xf]
      %v6541 = vld [vmem:[%s6492 + $0xc0] sm:$0xf]
      %v6542 = vld [vmem:[%s6492 + $0xc4] sm:$0xf]
      %v6543 = vld [vmem:[%s6492 + $0xc8] sm:$0xf]
      %v6544 = vld [vmem:[%s6492 + $0xcc] sm:$0xf]
      %v6545 = vld [vmem:[%s6492 + $0xd0] sm:$0xf]
      %v6546 = vld [vmem:[%s6492 + $0xd4] sm:$0xf]
      %v6547 = vld [vmem:[%s6492 + $0xd8] sm:$0xf]
      %v6548 = vld [vmem:[%s6492 + $0xdc] sm:$0xf]
      %v6549 = vld [vmem:[%s6492 + $0xe0] sm:$0xf]
      %v6550 = vld [vmem:[%s6492 + $0xe4] sm:$0xf]
      %v6551 = vld [vmem:[%s6492 + $0xe8] sm:$0xf]
      %v6552 = vld [vmem:[%s6492 + $0xec] sm:$0xf]
      %v6553 = vld [vmem:[%s6492 + $0xf0] sm:$0xf]
      %v6554 = vld [vmem:[%s6492 + $0xf4] sm:$0xf]
      %v6555 = vld [vmem:[%s6492 + $0xf8] sm:$0xf]
      %v6556 = vld [vmem:[%s6492 + $0xfc] sm:$0xf]
      %v6557 = vld [vmem:[%s6492 + $0x100] sm:$0xf]
      %v6558 = vld [vmem:[%s6492 + $0x104] sm:$0xf]
      %v6559 = vld [vmem:[%s6492 + $0x108] sm:$0xf]
      %v6560 = vld [vmem:[%s6492 + $0x10c] sm:$0xf]
      %v6561 = vld [vmem:[%s6492 + $0x110] sm:$0xf]
      %v6562 = vld [vmem:[%s6492 + $0x114] sm:$0xf]
      %v6563 = vld [vmem:[%s6492 + $0x118] sm:$0xf]
      %v6564 = vld [vmem:[%s6492 + $0x11c] sm:$0xf]
      %v6565 = vld [vmem:[%s6492 + $0x120] sm:$0xf]
      %v6566 = vld [vmem:[%s6492 + $0x124] sm:$0xf]
      %v6567 = vld [vmem:[%s6492 + $0x128] sm:$0xf]
      %v6568 = vld [vmem:[%s6492 + $0x12c] sm:$0xf]
      %v6569 = vld [vmem:[%s6492 + $0x130] sm:$0xf]
      %v6570 = vld [vmem:[%s6492 + $0x134] sm:$0xf]
      %v6571 = vld [vmem:[%s6492 + $0x138] sm:$0xf]
      %v6572 = vld [vmem:[%s6492 + $0x13c] sm:$0xf]
      %v6573 = vld [vmem:[%s6492 + $0x140] sm:$0xf]
      %v6574 = vld [vmem:[%s6492 + $0x144] sm:$0xf]
      %v6575 = vld [vmem:[%s6492 + $0x148] sm:$0xf]
      %v6576 = vld [vmem:[%s6492 + $0x14c] sm:$0xf]
      %v6577 = vld [vmem:[%s6492 + $0x150] sm:$0xf]
      %v6578 = vld [vmem:[%s6492 + $0x154] sm:$0xf]
      %v6579 = vld [vmem:[%s6492 + $0x158] sm:$0xf]
      %v6580 = vld [vmem:[%s6492 + $0x15c] sm:$0xf]
      %v6581 = vld [vmem:[%s6492 + $0x160] sm:$0xf]
      %v6582 = vld [vmem:[%s6492 + $0x164] sm:$0xf]
      %v6583 = vld [vmem:[%s6492 + $0x168] sm:$0xf]
      %v6584 = vld [vmem:[%s6492 + $0x16c] sm:$0xf]
      %v6585 = vld [vmem:[%s6492 + $0x170] sm:$0xf]
      %v6586 = vld [vmem:[%s6492 + $0x174] sm:$0xf]
      %v6587 = vld [vmem:[%s6492 + $0x178] sm:$0xf]
      %v6588 = vld [vmem:[%s6492 + $0x17c] sm:$0xf]
      %v6589 = vld [vmem:[%s6492 + $0x180] sm:$0xf]
      %v6590 = vld [vmem:[%s6492 + $0x184] sm:$0xf]
      %v6591 = vld [vmem:[%s6492 + $0x188] sm:$0xf]
      %v6592 = vld [vmem:[%s6492 + $0x18c] sm:$0xf]
      %v6593 = vld [vmem:[%s6492 + $0x190] sm:$0xf]
      %v6594 = vld [vmem:[%s6492 + $0x194] sm:$0xf]
      %v6595 = vld [vmem:[%s6492 + $0x198] sm:$0xf]
      %v6596 = vld [vmem:[%s6492 + $0x19c] sm:$0xf]
      %v6597 = vld [vmem:[%s6492 + $0x1a0] sm:$0xf]
      %v6598 = vld [vmem:[%s6492 + $0x1a4] sm:$0xf]
      %v6599 = vld [vmem:[%s6492 + $0x1a8] sm:$0xf]
      %v6600 = vld [vmem:[%s6492 + $0x1ac] sm:$0xf]
      %v6601 = vld [vmem:[%s6492 + $0x1b0] sm:$0xf]
      %v6602 = vld [vmem:[%s6492 + $0x1b4] sm:$0xf]
      %v6603 = vld [vmem:[%s6492 + $0x1b8] sm:$0xf]
      %v6604 = vld [vmem:[%s6492 + $0x1bc] sm:$0xf]
      %v6605 = vld [vmem:[%s6492 + $0x1c0] sm:$0xf]
      %v6606 = vld [vmem:[%s6492 + $0x1c4] sm:$0xf]
      %v6607 = vld [vmem:[%s6492 + $0x1c8] sm:$0xf]
      %v6608 = vld [vmem:[%s6492 + $0x1cc] sm:$0xf]
      %v6609 = vld [vmem:[%s6492 + $0x1d0] sm:$0xf]
      %v6610 = vld [vmem:[%s6492 + $0x1d4] sm:$0xf]
      %v6611 = vld [vmem:[%s6492 + $0x1d8] sm:$0xf]
      %v6612 = vld [vmem:[%s6492 + $0x1dc] sm:$0xf]
      %v6613 = vld [vmem:[%s6492 + $0x1e0] sm:$0xf]
      %v6614 = vld [vmem:[%s6492 + $0x1e4] sm:$0xf]
      %v6615 = vld [vmem:[%s6492 + $0x1e8] sm:$0xf]
      %v6616 = vld [vmem:[%s6492 + $0x1ec] sm:$0xf]
      %v6617 = vld [vmem:[%s6492 + $0x1f0] sm:$0xf]
      %v6618 = vld [vmem:[%s6492 + $0x1f4] sm:$0xf]
      %v6619 = vld [vmem:[%s6492 + $0x1f8] sm:$0xf]
      %v6620 = vld [vmem:[%s6492 + $0x1fc] sm:$0xf]
      %v6621 = vld [vmem:[%s6492 + $0x200] sm:$0xf]
      %v6622 = vld [vmem:[%s6492 + $0x204] sm:$0xf]
      %v6623 = vld [vmem:[%s6492 + $0x208] sm:$0xf]
      %v6624 = vld [vmem:[%s6492 + $0x20c] sm:$0xf]
      %v6625 = vld [vmem:[%s6492 + $0x210] sm:$0xf]
      %v6626 = vld [vmem:[%s6492 + $0x214] sm:$0xf]
      %v6627 = vld [vmem:[%s6492 + $0x218] sm:$0xf]
      %v6628 = vld [vmem:[%s6492 + $0x21c] sm:$0xf]
      %v6629 = vld [vmem:[%s6492 + $0x220] sm:$0xf]
      %v6630 = vld [vmem:[%s6492 + $0x224] sm:$0xf]
      %v6631 = vld [vmem:[%s6492 + $0x228] sm:$0xf]
      %v6632 = vld [vmem:[%s6492 + $0x22c] sm:$0xf]
      %v6633 = vld [vmem:[%s6492 + $0x230] sm:$0xf]
      %v6634 = vld [vmem:[%s6492 + $0x234] sm:$0xf]
      %v6635 = vld [vmem:[%s6492 + $0x238] sm:$0xf]
      %v6636 = vld [vmem:[%s6492 + $0x23c] sm:$0xf]
      %v6637 = vld [vmem:[%s6492 + $0x240] sm:$0xf]
      %v6638 = vld [vmem:[%s6492 + $0x244] sm:$0xf]
      %v6639 = vld [vmem:[%s6492 + $0x248] sm:$0xf]
      %v6640 = vld [vmem:[%s6492 + $0x24c] sm:$0xf]
      %v6641 = vld [vmem:[%s6492 + $0x250] sm:$0xf]
      %v6642 = vld [vmem:[%s6492 + $0x254] sm:$0xf]
      %v6643 = vld [vmem:[%s6492 + $0x258] sm:$0xf]
      %v6644 = vld [vmem:[%s6492 + $0x25c] sm:$0xf]
      %v6645 = vld [vmem:[%s6492 + $0x260] sm:$0xf]
      %v6646 = vld [vmem:[%s6492 + $0x264] sm:$0xf]
      %v6647 = vld [vmem:[%s6492 + $0x268] sm:$0xf]
      %v6648 = vld [vmem:[%s6492 + $0x26c] sm:$0xf]
      %v6649 = vld [vmem:[%s6492 + $0x270] sm:$0xf]
      %v6650 = vld [vmem:[%s6492 + $0x274] sm:$0xf]
      %v6651 = vld [vmem:[%s6492 + $0x278] sm:$0xf]
      %v6652 = vld [vmem:[%s6492 + $0x27c] sm:$0xf]
      %v6653 = vld [vmem:[%s6492 + $0x280] sm:$0xf]
      %v6654 = vld [vmem:[%s6492 + $0x284] sm:$0xf]
      %v6655 = vld [vmem:[%s6492 + $0x288] sm:$0xf]
      %v6656 = vld [vmem:[%s6492 + $0x28c] sm:$0xf]
      %v6657 = vld [vmem:[%s6492 + $0x290] sm:$0xf]
      %v6658 = vld [vmem:[%s6492 + $0x294] sm:$0xf]
      %v6659 = vld [vmem:[%s6492 + $0x298] sm:$0xf]
      %v6660 = vld [vmem:[%s6492 + $0x29c] sm:$0xf]
      %v6661 = vld [vmem:[%s6492 + $0x2a0] sm:$0xf]
      %v6662 = vld [vmem:[%s6492 + $0x2a4] sm:$0xf]
      %v6663 = vld [vmem:[%s6492 + $0x2a8] sm:$0xf]
      %v6664 = vld [vmem:[%s6492 + $0x2ac] sm:$0xf]
      %v6665 = vld [vmem:[%s6492 + $0x2b0] sm:$0xf]
      %v6666 = vld [vmem:[%s6492 + $0x2b4] sm:$0xf]
      %v6667 = vld [vmem:[%s6492 + $0x2b8] sm:$0xf]
      %v6668 = vld [vmem:[%s6492 + $0x2bc] sm:$0xf]
      %v6669 = vld [vmem:[%s6492 + $0x2c0] sm:$0xf]
      %v6670 = vld [vmem:[%s6492 + $0x2c4] sm:$0xf]
      %v6671 = vld [vmem:[%s6492 + $0x2c8] sm:$0xf]
      %v6672 = vld [vmem:[%s6492 + $0x2cc] sm:$0xf]
      %v6673 = vld [vmem:[%s6492 + $0x2d0] sm:$0xf]
      %v6674 = vld [vmem:[%s6492 + $0x2d4] sm:$0xf]
      %v6675 = vld [vmem:[%s6492 + $0x2d8] sm:$0xf]
      %v6676 = vld [vmem:[%s6492 + $0x2dc] sm:$0xf]
      %v6677 = vld [vmem:[%s6492 + $0x2e0] sm:$0xf]
      %v6678 = vld [vmem:[%s6492 + $0x2e4] sm:$0xf]
      %v6679 = vld [vmem:[%s6492 + $0x2e8] sm:$0xf]
      %v6680 = vld [vmem:[%s6492 + $0x2ec] sm:$0xf]
      %v6681 = vld [vmem:[%s6492 + $0x2f0] sm:$0xf]
      %v6682 = vld [vmem:[%s6492 + $0x2f4] sm:$0xf]
      %v6683 = vld [vmem:[%s6492 + $0x2f8] sm:$0xf]
      %v6684 = vld [vmem:[%s6492 + $0x2fc] sm:$0xf]
      %v6685 = vld [vmem:[%s6492 + $0x300] sm:$0xf]
      %v6686 = vld [vmem:[%s6492 + $0x304] sm:$0xf]
      %v6687 = vld [vmem:[%s6492 + $0x308] sm:$0xf]
      %v6688 = vld [vmem:[%s6492 + $0x30c] sm:$0xf]
      %v6689 = vld [vmem:[%s6492 + $0x310] sm:$0xf]
      %v6690 = vld [vmem:[%s6492 + $0x314] sm:$0xf]
      %v6691 = vld [vmem:[%s6492 + $0x318] sm:$0xf]
      %v6692 = vld [vmem:[%s6492 + $0x31c] sm:$0xf]
      %v6693 = vld [vmem:[%s6492 + $0x320] sm:$0xf]
      %v6694 = vld [vmem:[%s6492 + $0x324] sm:$0xf]
      %v6695 = vld [vmem:[%s6492 + $0x328] sm:$0xf]
      %v6696 = vld [vmem:[%s6492 + $0x32c] sm:$0xf]
      %v6697 = vld [vmem:[%s6492 + $0x330] sm:$0xf]
      %v6698 = vld [vmem:[%s6492 + $0x334] sm:$0xf]
      %v6699 = vld [vmem:[%s6492 + $0x338] sm:$0xf]
      %v6700 = vld [vmem:[%s6492 + $0x33c] sm:$0xf]
      %v6701 = vld [vmem:[%s6492 + $0x340] sm:$0xf]
      %v6702 = vld [vmem:[%s6492 + $0x344] sm:$0xf]
      %v6703 = vld [vmem:[%s6492 + $0x348] sm:$0xf]
      %v6704 = vld [vmem:[%s6492 + $0x34c] sm:$0xf]
      %v6705 = vld [vmem:[%s6492 + $0x350] sm:$0xf]
      %v6706 = vld [vmem:[%s6492 + $0x354] sm:$0xf]
      %v6707 = vld [vmem:[%s6492 + $0x358] sm:$0xf]
      %v6708 = vld [vmem:[%s6492 + $0x35c] sm:$0xf]
      %v6709 = vld [vmem:[%s6492 + $0x360] sm:$0xf]
      %v6710 = vld [vmem:[%s6492 + $0x364] sm:$0xf]
      %v6711 = vld [vmem:[%s6492 + $0x368] sm:$0xf]
      %v6712 = vld [vmem:[%s6492 + $0x36c] sm:$0xf]
      %v6713 = vld [vmem:[%s6492 + $0x370] sm:$0xf]
      %v6714 = vld [vmem:[%s6492 + $0x374] sm:$0xf]
      %v6715 = vld [vmem:[%s6492 + $0x378] sm:$0xf]
      %v6716 = vld [vmem:[%s6492 + $0x37c] sm:$0xf]
      %v6717 = vld [vmem:[%s6492 + $0x380] sm:$0xf]
      %v6718 = vld [vmem:[%s6492 + $0x384] sm:$0xf]
      %v6719 = vld [vmem:[%s6492 + $0x388] sm:$0xf]
      %v6720 = vld [vmem:[%s6492 + $0x38c] sm:$0xf]
      %v6721 = vld [vmem:[%s6492 + $0x390] sm:$0xf]
      %v6722 = vld [vmem:[%s6492 + $0x394] sm:$0xf]
      %v6723 = vld [vmem:[%s6492 + $0x398] sm:$0xf]
      %v6724 = vld [vmem:[%s6492 + $0x39c] sm:$0xf]
      %v6725 = vld [vmem:[%s6492 + $0x3a0] sm:$0xf]
      %v6726 = vld [vmem:[%s6492 + $0x3a4] sm:$0xf]
      %v6727 = vld [vmem:[%s6492 + $0x3a8] sm:$0xf]
      %v6728 = vld [vmem:[%s6492 + $0x3ac] sm:$0xf]
      %v6729 = vld [vmem:[%s6492 + $0x3b0] sm:$0xf]
      %v6730 = vld [vmem:[%s6492 + $0x3b4] sm:$0xf]
      %v6731 = vld [vmem:[%s6492 + $0x3b8] sm:$0xf]
      %v6732 = vld [vmem:[%s6492 + $0x3bc] sm:$0xf]
      %v6733 = vld [vmem:[%s6492 + $0x3c0] sm:$0xf]
      %v6734 = vld [vmem:[%s6492 + $0x3c4] sm:$0xf]
      %v6735 = vld [vmem:[%s6492 + $0x3c8] sm:$0xf]
      %v6736 = vld [vmem:[%s6492 + $0x3cc] sm:$0xf]
      %v6737 = vld [vmem:[%s6492 + $0x3d0] sm:$0xf]
      %v6738 = vld [vmem:[%s6492 + $0x3d4] sm:$0xf]
      %v6739 = vld [vmem:[%s6492 + $0x3d8] sm:$0xf]
      %v6740 = vld [vmem:[%s6492 + $0x3dc] sm:$0xf]
      %v6741 = vld [vmem:[%s6492 + $0x3e0] sm:$0xf]
      %v6742 = vld [vmem:[%s6492 + $0x3e4] sm:$0xf]
      %v6743 = vld [vmem:[%s6492 + $0x3e8] sm:$0xf]
      %v6744 = vld [vmem:[%s6492 + $0x3ec] sm:$0xf]
      %v6745 = vld [vmem:[%s6492 + $0x3f0] sm:$0xf]
      %v6746 = vld [vmem:[%s6492 + $0x3f4] sm:$0xf]
      %v6747 = vld [vmem:[%s6492 + $0x3f8] sm:$0xf]
      %v6748 = vld [vmem:[%s6492 + $0x3fc] sm:$0xf]
      %v6749 = vperm.slane %v4446, 3
      %v7006 = vunpack.c.l.b16 %v6493
      %v7007 = vunpack.c.l.b16 %v6494
      %v7008 = vunpack.c.l.b16 %v6495
      %v7009 = vunpack.c.l.b16 %v6496
      %v7010 = vunpack.c.l.b16 %v6497
      %v7011 = vunpack.c.l.b16 %v6498
      %v7012 = vunpack.c.l.b16 %v6499
      %v7013 = vunpack.c.l.b16 %v6500
      %v7014 = vunpack.c.l.b16 %v6501
      %v7015 = vunpack.c.l.b16 %v6502
      %v7016 = vunpack.c.l.b16 %v6503
      %v7017 = vunpack.c.l.b16 %v6504
      %v7018 = vunpack.c.l.b16 %v6505
      %v7019 = vunpack.c.l.b16 %v6506
      %v7020 = vunpack.c.l.b16 %v6507
      %v7021 = vunpack.c.l.b16 %v6508
      %v7022 = vunpack.c.l.b16 %v6509
      %v7023 = vunpack.c.l.b16 %v6510
      %v7024 = vunpack.c.l.b16 %v6511
      %v7025 = vunpack.c.l.b16 %v6512
      %v7026 = vunpack.c.l.b16 %v6513
      %v7027 = vunpack.c.l.b16 %v6514
      %v7028 = vunpack.c.l.b16 %v6515
      %v7029 = vunpack.c.l.b16 %v6516
      %v7030 = vunpack.c.l.b16 %v6517
      %v7031 = vunpack.c.l.b16 %v6518
      %v7032 = vunpack.c.l.b16 %v6519
      %v7033 = vunpack.c.l.b16 %v6520
      %v7034 = vunpack.c.l.b16 %v6521
      %v7035 = vunpack.c.l.b16 %v6522
      %v7036 = vunpack.c.l.b16 %v6523
      %v7037 = vunpack.c.l.b16 %v6524
      %v7038 = vunpack.c.l.b16 %v6525
      %v7039 = vunpack.c.l.b16 %v6526
      %v7040 = vunpack.c.l.b16 %v6527
      %v7041 = vunpack.c.l.b16 %v6528
      %v7042 = vunpack.c.l.b16 %v6529
      %v7043 = vunpack.c.l.b16 %v6530
      %v7044 = vunpack.c.l.b16 %v6531
      %v7045 = vunpack.c.l.b16 %v6532
      %v7046 = vunpack.c.l.b16 %v6533
      %v7047 = vunpack.c.l.b16 %v6534
      %v7048 = vunpack.c.l.b16 %v6535
      %v7049 = vunpack.c.l.b16 %v6536
      %v7050 = vunpack.c.l.b16 %v6537
      %v7051 = vunpack.c.l.b16 %v6538
      %v7052 = vunpack.c.l.b16 %v6539
      %v7053 = vunpack.c.l.b16 %v6540
      %v7054 = vunpack.c.l.b16 %v6541
      %v7055 = vunpack.c.l.b16 %v6542
      %v7056 = vunpack.c.l.b16 %v6543
      %v7057 = vunpack.c.l.b16 %v6544
      %v7058 = vunpack.c.l.b16 %v6545
      %v7059 = vunpack.c.l.b16 %v6546
      %v7060 = vunpack.c.l.b16 %v6547
      %v7061 = vunpack.c.l.b16 %v6548
      %v7062 = vunpack.c.l.b16 %v6549
      %v7063 = vunpack.c.l.b16 %v6550
      %v7064 = vunpack.c.l.b16 %v6551
      %v7065 = vunpack.c.l.b16 %v6552
      %v7066 = vunpack.c.l.b16 %v6553
      %v7067 = vunpack.c.l.b16 %v6554
      %v7068 = vunpack.c.l.b16 %v6555
      %v7069 = vunpack.c.l.b16 %v6556
      %v7070 = vunpack.c.l.b16 %v6557
      %v7071 = vunpack.c.l.b16 %v6558
      %v7072 = vunpack.c.l.b16 %v6559
      %v7073 = vunpack.c.l.b16 %v6560
      %v7074 = vunpack.c.l.b16 %v6561
      %v7075 = vunpack.c.l.b16 %v6562
      %v7076 = vunpack.c.l.b16 %v6563
      %v7077 = vunpack.c.l.b16 %v6564
      %v7078 = vunpack.c.l.b16 %v6565
      %v7079 = vunpack.c.l.b16 %v6566
      %v7080 = vunpack.c.l.b16 %v6567
      %v7081 = vunpack.c.l.b16 %v6568
      %v7082 = vunpack.c.l.b16 %v6569
      %v7083 = vunpack.c.l.b16 %v6570
      %v7084 = vunpack.c.l.b16 %v6571
      %v7085 = vunpack.c.l.b16 %v6572
      %v7086 = vunpack.c.l.b16 %v6573
      %v7087 = vunpack.c.l.b16 %v6574
      %v7088 = vunpack.c.l.b16 %v6575
      %v7089 = vunpack.c.l.b16 %v6576
      %v7090 = vunpack.c.l.b16 %v6577
      %v7091 = vunpack.c.l.b16 %v6578
      %v7092 = vunpack.c.l.b16 %v6579
      %v7093 = vunpack.c.l.b16 %v6580
      %v7094 = vunpack.c.l.b16 %v6581
      %v7095 = vunpack.c.l.b16 %v6582
      %v7096 = vunpack.c.l.b16 %v6583
      %v7097 = vunpack.c.l.b16 %v6584
      %v7098 = vunpack.c.l.b16 %v6585
      %v7099 = vunpack.c.l.b16 %v6586
      %v7100 = vunpack.c.l.b16 %v6587
      %v7101 = vunpack.c.l.b16 %v6588
      %v7102 = vunpack.c.l.b16 %v6589
      %v7103 = vunpack.c.l.b16 %v6590
      %v7104 = vunpack.c.l.b16 %v6591
      %v7105 = vunpack.c.l.b16 %v6592
      %v7106 = vunpack.c.l.b16 %v6593
      %v7107 = vunpack.c.l.b16 %v6594
      %v7108 = vunpack.c.l.b16 %v6595
      %v7109 = vunpack.c.l.b16 %v6596
      %v7110 = vunpack.c.l.b16 %v6597
      %v7111 = vunpack.c.l.b16 %v6598
      %v7112 = vunpack.c.l.b16 %v6599
      %v7113 = vunpack.c.l.b16 %v6600
      %v7114 = vunpack.c.l.b16 %v6601
      %v7115 = vunpack.c.l.b16 %v6602
      %v7116 = vunpack.c.l.b16 %v6603
      %v7117 = vunpack.c.l.b16 %v6604
      %v7118 = vunpack.c.l.b16 %v6605
      %v7119 = vunpack.c.l.b16 %v6606
      %v7120 = vunpack.c.l.b16 %v6607
      %v7121 = vunpack.c.l.b16 %v6608
      %v7122 = vunpack.c.l.b16 %v6609
      %v7123 = vunpack.c.l.b16 %v6610
      %v7124 = vunpack.c.l.b16 %v6611
      %v7125 = vunpack.c.l.b16 %v6612
      %v7126 = vunpack.c.l.b16 %v6613
      %v7127 = vunpack.c.l.b16 %v6614
      %v7128 = vunpack.c.l.b16 %v6615
      %v7129 = vunpack.c.l.b16 %v6616
      %v7130 = vunpack.c.l.b16 %v6617
      %v7131 = vunpack.c.l.b16 %v6618
      %v7132 = vunpack.c.l.b16 %v6619
      %v7133 = vunpack.c.l.b16 %v6620
      %v7134 = vunpack.c.l.b16 %v6621
      %v7135 = vunpack.c.l.b16 %v6622
      %v7136 = vunpack.c.l.b16 %v6623
      %v7137 = vunpack.c.l.b16 %v6624
      %v7138 = vunpack.c.l.b16 %v6625
      %v7139 = vunpack.c.l.b16 %v6626
      %v7140 = vunpack.c.l.b16 %v6627
      %v7141 = vunpack.c.l.b16 %v6628
      %v7142 = vunpack.c.l.b16 %v6629
      %v7143 = vunpack.c.l.b16 %v6630
      %v7144 = vunpack.c.l.b16 %v6631
      %v7145 = vunpack.c.l.b16 %v6632
      %v7146 = vunpack.c.l.b16 %v6633
      %v7147 = vunpack.c.l.b16 %v6634
      %v7148 = vunpack.c.l.b16 %v6635
      %v7149 = vunpack.c.l.b16 %v6636
      %v7150 = vunpack.c.l.b16 %v6637
      %v7151 = vunpack.c.l.b16 %v6638
      %v7152 = vunpack.c.l.b16 %v6639
      %v7153 = vunpack.c.l.b16 %v6640
      %v7154 = vunpack.c.l.b16 %v6641
      %v7155 = vunpack.c.l.b16 %v6642
      %v7156 = vunpack.c.l.b16 %v6643
      %v7157 = vunpack.c.l.b16 %v6644
      %v7158 = vunpack.c.l.b16 %v6645
      %v7159 = vunpack.c.l.b16 %v6646
      %v7160 = vunpack.c.l.b16 %v6647
      %v7161 = vunpack.c.l.b16 %v6648
      %v7162 = vunpack.c.l.b16 %v6649
      %v7163 = vunpack.c.l.b16 %v6650
      %v7164 = vunpack.c.l.b16 %v6651
      %v7165 = vunpack.c.l.b16 %v6652
      %v7166 = vunpack.c.l.b16 %v6653
      %v7167 = vunpack.c.l.b16 %v6654
      %v7168 = vunpack.c.l.b16 %v6655
      %v7169 = vunpack.c.l.b16 %v6656
      %v7170 = vunpack.c.l.b16 %v6657
      %v7171 = vunpack.c.l.b16 %v6658
      %v7172 = vunpack.c.l.b16 %v6659
      %v7173 = vunpack.c.l.b16 %v6660
      %v7174 = vunpack.c.l.b16 %v6661
      %v7175 = vunpack.c.l.b16 %v6662
      %v7176 = vunpack.c.l.b16 %v6663
      %v7177 = vunpack.c.l.b16 %v6664
      %v7178 = vunpack.c.l.b16 %v6665
      %v7179 = vunpack.c.l.b16 %v6666
      %v7180 = vunpack.c.l.b16 %v6667
      %v7181 = vunpack.c.l.b16 %v6668
      %v7182 = vunpack.c.l.b16 %v6669
      %v7183 = vunpack.c.l.b16 %v6670
      %v7184 = vunpack.c.l.b16 %v6671
      %v7185 = vunpack.c.l.b16 %v6672
      %v7186 = vunpack.c.l.b16 %v6673
      %v7187 = vunpack.c.l.b16 %v6674
      %v7188 = vunpack.c.l.b16 %v6675
      %v7189 = vunpack.c.l.b16 %v6676
      %v7190 = vunpack.c.l.b16 %v6677
      %v7191 = vunpack.c.l.b16 %v6678
      %v7192 = vunpack.c.l.b16 %v6679
      %v7193 = vunpack.c.l.b16 %v6680
      %v7194 = vunpack.c.l.b16 %v6681
      %v7195 = vunpack.c.l.b16 %v6682
      %v7196 = vunpack.c.l.b16 %v6683
      %v7197 = vunpack.c.l.b16 %v6684
      %v7198 = vunpack.c.l.b16 %v6685
      %v7199 = vunpack.c.l.b16 %v6686
      %v7200 = vunpack.c.l.b16 %v6687
      %v7201 = vunpack.c.l.b16 %v6688
      %v7202 = vunpack.c.l.b16 %v6689
      %v7203 = vunpack.c.l.b16 %v6690
      %v7204 = vunpack.c.l.b16 %v6691
      %v7205 = vunpack.c.l.b16 %v6692
      %v7206 = vunpack.c.l.b16 %v6693
      %v7207 = vunpack.c.l.b16 %v6694
      %v7208 = vunpack.c.l.b16 %v6695
      %v7209 = vunpack.c.l.b16 %v6696
      %v7210 = vunpack.c.l.b16 %v6697
      %v7211 = vunpack.c.l.b16 %v6698
      %v7212 = vunpack.c.l.b16 %v6699
      %v7213 = vunpack.c.l.b16 %v6700
      %v7214 = vunpack.c.l.b16 %v6701
      %v7215 = vunpack.c.l.b16 %v6702
      %v7216 = vunpack.c.l.b16 %v6703
      %v7217 = vunpack.c.l.b16 %v6704
      %v7218 = vunpack.c.l.b16 %v6705
      %v7219 = vunpack.c.l.b16 %v6706
      %v7220 = vunpack.c.l.b16 %v6707
      %v7221 = vunpack.c.l.b16 %v6708
      %v7222 = vunpack.c.l.b16 %v6709
      %v7223 = vunpack.c.l.b16 %v6710
      %v7224 = vunpack.c.l.b16 %v6711
      %v7225 = vunpack.c.l.b16 %v6712
      %v7226 = vunpack.c.l.b16 %v6713
      %v7227 = vunpack.c.l.b16 %v6714
      %v7228 = vunpack.c.l.b16 %v6715
      %v7229 = vunpack.c.l.b16 %v6716
      %v7230 = vunpack.c.l.b16 %v6717
      %v7231 = vunpack.c.l.b16 %v6718
      %v7232 = vunpack.c.l.b16 %v6719
      %v7233 = vunpack.c.l.b16 %v6720
      %v7234 = vunpack.c.l.b16 %v6721
      %v7235 = vunpack.c.l.b16 %v6722
      %v7236 = vunpack.c.l.b16 %v6723
      %v7237 = vunpack.c.l.b16 %v6724
      %v7238 = vunpack.c.l.b16 %v6725
      %v7239 = vunpack.c.l.b16 %v6726
      %v7240 = vunpack.c.l.b16 %v6727
      %v7241 = vunpack.c.l.b16 %v6728
      %v7242 = vunpack.c.l.b16 %v6729
      %v7243 = vunpack.c.l.b16 %v6730
      %v7244 = vunpack.c.l.b16 %v6731
      %v7245 = vunpack.c.l.b16 %v6732
      %v7246 = vunpack.c.l.b16 %v6733
      %v7247 = vunpack.c.l.b16 %v6734
      %v7248 = vunpack.c.l.b16 %v6735
      %v7249 = vunpack.c.l.b16 %v6736
      %v7250 = vunpack.c.l.b16 %v6737
      %v7251 = vunpack.c.l.b16 %v6738
      %v7252 = vunpack.c.l.b16 %v6739
      %v7253 = vunpack.c.l.b16 %v6740
      %v7254 = vunpack.c.l.b16 %v6741
      %v7255 = vunpack.c.l.b16 %v6742
      %v7256 = vunpack.c.l.b16 %v6743
      %v7257 = vunpack.c.l.b16 %v6744
      %v7258 = vunpack.c.l.b16 %v6745
      %v7259 = vunpack.c.l.b16 %v6746
      %v7260 = vunpack.c.l.b16 %v6747
      %v7261 = vunpack.c.l.b16 %v6748
      %v7262 = vpack.c.b16 %v7007, %v7006
      %v7263 = vpack.c.b16 %v7009, %v7008
      %v7264 = vpack.c.b16 %v7011, %v7010
      %v7265 = vpack.c.b16 %v7013, %v7012
      %v7266 = vpack.c.b16 %v7015, %v7014
      %v7267 = vpack.c.b16 %v7017, %v7016
      %v7268 = vpack.c.b16 %v7019, %v7018
      %v7269 = vpack.c.b16 %v7021, %v7020
      %v7270 = vpack.c.b16 %v7023, %v7022
      %v7271 = vpack.c.b16 %v7025, %v7024
      %v7272 = vpack.c.b16 %v7027, %v7026
      %v7273 = vpack.c.b16 %v7029, %v7028
      %v7274 = vpack.c.b16 %v7031, %v7030
      %v7275 = vpack.c.b16 %v7033, %v7032
      %v7276 = vpack.c.b16 %v7035, %v7034
      %v7277 = vpack.c.b16 %v7037, %v7036
      %v7278 = vpack.c.b16 %v7039, %v7038
      %v7279 = vpack.c.b16 %v7041, %v7040
      %v7280 = vpack.c.b16 %v7043, %v7042
      %v7281 = vpack.c.b16 %v7045, %v7044
      %v7282 = vpack.c.b16 %v7047, %v7046
      %v7283 = vpack.c.b16 %v7049, %v7048
      %v7284 = vpack.c.b16 %v7051, %v7050
      %v7285 = vpack.c.b16 %v7053, %v7052
      %v7286 = vpack.c.b16 %v7055, %v7054
      %v7287 = vpack.c.b16 %v7057, %v7056
      %v7288 = vpack.c.b16 %v7059, %v7058
      %v7289 = vpack.c.b16 %v7061, %v7060
      %v7290 = vpack.c.b16 %v7063, %v7062
      %v7291 = vpack.c.b16 %v7065, %v7064
      %v7292 = vpack.c.b16 %v7067, %v7066
      %v7293 = vpack.c.b16 %v7069, %v7068
      %v7294 = vpack.c.b16 %v7071, %v7070
      %v7295 = vpack.c.b16 %v7073, %v7072
      %v7296 = vpack.c.b16 %v7075, %v7074
      %v7297 = vpack.c.b16 %v7077, %v7076
      %v7298 = vpack.c.b16 %v7079, %v7078
      %v7299 = vpack.c.b16 %v7081, %v7080
      %v7300 = vpack.c.b16 %v7083, %v7082
      %v7301 = vpack.c.b16 %v7085, %v7084
      %v7302 = vpack.c.b16 %v7087, %v7086
      %v7303 = vpack.c.b16 %v7089, %v7088
      %v7304 = vpack.c.b16 %v7091, %v7090
      %v7305 = vpack.c.b16 %v7093, %v7092
      %v7306 = vpack.c.b16 %v7095, %v7094
      %v7307 = vpack.c.b16 %v7097, %v7096
      %v7308 = vpack.c.b16 %v7099, %v7098
      %v7309 = vpack.c.b16 %v7101, %v7100
      %v7310 = vpack.c.b16 %v7103, %v7102
      %v7311 = vpack.c.b16 %v7105, %v7104
      %v7312 = vpack.c.b16 %v7107, %v7106
      %v7313 = vpack.c.b16 %v7109, %v7108
      %v7314 = vpack.c.b16 %v7111, %v7110
      %v7315 = vpack.c.b16 %v7113, %v7112
      %v7316 = vpack.c.b16 %v7115, %v7114
      %v7317 = vpack.c.b16 %v7117, %v7116
      %v7318 = vpack.c.b16 %v7119, %v7118
      %v7319 = vpack.c.b16 %v7121, %v7120
      %v7320 = vpack.c.b16 %v7123, %v7122
      %v7321 = vpack.c.b16 %v7125, %v7124
      %v7322 = vpack.c.b16 %v7127, %v7126
      %v7323 = vpack.c.b16 %v7129, %v7128
      %v7324 = vpack.c.b16 %v7131, %v7130
      %v7325 = vpack.c.b16 %v7133, %v7132
      %v7326 = vpack.c.b16 %v7135, %v7134
      %v7327 = vpack.c.b16 %v7137, %v7136
      %v7328 = vpack.c.b16 %v7139, %v7138
      %v7329 = vpack.c.b16 %v7141, %v7140
      %v7330 = vpack.c.b16 %v7143, %v7142
      %v7331 = vpack.c.b16 %v7145, %v7144
      %v7332 = vpack.c.b16 %v7147, %v7146
      %v7333 = vpack.c.b16 %v7149, %v7148
      %v7334 = vpack.c.b16 %v7151, %v7150
      %v7335 = vpack.c.b16 %v7153, %v7152
      %v7336 = vpack.c.b16 %v7155, %v7154
      %v7337 = vpack.c.b16 %v7157, %v7156
      %v7338 = vpack.c.b16 %v7159, %v7158
      %v7339 = vpack.c.b16 %v7161, %v7160
      %v7340 = vpack.c.b16 %v7163, %v7162
      %v7341 = vpack.c.b16 %v7165, %v7164
      %v7342 = vpack.c.b16 %v7167, %v7166
      %v7343 = vpack.c.b16 %v7169, %v7168
      %v7344 = vpack.c.b16 %v7171, %v7170
      %v7345 = vpack.c.b16 %v7173, %v7172
      %v7346 = vpack.c.b16 %v7175, %v7174
      %v7347 = vpack.c.b16 %v7177, %v7176
      %v7348 = vpack.c.b16 %v7179, %v7178
      %v7349 = vpack.c.b16 %v7181, %v7180
      %v7350 = vpack.c.b16 %v7183, %v7182
      %v7351 = vpack.c.b16 %v7185, %v7184
      %v7352 = vpack.c.b16 %v7187, %v7186
      %v7353 = vpack.c.b16 %v7189, %v7188
      %v7354 = vpack.c.b16 %v7191, %v7190
      %v7355 = vpack.c.b16 %v7193, %v7192
      %v7356 = vpack.c.b16 %v7195, %v7194
      %v7357 = vpack.c.b16 %v7197, %v7196
      %v7358 = vpack.c.b16 %v7199, %v7198
      %v7359 = vpack.c.b16 %v7201, %v7200
      %v7360 = vpack.c.b16 %v7203, %v7202
      %v7361 = vpack.c.b16 %v7205, %v7204
      %v7362 = vpack.c.b16 %v7207, %v7206
      %v7363 = vpack.c.b16 %v7209, %v7208
      %v7364 = vpack.c.b16 %v7211, %v7210
      %v7365 = vpack.c.b16 %v7213, %v7212
      %v7366 = vpack.c.b16 %v7215, %v7214
      %v7367 = vpack.c.b16 %v7217, %v7216
      %v7368 = vpack.c.b16 %v7219, %v7218
      %v7369 = vpack.c.b16 %v7221, %v7220
      %v7370 = vpack.c.b16 %v7223, %v7222
      %v7371 = vpack.c.b16 %v7225, %v7224
      %v7372 = vpack.c.b16 %v7227, %v7226
      %v7373 = vpack.c.b16 %v7229, %v7228
      %v7374 = vpack.c.b16 %v7231, %v7230
      %v7375 = vpack.c.b16 %v7233, %v7232
      %v7376 = vpack.c.b16 %v7235, %v7234
      %v7377 = vpack.c.b16 %v7237, %v7236
      %v7378 = vpack.c.b16 %v7239, %v7238
      %v7379 = vpack.c.b16 %v7241, %v7240
      %v7380 = vpack.c.b16 %v7243, %v7242
      %v7381 = vpack.c.b16 %v7245, %v7244
      %v7382 = vpack.c.b16 %v7247, %v7246
      %v7383 = vpack.c.b16 %v7249, %v7248
      %v7384 = vpack.c.b16 %v7251, %v7250
      %v7385 = vpack.c.b16 %v7253, %v7252
      %v7386 = vpack.c.b16 %v7255, %v7254
      %v7387 = vpack.c.b16 %v7257, %v7256
      %v7388 = vpack.c.b16 %v7259, %v7258
      %v7389 = vpack.c.b16 %v7261, %v7260
      %7518 = vmatpush.bf16.msra.mxu0 %v7269
      %7519 = vmatpush.bf16.msra.mxu0 %v7268
      %7520 = vmatpush.bf16.msra.mxu0 %v7267
      %7521 = vmatpush.bf16.msra.mxu0 %v7266
      %7522 = vmatpush.bf16.msra.mxu0 %v7265
      %7523 = vmatpush.bf16.msra.mxu0 %v7264
      %7524 = vmatpush.bf16.msra.mxu0 %v7263
      %7525 = vmatpush.bf16.msra.mxu0 %v7262
      %7526 = vmatmul.bf16.gmra.mxu0 %v6412
      %v7527 = vpop.f32.mrf.mxu0
      %v7528 = vadd.f32 %v6749, %v7527
      %v7529 = vpop.f32.mrf.mxu0
      %v7530 = vadd.f32 %v6749, %v7529
      %7531 = vmatmul.bf16.gmra.mxu0 %v6428
      %v7532 = vpop.f32.mrf.mxu0
      %v7533 = vadd.f32 %v6749, %v7532
      %v7534 = vpop.f32.mrf.mxu0
      %v7535 = vadd.f32 %v6749, %v7534
      %7536 = vmatmul.bf16.gmra.mxu0 %v6444
      %v7537 = vpop.f32.mrf.mxu0
      %v7538 = vadd.f32 %v6749, %v7537
      %v7539 = vpop.f32.mrf.mxu0
      %v7540 = vadd.f32 %v6749, %v7539
      %7541 = vmatmul.bf16.gmra.mxu0 %v6460
      %v7542 = vpop.f32.mrf.mxu0
      %v7543 = vadd.f32 %v6749, %v7542
      %v7544 = vpop.f32.mrf.mxu0
      %v7545 = vadd.f32 %v6749, %v7544
      %7546 = vmatmul.bf16.gmra.mxu0 %v6476
      %v7547 = vpop.f32.mrf.mxu0
      %v7548 = vadd.f32 %v6749, %v7547
      %v7549 = vpop.f32.mrf.mxu0
      %v7550 = vadd.f32 %v6749, %v7549
      %7551 = vdwg.mxu0
      %7552 = vmatpush.bf16.msra.mxu0 %v7277
      %7553 = vmatpush.bf16.msra.mxu0 %v7276
      %7554 = vmatpush.bf16.msra.mxu0 %v7275
      %7555 = vmatpush.bf16.msra.mxu0 %v7274
      %7556 = vmatpush.bf16.msra.mxu0 %v7273
      %7557 = vmatpush.bf16.msra.mxu0 %v7272
      %7558 = vmatpush.bf16.msra.mxu0 %v7271
      %7559 = vmatpush.bf16.msra.mxu0 %v7270
      %7560 = vmatmul.bf16.gmra.mxu0 %v6413
      %v7561 = vpop.f32.mrf.mxu0
      %v7562 = vadd.f32 %v7528, %v7561
      %v7563 = vpop.f32.mrf.mxu0
      %v7564 = vadd.f32 %v7530, %v7563
      %7565 = vmatmul.bf16.gmra.mxu0 %v6429
      %v7566 = vpop.f32.mrf.mxu0
      %v7567 = vadd.f32 %v7533, %v7566
      %v7568 = vpop.f32.mrf.mxu0
      %v7569 = vadd.f32 %v7535, %v7568
      %7570 = vmatmul.bf16.gmra.mxu0 %v6445
      %v7571 = vpop.f32.mrf.mxu0
      %v7572 = vadd.f32 %v7538, %v7571
      %v7573 = vpop.f32.mrf.mxu0
      %v7574 = vadd.f32 %v7540, %v7573
      %7575 = vmatmul.bf16.gmra.mxu0 %v6461
      %v7576 = vpop.f32.mrf.mxu0
      %v7577 = vadd.f32 %v7543, %v7576
      %v7578 = vpop.f32.mrf.mxu0
      %v7579 = vadd.f32 %v7545, %v7578
      %7580 = vmatmul.bf16.gmra.mxu0 %v6477
      %v7581 = vpop.f32.mrf.mxu0
      %v7582 = vadd.f32 %v7548, %v7581
      %v7583 = vpop.f32.mrf.mxu0
      %v7584 = vadd.f32 %v7550, %v7583
      %7585 = vdwg.mxu0
      %7586 = vmatpush.bf16.msra.mxu0 %v7285
      %7587 = vmatpush.bf16.msra.mxu0 %v7284
      %7588 = vmatpush.bf16.msra.mxu0 %v7283
      %7589 = vmatpush.bf16.msra.mxu0 %v7282
      %7590 = vmatpush.bf16.msra.mxu0 %v7281
      %7591 = vmatpush.bf16.msra.mxu0 %v7280
      %7592 = vmatpush.bf16.msra.mxu0 %v7279
      %7593 = vmatpush.bf16.msra.mxu0 %v7278
      %7594 = vmatmul.bf16.gmra.mxu0 %v6414
      %v7595 = vpop.f32.mrf.mxu0
      %v7596 = vadd.f32 %v7562, %v7595
      %v7597 = vpop.f32.mrf.mxu0
      %v7598 = vadd.f32 %v7564, %v7597
      %7599 = vmatmul.bf16.gmra.mxu0 %v6430
      %v7600 = vpop.f32.mrf.mxu0
      %v7601 = vadd.f32 %v7567, %v7600
      %v7602 = vpop.f32.mrf.mxu0
      %v7603 = vadd.f32 %v7569, %v7602
      %7604 = vmatmul.bf16.gmra.mxu0 %v6446
      %v7605 = vpop.f32.mrf.mxu0
      %v7606 = vadd.f32 %v7572, %v7605
      %v7607 = vpop.f32.mrf.mxu0
      %v7608 = vadd.f32 %v7574, %v7607
      %7609 = vmatmul.bf16.gmra.mxu0 %v6462
      %v7610 = vpop.f32.mrf.mxu0
      %v7611 = vadd.f32 %v7577, %v7610
      %v7612 = vpop.f32.mrf.mxu0
      %v7613 = vadd.f32 %v7579, %v7612
      %7614 = vmatmul.bf16.gmra.mxu0 %v6478
      %v7615 = vpop.f32.mrf.mxu0
      %v7616 = vadd.f32 %v7582, %v7615
      %v7617 = vpop.f32.mrf.mxu0
      %v7618 = vadd.f32 %v7584, %v7617
      %7619 = vdwg.mxu0
      %7620 = vmatpush.bf16.msra.mxu0 %v7293
      %7621 = vmatpush.bf16.msra.mxu0 %v7292
      %7622 = vmatpush.bf16.msra.mxu0 %v7291
      %7623 = vmatpush.bf16.msra.mxu0 %v7290
      %7624 = vmatpush.bf16.msra.mxu0 %v7289
      %7625 = vmatpush.bf16.msra.mxu0 %v7288
      %7626 = vmatpush.bf16.msra.mxu0 %v7287
      %7627 = vmatpush.bf16.msra.mxu0 %v7286
      %7628 = vmatmul.bf16.gmra.mxu0 %v6415
      %v7629 = vpop.f32.mrf.mxu0
      %v7630 = vadd.f32 %v7596, %v7629
      %v7631 = vpop.f32.mrf.mxu0
      %v7632 = vadd.f32 %v7598, %v7631
      %7633 = vmatmul.bf16.gmra.mxu0 %v6431
      %v7634 = vpop.f32.mrf.mxu0
      %v7635 = vadd.f32 %v7601, %v7634
      %v7636 = vpop.f32.mrf.mxu0
      %v7637 = vadd.f32 %v7603, %v7636
      %7638 = vmatmul.bf16.gmra.mxu0 %v6447
      %v7639 = vpop.f32.mrf.mxu0
      %v7640 = vadd.f32 %v7606, %v7639
      %v7641 = vpop.f32.mrf.mxu0
      %v7642 = vadd.f32 %v7608, %v7641
      %7643 = vmatmul.bf16.gmra.mxu0 %v6463
      %v7644 = vpop.f32.mrf.mxu0
      %v7645 = vadd.f32 %v7611, %v7644
      %v7646 = vpop.f32.mrf.mxu0
      %v7647 = vadd.f32 %v7613, %v7646
      %7648 = vmatmul.bf16.gmra.mxu0 %v6479
      %v7649 = vpop.f32.mrf.mxu0
      %v7650 = vadd.f32 %v7616, %v7649
      %v7651 = vpop.f32.mrf.mxu0
      %v7652 = vadd.f32 %v7618, %v7651
      %7653 = vdwg.mxu0
      %7654 = vmatpush.bf16.msra.mxu0 %v7301
      %7655 = vmatpush.bf16.msra.mxu0 %v7300
      %7656 = vmatpush.bf16.msra.mxu0 %v7299
      %7657 = vmatpush.bf16.msra.mxu0 %v7298
      %7658 = vmatpush.bf16.msra.mxu0 %v7297
      %7659 = vmatpush.bf16.msra.mxu0 %v7296
      %7660 = vmatpush.bf16.msra.mxu0 %v7295
      %7661 = vmatpush.bf16.msra.mxu0 %v7294
      %7662 = vmatmul.bf16.gmra.mxu0 %v6416
      %v7663 = vpop.f32.mrf.mxu0
      %v7664 = vadd.f32 %v7630, %v7663
      %v7665 = vpop.f32.mrf.mxu0
      %v7666 = vadd.f32 %v7632, %v7665
      %7667 = vmatmul.bf16.gmra.mxu0 %v6432
      %v7668 = vpop.f32.mrf.mxu0
      %v7669 = vadd.f32 %v7635, %v7668
      %v7670 = vpop.f32.mrf.mxu0
      %v7671 = vadd.f32 %v7637, %v7670
      %7672 = vmatmul.bf16.gmra.mxu0 %v6448
      %v7673 = vpop.f32.mrf.mxu0
      %v7674 = vadd.f32 %v7640, %v7673
      %v7675 = vpop.f32.mrf.mxu0
      %v7676 = vadd.f32 %v7642, %v7675
      %7677 = vmatmul.bf16.gmra.mxu0 %v6464
      %v7678 = vpop.f32.mrf.mxu0
      %v7679 = vadd.f32 %v7645, %v7678
      %v7680 = vpop.f32.mrf.mxu0
      %v7681 = vadd.f32 %v7647, %v7680
      %7682 = vmatmul.bf16.gmra.mxu0 %v6480
      %v7683 = vpop.f32.mrf.mxu0
      %v7684 = vadd.f32 %v7650, %v7683
      %v7685 = vpop.f32.mrf.mxu0
      %v7686 = vadd.f32 %v7652, %v7685
      %7687 = vdwg.mxu0
      %7688 = vmatpush.bf16.msra.mxu0 %v7309
      %7689 = vmatpush.bf16.msra.mxu0 %v7308
      %7690 = vmatpush.bf16.msra.mxu0 %v7307
      %7691 = vmatpush.bf16.msra.mxu0 %v7306
      %7692 = vmatpush.bf16.msra.mxu0 %v7305
      %7693 = vmatpush.bf16.msra.mxu0 %v7304
      %7694 = vmatpush.bf16.msra.mxu0 %v7303
      %7695 = vmatpush.bf16.msra.mxu0 %v7302
      %7696 = vmatmul.bf16.gmra.mxu0 %v6417
      %v7697 = vpop.f32.mrf.mxu0
      %v7698 = vadd.f32 %v7664, %v7697
      %v7699 = vpop.f32.mrf.mxu0
      %v7700 = vadd.f32 %v7666, %v7699
      %7701 = vmatmul.bf16.gmra.mxu0 %v6433
      %v7702 = vpop.f32.mrf.mxu0
      %v7703 = vadd.f32 %v7669, %v7702
      %v7704 = vpop.f32.mrf.mxu0
      %v7705 = vadd.f32 %v7671, %v7704
      %7706 = vmatmul.bf16.gmra.mxu0 %v6449
      %v7707 = vpop.f32.mrf.mxu0
      %v7708 = vadd.f32 %v7674, %v7707
      %v7709 = vpop.f32.mrf.mxu0
      %v7710 = vadd.f32 %v7676, %v7709
      %7711 = vmatmul.bf16.gmra.mxu0 %v6465
      %v7712 = vpop.f32.mrf.mxu0
      %v7713 = vadd.f32 %v7679, %v7712
      %v7714 = vpop.f32.mrf.mxu0
      %v7715 = vadd.f32 %v7681, %v7714
      %7716 = vmatmul.bf16.gmra.mxu0 %v6481
      %v7717 = vpop.f32.mrf.mxu0
      %v7718 = vadd.f32 %v7684, %v7717
      %v7719 = vpop.f32.mrf.mxu0
      %v7720 = vadd.f32 %v7686, %v7719
      %7721 = vdwg.mxu0
      %7722 = vmatpush.bf16.msra.mxu0 %v7317
      %7723 = vmatpush.bf16.msra.mxu0 %v7316
      %7724 = vmatpush.bf16.msra.mxu0 %v7315
      %7725 = vmatpush.bf16.msra.mxu0 %v7314
      %7726 = vmatpush.bf16.msra.mxu0 %v7313
      %7727 = vmatpush.bf16.msra.mxu0 %v7312
      %7728 = vmatpush.bf16.msra.mxu0 %v7311
      %7729 = vmatpush.bf16.msra.mxu0 %v7310
      %7730 = vmatmul.bf16.gmra.mxu0 %v6418
      %v7731 = vpop.f32.mrf.mxu0
      %v7732 = vadd.f32 %v7698, %v7731
      %v7733 = vpop.f32.mrf.mxu0
      %v7734 = vadd.f32 %v7700, %v7733
      %7735 = vmatmul.bf16.gmra.mxu0 %v6434
      %v7736 = vpop.f32.mrf.mxu0
      %v7737 = vadd.f32 %v7703, %v7736
      %v7738 = vpop.f32.mrf.mxu0
      %v7739 = vadd.f32 %v7705, %v7738
      %7740 = vmatmul.bf16.gmra.mxu0 %v6450
      %v7741 = vpop.f32.mrf.mxu0
      %v7742 = vadd.f32 %v7708, %v7741
      %v7743 = vpop.f32.mrf.mxu0
      %v7744 = vadd.f32 %v7710, %v7743
      %7745 = vmatmul.bf16.gmra.mxu0 %v6466
      %v7746 = vpop.f32.mrf.mxu0
      %v7747 = vadd.f32 %v7713, %v7746
      %v7748 = vpop.f32.mrf.mxu0
      %v7749 = vadd.f32 %v7715, %v7748
      %7750 = vmatmul.bf16.gmra.mxu0 %v6482
      %v7751 = vpop.f32.mrf.mxu0
      %v7752 = vadd.f32 %v7718, %v7751
      %v7753 = vpop.f32.mrf.mxu0
      %v7754 = vadd.f32 %v7720, %v7753
      %7755 = vdwg.mxu0
      %7756 = vmatpush.bf16.msra.mxu0 %v7325
      %7757 = vmatpush.bf16.msra.mxu0 %v7324
      %7758 = vmatpush.bf16.msra.mxu0 %v7323
      %7759 = vmatpush.bf16.msra.mxu0 %v7322
      %7760 = vmatpush.bf16.msra.mxu0 %v7321
      %7761 = vmatpush.bf16.msra.mxu0 %v7320
      %7762 = vmatpush.bf16.msra.mxu0 %v7319
      %7763 = vmatpush.bf16.msra.mxu0 %v7318
      %7764 = vmatmul.bf16.gmra.mxu0 %v6419
      %v7765 = vpop.f32.mrf.mxu0
      %v7766 = vadd.f32 %v7732, %v7765
      %v7767 = vpop.f32.mrf.mxu0
      %v7768 = vadd.f32 %v7734, %v7767
      %7769 = vmatmul.bf16.gmra.mxu0 %v6435
      %v7770 = vpop.f32.mrf.mxu0
      %v7771 = vadd.f32 %v7737, %v7770
      %v7772 = vpop.f32.mrf.mxu0
      %v7773 = vadd.f32 %v7739, %v7772
      %7774 = vmatmul.bf16.gmra.mxu0 %v6451
      %v7775 = vpop.f32.mrf.mxu0
      %v7776 = vadd.f32 %v7742, %v7775
      %v7777 = vpop.f32.mrf.mxu0
      %v7778 = vadd.f32 %v7744, %v7777
      %7779 = vmatmul.bf16.gmra.mxu0 %v6467
      %v7780 = vpop.f32.mrf.mxu0
      %v7781 = vadd.f32 %v7747, %v7780
      %v7782 = vpop.f32.mrf.mxu0
      %v7783 = vadd.f32 %v7749, %v7782
      %7784 = vmatmul.bf16.gmra.mxu0 %v6483
      %v7785 = vpop.f32.mrf.mxu0
      %v7786 = vadd.f32 %v7752, %v7785
      %v7787 = vpop.f32.mrf.mxu0
      %v7788 = vadd.f32 %v7754, %v7787
      %7789 = vdwg.mxu0
      %7790 = vmatpush.bf16.msra.mxu0 %v7333
      %7791 = vmatpush.bf16.msra.mxu0 %v7332
      %7792 = vmatpush.bf16.msra.mxu0 %v7331
      %7793 = vmatpush.bf16.msra.mxu0 %v7330
      %7794 = vmatpush.bf16.msra.mxu0 %v7329
      %7795 = vmatpush.bf16.msra.mxu0 %v7328
      %7796 = vmatpush.bf16.msra.mxu0 %v7327
      %7797 = vmatpush.bf16.msra.mxu0 %v7326
      %7798 = vmatmul.bf16.gmra.mxu0 %v6420
      %v7799 = vpop.f32.mrf.mxu0
      %v7800 = vadd.f32 %v7766, %v7799
      %v7801 = vpop.f32.mrf.mxu0
      %v7802 = vadd.f32 %v7768, %v7801
      %7803 = vmatmul.bf16.gmra.mxu0 %v6436
      %v7804 = vpop.f32.mrf.mxu0
      %v7805 = vadd.f32 %v7771, %v7804
      %v7806 = vpop.f32.mrf.mxu0
      %v7807 = vadd.f32 %v7773, %v7806
      %7808 = vmatmul.bf16.gmra.mxu0 %v6452
      %v7809 = vpop.f32.mrf.mxu0
      %v7810 = vadd.f32 %v7776, %v7809
      %v7811 = vpop.f32.mrf.mxu0
      %v7812 = vadd.f32 %v7778, %v7811
      %7813 = vmatmul.bf16.gmra.mxu0 %v6468
      %v7814 = vpop.f32.mrf.mxu0
      %v7815 = vadd.f32 %v7781, %v7814
      %v7816 = vpop.f32.mrf.mxu0
      %v7817 = vadd.f32 %v7783, %v7816
      %7818 = vmatmul.bf16.gmra.mxu0 %v6484
      %v7819 = vpop.f32.mrf.mxu0
      %v7820 = vadd.f32 %v7786, %v7819
      %v7821 = vpop.f32.mrf.mxu0
      %v7822 = vadd.f32 %v7788, %v7821
      %7823 = vdwg.mxu0
      %7824 = vmatpush.bf16.msra.mxu0 %v7341
      %7825 = vmatpush.bf16.msra.mxu0 %v7340
      %7826 = vmatpush.bf16.msra.mxu0 %v7339
      %7827 = vmatpush.bf16.msra.mxu0 %v7338
      %7828 = vmatpush.bf16.msra.mxu0 %v7337
      %7829 = vmatpush.bf16.msra.mxu0 %v7336
      %7830 = vmatpush.bf16.msra.mxu0 %v7335
      %7831 = vmatpush.bf16.msra.mxu0 %v7334
      %7832 = vmatmul.bf16.gmra.mxu0 %v6421
      %v7833 = vpop.f32.mrf.mxu0
      %v7834 = vadd.f32 %v7800, %v7833
      %v7835 = vpop.f32.mrf.mxu0
      %v7836 = vadd.f32 %v7802, %v7835
      %7837 = vmatmul.bf16.gmra.mxu0 %v6437
      %v7838 = vpop.f32.mrf.mxu0
      %v7839 = vadd.f32 %v7805, %v7838
      %v7840 = vpop.f32.mrf.mxu0
      %v7841 = vadd.f32 %v7807, %v7840
      %7842 = vmatmul.bf16.gmra.mxu0 %v6453
      %v7843 = vpop.f32.mrf.mxu0
      %v7844 = vadd.f32 %v7810, %v7843
      %v7845 = vpop.f32.mrf.mxu0
      %v7846 = vadd.f32 %v7812, %v7845
      %7847 = vmatmul.bf16.gmra.mxu0 %v6469
      %v7848 = vpop.f32.mrf.mxu0
      %v7849 = vadd.f32 %v7815, %v7848
      %v7850 = vpop.f32.mrf.mxu0
      %v7851 = vadd.f32 %v7817, %v7850
      %7852 = vmatmul.bf16.gmra.mxu0 %v6485
      %v7853 = vpop.f32.mrf.mxu0
      %v7854 = vadd.f32 %v7820, %v7853
      %v7855 = vpop.f32.mrf.mxu0
      %v7856 = vadd.f32 %v7822, %v7855
      %7857 = vdwg.mxu0
      %7858 = vmatpush.bf16.msra.mxu0 %v7349
      %7859 = vmatpush.bf16.msra.mxu0 %v7348
      %7860 = vmatpush.bf16.msra.mxu0 %v7347
      %7861 = vmatpush.bf16.msra.mxu0 %v7346
      %7862 = vmatpush.bf16.msra.mxu0 %v7345
      %7863 = vmatpush.bf16.msra.mxu0 %v7344
      %7864 = vmatpush.bf16.msra.mxu0 %v7343
      %7865 = vmatpush.bf16.msra.mxu0 %v7342
      %7866 = vmatmul.bf16.gmra.mxu0 %v6422
      %v7867 = vpop.f32.mrf.mxu0
      %v7868 = vadd.f32 %v7834, %v7867
      %v7869 = vpop.f32.mrf.mxu0
      %v7870 = vadd.f32 %v7836, %v7869
      %7871 = vmatmul.bf16.gmra.mxu0 %v6438
      %v7872 = vpop.f32.mrf.mxu0
      %v7873 = vadd.f32 %v7839, %v7872
      %v7874 = vpop.f32.mrf.mxu0
      %v7875 = vadd.f32 %v7841, %v7874
      %7876 = vmatmul.bf16.gmra.mxu0 %v6454
      %v7877 = vpop.f32.mrf.mxu0
      %v7878 = vadd.f32 %v7844, %v7877
      %v7879 = vpop.f32.mrf.mxu0
      %v7880 = vadd.f32 %v7846, %v7879
      %7881 = vmatmul.bf16.gmra.mxu0 %v6470
      %v7882 = vpop.f32.mrf.mxu0
      %v7883 = vadd.f32 %v7849, %v7882
      %v7884 = vpop.f32.mrf.mxu0
      %v7885 = vadd.f32 %v7851, %v7884
      %7886 = vmatmul.bf16.gmra.mxu0 %v6486
      %v7887 = vpop.f32.mrf.mxu0
      %v7888 = vadd.f32 %v7854, %v7887
      %v7889 = vpop.f32.mrf.mxu0
      %v7890 = vadd.f32 %v7856, %v7889
      %7891 = vdwg.mxu0
      %7892 = vmatpush.bf16.msra.mxu0 %v7357
      %7893 = vmatpush.bf16.msra.mxu0 %v7356
      %7894 = vmatpush.bf16.msra.mxu0 %v7355
      %7895 = vmatpush.bf16.msra.mxu0 %v7354
      %7896 = vmatpush.bf16.msra.mxu0 %v7353
      %7897 = vmatpush.bf16.msra.mxu0 %v7352
      %7898 = vmatpush.bf16.msra.mxu0 %v7351
      %7899 = vmatpush.bf16.msra.mxu0 %v7350
      %7900 = vmatmul.bf16.gmra.mxu0 %v6423
      %v7901 = vpop.f32.mrf.mxu0
      %v7902 = vadd.f32 %v7868, %v7901
      %v7903 = vpop.f32.mrf.mxu0
      %v7904 = vadd.f32 %v7870, %v7903
      %7905 = vmatmul.bf16.gmra.mxu0 %v6439
      %v7906 = vpop.f32.mrf.mxu0
      %v7907 = vadd.f32 %v7873, %v7906
      %v7908 = vpop.f32.mrf.mxu0
      %v7909 = vadd.f32 %v7875, %v7908
      %7910 = vmatmul.bf16.gmra.mxu0 %v6455
      %v7911 = vpop.f32.mrf.mxu0
      %v7912 = vadd.f32 %v7878, %v7911
      %v7913 = vpop.f32.mrf.mxu0
      %v7914 = vadd.f32 %v7880, %v7913
      %7915 = vmatmul.bf16.gmra.mxu0 %v6471
      %v7916 = vpop.f32.mrf.mxu0
      %v7917 = vadd.f32 %v7883, %v7916
      %v7918 = vpop.f32.mrf.mxu0
      %v7919 = vadd.f32 %v7885, %v7918
      %7920 = vmatmul.bf16.gmra.mxu0 %v6487
      %v7921 = vpop.f32.mrf.mxu0
      %v7922 = vadd.f32 %v7888, %v7921
      %v7923 = vpop.f32.mrf.mxu0
      %v7924 = vadd.f32 %v7890, %v7923
      %7925 = vdwg.mxu0
      %7926 = vmatpush.bf16.msra.mxu0 %v7365
      %7927 = vmatpush.bf16.msra.mxu0 %v7364
      %7928 = vmatpush.bf16.msra.mxu0 %v7363
      %7929 = vmatpush.bf16.msra.mxu0 %v7362
      %7930 = vmatpush.bf16.msra.mxu0 %v7361
      %7931 = vmatpush.bf16.msra.mxu0 %v7360
      %7932 = vmatpush.bf16.msra.mxu0 %v7359
      %7933 = vmatpush.bf16.msra.mxu0 %v7358
      %7934 = vmatmul.bf16.gmra.mxu0 %v6424
      %v7935 = vpop.f32.mrf.mxu0
      %v7936 = vadd.f32 %v7902, %v7935
      %v7937 = vpop.f32.mrf.mxu0
      %v7938 = vadd.f32 %v7904, %v7937
      %7939 = vmatmul.bf16.gmra.mxu0 %v6440
      %v7940 = vpop.f32.mrf.mxu0
      %v7941 = vadd.f32 %v7907, %v7940
      %v7942 = vpop.f32.mrf.mxu0
      %v7943 = vadd.f32 %v7909, %v7942
      %7944 = vmatmul.bf16.gmra.mxu0 %v6456
      %v7945 = vpop.f32.mrf.mxu0
      %v7946 = vadd.f32 %v7912, %v7945
      %v7947 = vpop.f32.mrf.mxu0
      %v7948 = vadd.f32 %v7914, %v7947
      %7949 = vmatmul.bf16.gmra.mxu0 %v6472
      %v7950 = vpop.f32.mrf.mxu0
      %v7951 = vadd.f32 %v7917, %v7950
      %v7952 = vpop.f32.mrf.mxu0
      %v7953 = vadd.f32 %v7919, %v7952
      %7954 = vmatmul.bf16.gmra.mxu0 %v6488
      %v7955 = vpop.f32.mrf.mxu0
      %v7956 = vadd.f32 %v7922, %v7955
      %v7957 = vpop.f32.mrf.mxu0
      %v7958 = vadd.f32 %v7924, %v7957
      %7959 = vdwg.mxu0
      %7960 = vmatpush.bf16.msra.mxu0 %v7373
      %7961 = vmatpush.bf16.msra.mxu0 %v7372
      %7962 = vmatpush.bf16.msra.mxu0 %v7371
      %7963 = vmatpush.bf16.msra.mxu0 %v7370
      %7964 = vmatpush.bf16.msra.mxu0 %v7369
      %7965 = vmatpush.bf16.msra.mxu0 %v7368
      %7966 = vmatpush.bf16.msra.mxu0 %v7367
      %7967 = vmatpush.bf16.msra.mxu0 %v7366
      %7968 = vmatmul.bf16.gmra.mxu0 %v6425
      %v7969 = vpop.f32.mrf.mxu0
      %v7970 = vadd.f32 %v7936, %v7969
      %v7971 = vpop.f32.mrf.mxu0
      %v7972 = vadd.f32 %v7938, %v7971
      %7973 = vmatmul.bf16.gmra.mxu0 %v6441
      %v7974 = vpop.f32.mrf.mxu0
      %v7975 = vadd.f32 %v7941, %v7974
      %v7976 = vpop.f32.mrf.mxu0
      %v7977 = vadd.f32 %v7943, %v7976
      %7978 = vmatmul.bf16.gmra.mxu0 %v6457
      %v7979 = vpop.f32.mrf.mxu0
      %v7980 = vadd.f32 %v7946, %v7979
      %v7981 = vpop.f32.mrf.mxu0
      %v7982 = vadd.f32 %v7948, %v7981
      %7983 = vmatmul.bf16.gmra.mxu0 %v6473
      %v7984 = vpop.f32.mrf.mxu0
      %v7985 = vadd.f32 %v7951, %v7984
      %v7986 = vpop.f32.mrf.mxu0
      %v7987 = vadd.f32 %v7953, %v7986
      %7988 = vmatmul.bf16.gmra.mxu0 %v6489
      %v7989 = vpop.f32.mrf.mxu0
      %v7990 = vadd.f32 %v7956, %v7989
      %v7991 = vpop.f32.mrf.mxu0
      %v7992 = vadd.f32 %v7958, %v7991
      %7993 = vdwg.mxu0
      %7994 = vmatpush.bf16.msra.mxu0 %v7381
      %7995 = vmatpush.bf16.msra.mxu0 %v7380
      %7996 = vmatpush.bf16.msra.mxu0 %v7379
      %7997 = vmatpush.bf16.msra.mxu0 %v7378
      %7998 = vmatpush.bf16.msra.mxu0 %v7377
      %7999 = vmatpush.bf16.msra.mxu0 %v7376
      %8000 = vmatpush.bf16.msra.mxu0 %v7375
      %8001 = vmatpush.bf16.msra.mxu0 %v7374
      %8002 = vmatmul.bf16.gmra.mxu0 %v6426
      %v8003 = vpop.f32.mrf.mxu0
      %v8004 = vadd.f32 %v7970, %v8003
      %v8005 = vpop.f32.mrf.mxu0
      %v8006 = vadd.f32 %v7972, %v8005
      %8007 = vmatmul.bf16.gmra.mxu0 %v6442
      %v8008 = vpop.f32.mrf.mxu0
      %v8009 = vadd.f32 %v7975, %v8008
      %v8010 = vpop.f32.mrf.mxu0
      %v8011 = vadd.f32 %v7977, %v8010
      %8012 = vmatmul.bf16.gmra.mxu0 %v6458
      %v8013 = vpop.f32.mrf.mxu0
      %v8014 = vadd.f32 %v7980, %v8013
      %v8015 = vpop.f32.mrf.mxu0
      %v8016 = vadd.f32 %v7982, %v8015
      %8017 = vmatmul.bf16.gmra.mxu0 %v6474
      %v8018 = vpop.f32.mrf.mxu0
      %v8019 = vadd.f32 %v7985, %v8018
      %v8020 = vpop.f32.mrf.mxu0
      %v8021 = vadd.f32 %v7987, %v8020
      %8022 = vmatmul.bf16.gmra.mxu0 %v6490
      %v8023 = vpop.f32.mrf.mxu0
      %v8024 = vadd.f32 %v7990, %v8023
      %v8025 = vpop.f32.mrf.mxu0
      %v8026 = vadd.f32 %v7992, %v8025
      %8027 = vdwg.mxu0
      %8028 = vmatpush.bf16.msra.mxu0 %v7389
      %8029 = vmatpush.bf16.msra.mxu0 %v7388
      %8030 = vmatpush.bf16.msra.mxu0 %v7387
      %8031 = vmatpush.bf16.msra.mxu0 %v7386
      %8032 = vmatpush.bf16.msra.mxu0 %v7385
      %8033 = vmatpush.bf16.msra.mxu0 %v7384
      %8034 = vmatpush.bf16.msra.mxu0 %v7383
      %8035 = vmatpush.bf16.msra.mxu0 %v7382
      %8036 = vmatmul.bf16.gmra.mxu0 %v6427
      %v8037 = vpop.f32.mrf.mxu0
      %v8038 = vadd.f32 %v8004, %v8037
      %v8039 = vpop.f32.mrf.mxu0
      %v8040 = vadd.f32 %v8006, %v8039
      %8041 = vmatmul.bf16.gmra.mxu0 %v6443
      %v8042 = vpop.f32.mrf.mxu0
      %v8043 = vadd.f32 %v8009, %v8042
      %v8044 = vpop.f32.mrf.mxu0
      %v8045 = vadd.f32 %v8011, %v8044
      %8046 = vmatmul.bf16.gmra.mxu0 %v6459
      %v8047 = vpop.f32.mrf.mxu0
      %v8048 = vadd.f32 %v8014, %v8047
      %v8049 = vpop.f32.mrf.mxu0
      %v8050 = vadd.f32 %v8016, %v8049
      %8051 = vmatmul.bf16.gmra.mxu0 %v6475
      %v8052 = vpop.f32.mrf.mxu0
      %v8053 = vadd.f32 %v8019, %v8052
      %v8054 = vpop.f32.mrf.mxu0
      %v8055 = vadd.f32 %v8021, %v8054
      %8056 = vmatmul.bf16.gmra.mxu0 %v6491
      %v8057 = vpop.f32.mrf.mxu0
      %v8058 = vadd.f32 %v8024, %v8057
      %v8059 = vpop.f32.mrf.mxu0
      %v8060 = vadd.f32 %v8026, %v8059
      %8061 = vdwg.mxu0
      %v8062 = vadd.f32 %v5256, %v8038
      %v8063 = vadd.f32 %v5257, %v8040
      %v8064 = vadd.f32 %v5258, %v8043
      %v8065 = vadd.f32 %v5259, %v8045
      %v8066 = vadd.f32 %v5260, %v8048
      %v8067 = vadd.f32 %v5261, %v8050
      %v8068 = vadd.f32 %v5262, %v8053
      %v8069 = vadd.f32 %v5263, %v8055
      %v8070 = vadd.f32 %v5264, %v8058
      %v8071 = vadd.f32 %v5265, %v8060
      %v8072 = vsel %vm635, %v8062, 0.0
      %8073 = vadd.xlane.f32.xlu0 %v8072
      %v8074 = vpop.xlane.xlu0 %8073
      %v8075 = vsel %vm635, %v8063, 0.0
      %8076 = vadd.xlane.f32.xlu0 %v8075
      %v8077 = vpop.xlane.xlu0 %8076
      %v8078 = vsel %vm635, %v8064, 0.0
      %8079 = vadd.xlane.f32.xlu0 %v8078
      %v8080 = vpop.xlane.xlu0 %8079
      %v8081 = vsel %vm635, %v8065, 0.0
      %8082 = vadd.xlane.f32.xlu0 %v8081
      %v8083 = vpop.xlane.xlu0 %8082
      %v8084 = vsel %vm635, %v8066, 0.0
      %8085 = vadd.xlane.f32.xlu0 %v8084
      %v8086 = vpop.xlane.xlu0 %8085
      %v8087 = vsel %vm635, %v8067, 0.0
      %8088 = vadd.xlane.f32.xlu0 %v8087
      %v8089 = vpop.xlane.xlu0 %8088
      %v8090 = vsel %vm635, %v8068, 0.0
      %8091 = vadd.xlane.f32.xlu0 %v8090
      %v8092 = vpop.xlane.xlu0 %8091
      %v8093 = vsel %vm635, %v8069, 0.0
      %8094 = vadd.xlane.f32.xlu0 %v8093
      %v8095 = vpop.xlane.xlu0 %8094
      %v8096 = vsel %vm635, %v8070, 0.0
      %8097 = vadd.xlane.f32.xlu0 %v8096
      %v8098 = vpop.xlane.xlu0 %8097
      %v8099 = vsel %vm635, %v8071, 0.0
      %8100 = vadd.xlane.f32.xlu0 %v8099
      %v8101 = vpop.xlane.xlu0 %8100
      %v8102 = vmul.f32 %v8074, %v1187
      %v8103 = vmul.f32 %v8077, %v1187
      %v8104 = vmul.f32 %v8080, %v1187
      %v8105 = vmul.f32 %v8083, %v1187
      %v8106 = vmul.f32 %v8086, %v1187
      %v8107 = vmul.f32 %v8089, %v1187
      %v8108 = vmul.f32 %v8092, %v1187
      %v8109 = vmul.f32 %v8095, %v1187
      %v8110 = vmul.f32 %v8098, %v1187
      %v8111 = vmul.f32 %v8101, %v1187
      %v8112 = vsub.f32 %v8062, %v8102
      %v8113 = vsub.f32 %v8063, %v8103
      %v8114 = vsub.f32 %v8064, %v8104
      %v8115 = vsub.f32 %v8065, %v8105
      %v8116 = vsub.f32 %v8066, %v8106
      %v8117 = vsub.f32 %v8067, %v8107
      %v8118 = vsub.f32 %v8068, %v8108
      %v8119 = vsub.f32 %v8069, %v8109
      %v8120 = vsub.f32 %v8070, %v8110
      %v8121 = vsub.f32 %v8071, %v8111
      %v8122 = vmul.f32 %v8112, %v8112
      %v8123 = vmul.f32 %v8113, %v8113
      %v8124 = vmul.f32 %v8114, %v8114
      %v8125 = vmul.f32 %v8115, %v8115
      %v8126 = vmul.f32 %v8116, %v8116
      %v8127 = vmul.f32 %v8117, %v8117
      %v8128 = vmul.f32 %v8118, %v8118
      %v8129 = vmul.f32 %v8119, %v8119
      %v8130 = vmul.f32 %v8120, %v8120
      %v8131 = vmul.f32 %v8121, %v8121
      %v8132 = vsel %vm635, %v8122, 0.0
      %8133 = vadd.xlane.f32.xlu0 %v8132
      %v8134 = vpop.xlane.xlu0 %8133
      %v8135 = vsel %vm635, %v8123, 0.0
      %8136 = vadd.xlane.f32.xlu0 %v8135
      %v8137 = vpop.xlane.xlu0 %8136
      %v8138 = vsel %vm635, %v8124, 0.0
      %8139 = vadd.xlane.f32.xlu0 %v8138
      %v8140 = vpop.xlane.xlu0 %8139
      %v8141 = vsel %vm635, %v8125, 0.0
      %8142 = vadd.xlane.f32.xlu0 %v8141
      %v8143 = vpop.xlane.xlu0 %8142
      %v8144 = vsel %vm635, %v8126, 0.0
      %8145 = vadd.xlane.f32.xlu0 %v8144
      %v8146 = vpop.xlane.xlu0 %8145
      %v8147 = vsel %vm635, %v8127, 0.0
      %8148 = vadd.xlane.f32.xlu0 %v8147
      %v8149 = vpop.xlane.xlu0 %8148
      %v8150 = vsel %vm635, %v8128, 0.0
      %8151 = vadd.xlane.f32.xlu0 %v8150
      %v8152 = vpop.xlane.xlu0 %8151
      %v8153 = vsel %vm635, %v8129, 0.0
      %8154 = vadd.xlane.f32.xlu0 %v8153
      %v8155 = vpop.xlane.xlu0 %8154
      %v8156 = vsel %vm635, %v8130, 0.0
      %8157 = vadd.xlane.f32.xlu0 %v8156
      %v8158 = vpop.xlane.xlu0 %8157
      %v8159 = vsel %vm635, %v8131, 0.0
      %8160 = vadd.xlane.f32.xlu0 %v8159
      %v8161 = vpop.xlane.xlu0 %8160
      %v8162 = vmul.f32 %v8134, %v1187
      %v8163 = vmul.f32 %v8137, %v1187
      %v8164 = vmul.f32 %v8140, %v1187
      %v8165 = vmul.f32 %v8143, %v1187
      %v8166 = vmul.f32 %v8146, %v1187
      %v8167 = vmul.f32 %v8149, %v1187
      %v8168 = vmul.f32 %v8152, %v1187
      %v8169 = vmul.f32 %v8155, %v1187
      %v8170 = vmul.f32 %v8158, %v1187
      %v8171 = vmul.f32 %v8161, %v1187
      %v8172 = vadd.f32 %v8162, 1e-05
      %v8173 = vadd.f32 %v8163, 1e-05
      %v8174 = vadd.f32 %v8164, 1e-05
      %v8175 = vadd.f32 %v8165, 1e-05
      %v8176 = vadd.f32 %v8166, 1e-05
      %v8177 = vadd.f32 %v8167, 1e-05
      %v8178 = vadd.f32 %v8168, 1e-05
      %v8179 = vadd.f32 %v8169, 1e-05
      %v8180 = vadd.f32 %v8170, 1e-05
      %v8181 = vadd.f32 %v8171, 1e-05
      %v8182 = vrsqrt.pop %v8172
      %v8183 = vmul.f32 %v8182, %v8172
      %v8184 = vmul.f32 %v8183, %v8182
      %v8185 = vmul.f32 0.5, %v8184
      %v8186 = vsub.f32 1.5, %v8185
      %v8187 = vmul.f32 %v8182, %v8186
      %vm8188 = vweird.f32 %v8172
      %vm8189 = vweird.f32 %v8182
      %vm8190 = vmor %vm8188, %vm8189
      %v8191 = vsel %vm8190, %v8182, %v8187
      %v8192 = vrsqrt.pop %v8173
      %v8193 = vmul.f32 %v8192, %v8173
      %v8194 = vmul.f32 %v8193, %v8192
      %v8195 = vmul.f32 0.5, %v8194
      %v8196 = vsub.f32 1.5, %v8195
      %v8197 = vmul.f32 %v8192, %v8196
      %vm8198 = vweird.f32 %v8173
      %vm8199 = vweird.f32 %v8192
      %vm8200 = vmor %vm8198, %vm8199
      %v8201 = vsel %vm8200, %v8192, %v8197
      %v8202 = vrsqrt.pop %v8174
      %v8203 = vmul.f32 %v8202, %v8174
      %v8204 = vmul.f32 %v8203, %v8202
      %v8205 = vmul.f32 0.5, %v8204
      %v8206 = vsub.f32 1.5, %v8205
      %v8207 = vmul.f32 %v8202, %v8206
      %vm8208 = vweird.f32 %v8174
      %vm8209 = vweird.f32 %v8202
      %vm8210 = vmor %vm8208, %vm8209
      %v8211 = vsel %vm8210, %v8202, %v8207
      %v8212 = vrsqrt.pop %v8175
      %v8213 = vmul.f32 %v8212, %v8175
      %v8214 = vmul.f32 %v8213, %v8212
      %v8215 = vmul.f32 0.5, %v8214
      %v8216 = vsub.f32 1.5, %v8215
      %v8217 = vmul.f32 %v8212, %v8216
      %vm8218 = vweird.f32 %v8175
      %vm8219 = vweird.f32 %v8212
      %vm8220 = vmor %vm8218, %vm8219
      %v8221 = vsel %vm8220, %v8212, %v8217
      %v8222 = vrsqrt.pop %v8176
      %v8223 = vmul.f32 %v8222, %v8176
      %v8224 = vmul.f32 %v8223, %v8222
      %v8225 = vmul.f32 0.5, %v8224
      %v8226 = vsub.f32 1.5, %v8225
      %v8227 = vmul.f32 %v8222, %v8226
      %vm8228 = vweird.f32 %v8176
      %vm8229 = vweird.f32 %v8222
      %vm8230 = vmor %vm8228, %vm8229
      %v8231 = vsel %vm8230, %v8222, %v8227
      %v8232 = vrsqrt.pop %v8177
      %v8233 = vmul.f32 %v8232, %v8177
      %v8234 = vmul.f32 %v8233, %v8232
      %v8235 = vmul.f32 0.5, %v8234
      %v8236 = vsub.f32 1.5, %v8235
      %v8237 = vmul.f32 %v8232, %v8236
      %vm8238 = vweird.f32 %v8177
      %vm8239 = vweird.f32 %v8232
      %vm8240 = vmor %vm8238, %vm8239
      %v8241 = vsel %vm8240, %v8232, %v8237
      %v8242 = vrsqrt.pop %v8178
      %v8243 = vmul.f32 %v8242, %v8178
      %v8244 = vmul.f32 %v8243, %v8242
      %v8245 = vmul.f32 0.5, %v8244
      %v8246 = vsub.f32 1.5, %v8245
      %v8247 = vmul.f32 %v8242, %v8246
      %vm8248 = vweird.f32 %v8178
      %vm8249 = vweird.f32 %v8242
      %vm8250 = vmor %vm8248, %vm8249
      %v8251 = vsel %vm8250, %v8242, %v8247
      %v8252 = vrsqrt.pop %v8179
      %v8253 = vmul.f32 %v8252, %v8179
      %v8254 = vmul.f32 %v8253, %v8252
      %v8255 = vmul.f32 0.5, %v8254
      %v8256 = vsub.f32 1.5, %v8255
      %v8257 = vmul.f32 %v8252, %v8256
      %vm8258 = vweird.f32 %v8179
      %vm8259 = vweird.f32 %v8252
      %vm8260 = vmor %vm8258, %vm8259
      %v8261 = vsel %vm8260, %v8252, %v8257
      %v8262 = vrsqrt.pop %v8180
      %v8263 = vmul.f32 %v8262, %v8180
      %v8264 = vmul.f32 %v8263, %v8262
      %v8265 = vmul.f32 0.5, %v8264
      %v8266 = vsub.f32 1.5, %v8265
      %v8267 = vmul.f32 %v8262, %v8266
      %vm8268 = vweird.f32 %v8180
      %vm8269 = vweird.f32 %v8262
      %vm8270 = vmor %vm8268, %vm8269
      %v8271 = vsel %vm8270, %v8262, %v8267
      %v8272 = vrsqrt.pop %v8181
      %v8273 = vmul.f32 %v8272, %v8181
      %v8274 = vmul.f32 %v8273, %v8272
      %v8275 = vmul.f32 0.5, %v8274
      %v8276 = vsub.f32 1.5, %v8275
      %v8277 = vmul.f32 %v8272, %v8276
      %vm8278 = vweird.f32 %v8181
      %vm8279 = vweird.f32 %v8272
      %vm8280 = vmor %vm8278, %vm8279
      %v8281 = vsel %vm8280, %v8272, %v8277
      %v8282 = vmul.f32 %v8112, %v8191
      %v8283 = vmul.f32 %v8113, %v8201
      %v8284 = vmul.f32 %v8114, %v8211
      %v8285 = vmul.f32 %v8115, %v8221
      %v8286 = vmul.f32 %v8116, %v8231
      %v8287 = vmul.f32 %v8117, %v8241
      %v8288 = vmul.f32 %v8118, %v8251
      %v8289 = vmul.f32 %v8119, %v8261
      %v8290 = vmul.f32 %v8120, %v8271
      %v8291 = vmul.f32 %v8121, %v8281
      %v8292 = vperm.slane %v4446, 4
      %v8293 = vmul.f32 %v8282, %v8292
      %v8294 = vmul.f32 %v8283, %v8292
      %v8295 = vmul.f32 %v8284, %v8292
      %v8296 = vmul.f32 %v8285, %v8292
      %v8297 = vmul.f32 %v8286, %v8292
      %v8298 = vmul.f32 %v8287, %v8292
      %v8299 = vmul.f32 %v8288, %v8292
      %v8300 = vmul.f32 %v8289, %v8292
      %v8301 = vmul.f32 %v8290, %v8292
      %v8302 = vmul.f32 %v8291, %v8292
      %v8303 = vperm.slane %v4446, 5
      %v8304 = vadd.f32 %v8293, %v8303
      %v8305 = vadd.f32 %v8294, %v8303
      %v8306 = vadd.f32 %v8295, %v8303
      %v8307 = vadd.f32 %v8296, %v8303
      %v8308 = vadd.f32 %v8297, %v8303
      %v8309 = vadd.f32 %v8298, %v8303
      %v8310 = vadd.f32 %v8299, %v8303
      %v8311 = vadd.f32 %v8300, %v8303
      %v8312 = vadd.f32 %v8301, %v8303
      %v8313 = vadd.f32 %v8302, %v8303
      %s8314 = scalar_lea.vmem %s6, 16
      %v8315 = vld [vmem:[%s8314] sm:$0xff]
      %v8316 = vpack.c.bf16 %v8305, %v8304
      %v8317 = vpack.c.bf16 %v8307, %v8306
      %v8318 = vpack.c.bf16 %v8309, %v8308
      %v8319 = vpack.c.bf16 %v8311, %v8310
      %v8320 = vpack.c.bf16 %v8313, %v8312
      %s8321 = scalar_lea.vmem %s3, 128
      %v8322 = vld [vmem:[%s8321] sm:$0xff]
      %v8323 = vld [vmem:[%s8321 + $0x8] sm:$0xff]
      %v8324 = vld [vmem:[%s8321 + $0x10] sm:$0xff]
      %v8325 = vld [vmem:[%s8321 + $0x18] sm:$0xff]
      %v8326 = vld [vmem:[%s8321 + $0x20] sm:$0xff]
      %v8327 = vld [vmem:[%s8321 + $0x28] sm:$0xff]
      %v8328 = vld [vmem:[%s8321 + $0x30] sm:$0xff]
      %v8329 = vld [vmem:[%s8321 + $0x38] sm:$0xff]
      %s8330 = scalar_lea.vmem %s4, 4
      %v8331 = vld [vmem:[%s8330] sm:$0x3]
      %v8333 = vperm.slane %v8331, 0
      %v8334 = vperm.slane %v8331, 1
      %v8345 = vunpack.c.l.b16 %v8322
      %v8346 = vunpack.c.h.b16 %v8322
      %v8347 = vunpack.c.l.b16 %v8323
      %v8348 = vunpack.c.h.b16 %v8323
      %v8349 = vunpack.c.l.b16 %v8324
      %v8350 = vunpack.c.h.b16 %v8324
      %v8351 = vunpack.c.l.b16 %v8325
      %v8352 = vunpack.c.h.b16 %v8325
      %v8353 = vunpack.c.l.b16 %v8326
      %v8354 = vunpack.c.h.b16 %v8326
      %v8355 = vunpack.c.l.b16 %v8327
      %v8356 = vunpack.c.h.b16 %v8327
      %v8357 = vunpack.c.l.b16 %v8328
      %v8358 = vunpack.c.h.b16 %v8328
      %v8359 = vunpack.c.l.b16 %v8329
      %v8360 = vunpack.c.h.b16 %v8329
      %v8361 = vpack.c.b16 %v8347, %v8345
      %v8362 = vpack.c.b16 %v8348, %v8346
      %v8363 = vpack.c.b16 %v8351, %v8349
      %v8364 = vpack.c.b16 %v8352, %v8350
      %v8365 = vpack.c.b16 %v8355, %v8353
      %v8366 = vpack.c.b16 %v8356, %v8354
      %v8367 = vpack.c.b16 %v8359, %v8357
      %v8368 = vpack.c.b16 %v8360, %v8358
      %v8378 = vsel %vm635, %v8316, 0
      %v8381 = vsel %vm635, %v8317, 0
      %v8384 = vsel %vm635, %v8318, 0
      %v8387 = vsel %vm635, %v8319, 0
      %v8390 = vsel %vm635, %v8320, 0
      %8392 = vmatpush.bf16.msra.mxu0 0
      %8393 = vmatpush.bf16.msra.mxu0 0
      %8394 = vmatpush.bf16.msra.mxu0 0
      %8395 = vmatpush.bf16.msra.mxu0 0
      %8396 = vmatpush.bf16.msra.mxu0 %v8367
      %8397 = vmatpush.bf16.msra.mxu0 %v8365
      %8398 = vmatpush.bf16.msra.mxu0 %v8363
      %8399 = vmatpush.bf16.msra.mxu0 %v8361
      %8400 = vmatmul.bf16.gmra.mxu0 %v8378
      %v8401 = vpop.f32.mrf.mxu0
      %v8402 = vadd.f32 %v8333, %v8401
      %v8403 = vpop.f32.mrf.mxu0
      %v8404 = vadd.f32 %v8333, %v8403
      %8405 = vmatmul.bf16.gmra.mxu0 %v8381
      %v8406 = vpop.f32.mrf.mxu0
      %v8407 = vadd.f32 %v8333, %v8406
      %v8408 = vpop.f32.mrf.mxu0
      %v8409 = vadd.f32 %v8333, %v8408
      %8410 = vmatmul.bf16.gmra.mxu0 %v8384
      %v8411 = vpop.f32.mrf.mxu0
      %v8412 = vadd.f32 %v8333, %v8411
      %v8413 = vpop.f32.mrf.mxu0
      %v8414 = vadd.f32 %v8333, %v8413
      %8415 = vmatmul.bf16.gmra.mxu0 %v8387
      %v8416 = vpop.f32.mrf.mxu0
      %v8417 = vadd.f32 %v8333, %v8416
      %v8418 = vpop.f32.mrf.mxu0
      %v8419 = vadd.f32 %v8333, %v8418
      %8420 = vmatmul.bf16.gmra.mxu0 %v8390
      %v8421 = vpop.f32.mrf.mxu0
      %v8422 = vadd.f32 %v8333, %v8421
      %v8423 = vpop.f32.mrf.mxu0
      %v8424 = vadd.f32 %v8333, %v8423
      %8425 = vdwg.mxu0
      %8426 = vmatpush.bf16.msra.mxu0 0
      %8427 = vmatpush.bf16.msra.mxu0 0
      %8428 = vmatpush.bf16.msra.mxu0 0
      %8429 = vmatpush.bf16.msra.mxu0 0
      %8430 = vmatpush.bf16.msra.mxu0 %v8368
      %8431 = vmatpush.bf16.msra.mxu0 %v8366
      %8432 = vmatpush.bf16.msra.mxu0 %v8364
      %8433 = vmatpush.bf16.msra.mxu0 %v8362
      %8434 = vmatmul.bf16.gmra.mxu0 %v8378
      %v8435 = vpop.f32.mrf.mxu0
      %v8436 = vadd.f32 %v8334, %v8435
      %v8437 = vpop.f32.mrf.mxu0
      %v8438 = vadd.f32 %v8334, %v8437
      %8439 = vmatmul.bf16.gmra.mxu0 %v8381
      %v8440 = vpop.f32.mrf.mxu0
      %v8441 = vadd.f32 %v8334, %v8440
      %v8442 = vpop.f32.mrf.mxu0
      %v8443 = vadd.f32 %v8334, %v8442
      %8444 = vmatmul.bf16.gmra.mxu0 %v8384
      %v8445 = vpop.f32.mrf.mxu0
      %v8446 = vadd.f32 %v8334, %v8445
      %v8447 = vpop.f32.mrf.mxu0
      %v8448 = vadd.f32 %v8334, %v8447
      %8449 = vmatmul.bf16.gmra.mxu0 %v8387
      %v8450 = vpop.f32.mrf.mxu0
      %v8451 = vadd.f32 %v8334, %v8450
      %v8452 = vpop.f32.mrf.mxu0
      %v8453 = vadd.f32 %v8334, %v8452
      %8454 = vmatmul.bf16.gmra.mxu0 %v8390
      %v8455 = vpop.f32.mrf.mxu0
      %v8456 = vadd.f32 %v8334, %v8455
      %v8457 = vpop.f32.mrf.mxu0
      %v8458 = vadd.f32 %v8334, %v8457
      %8459 = vdwg.mxu0
      %v8460 = vpack.c.bf16 %v8404, %v8402
      %v8461 = vpack.c.bf16 %v8409, %v8407
      %v8462 = vpack.c.bf16 %v8414, %v8412
      %v8463 = vpack.c.bf16 %v8419, %v8417
      %v8464 = vpack.c.bf16 %v8424, %v8422
      loop: start=0, step=1, limit=4
      $region83: #{wave_transformer.1} parent=67 // loop_pre_header
        _
      $region84: #{wave_transformer.1} parent=67 // loop_header
        %s8466 = sphi 0, %s8470
        %p8467 = scmp.ge.s32.totalorder %s8466, 4
        %v8471 = vphi 0.0, %v8785
        %v8472 = vphi 0.0, %v8786
        %v8473 = vphi 0.0, %v8787
        %v8474 = vphi 0.0, %v8788
        %v8475 = vphi 0.0, %v8789
        %v8476 = vphi 0.0, %v8790
        %v8477 = vphi 0.0, %v8791
        %v8478 = vphi 0.0, %v8792
        %v8479 = vphi 0.0, %v8793
        %v8480 = vphi 0.0, %v8794
      $region85: #{wave_transformer.1} parent=67 // loop_header_branch
        %8469 = sbr.rel (%p8467) target = $region89
      $region86: #{wave_transformer.1} parent=67 // loop_body
        %s8481 = smul.u32 %s8466, 16
        %v8482 = vstv %s8481
        %vm8483 = vcmp.ge.s32.totalorder %v440, %v8482
        %s8484 = sadd.s32 %s8466, 1
        %s8485 = smul.u32 %s8484, 16
        %v8486 = vstv %s8485
        %vm8487 = vcmp.lt.s32.totalorder %v440, %v8486
        %vm8488 = vmand %vm8483, %vm8487
        %v8489 = vsel %vm8488, 1, 0
        %v8490 = vcvt.s32.f32 %v8489
        %v8491 = vmul.f32 %v8402, %v8490
        %v8492 = vmul.f32 %v8404, %v8490
        %v8493 = vmul.f32 %v8407, %v8490
        %v8494 = vmul.f32 %v8409, %v8490
        %v8495 = vmul.f32 %v8412, %v8490
        %v8496 = vmul.f32 %v8414, %v8490
        %v8497 = vmul.f32 %v8417, %v8490
        %v8498 = vmul.f32 %v8419, %v8490
        %v8499 = vmul.f32 %v8422, %v8490
        %v8500 = vmul.f32 %v8424, %v8490
        %v8501 = vpack.c.bf16 %v8492, %v8491
        %v8502 = vpack.c.bf16 %v8494, %v8493
        %v8503 = vpack.c.bf16 %v8496, %v8495
        %v8504 = vpack.c.bf16 %v8498, %v8497
        %v8505 = vpack.c.bf16 %v8500, %v8499
        %8511 = vrot.lane.b32.xlu0 %v8460, 64
        %v8512 = vpop.permute.xlu0 %8511
        %8513 = vrot.lane.b32.xlu0 %v8461, 64
        %v8514 = vpop.permute.xlu0 %8513
        %8515 = vrot.lane.b32.xlu0 %v8462, 64
        %v8516 = vpop.permute.xlu0 %8515
        %8517 = vrot.lane.b32.xlu0 %v8463, 64
        %v8518 = vpop.permute.xlu0 %8517
        %8519 = vrot.lane.b32.xlu0 %v8464, 64
        %v8520 = vpop.permute.xlu0 %8519
        %v8522 = vsel %vm635, %v8501, 0
        %v8525 = vsel %vm635, %v8502, 0
        %v8528 = vsel %vm635, %v8503, 0
        %v8531 = vsel %vm635, %v8504, 0
        %v8534 = vsel %vm635, %v8505, 0
        %v8537 = vsel %vm635, %v8512, 0
        %v8540 = vsel %vm635, %v8514, 0
        %v8543 = vsel %vm635, %v8516, 0
        %v8546 = vsel %vm635, %v8518, 0
        %v8549 = vsel %vm635, %v8520, 0
        %8551 = vmatpush.bf16.xpose.msra.mxu0 0
        %8552 = vmatpush.bf16.xpose.msra.mxu0 0
        %8553 = vmatpush.bf16.xpose.msra.mxu0 0
        %8554 = vmatpush.bf16.xpose.msra.mxu0 %v8549
        %8555 = vmatpush.bf16.xpose.msra.mxu0 %v8546
        %8556 = vmatpush.bf16.xpose.msra.mxu0 %v8543
        %8557 = vmatpush.bf16.xpose.msra.mxu0 %v8540
        %8558 = vmatpush.bf16.xpose.msra.mxu0 %v8537
        %8559 = vmatmul.bf16.gmra.mxu0 %v8522
        %v8560 = vpop.f32.mrf.mxu0
        %v8561 = vadd.f32 0.0, %v8560
        %v8562 = vpop.f32.mrf.mxu0
        %v8563 = vadd.f32 0.0, %v8562
        %8564 = vmatmul.bf16.gmra.mxu0 %v8525
        %v8565 = vpop.f32.mrf.mxu0
        %v8566 = vadd.f32 0.0, %v8565
        %v8567 = vpop.f32.mrf.mxu0
        %v8568 = vadd.f32 0.0, %v8567
        %8569 = vmatmul.bf16.gmra.mxu0 %v8528
        %v8570 = vpop.f32.mrf.mxu0
        %v8571 = vadd.f32 0.0, %v8570
        %v8572 = vpop.f32.mrf.mxu0
        %v8573 = vadd.f32 0.0, %v8572
        %8574 = vmatmul.bf16.gmra.mxu0 %v8531
        %v8575 = vpop.f32.mrf.mxu0
        %v8576 = vadd.f32 0.0, %v8575
        %v8577 = vpop.f32.mrf.mxu0
        %v8578 = vadd.f32 0.0, %v8577
        %8579 = vmatmul.bf16.gmra.mxu0 %v8534
        %v8580 = vpop.f32.mrf.mxu0
        %v8581 = vadd.f32 0.0, %v8580
        %v8582 = vpop.f32.mrf.mxu0
        %v8583 = vadd.f32 0.0, %v8582
        %8584 = vdwg.mxu0
        %v8585 = vmul.f32 %v8561, 0.25
        %v8586 = vmul.f32 %v8563, 0.25
        %v8587 = vmul.f32 %v8566, 0.25
        %v8588 = vmul.f32 %v8568, 0.25
        %v8589 = vmul.f32 %v8571, 0.25
        %v8590 = vmul.f32 %v8573, 0.25
        %v8591 = vmul.f32 %v8576, 0.25
        %v8592 = vmul.f32 %v8578, 0.25
        %v8593 = vmul.f32 %v8581, 0.25
        %v8594 = vmul.f32 %v8583, 0.25
        %v8595 = vadd.f32 %v8585, %v485
        %v8596 = vadd.f32 %v8586, %v486
        %v8597 = vadd.f32 %v8587, %v487
        %v8598 = vadd.f32 %v8588, %v488
        %v8599 = vadd.f32 %v8589, %v489
        %v8600 = vadd.f32 %v8590, %v490
        %v8601 = vadd.f32 %v8591, %v491
        %v8602 = vadd.f32 %v8592, %v492
        %v8603 = vadd.f32 %v8593, %v493
        %v8604 = vadd.f32 %v8594, %v494
        %vm8605 = vcmask 654336
        %v8606 = vsel %vm8605, %v8595, -inf
        %8607 = vmax.xlane.f32.xlu0 %v8606
        %v8608 = vpop.xlane.xlu0 %8607
        %v8609 = vsel %vm8605, %v8596, -inf
        %8610 = vmax.xlane.f32.xlu0 %v8609
        %v8611 = vpop.xlane.xlu0 %8610
        %v8612 = vsel %vm8605, %v8597, -inf
        %8613 = vmax.xlane.f32.xlu0 %v8612
        %v8614 = vpop.xlane.xlu0 %8613
        %v8615 = vsel %vm8605, %v8598, -inf
        %8616 = vmax.xlane.f32.xlu0 %v8615
        %v8617 = vpop.xlane.xlu0 %8616
        %v8618 = vsel %vm8605, %v8599, -inf
        %8619 = vmax.xlane.f32.xlu0 %v8618
        %v8620 = vpop.xlane.xlu0 %8619
        %v8621 = vsel %vm8605, %v8600, -inf
        %8622 = vmax.xlane.f32.xlu0 %v8621
        %v8623 = vpop.xlane.xlu0 %8622
        %v8624 = vsel %vm8605, %v8601, -inf
        %8625 = vmax.xlane.f32.xlu0 %v8624
        %v8626 = vpop.xlane.xlu0 %8625
        %v8627 = vsel %vm8605, %v8602, -inf
        %8628 = vmax.xlane.f32.xlu0 %v8627
        %v8629 = vpop.xlane.xlu0 %8628
        %v8630 = vsel %vm8605, %v8603, -inf
        %8631 = vmax.xlane.f32.xlu0 %v8630
        %v8632 = vpop.xlane.xlu0 %8631
        %v8633 = vsel %vm8605, %v8604, -inf
        %8634 = vmax.xlane.f32.xlu0 %v8633
        %v8635 = vpop.xlane.xlu0 %8634
        %v8636 = vsub.f32 %v8595, %v8608
        %v8637 = vsub.f32 %v8596, %v8611
        %v8638 = vsub.f32 %v8597, %v8614
        %v8639 = vsub.f32 %v8598, %v8617
        %v8640 = vsub.f32 %v8599, %v8620
        %v8641 = vsub.f32 %v8600, %v8623
        %v8642 = vsub.f32 %v8601, %v8626
        %v8643 = vsub.f32 %v8602, %v8629
        %v8644 = vsub.f32 %v8603, %v8632
        %v8645 = vsub.f32 %v8604, %v8635
        %v8646 = vmul.f32 %v8636, 1.442695
        %v8647 = vpow.pop %v8646
        %v8648 = vmul.f32 %v8637, 1.442695
        %v8649 = vpow.pop %v8648
        %v8650 = vmul.f32 %v8638, 1.442695
        %v8651 = vpow.pop %v8650
        %v8652 = vmul.f32 %v8639, 1.442695
        %v8653 = vpow.pop %v8652
        %v8654 = vmul.f32 %v8640, 1.442695
        %v8655 = vpow.pop %v8654
        %v8656 = vmul.f32 %v8641, 1.442695
        %v8657 = vpow.pop %v8656
        %v8658 = vmul.f32 %v8642, 1.442695
        %v8659 = vpow.pop %v8658
        %v8660 = vmul.f32 %v8643, 1.442695
        %v8661 = vpow.pop %v8660
        %v8662 = vmul.f32 %v8644, 1.442695
        %v8663 = vpow.pop %v8662
        %v8664 = vmul.f32 %v8645, 1.442695
        %v8665 = vpow.pop %v8664
        %v8666 = vsel %vm8605, %v8647, 0.0
        %8667 = vadd.xlane.f32.xlu0 %v8666
        %v8668 = vpop.xlane.xlu0 %8667
        %v8669 = vsel %vm8605, %v8649, 0.0
        %8670 = vadd.xlane.f32.xlu0 %v8669
        %v8671 = vpop.xlane.xlu0 %8670
        %v8672 = vsel %vm8605, %v8651, 0.0
        %8673 = vadd.xlane.f32.xlu0 %v8672
        %v8674 = vpop.xlane.xlu0 %8673
        %v8675 = vsel %vm8605, %v8653, 0.0
        %8676 = vadd.xlane.f32.xlu0 %v8675
        %v8677 = vpop.xlane.xlu0 %8676
        %v8678 = vsel %vm8605, %v8655, 0.0
        %8679 = vadd.xlane.f32.xlu0 %v8678
        %v8680 = vpop.xlane.xlu0 %8679
        %v8681 = vsel %vm8605, %v8657, 0.0
        %8682 = vadd.xlane.f32.xlu0 %v8681
        %v8683 = vpop.xlane.xlu0 %8682
        %v8684 = vsel %vm8605, %v8659, 0.0
        %8685 = vadd.xlane.f32.xlu0 %v8684
        %v8686 = vpop.xlane.xlu0 %8685
        %v8687 = vsel %vm8605, %v8661, 0.0
        %8688 = vadd.xlane.f32.xlu0 %v8687
        %v8689 = vpop.xlane.xlu0 %8688
        %v8690 = vsel %vm8605, %v8663, 0.0
        %8691 = vadd.xlane.f32.xlu0 %v8690
        %v8692 = vpop.xlane.xlu0 %8691
        %v8693 = vsel %vm8605, %v8665, 0.0
        %8694 = vadd.xlane.f32.xlu0 %v8693
        %v8695 = vpop.xlane.xlu0 %8694
        %v8696 = vrcp.pop %v8668
        %v8697 = vrcp.pop %v8671
        %v8698 = vrcp.pop %v8674
        %v8699 = vrcp.pop %v8677
        %v8700 = vrcp.pop %v8680
        %v8701 = vrcp.pop %v8683
        %v8702 = vrcp.pop %v8686
        %v8703 = vrcp.pop %v8689
        %v8704 = vrcp.pop %v8692
        %v8705 = vrcp.pop %v8695
        %v8706 = vmul.f32 %v8647, %v8696
        %v8707 = vmul.f32 %v8649, %v8697
        %v8708 = vmul.f32 %v8651, %v8698
        %v8709 = vmul.f32 %v8653, %v8699
        %v8710 = vmul.f32 %v8655, %v8700
        %v8711 = vmul.f32 %v8657, %v8701
        %v8712 = vmul.f32 %v8659, %v8702
        %v8713 = vmul.f32 %v8661, %v8703
        %v8714 = vmul.f32 %v8663, %v8704
        %v8715 = vmul.f32 %v8665, %v8705
        %v8716 = vpack.c.bf16 %v8707, %v8706
        %v8717 = vpack.c.bf16 %v8709, %v8708
        %v8718 = vpack.c.bf16 %v8711, %v8710
        %v8719 = vpack.c.bf16 %v8713, %v8712
        %v8720 = vpack.c.bf16 %v8715, %v8714
        %v8721 = vmul.f32 %v8436, %v8490
        %v8722 = vmul.f32 %v8438, %v8490
        %v8723 = vmul.f32 %v8441, %v8490
        %v8724 = vmul.f32 %v8443, %v8490
        %v8725 = vmul.f32 %v8446, %v8490
        %v8726 = vmul.f32 %v8448, %v8490
        %v8727 = vmul.f32 %v8451, %v8490
        %v8728 = vmul.f32 %v8453, %v8490
        %v8729 = vmul.f32 %v8456, %v8490
        %v8730 = vmul.f32 %v8458, %v8490
        %v8731 = vpack.c.bf16 %v8722, %v8721
        %v8732 = vpack.c.bf16 %v8724, %v8723
        %v8733 = vpack.c.bf16 %v8726, %v8725
        %v8734 = vpack.c.bf16 %v8728, %v8727
        %v8735 = vpack.c.bf16 %v8730, %v8729
        %v8737 = vsel %vm8605, %v8716, 0
        %v8740 = vsel %vm8605, %v8717, 0
        %v8743 = vsel %vm8605, %v8718, 0
        %v8746 = vsel %vm8605, %v8719, 0
        %v8749 = vsel %vm8605, %v8720, 0
        %8751 = vmatpush.bf16.msra.mxu0 0
        %8752 = vmatpush.bf16.msra.mxu0 0
        %8753 = vmatpush.bf16.msra.mxu0 0
        %8754 = vmatpush.bf16.msra.mxu0 %v8735
        %8755 = vmatpush.bf16.msra.mxu0 %v8734
        %8756 = vmatpush.bf16.msra.mxu0 %v8733
        %8757 = vmatpush.bf16.msra.mxu0 %v8732
        %8758 = vmatpush.bf16.msra.mxu0 %v8731
        %8759 = vmatmul.bf16.gmra.mxu0 %v8737
        %v8760 = vpop.f32.mrf.mxu0
        %v8761 = vadd.f32 0.0, %v8760
        %v8762 = vpop.f32.mrf.mxu0
        %v8763 = vadd.f32 0.0, %v8762
        %8764 = vmatmul.bf16.gmra.mxu0 %v8740
        %v8765 = vpop.f32.mrf.mxu0
        %v8766 = vadd.f32 0.0, %v8765
        %v8767 = vpop.f32.mrf.mxu0
        %v8768 = vadd.f32 0.0, %v8767
        %8769 = vmatmul.bf16.gmra.mxu0 %v8743
        %v8770 = vpop.f32.mrf.mxu0
        %v8771 = vadd.f32 0.0, %v8770
        %v8772 = vpop.f32.mrf.mxu0
        %v8773 = vadd.f32 0.0, %v8772
        %8774 = vmatmul.bf16.gmra.mxu0 %v8746
        %v8775 = vpop.f32.mrf.mxu0
        %v8776 = vadd.f32 0.0, %v8775
        %v8777 = vpop.f32.mrf.mxu0
        %v8778 = vadd.f32 0.0, %v8777
        %8779 = vmatmul.bf16.gmra.mxu0 %v8749
        %v8780 = vpop.f32.mrf.mxu0
        %v8781 = vadd.f32 0.0, %v8780
        %v8782 = vpop.f32.mrf.mxu0
        %v8783 = vadd.f32 0.0, %v8782
        %8784 = vdwg.mxu0
        %v8785 = vadd.f32 %v8471, %v8761
        %v8786 = vadd.f32 %v8472, %v8763
        %v8787 = vadd.f32 %v8473, %v8766
        %v8788 = vadd.f32 %v8474, %v8768
        %v8789 = vadd.f32 %v8475, %v8771
        %v8790 = vadd.f32 %v8476, %v8773
        %v8791 = vadd.f32 %v8477, %v8776
        %v8792 = vadd.f32 %v8478, %v8778
        %v8793 = vadd.f32 %v8479, %v8781
        %v8794 = vadd.f32 %v8480, %v8783
      $region87: #{wave_transformer.1} parent=67 // loop_footer
        %s8470 = sadd.s32 1, %s8466
      $region88: #{wave_transformer.1} parent=67 // loop_footer_branch
        %8465 = sbr.rel target = $region84
      $region89: #{wave_transformer.1} parent=67 // loop_exit
        _
      %v8795 = vpack.c.bf16 %v8472, %v8471
      %v8796 = vpack.c.bf16 %v8474, %v8473
      %v8797 = vpack.c.bf16 %v8476, %v8475
      %v8798 = vpack.c.bf16 %v8478, %v8477
      %v8799 = vpack.c.bf16 %v8480, %v8479
      %s8800 = scalar_lea.vmem %s5, 64
      %v8801 = vld [vmem:[%s8800] sm:$0xf]
      %v8802 = vld [vmem:[%s8800 + $0x4] sm:$0xf]
      %v8803 = vld [vmem:[%s8800 + $0x8] sm:$0xf]
      %v8804 = vld [vmem:[%s8800 + $0xc] sm:$0xf]
      %v8805 = vld [vmem:[%s8800 + $0x10] sm:$0xf]
      %v8806 = vld [vmem:[%s8800 + $0x14] sm:$0xf]
      %v8807 = vld [vmem:[%s8800 + $0x18] sm:$0xf]
      %v8808 = vld [vmem:[%s8800 + $0x1c] sm:$0xf]
      %v8809 = vperm.slane %v8315, 0
      %v8818 = vunpack.c.l.b16 %v8801
      %v8819 = vunpack.c.l.b16 %v8802
      %v8820 = vunpack.c.l.b16 %v8803
      %v8821 = vunpack.c.l.b16 %v8804
      %v8822 = vunpack.c.l.b16 %v8805
      %v8823 = vunpack.c.l.b16 %v8806
      %v8824 = vunpack.c.l.b16 %v8807
      %v8825 = vunpack.c.l.b16 %v8808
      %v8826 = vpack.c.b16 %v8819, %v8818
      %v8827 = vpack.c.b16 %v8821, %v8820
      %v8828 = vpack.c.b16 %v8823, %v8822
      %v8829 = vpack.c.b16 %v8825, %v8824
      %v8835 = vsel %vm635, %v8795, 0
      %v8838 = vsel %vm635, %v8796, 0
      %v8841 = vsel %vm635, %v8797, 0
      %v8844 = vsel %vm635, %v8798, 0
      %v8847 = vsel %vm635, %v8799, 0
      %8849 = vmatpush.bf16.msra.mxu0 0
      %8850 = vmatpush.bf16.msra.mxu0 0
      %8851 = vmatpush.bf16.msra.mxu0 0
      %8852 = vmatpush.bf16.msra.mxu0 0
      %8853 = vmatpush.bf16.msra.mxu0 %v8829
      %8854 = vmatpush.bf16.msra.mxu0 %v8828
      %8855 = vmatpush.bf16.msra.mxu0 %v8827
      %8856 = vmatpush.bf16.msra.mxu0 %v8826
      %8857 = vmatmul.bf16.gmra.mxu0 %v8835
      %v8858 = vpop.f32.mrf.mxu0
      %v8859 = vadd.f32 %v8809, %v8858
      %v8860 = vpop.f32.mrf.mxu0
      %v8861 = vadd.f32 %v8809, %v8860
      %8862 = vmatmul.bf16.gmra.mxu0 %v8838
      %v8863 = vpop.f32.mrf.mxu0
      %v8864 = vadd.f32 %v8809, %v8863
      %v8865 = vpop.f32.mrf.mxu0
      %v8866 = vadd.f32 %v8809, %v8865
      %8867 = vmatmul.bf16.gmra.mxu0 %v8841
      %v8868 = vpop.f32.mrf.mxu0
      %v8869 = vadd.f32 %v8809, %v8868
      %v8870 = vpop.f32.mrf.mxu0
      %v8871 = vadd.f32 %v8809, %v8870
      %8872 = vmatmul.bf16.gmra.mxu0 %v8844
      %v8873 = vpop.f32.mrf.mxu0
      %v8874 = vadd.f32 %v8809, %v8873
      %v8875 = vpop.f32.mrf.mxu0
      %v8876 = vadd.f32 %v8809, %v8875
      %8877 = vmatmul.bf16.gmra.mxu0 %v8847
      %v8878 = vpop.f32.mrf.mxu0
      %v8879 = vadd.f32 %v8809, %v8878
      %v8880 = vpop.f32.mrf.mxu0
      %v8881 = vadd.f32 %v8809, %v8880
      %8882 = vdwg.mxu0
      %v8883 = vadd.f32 %v8304, %v8859
      %v8884 = vadd.f32 %v8305, %v8861
      %v8885 = vadd.f32 %v8306, %v8864
      %v8886 = vadd.f32 %v8307, %v8866
      %v8887 = vadd.f32 %v8308, %v8869
      %v8888 = vadd.f32 %v8309, %v8871
      %v8889 = vadd.f32 %v8310, %v8874
      %v8890 = vadd.f32 %v8311, %v8876
      %v8891 = vadd.f32 %v8312, %v8879
      %v8892 = vadd.f32 %v8313, %v8881
      %v8893 = vsel %vm635, %v8883, 0.0
      %8894 = vadd.xlane.f32.xlu0 %v8893
      %v8895 = vpop.xlane.xlu0 %8894
      %v8896 = vsel %vm635, %v8884, 0.0
      %8897 = vadd.xlane.f32.xlu0 %v8896
      %v8898 = vpop.xlane.xlu0 %8897
      %v8899 = vsel %vm635, %v8885, 0.0
      %8900 = vadd.xlane.f32.xlu0 %v8899
      %v8901 = vpop.xlane.xlu0 %8900
      %v8902 = vsel %vm635, %v8886, 0.0
      %8903 = vadd.xlane.f32.xlu0 %v8902
      %v8904 = vpop.xlane.xlu0 %8903
      %v8905 = vsel %vm635, %v8887, 0.0
      %8906 = vadd.xlane.f32.xlu0 %v8905
      %v8907 = vpop.xlane.xlu0 %8906
      %v8908 = vsel %vm635, %v8888, 0.0
      %8909 = vadd.xlane.f32.xlu0 %v8908
      %v8910 = vpop.xlane.xlu0 %8909
      %v8911 = vsel %vm635, %v8889, 0.0
      %8912 = vadd.xlane.f32.xlu0 %v8911
      %v8913 = vpop.xlane.xlu0 %8912
      %v8914 = vsel %vm635, %v8890, 0.0
      %8915 = vadd.xlane.f32.xlu0 %v8914
      %v8916 = vpop.xlane.xlu0 %8915
      %v8917 = vsel %vm635, %v8891, 0.0
      %8918 = vadd.xlane.f32.xlu0 %v8917
      %v8919 = vpop.xlane.xlu0 %8918
      %v8920 = vsel %vm635, %v8892, 0.0
      %8921 = vadd.xlane.f32.xlu0 %v8920
      %v8922 = vpop.xlane.xlu0 %8921
      %v8923 = vmul.f32 %v8895, %v1187
      %v8924 = vmul.f32 %v8898, %v1187
      %v8925 = vmul.f32 %v8901, %v1187
      %v8926 = vmul.f32 %v8904, %v1187
      %v8927 = vmul.f32 %v8907, %v1187
      %v8928 = vmul.f32 %v8910, %v1187
      %v8929 = vmul.f32 %v8913, %v1187
      %v8930 = vmul.f32 %v8916, %v1187
      %v8931 = vmul.f32 %v8919, %v1187
      %v8932 = vmul.f32 %v8922, %v1187
      %v8933 = vsub.f32 %v8883, %v8923
      %v8934 = vsub.f32 %v8884, %v8924
      %v8935 = vsub.f32 %v8885, %v8925
      %v8936 = vsub.f32 %v8886, %v8926
      %v8937 = vsub.f32 %v8887, %v8927
      %v8938 = vsub.f32 %v8888, %v8928
      %v8939 = vsub.f32 %v8889, %v8929
      %v8940 = vsub.f32 %v8890, %v8930
      %v8941 = vsub.f32 %v8891, %v8931
      %v8942 = vsub.f32 %v8892, %v8932
      %v8943 = vmul.f32 %v8933, %v8933
      %v8944 = vmul.f32 %v8934, %v8934
      %v8945 = vmul.f32 %v8935, %v8935
      %v8946 = vmul.f32 %v8936, %v8936
      %v8947 = vmul.f32 %v8937, %v8937
      %v8948 = vmul.f32 %v8938, %v8938
      %v8949 = vmul.f32 %v8939, %v8939
      %v8950 = vmul.f32 %v8940, %v8940
      %v8951 = vmul.f32 %v8941, %v8941
      %v8952 = vmul.f32 %v8942, %v8942
      %v8953 = vsel %vm635, %v8943, 0.0
      %8954 = vadd.xlane.f32.xlu0 %v8953
      %v8955 = vpop.xlane.xlu0 %8954
      %v8956 = vsel %vm635, %v8944, 0.0
      %8957 = vadd.xlane.f32.xlu0 %v8956
      %v8958 = vpop.xlane.xlu0 %8957
      %v8959 = vsel %vm635, %v8945, 0.0
      %8960 = vadd.xlane.f32.xlu0 %v8959
      %v8961 = vpop.xlane.xlu0 %8960
      %v8962 = vsel %vm635, %v8946, 0.0
      %8963 = vadd.xlane.f32.xlu0 %v8962
      %v8964 = vpop.xlane.xlu0 %8963
      %v8965 = vsel %vm635, %v8947, 0.0
      %8966 = vadd.xlane.f32.xlu0 %v8965
      %v8967 = vpop.xlane.xlu0 %8966
      %v8968 = vsel %vm635, %v8948, 0.0
      %8969 = vadd.xlane.f32.xlu0 %v8968
      %v8970 = vpop.xlane.xlu0 %8969
      %v8971 = vsel %vm635, %v8949, 0.0
      %8972 = vadd.xlane.f32.xlu0 %v8971
      %v8973 = vpop.xlane.xlu0 %8972
      %v8974 = vsel %vm635, %v8950, 0.0
      %8975 = vadd.xlane.f32.xlu0 %v8974
      %v8976 = vpop.xlane.xlu0 %8975
      %v8977 = vsel %vm635, %v8951, 0.0
      %8978 = vadd.xlane.f32.xlu0 %v8977
      %v8979 = vpop.xlane.xlu0 %8978
      %v8980 = vsel %vm635, %v8952, 0.0
      %8981 = vadd.xlane.f32.xlu0 %v8980
      %v8982 = vpop.xlane.xlu0 %8981
      %v8983 = vmul.f32 %v8955, %v1187
      %v8984 = vmul.f32 %v8958, %v1187
      %v8985 = vmul.f32 %v8961, %v1187
      %v8986 = vmul.f32 %v8964, %v1187
      %v8987 = vmul.f32 %v8967, %v1187
      %v8988 = vmul.f32 %v8970, %v1187
      %v8989 = vmul.f32 %v8973, %v1187
      %v8990 = vmul.f32 %v8976, %v1187
      %v8991 = vmul.f32 %v8979, %v1187
      %v8992 = vmul.f32 %v8982, %v1187
      %v8993 = vadd.f32 %v8983, 1e-05
      %v8994 = vadd.f32 %v8984, 1e-05
      %v8995 = vadd.f32 %v8985, 1e-05
      %v8996 = vadd.f32 %v8986, 1e-05
      %v8997 = vadd.f32 %v8987, 1e-05
      %v8998 = vadd.f32 %v8988, 1e-05
      %v8999 = vadd.f32 %v8989, 1e-05
      %v9000 = vadd.f32 %v8990, 1e-05
      %v9001 = vadd.f32 %v8991, 1e-05
      %v9002 = vadd.f32 %v8992, 1e-05
      %v9003 = vrsqrt.pop %v8993
      %v9004 = vmul.f32 %v9003, %v8993
      %v9005 = vmul.f32 %v9004, %v9003
      %v9006 = vmul.f32 0.5, %v9005
      %v9007 = vsub.f32 1.5, %v9006
      %v9008 = vmul.f32 %v9003, %v9007
      %vm9009 = vweird.f32 %v8993
      %vm9010 = vweird.f32 %v9003
      %vm9011 = vmor %vm9009, %vm9010
      %v9012 = vsel %vm9011, %v9003, %v9008
      %v9013 = vrsqrt.pop %v8994
      %v9014 = vmul.f32 %v9013, %v8994
      %v9015 = vmul.f32 %v9014, %v9013
      %v9016 = vmul.f32 0.5, %v9015
      %v9017 = vsub.f32 1.5, %v9016
      %v9018 = vmul.f32 %v9013, %v9017
      %vm9019 = vweird.f32 %v8994
      %vm9020 = vweird.f32 %v9013
      %vm9021 = vmor %vm9019, %vm9020
      %v9022 = vsel %vm9021, %v9013, %v9018
      %v9023 = vrsqrt.pop %v8995
      %v9024 = vmul.f32 %v9023, %v8995
      %v9025 = vmul.f32 %v9024, %v9023
      %v9026 = vmul.f32 0.5, %v9025
      %v9027 = vsub.f32 1.5, %v9026
      %v9028 = vmul.f32 %v9023, %v9027
      %vm9029 = vweird.f32 %v8995
      %vm9030 = vweird.f32 %v9023
      %vm9031 = vmor %vm9029, %vm9030
      %v9032 = vsel %vm9031, %v9023, %v9028
      %v9033 = vrsqrt.pop %v8996
      %v9034 = vmul.f32 %v9033, %v8996
      %v9035 = vmul.f32 %v9034, %v9033
      %v9036 = vmul.f32 0.5, %v9035
      %v9037 = vsub.f32 1.5, %v9036
      %v9038 = vmul.f32 %v9033, %v9037
      %vm9039 = vweird.f32 %v8996
      %vm9040 = vweird.f32 %v9033
      %vm9041 = vmor %vm9039, %vm9040
      %v9042 = vsel %vm9041, %v9033, %v9038
      %v9043 = vrsqrt.pop %v8997
      %v9044 = vmul.f32 %v9043, %v8997
      %v9045 = vmul.f32 %v9044, %v9043
      %v9046 = vmul.f32 0.5, %v9045
      %v9047 = vsub.f32 1.5, %v9046
      %v9048 = vmul.f32 %v9043, %v9047
      %vm9049 = vweird.f32 %v8997
      %vm9050 = vweird.f32 %v9043
      %vm9051 = vmor %vm9049, %vm9050
      %v9052 = vsel %vm9051, %v9043, %v9048
      %v9053 = vrsqrt.pop %v8998
      %v9054 = vmul.f32 %v9053, %v8998
      %v9055 = vmul.f32 %v9054, %v9053
      %v9056 = vmul.f32 0.5, %v9055
      %v9057 = vsub.f32 1.5, %v9056
      %v9058 = vmul.f32 %v9053, %v9057
      %vm9059 = vweird.f32 %v8998
      %vm9060 = vweird.f32 %v9053
      %vm9061 = vmor %vm9059, %vm9060
      %v9062 = vsel %vm9061, %v9053, %v9058
      %v9063 = vrsqrt.pop %v8999
      %v9064 = vmul.f32 %v9063, %v8999
      %v9065 = vmul.f32 %v9064, %v9063
      %v9066 = vmul.f32 0.5, %v9065
      %v9067 = vsub.f32 1.5, %v9066
      %v9068 = vmul.f32 %v9063, %v9067
      %vm9069 = vweird.f32 %v8999
      %vm9070 = vweird.f32 %v9063
      %vm9071 = vmor %vm9069, %vm9070
      %v9072 = vsel %vm9071, %v9063, %v9068
      %v9073 = vrsqrt.pop %v9000
      %v9074 = vmul.f32 %v9073, %v9000
      %v9075 = vmul.f32 %v9074, %v9073
      %v9076 = vmul.f32 0.5, %v9075
      %v9077 = vsub.f32 1.5, %v9076
      %v9078 = vmul.f32 %v9073, %v9077
      %vm9079 = vweird.f32 %v9000
      %vm9080 = vweird.f32 %v9073
      %vm9081 = vmor %vm9079, %vm9080
      %v9082 = vsel %vm9081, %v9073, %v9078
      %v9083 = vrsqrt.pop %v9001
      %v9084 = vmul.f32 %v9083, %v9001
      %v9085 = vmul.f32 %v9084, %v9083
      %v9086 = vmul.f32 0.5, %v9085
      %v9087 = vsub.f32 1.5, %v9086
      %v9088 = vmul.f32 %v9083, %v9087
      %vm9089 = vweird.f32 %v9001
      %vm9090 = vweird.f32 %v9083
      %vm9091 = vmor %vm9089, %vm9090
      %v9092 = vsel %vm9091, %v9083, %v9088
      %v9093 = vrsqrt.pop %v9002
      %v9094 = vmul.f32 %v9093, %v9002
      %v9095 = vmul.f32 %v9094, %v9093
      %v9096 = vmul.f32 0.5, %v9095
      %v9097 = vsub.f32 1.5, %v9096
      %v9098 = vmul.f32 %v9093, %v9097
      %vm9099 = vweird.f32 %v9002
      %vm9100 = vweird.f32 %v9093
      %vm9101 = vmor %vm9099, %vm9100
      %v9102 = vsel %vm9101, %v9093, %v9098
      %v9103 = vmul.f32 %v8933, %v9012
      %v9104 = vmul.f32 %v8934, %v9022
      %v9105 = vmul.f32 %v8935, %v9032
      %v9106 = vmul.f32 %v8936, %v9042
      %v9107 = vmul.f32 %v8937, %v9052
      %v9108 = vmul.f32 %v8938, %v9062
      %v9109 = vmul.f32 %v8939, %v9072
      %v9110 = vmul.f32 %v8940, %v9082
      %v9111 = vmul.f32 %v8941, %v9092
      %v9112 = vmul.f32 %v8942, %v9102
      %v9113 = vperm.slane %v8315, 1
      %v9114 = vmul.f32 %v9103, %v9113
      %v9115 = vmul.f32 %v9104, %v9113
      %v9116 = vmul.f32 %v9105, %v9113
      %v9117 = vmul.f32 %v9106, %v9113
      %v9118 = vmul.f32 %v9107, %v9113
      %v9119 = vmul.f32 %v9108, %v9113
      %v9120 = vmul.f32 %v9109, %v9113
      %v9121 = vmul.f32 %v9110, %v9113
      %v9122 = vmul.f32 %v9111, %v9113
      %v9123 = vmul.f32 %v9112, %v9113
      %v9124 = vperm.slane %v8315, 2
      %v9125 = vadd.f32 %v9114, %v9124
      %v9126 = vadd.f32 %v9115, %v9124
      %v9127 = vadd.f32 %v9116, %v9124
      %v9128 = vadd.f32 %v9117, %v9124
      %v9129 = vadd.f32 %v9118, %v9124
      %v9130 = vadd.f32 %v9119, %v9124
      %v9131 = vadd.f32 %v9120, %v9124
      %v9132 = vadd.f32 %v9121, %v9124
      %v9133 = vadd.f32 %v9122, %v9124
      %v9134 = vadd.f32 %v9123, %v9124
      %v9135 = vpack.c.bf16 %v9126, %v9125
      %v9136 = vpack.c.bf16 %v9128, %v9127
      %v9137 = vpack.c.bf16 %v9130, %v9129
      %v9138 = vpack.c.bf16 %v9132, %v9131
      %v9139 = vpack.c.bf16 %v9134, %v9133
      %s9140 = scalar_lea.vmem %s7, 1024
      %v9141 = vld [vmem:[%s9140] sm:$0xff]
      %v9142 = vld [vmem:[%s9140 + $0x8] sm:$0xff]
      %v9143 = vld [vmem:[%s9140 + $0x10] sm:$0xff]
      %v9144 = vld [vmem:[%s9140 + $0x18] sm:$0xff]
      %v9145 = vld [vmem:[%s9140 + $0x20] sm:$0xff]
      %v9146 = vld [vmem:[%s9140 + $0x28] sm:$0xff]
      %v9147 = vld [vmem:[%s9140 + $0x30] sm:$0xff]
      %v9148 = vld [vmem:[%s9140 + $0x38] sm:$0xff]
      %v9149 = vld [vmem:[%s9140 + $0x40] sm:$0xff]
      %v9150 = vld [vmem:[%s9140 + $0x48] sm:$0xff]
      %v9151 = vld [vmem:[%s9140 + $0x50] sm:$0xff]
      %v9152 = vld [vmem:[%s9140 + $0x58] sm:$0xff]
      %v9153 = vld [vmem:[%s9140 + $0x60] sm:$0xff]
      %v9154 = vld [vmem:[%s9140 + $0x68] sm:$0xff]
      %v9155 = vld [vmem:[%s9140 + $0x70] sm:$0xff]
      %v9156 = vld [vmem:[%s9140 + $0x78] sm:$0xff]
      %v9157 = vld [vmem:[%s9140 + $0x80] sm:$0xff]
      %v9158 = vld [vmem:[%s9140 + $0x88] sm:$0xff]
      %v9159 = vld [vmem:[%s9140 + $0x90] sm:$0xff]
      %v9160 = vld [vmem:[%s9140 + $0x98] sm:$0xff]
      %v9161 = vld [vmem:[%s9140 + $0xa0] sm:$0xff]
      %v9162 = vld [vmem:[%s9140 + $0xa8] sm:$0xff]
      %v9163 = vld [vmem:[%s9140 + $0xb0] sm:$0xff]
      %v9164 = vld [vmem:[%s9140 + $0xb8] sm:$0xff]
      %v9165 = vld [vmem:[%s9140 + $0xc0] sm:$0xff]
      %v9166 = vld [vmem:[%s9140 + $0xc8] sm:$0xff]
      %v9167 = vld [vmem:[%s9140 + $0xd0] sm:$0xff]
      %v9168 = vld [vmem:[%s9140 + $0xd8] sm:$0xff]
      %v9169 = vld [vmem:[%s9140 + $0xe0] sm:$0xff]
      %v9170 = vld [vmem:[%s9140 + $0xe8] sm:$0xff]
      %v9171 = vld [vmem:[%s9140 + $0xf0] sm:$0xff]
      %v9172 = vld [vmem:[%s9140 + $0xf8] sm:$0xff]
      %v9173 = vld [vmem:[%s9140 + $0x100] sm:$0xff]
      %v9174 = vld [vmem:[%s9140 + $0x108] sm:$0xff]
      %v9175 = vld [vmem:[%s9140 + $0x110] sm:$0xff]
      %v9176 = vld [vmem:[%s9140 + $0x118] sm:$0xff]
      %v9177 = vld [vmem:[%s9140 + $0x120] sm:$0xff]
      %v9178 = vld [vmem:[%s9140 + $0x128] sm:$0xff]
      %v9179 = vld [vmem:[%s9140 + $0x130] sm:$0xff]
      %v9180 = vld [vmem:[%s9140 + $0x138] sm:$0xff]
      %v9181 = vld [vmem:[%s9140 + $0x140] sm:$0xff]
      %v9182 = vld [vmem:[%s9140 + $0x148] sm:$0xff]
      %v9183 = vld [vmem:[%s9140 + $0x150] sm:$0xff]
      %v9184 = vld [vmem:[%s9140 + $0x158] sm:$0xff]
      %v9185 = vld [vmem:[%s9140 + $0x160] sm:$0xff]
      %v9186 = vld [vmem:[%s9140 + $0x168] sm:$0xff]
      %v9187 = vld [vmem:[%s9140 + $0x170] sm:$0xff]
      %v9188 = vld [vmem:[%s9140 + $0x178] sm:$0xff]
      %v9189 = vld [vmem:[%s9140 + $0x180] sm:$0xff]
      %v9190 = vld [vmem:[%s9140 + $0x188] sm:$0xff]
      %v9191 = vld [vmem:[%s9140 + $0x190] sm:$0xff]
      %v9192 = vld [vmem:[%s9140 + $0x198] sm:$0xff]
      %v9193 = vld [vmem:[%s9140 + $0x1a0] sm:$0xff]
      %v9194 = vld [vmem:[%s9140 + $0x1a8] sm:$0xff]
      %v9195 = vld [vmem:[%s9140 + $0x1b0] sm:$0xff]
      %v9196 = vld [vmem:[%s9140 + $0x1b8] sm:$0xff]
      %v9197 = vld [vmem:[%s9140 + $0x1c0] sm:$0xff]
      %v9198 = vld [vmem:[%s9140 + $0x1c8] sm:$0xff]
      %v9199 = vld [vmem:[%s9140 + $0x1d0] sm:$0xff]
      %v9200 = vld [vmem:[%s9140 + $0x1d8] sm:$0xff]
      %v9201 = vld [vmem:[%s9140 + $0x1e0] sm:$0xff]
      %v9202 = vld [vmem:[%s9140 + $0x1e8] sm:$0xff]
      %v9203 = vld [vmem:[%s9140 + $0x1f0] sm:$0xff]
      %v9204 = vld [vmem:[%s9140 + $0x1f8] sm:$0xff]
      %s9205 = scalar_lea.vmem %s8, 32
      %v9206 = vld [vmem:[%s9205] sm:$0xff]
      %v9207 = vld [vmem:[%s9205 + $0x8] sm:$0xff]
      %v9210 = vperm.slane %v9206, 0
      %v9211 = vperm.slane %v9206, 1
      %v9212 = vperm.slane %v9206, 2
      %v9213 = vperm.slane %v9206, 3
      %v9214 = vperm.slane %v9206, 4
      %v9215 = vperm.slane %v9206, 5
      %v9216 = vperm.slane %v9206, 6
      %v9217 = vperm.slane %v9206, 7
      %v9218 = vperm.slane %v9207, 0
      %v9219 = vperm.slane %v9207, 1
      %v9220 = vperm.slane %v9207, 2
      %v9221 = vperm.slane %v9207, 3
      %v9222 = vperm.slane %v9207, 4
      %v9223 = vperm.slane %v9207, 5
      %v9224 = vperm.slane %v9207, 6
      %v9225 = vperm.slane %v9207, 7
      %v9306 = vunpack.c.l.b16 %v9141
      %v9307 = vunpack.c.h.b16 %v9141
      %v9308 = vunpack.c.l.b16 %v9142
      %v9309 = vunpack.c.h.b16 %v9142
      %v9310 = vunpack.c.l.b16 %v9143
      %v9311 = vunpack.c.h.b16 %v9143
      %v9312 = vunpack.c.l.b16 %v9144
      %v9313 = vunpack.c.h.b16 %v9144
      %v9314 = vunpack.c.l.b16 %v9145
      %v9315 = vunpack.c.h.b16 %v9145
      %v9316 = vunpack.c.l.b16 %v9146
      %v9317 = vunpack.c.h.b16 %v9146
      %v9318 = vunpack.c.l.b16 %v9147
      %v9319 = vunpack.c.h.b16 %v9147
      %v9320 = vunpack.c.l.b16 %v9148
      %v9321 = vunpack.c.h.b16 %v9148
      %v9322 = vunpack.c.l.b16 %v9149
      %v9323 = vunpack.c.h.b16 %v9149
      %v9324 = vunpack.c.l.b16 %v9150
      %v9325 = vunpack.c.h.b16 %v9150
      %v9326 = vunpack.c.l.b16 %v9151
      %v9327 = vunpack.c.h.b16 %v9151
      %v9328 = vunpack.c.l.b16 %v9152
      %v9329 = vunpack.c.h.b16 %v9152
      %v9330 = vunpack.c.l.b16 %v9153
      %v9331 = vunpack.c.h.b16 %v9153
      %v9332 = vunpack.c.l.b16 %v9154
      %v9333 = vunpack.c.h.b16 %v9154
      %v9334 = vunpack.c.l.b16 %v9155
      %v9335 = vunpack.c.h.b16 %v9155
      %v9336 = vunpack.c.l.b16 %v9156
      %v9337 = vunpack.c.h.b16 %v9156
      %v9338 = vunpack.c.l.b16 %v9157
      %v9339 = vunpack.c.h.b16 %v9157
      %v9340 = vunpack.c.l.b16 %v9158
      %v9341 = vunpack.c.h.b16 %v9158
      %v9342 = vunpack.c.l.b16 %v9159
      %v9343 = vunpack.c.h.b16 %v9159
      %v9344 = vunpack.c.l.b16 %v9160
      %v9345 = vunpack.c.h.b16 %v9160
      %v9346 = vunpack.c.l.b16 %v9161
      %v9347 = vunpack.c.h.b16 %v9161
      %v9348 = vunpack.c.l.b16 %v9162
      %v9349 = vunpack.c.h.b16 %v9162
      %v9350 = vunpack.c.l.b16 %v9163
      %v9351 = vunpack.c.h.b16 %v9163
      %v9352 = vunpack.c.l.b16 %v9164
      %v9353 = vunpack.c.h.b16 %v9164
      %v9354 = vunpack.c.l.b16 %v9165
      %v9355 = vunpack.c.h.b16 %v9165
      %v9356 = vunpack.c.l.b16 %v9166
      %v9357 = vunpack.c.h.b16 %v9166
      %v9358 = vunpack.c.l.b16 %v9167
      %v9359 = vunpack.c.h.b16 %v9167
      %v9360 = vunpack.c.l.b16 %v9168
      %v9361 = vunpack.c.h.b16 %v9168
      %v9362 = vunpack.c.l.b16 %v9169
      %v9363 = vunpack.c.h.b16 %v9169
      %v9364 = vunpack.c.l.b16 %v9170
      %v9365 = vunpack.c.h.b16 %v9170
      %v9366 = vunpack.c.l.b16 %v9171
      %v9367 = vunpack.c.h.b16 %v9171
      %v9368 = vunpack.c.l.b16 %v9172
      %v9369 = vunpack.c.h.b16 %v9172
      %v9370 = vunpack.c.l.b16 %v9173
      %v9371 = vunpack.c.h.b16 %v9173
      %v9372 = vunpack.c.l.b16 %v9174
      %v9373 = vunpack.c.h.b16 %v9174
      %v9374 = vunpack.c.l.b16 %v9175
      %v9375 = vunpack.c.h.b16 %v9175
      %v9376 = vunpack.c.l.b16 %v9176
      %v9377 = vunpack.c.h.b16 %v9176
      %v9378 = vunpack.c.l.b16 %v9177
      %v9379 = vunpack.c.h.b16 %v9177
      %v9380 = vunpack.c.l.b16 %v9178
      %v9381 = vunpack.c.h.b16 %v9178
      %v9382 = vunpack.c.l.b16 %v9179
      %v9383 = vunpack.c.h.b16 %v9179
      %v9384 = vunpack.c.l.b16 %v9180
      %v9385 = vunpack.c.h.b16 %v9180
      %v9386 = vunpack.c.l.b16 %v9181
      %v9387 = vunpack.c.h.b16 %v9181
      %v9388 = vunpack.c.l.b16 %v9182
      %v9389 = vunpack.c.h.b16 %v9182
      %v9390 = vunpack.c.l.b16 %v9183
      %v9391 = vunpack.c.h.b16 %v9183
      %v9392 = vunpack.c.l.b16 %v9184
      %v9393 = vunpack.c.h.b16 %v9184
      %v9394 = vunpack.c.l.b16 %v9185
      %v9395 = vunpack.c.h.b16 %v9185
      %v9396 = vunpack.c.l.b16 %v9186
      %v9397 = vunpack.c.h.b16 %v9186
      %v9398 = vunpack.c.l.b16 %v9187
      %v9399 = vunpack.c.h.b16 %v9187
      %v9400 = vunpack.c.l.b16 %v9188
      %v9401 = vunpack.c.h.b16 %v9188
      %v9402 = vunpack.c.l.b16 %v9189
      %v9403 = vunpack.c.h.b16 %v9189
      %v9404 = vunpack.c.l.b16 %v9190
      %v9405 = vunpack.c.h.b16 %v9190
      %v9406 = vunpack.c.l.b16 %v9191
      %v9407 = vunpack.c.h.b16 %v9191
      %v9408 = vunpack.c.l.b16 %v9192
      %v9409 = vunpack.c.h.b16 %v9192
      %v9410 = vunpack.c.l.b16 %v9193
      %v9411 = vunpack.c.h.b16 %v9193
      %v9412 = vunpack.c.l.b16 %v9194
      %v9413 = vunpack.c.h.b16 %v9194
      %v9414 = vunpack.c.l.b16 %v9195
      %v9415 = vunpack.c.h.b16 %v9195
      %v9416 = vunpack.c.l.b16 %v9196
      %v9417 = vunpack.c.h.b16 %v9196
      %v9418 = vunpack.c.l.b16 %v9197
      %v9419 = vunpack.c.h.b16 %v9197
      %v9420 = vunpack.c.l.b16 %v9198
      %v9421 = vunpack.c.h.b16 %v9198
      %v9422 = vunpack.c.l.b16 %v9199
      %v9423 = vunpack.c.h.b16 %v9199
      %v9424 = vunpack.c.l.b16 %v9200
      %v9425 = vunpack.c.h.b16 %v9200
      %v9426 = vunpack.c.l.b16 %v9201
      %v9427 = vunpack.c.h.b16 %v9201
      %v9428 = vunpack.c.l.b16 %v9202
      %v9429 = vunpack.c.h.b16 %v9202
      %v9430 = vunpack.c.l.b16 %v9203
      %v9431 = vunpack.c.h.b16 %v9203
      %v9432 = vunpack.c.l.b16 %v9204
      %v9433 = vunpack.c.h.b16 %v9204
      %v9434 = vpack.c.b16 %v9322, %v9306
      %v9435 = vpack.c.b16 %v9323, %v9307
      %v9436 = vpack.c.b16 %v9324, %v9308
      %v9437 = vpack.c.b16 %v9325, %v9309
      %v9438 = vpack.c.b16 %v9326, %v9310
      %v9439 = vpack.c.b16 %v9327, %v9311
      %v9440 = vpack.c.b16 %v9328, %v9312
      %v9441 = vpack.c.b16 %v9329, %v9313
      %v9442 = vpack.c.b16 %v9330, %v9314
      %v9443 = vpack.c.b16 %v9331, %v9315
      %v9444 = vpack.c.b16 %v9332, %v9316
      %v9445 = vpack.c.b16 %v9333, %v9317
      %v9446 = vpack.c.b16 %v9334, %v9318
      %v9447 = vpack.c.b16 %v9335, %v9319
      %v9448 = vpack.c.b16 %v9336, %v9320
      %v9449 = vpack.c.b16 %v9337, %v9321
      %v9450 = vpack.c.b16 %v9354, %v9338
      %v9451 = vpack.c.b16 %v9355, %v9339
      %v9452 = vpack.c.b16 %v9356, %v9340
      %v9453 = vpack.c.b16 %v9357, %v9341
      %v9454 = vpack.c.b16 %v9358, %v9342
      %v9455 = vpack.c.b16 %v9359, %v9343
      %v9456 = vpack.c.b16 %v9360, %v9344
      %v9457 = vpack.c.b16 %v9361, %v9345
      %v9458 = vpack.c.b16 %v9362, %v9346
      %v9459 = vpack.c.b16 %v9363, %v9347
      %v9460 = vpack.c.b16 %v9364, %v9348
      %v9461 = vpack.c.b16 %v9365, %v9349
      %v9462 = vpack.c.b16 %v9366, %v9350
      %v9463 = vpack.c.b16 %v9367, %v9351
      %v9464 = vpack.c.b16 %v9368, %v9352
      %v9465 = vpack.c.b16 %v9369, %v9353
      %v9466 = vpack.c.b16 %v9386, %v9370
      %v9467 = vpack.c.b16 %v9387, %v9371
      %v9468 = vpack.c.b16 %v9388, %v9372
      %v9469 = vpack.c.b16 %v9389, %v9373
      %v9470 = vpack.c.b16 %v9390, %v9374
      %v9471 = vpack.c.b16 %v9391, %v9375
      %v9472 = vpack.c.b16 %v9392, %v9376
      %v9473 = vpack.c.b16 %v9393, %v9377
      %v9474 = vpack.c.b16 %v9394, %v9378
      %v9475 = vpack.c.b16 %v9395, %v9379
      %v9476 = vpack.c.b16 %v9396, %v9380
      %v9477 = vpack.c.b16 %v9397, %v9381
      %v9478 = vpack.c.b16 %v9398, %v9382
      %v9479 = vpack.c.b16 %v9399, %v9383
      %v9480 = vpack.c.b16 %v9400, %v9384
      %v9481 = vpack.c.b16 %v9401, %v9385
      %v9482 = vpack.c.b16 %v9418, %v9402
      %v9483 = vpack.c.b16 %v9419, %v9403
      %v9484 = vpack.c.b16 %v9420, %v9404
      %v9485 = vpack.c.b16 %v9421, %v9405
      %v9486 = vpack.c.b16 %v9422, %v9406
      %v9487 = vpack.c.b16 %v9423, %v9407
      %v9488 = vpack.c.b16 %v9424, %v9408
      %v9489 = vpack.c.b16 %v9425, %v9409
      %v9490 = vpack.c.b16 %v9426, %v9410
      %v9491 = vpack.c.b16 %v9427, %v9411
      %v9492 = vpack.c.b16 %v9428, %v9412
      %v9493 = vpack.c.b16 %v9429, %v9413
      %v9494 = vpack.c.b16 %v9430, %v9414
      %v9495 = vpack.c.b16 %v9431, %v9415
      %v9496 = vpack.c.b16 %v9432, %v9416
      %v9497 = vpack.c.b16 %v9433, %v9417
      %v9563 = vsel %vm635, %v9135, 0
      %v9566 = vsel %vm635, %v9136, 0
      %v9569 = vsel %vm635, %v9137, 0
      %v9572 = vsel %vm635, %v9138, 0
      %v9575 = vsel %vm635, %v9139, 0
      %9577 = vmatpush.bf16.msra.mxu0 0
      %9578 = vmatpush.bf16.msra.mxu0 0
      %9579 = vmatpush.bf16.msra.mxu0 0
      %9580 = vmatpush.bf16.msra.mxu0 0
      %9581 = vmatpush.bf16.msra.mxu0 %v9482
      %9582 = vmatpush.bf16.msra.mxu0 %v9466
      %9583 = vmatpush.bf16.msra.mxu0 %v9450
      %9584 = vmatpush.bf16.msra.mxu0 %v9434
      %9585 = vmatmul.bf16.gmra.mxu0 %v9563
      %v9586 = vpop.f32.mrf.mxu0
      %v9587 = vadd.f32 %v9210, %v9586
      %v9588 = vpop.f32.mrf.mxu0
      %v9589 = vadd.f32 %v9210, %v9588
      %9590 = vmatmul.bf16.gmra.mxu0 %v9566
      %v9591 = vpop.f32.mrf.mxu0
      %v9592 = vadd.f32 %v9210, %v9591
      %v9593 = vpop.f32.mrf.mxu0
      %v9594 = vadd.f32 %v9210, %v9593
      %9595 = vmatmul.bf16.gmra.mxu0 %v9569
      %v9596 = vpop.f32.mrf.mxu0
      %v9597 = vadd.f32 %v9210, %v9596
      %v9598 = vpop.f32.mrf.mxu0
      %v9599 = vadd.f32 %v9210, %v9598
      %9600 = vmatmul.bf16.gmra.mxu0 %v9572
      %v9601 = vpop.f32.mrf.mxu0
      %v9602 = vadd.f32 %v9210, %v9601
      %v9603 = vpop.f32.mrf.mxu0
      %v9604 = vadd.f32 %v9210, %v9603
      %9605 = vmatmul.bf16.gmra.mxu0 %v9575
      %v9606 = vpop.f32.mrf.mxu0
      %v9607 = vadd.f32 %v9210, %v9606
      %v9608 = vpop.f32.mrf.mxu0
      %v9609 = vadd.f32 %v9210, %v9608
      %9610 = vdwg.mxu0
      %9611 = vmatpush.bf16.msra.mxu0 0
      %9612 = vmatpush.bf16.msra.mxu0 0
      %9613 = vmatpush.bf16.msra.mxu0 0
      %9614 = vmatpush.bf16.msra.mxu0 0
      %9615 = vmatpush.bf16.msra.mxu0 %v9483
      %9616 = vmatpush.bf16.msra.mxu0 %v9467
      %9617 = vmatpush.bf16.msra.mxu0 %v9451
      %9618 = vmatpush.bf16.msra.mxu0 %v9435
      %9619 = vmatmul.bf16.gmra.mxu0 %v9563
      %v9620 = vpop.f32.mrf.mxu0
      %v9621 = vadd.f32 %v9211, %v9620
      %v9622 = vpop.f32.mrf.mxu0
      %v9623 = vadd.f32 %v9211, %v9622
      %9624 = vmatmul.bf16.gmra.mxu0 %v9566
      %v9625 = vpop.f32.mrf.mxu0
      %v9626 = vadd.f32 %v9211, %v9625
      %v9627 = vpop.f32.mrf.mxu0
      %v9628 = vadd.f32 %v9211, %v9627
      %9629 = vmatmul.bf16.gmra.mxu0 %v9569
      %v9630 = vpop.f32.mrf.mxu0
      %v9631 = vadd.f32 %v9211, %v9630
      %v9632 = vpop.f32.mrf.mxu0
      %v9633 = vadd.f32 %v9211, %v9632
      %9634 = vmatmul.bf16.gmra.mxu0 %v9572
      %v9635 = vpop.f32.mrf.mxu0
      %v9636 = vadd.f32 %v9211, %v9635
      %v9637 = vpop.f32.mrf.mxu0
      %v9638 = vadd.f32 %v9211, %v9637
      %9639 = vmatmul.bf16.gmra.mxu0 %v9575
      %v9640 = vpop.f32.mrf.mxu0
      %v9641 = vadd.f32 %v9211, %v9640
      %v9642 = vpop.f32.mrf.mxu0
      %v9643 = vadd.f32 %v9211, %v9642
      %9644 = vdwg.mxu0
      %9645 = vmatpush.bf16.msra.mxu0 0
      %9646 = vmatpush.bf16.msra.mxu0 0
      %9647 = vmatpush.bf16.msra.mxu0 0
      %9648 = vmatpush.bf16.msra.mxu0 0
      %9649 = vmatpush.bf16.msra.mxu0 %v9484
      %9650 = vmatpush.bf16.msra.mxu0 %v9468
      %9651 = vmatpush.bf16.msra.mxu0 %v9452
      %9652 = vmatpush.bf16.msra.mxu0 %v9436
      %9653 = vmatmul.bf16.gmra.mxu0 %v9563
      %v9654 = vpop.f32.mrf.mxu0
      %v9655 = vadd.f32 %v9212, %v9654
      %v9656 = vpop.f32.mrf.mxu0
      %v9657 = vadd.f32 %v9212, %v9656
      %9658 = vmatmul.bf16.gmra.mxu0 %v9566
      %v9659 = vpop.f32.mrf.mxu0
      %v9660 = vadd.f32 %v9212, %v9659
      %v9661 = vpop.f32.mrf.mxu0
      %v9662 = vadd.f32 %v9212, %v9661
      %9663 = vmatmul.bf16.gmra.mxu0 %v9569
      %v9664 = vpop.f32.mrf.mxu0
      %v9665 = vadd.f32 %v9212, %v9664
      %v9666 = vpop.f32.mrf.mxu0
      %v9667 = vadd.f32 %v9212, %v9666
      %9668 = vmatmul.bf16.gmra.mxu0 %v9572
      %v9669 = vpop.f32.mrf.mxu0
      %v9670 = vadd.f32 %v9212, %v9669
      %v9671 = vpop.f32.mrf.mxu0
      %v9672 = vadd.f32 %v9212, %v9671
      %9673 = vmatmul.bf16.gmra.mxu0 %v9575
      %v9674 = vpop.f32.mrf.mxu0
      %v9675 = vadd.f32 %v9212, %v9674
      %v9676 = vpop.f32.mrf.mxu0
      %v9677 = vadd.f32 %v9212, %v9676
      %9678 = vdwg.mxu0
      %9679 = vmatpush.bf16.msra.mxu0 0
      %9680 = vmatpush.bf16.msra.mxu0 0
      %9681 = vmatpush.bf16.msra.mxu0 0
      %9682 = vmatpush.bf16.msra.mxu0 0
      %9683 = vmatpush.bf16.msra.mxu0 %v9485
      %9684 = vmatpush.bf16.msra.mxu0 %v9469
      %9685 = vmatpush.bf16.msra.mxu0 %v9453
      %9686 = vmatpush.bf16.msra.mxu0 %v9437
      %9687 = vmatmul.bf16.gmra.mxu0 %v9563
      %v9688 = vpop.f32.mrf.mxu0
      %v9689 = vadd.f32 %v9213, %v9688
      %v9690 = vpop.f32.mrf.mxu0
      %v9691 = vadd.f32 %v9213, %v9690
      %9692 = vmatmul.bf16.gmra.mxu0 %v9566
      %v9693 = vpop.f32.mrf.mxu0
      %v9694 = vadd.f32 %v9213, %v9693
      %v9695 = vpop.f32.mrf.mxu0
      %v9696 = vadd.f32 %v9213, %v9695
      %9697 = vmatmul.bf16.gmra.mxu0 %v9569
      %v9698 = vpop.f32.mrf.mxu0
      %v9699 = vadd.f32 %v9213, %v9698
      %v9700 = vpop.f32.mrf.mxu0
      %v9701 = vadd.f32 %v9213, %v9700
      %9702 = vmatmul.bf16.gmra.mxu0 %v9572
      %v9703 = vpop.f32.mrf.mxu0
      %v9704 = vadd.f32 %v9213, %v9703
      %v9705 = vpop.f32.mrf.mxu0
      %v9706 = vadd.f32 %v9213, %v9705
      %9707 = vmatmul.bf16.gmra.mxu0 %v9575
      %v9708 = vpop.f32.mrf.mxu0
      %v9709 = vadd.f32 %v9213, %v9708
      %v9710 = vpop.f32.mrf.mxu0
      %v9711 = vadd.f32 %v9213, %v9710
      %9712 = vdwg.mxu0
      %9713 = vmatpush.bf16.msra.mxu0 0
      %9714 = vmatpush.bf16.msra.mxu0 0
      %9715 = vmatpush.bf16.msra.mxu0 0
      %9716 = vmatpush.bf16.msra.mxu0 0
      %9717 = vmatpush.bf16.msra.mxu0 %v9486
      %9718 = vmatpush.bf16.msra.mxu0 %v9470
      %9719 = vmatpush.bf16.msra.mxu0 %v9454
      %9720 = vmatpush.bf16.msra.mxu0 %v9438
      %9721 = vmatmul.bf16.gmra.mxu0 %v9563
      %v9722 = vpop.f32.mrf.mxu0
      %v9723 = vadd.f32 %v9214, %v9722
      %v9724 = vpop.f32.mrf.mxu0
      %v9725 = vadd.f32 %v9214, %v9724
      %9726 = vmatmul.bf16.gmra.mxu0 %v9566
      %v9727 = vpop.f32.mrf.mxu0
      %v9728 = vadd.f32 %v9214, %v9727
      %v9729 = vpop.f32.mrf.mxu0
      %v9730 = vadd.f32 %v9214, %v9729
      %9731 = vmatmul.bf16.gmra.mxu0 %v9569
      %v9732 = vpop.f32.mrf.mxu0
      %v9733 = vadd.f32 %v9214, %v9732
      %v9734 = vpop.f32.mrf.mxu0
      %v9735 = vadd.f32 %v9214, %v9734
      %9736 = vmatmul.bf16.gmra.mxu0 %v9572
      %v9737 = vpop.f32.mrf.mxu0
      %v9738 = vadd.f32 %v9214, %v9737
      %v9739 = vpop.f32.mrf.mxu0
      %v9740 = vadd.f32 %v9214, %v9739
      %9741 = vmatmul.bf16.gmra.mxu0 %v9575
      %v9742 = vpop.f32.mrf.mxu0
      %v9743 = vadd.f32 %v9214, %v9742
      %v9744 = vpop.f32.mrf.mxu0
      %v9745 = vadd.f32 %v9214, %v9744
      %9746 = vdwg.mxu0
      %9747 = vmatpush.bf16.msra.mxu0 0
      %9748 = vmatpush.bf16.msra.mxu0 0
      %9749 = vmatpush.bf16.msra.mxu0 0
      %9750 = vmatpush.bf16.msra.mxu0 0
      %9751 = vmatpush.bf16.msra.mxu0 %v9487
      %9752 = vmatpush.bf16.msra.mxu0 %v9471
      %9753 = vmatpush.bf16.msra.mxu0 %v9455
      %9754 = vmatpush.bf16.msra.mxu0 %v9439
      %9755 = vmatmul.bf16.gmra.mxu0 %v9563
      %v9756 = vpop.f32.mrf.mxu0
      %v9757 = vadd.f32 %v9215, %v9756
      %v9758 = vpop.f32.mrf.mxu0
      %v9759 = vadd.f32 %v9215, %v9758
      %9760 = vmatmul.bf16.gmra.mxu0 %v9566
      %v9761 = vpop.f32.mrf.mxu0
      %v9762 = vadd.f32 %v9215, %v9761
      %v9763 = vpop.f32.mrf.mxu0
      %v9764 = vadd.f32 %v9215, %v9763
      %9765 = vmatmul.bf16.gmra.mxu0 %v9569
      %v9766 = vpop.f32.mrf.mxu0
      %v9767 = vadd.f32 %v9215, %v9766
      %v9768 = vpop.f32.mrf.mxu0
      %v9769 = vadd.f32 %v9215, %v9768
      %9770 = vmatmul.bf16.gmra.mxu0 %v9572
      %v9771 = vpop.f32.mrf.mxu0
      %v9772 = vadd.f32 %v9215, %v9771
      %v9773 = vpop.f32.mrf.mxu0
      %v9774 = vadd.f32 %v9215, %v9773
      %9775 = vmatmul.bf16.gmra.mxu0 %v9575
      %v9776 = vpop.f32.mrf.mxu0
      %v9777 = vadd.f32 %v9215, %v9776
      %v9778 = vpop.f32.mrf.mxu0
      %v9779 = vadd.f32 %v9215, %v9778
      %9780 = vdwg.mxu0
      %9781 = vmatpush.bf16.msra.mxu0 0
      %9782 = vmatpush.bf16.msra.mxu0 0
      %9783 = vmatpush.bf16.msra.mxu0 0
      %9784 = vmatpush.bf16.msra.mxu0 0
      %9785 = vmatpush.bf16.msra.mxu0 %v9488
      %9786 = vmatpush.bf16.msra.mxu0 %v9472
      %9787 = vmatpush.bf16.msra.mxu0 %v9456
      %9788 = vmatpush.bf16.msra.mxu0 %v9440
      %9789 = vmatmul.bf16.gmra.mxu0 %v9563
      %v9790 = vpop.f32.mrf.mxu0
      %v9791 = vadd.f32 %v9216, %v9790
      %v9792 = vpop.f32.mrf.mxu0
      %v9793 = vadd.f32 %v9216, %v9792
      %9794 = vmatmul.bf16.gmra.mxu0 %v9566
      %v9795 = vpop.f32.mrf.mxu0
      %v9796 = vadd.f32 %v9216, %v9795
      %v9797 = vpop.f32.mrf.mxu0
      %v9798 = vadd.f32 %v9216, %v9797
      %9799 = vmatmul.bf16.gmra.mxu0 %v9569
      %v9800 = vpop.f32.mrf.mxu0
      %v9801 = vadd.f32 %v9216, %v9800
      %v9802 = vpop.f32.mrf.mxu0
      %v9803 = vadd.f32 %v9216, %v9802
      %9804 = vmatmul.bf16.gmra.mxu0 %v9572
      %v9805 = vpop.f32.mrf.mxu0
      %v9806 = vadd.f32 %v9216, %v9805
      %v9807 = vpop.f32.mrf.mxu0
      %v9808 = vadd.f32 %v9216, %v9807
      %9809 = vmatmul.bf16.gmra.mxu0 %v9575
      %v9810 = vpop.f32.mrf.mxu0
      %v9811 = vadd.f32 %v9216, %v9810
      %v9812 = vpop.f32.mrf.mxu0
      %v9813 = vadd.f32 %v9216, %v9812
      %9814 = vdwg.mxu0
      %9815 = vmatpush.bf16.msra.mxu0 0
      %9816 = vmatpush.bf16.msra.mxu0 0
      %9817 = vmatpush.bf16.msra.mxu0 0
      %9818 = vmatpush.bf16.msra.mxu0 0
      %9819 = vmatpush.bf16.msra.mxu0 %v9489
      %9820 = vmatpush.bf16.msra.mxu0 %v9473
      %9821 = vmatpush.bf16.msra.mxu0 %v9457
      %9822 = vmatpush.bf16.msra.mxu0 %v9441
      %9823 = vmatmul.bf16.gmra.mxu0 %v9563
      %v9824 = vpop.f32.mrf.mxu0
      %v9825 = vadd.f32 %v9217, %v9824
      %v9826 = vpop.f32.mrf.mxu0
      %v9827 = vadd.f32 %v9217, %v9826
      %9828 = vmatmul.bf16.gmra.mxu0 %v9566
      %v9829 = vpop.f32.mrf.mxu0
      %v9830 = vadd.f32 %v9217, %v9829
      %v9831 = vpop.f32.mrf.mxu0
      %v9832 = vadd.f32 %v9217, %v9831
      %9833 = vmatmul.bf16.gmra.mxu0 %v9569
      %v9834 = vpop.f32.mrf.mxu0
      %v9835 = vadd.f32 %v9217, %v9834
      %v9836 = vpop.f32.mrf.mxu0
      %v9837 = vadd.f32 %v9217, %v9836
      %9838 = vmatmul.bf16.gmra.mxu0 %v9572
      %v9839 = vpop.f32.mrf.mxu0
      %v9840 = vadd.f32 %v9217, %v9839
      %v9841 = vpop.f32.mrf.mxu0
      %v9842 = vadd.f32 %v9217, %v9841
      %9843 = vmatmul.bf16.gmra.mxu0 %v9575
      %v9844 = vpop.f32.mrf.mxu0
      %v9845 = vadd.f32 %v9217, %v9844
      %v9846 = vpop.f32.mrf.mxu0
      %v9847 = vadd.f32 %v9217, %v9846
      %9848 = vdwg.mxu0
      %9849 = vmatpush.bf16.msra.mxu0 0
      %9850 = vmatpush.bf16.msra.mxu0 0
      %9851 = vmatpush.bf16.msra.mxu0 0
      %9852 = vmatpush.bf16.msra.mxu0 0
      %9853 = vmatpush.bf16.msra.mxu0 %v9490
      %9854 = vmatpush.bf16.msra.mxu0 %v9474
      %9855 = vmatpush.bf16.msra.mxu0 %v9458
      %9856 = vmatpush.bf16.msra.mxu0 %v9442
      %9857 = vmatmul.bf16.gmra.mxu0 %v9563
      %v9858 = vpop.f32.mrf.mxu0
      %v9859 = vadd.f32 %v9218, %v9858
      %v9860 = vpop.f32.mrf.mxu0
      %v9861 = vadd.f32 %v9218, %v9860
      %9862 = vmatmul.bf16.gmra.mxu0 %v9566
      %v9863 = vpop.f32.mrf.mxu0
      %v9864 = vadd.f32 %v9218, %v9863
      %v9865 = vpop.f32.mrf.mxu0
      %v9866 = vadd.f32 %v9218, %v9865
      %9867 = vmatmul.bf16.gmra.mxu0 %v9569
      %v9868 = vpop.f32.mrf.mxu0
      %v9869 = vadd.f32 %v9218, %v9868
      %v9870 = vpop.f32.mrf.mxu0
      %v9871 = vadd.f32 %v9218, %v9870
      %9872 = vmatmul.bf16.gmra.mxu0 %v9572
      %v9873 = vpop.f32.mrf.mxu0
      %v9874 = vadd.f32 %v9218, %v9873
      %v9875 = vpop.f32.mrf.mxu0
      %v9876 = vadd.f32 %v9218, %v9875
      %9877 = vmatmul.bf16.gmra.mxu0 %v9575
      %v9878 = vpop.f32.mrf.mxu0
      %v9879 = vadd.f32 %v9218, %v9878
      %v9880 = vpop.f32.mrf.mxu0
      %v9881 = vadd.f32 %v9218, %v9880
      %9882 = vdwg.mxu0
      %9883 = vmatpush.bf16.msra.mxu0 0
      %9884 = vmatpush.bf16.msra.mxu0 0
      %9885 = vmatpush.bf16.msra.mxu0 0
      %9886 = vmatpush.bf16.msra.mxu0 0
      %9887 = vmatpush.bf16.msra.mxu0 %v9491
      %9888 = vmatpush.bf16.msra.mxu0 %v9475
      %9889 = vmatpush.bf16.msra.mxu0 %v9459
      %9890 = vmatpush.bf16.msra.mxu0 %v9443
      %9891 = vmatmul.bf16.gmra.mxu0 %v9563
      %v9892 = vpop.f32.mrf.mxu0
      %v9893 = vadd.f32 %v9219, %v9892
      %v9894 = vpop.f32.mrf.mxu0
      %v9895 = vadd.f32 %v9219, %v9894
      %9896 = vmatmul.bf16.gmra.mxu0 %v9566
      %v9897 = vpop.f32.mrf.mxu0
      %v9898 = vadd.f32 %v9219, %v9897
      %v9899 = vpop.f32.mrf.mxu0
      %v9900 = vadd.f32 %v9219, %v9899
      %9901 = vmatmul.bf16.gmra.mxu0 %v9569
      %v9902 = vpop.f32.mrf.mxu0
      %v9903 = vadd.f32 %v9219, %v9902
      %v9904 = vpop.f32.mrf.mxu0
      %v9905 = vadd.f32 %v9219, %v9904
      %9906 = vmatmul.bf16.gmra.mxu0 %v9572
      %v9907 = vpop.f32.mrf.mxu0
      %v9908 = vadd.f32 %v9219, %v9907
      %v9909 = vpop.f32.mrf.mxu0
      %v9910 = vadd.f32 %v9219, %v9909
      %9911 = vmatmul.bf16.gmra.mxu0 %v9575
      %v9912 = vpop.f32.mrf.mxu0
      %v9913 = vadd.f32 %v9219, %v9912
      %v9914 = vpop.f32.mrf.mxu0
      %v9915 = vadd.f32 %v9219, %v9914
      %9916 = vdwg.mxu0
      %9917 = vmatpush.bf16.msra.mxu0 0
      %9918 = vmatpush.bf16.msra.mxu0 0
      %9919 = vmatpush.bf16.msra.mxu0 0
      %9920 = vmatpush.bf16.msra.mxu0 0
      %9921 = vmatpush.bf16.msra.mxu0 %v9492
      %9922 = vmatpush.bf16.msra.mxu0 %v9476
      %9923 = vmatpush.bf16.msra.mxu0 %v9460
      %9924 = vmatpush.bf16.msra.mxu0 %v9444
      %9925 = vmatmul.bf16.gmra.mxu0 %v9563
      %v9926 = vpop.f32.mrf.mxu0
      %v9927 = vadd.f32 %v9220, %v9926
      %v9928 = vpop.f32.mrf.mxu0
      %v9929 = vadd.f32 %v9220, %v9928
      %9930 = vmatmul.bf16.gmra.mxu0 %v9566
      %v9931 = vpop.f32.mrf.mxu0
      %v9932 = vadd.f32 %v9220, %v9931
      %v9933 = vpop.f32.mrf.mxu0
      %v9934 = vadd.f32 %v9220, %v9933
      %9935 = vmatmul.bf16.gmra.mxu0 %v9569
      %v9936 = vpop.f32.mrf.mxu0
      %v9937 = vadd.f32 %v9220, %v9936
      %v9938 = vpop.f32.mrf.mxu0
      %v9939 = vadd.f32 %v9220, %v9938
      %9940 = vmatmul.bf16.gmra.mxu0 %v9572
      %v9941 = vpop.f32.mrf.mxu0
      %v9942 = vadd.f32 %v9220, %v9941
      %v9943 = vpop.f32.mrf.mxu0
      %v9944 = vadd.f32 %v9220, %v9943
      %9945 = vmatmul.bf16.gmra.mxu0 %v9575
      %v9946 = vpop.f32.mrf.mxu0
      %v9947 = vadd.f32 %v9220, %v9946
      %v9948 = vpop.f32.mrf.mxu0
      %v9949 = vadd.f32 %v9220, %v9948
      %9950 = vdwg.mxu0
      %9951 = vmatpush.bf16.msra.mxu0 0
      %9952 = vmatpush.bf16.msra.mxu0 0
      %9953 = vmatpush.bf16.msra.mxu0 0
      %9954 = vmatpush.bf16.msra.mxu0 0
      %9955 = vmatpush.bf16.msra.mxu0 %v9493
      %9956 = vmatpush.bf16.msra.mxu0 %v9477
      %9957 = vmatpush.bf16.msra.mxu0 %v9461
      %9958 = vmatpush.bf16.msra.mxu0 %v9445
      %9959 = vmatmul.bf16.gmra.mxu0 %v9563
      %v9960 = vpop.f32.mrf.mxu0
      %v9961 = vadd.f32 %v9221, %v9960
      %v9962 = vpop.f32.mrf.mxu0
      %v9963 = vadd.f32 %v9221, %v9962
      %9964 = vmatmul.bf16.gmra.mxu0 %v9566
      %v9965 = vpop.f32.mrf.mxu0
      %v9966 = vadd.f32 %v9221, %v9965
      %v9967 = vpop.f32.mrf.mxu0
      %v9968 = vadd.f32 %v9221, %v9967
      %9969 = vmatmul.bf16.gmra.mxu0 %v9569
      %v9970 = vpop.f32.mrf.mxu0
      %v9971 = vadd.f32 %v9221, %v9970
      %v9972 = vpop.f32.mrf.mxu0
      %v9973 = vadd.f32 %v9221, %v9972
      %9974 = vmatmul.bf16.gmra.mxu0 %v9572
      %v9975 = vpop.f32.mrf.mxu0
      %v9976 = vadd.f32 %v9221, %v9975
      %v9977 = vpop.f32.mrf.mxu0
      %v9978 = vadd.f32 %v9221, %v9977
      %9979 = vmatmul.bf16.gmra.mxu0 %v9575
      %v9980 = vpop.f32.mrf.mxu0
      %v9981 = vadd.f32 %v9221, %v9980
      %v9982 = vpop.f32.mrf.mxu0
      %v9983 = vadd.f32 %v9221, %v9982
      %9984 = vdwg.mxu0
      %9985 = vmatpush.bf16.msra.mxu0 0
      %9986 = vmatpush.bf16.msra.mxu0 0
      %9987 = vmatpush.bf16.msra.mxu0 0
      %9988 = vmatpush.bf16.msra.mxu0 0
      %9989 = vmatpush.bf16.msra.mxu0 %v9494
      %9990 = vmatpush.bf16.msra.mxu0 %v9478
      %9991 = vmatpush.bf16.msra.mxu0 %v9462
      %9992 = vmatpush.bf16.msra.mxu0 %v9446
      %9993 = vmatmul.bf16.gmra.mxu0 %v9563
      %v9994 = vpop.f32.mrf.mxu0
      %v9995 = vadd.f32 %v9222, %v9994
      %v9996 = vpop.f32.mrf.mxu0
      %v9997 = vadd.f32 %v9222, %v9996
      %9998 = vmatmul.bf16.gmra.mxu0 %v9566
      %v9999 = vpop.f32.mrf.mxu0
      %v10000 = vadd.f32 %v9222, %v9999
      %v10001 = vpop.f32.mrf.mxu0
      %v10002 = vadd.f32 %v9222, %v10001
      %10003 = vmatmul.bf16.gmra.mxu0 %v9569
      %v10004 = vpop.f32.mrf.mxu0
      %v10005 = vadd.f32 %v9222, %v10004
      %v10006 = vpop.f32.mrf.mxu0
      %v10007 = vadd.f32 %v9222, %v10006
      %10008 = vmatmul.bf16.gmra.mxu0 %v9572
      %v10009 = vpop.f32.mrf.mxu0
      %v10010 = vadd.f32 %v9222, %v10009
      %v10011 = vpop.f32.mrf.mxu0
      %v10012 = vadd.f32 %v9222, %v10011
      %10013 = vmatmul.bf16.gmra.mxu0 %v9575
      %v10014 = vpop.f32.mrf.mxu0
      %v10015 = vadd.f32 %v9222, %v10014
      %v10016 = vpop.f32.mrf.mxu0
      %v10017 = vadd.f32 %v9222, %v10016
      %10018 = vdwg.mxu0
      %10019 = vmatpush.bf16.msra.mxu0 0
      %10020 = vmatpush.bf16.msra.mxu0 0
      %10021 = vmatpush.bf16.msra.mxu0 0
      %10022 = vmatpush.bf16.msra.mxu0 0
      %10023 = vmatpush.bf16.msra.mxu0 %v9495
      %10024 = vmatpush.bf16.msra.mxu0 %v9479
      %10025 = vmatpush.bf16.msra.mxu0 %v9463
      %10026 = vmatpush.bf16.msra.mxu0 %v9447
      %10027 = vmatmul.bf16.gmra.mxu0 %v9563
      %v10028 = vpop.f32.mrf.mxu0
      %v10029 = vadd.f32 %v9223, %v10028
      %v10030 = vpop.f32.mrf.mxu0
      %v10031 = vadd.f32 %v9223, %v10030
      %10032 = vmatmul.bf16.gmra.mxu0 %v9566
      %v10033 = vpop.f32.mrf.mxu0
      %v10034 = vadd.f32 %v9223, %v10033
      %v10035 = vpop.f32.mrf.mxu0
      %v10036 = vadd.f32 %v9223, %v10035
      %10037 = vmatmul.bf16.gmra.mxu0 %v9569
      %v10038 = vpop.f32.mrf.mxu0
      %v10039 = vadd.f32 %v9223, %v10038
      %v10040 = vpop.f32.mrf.mxu0
      %v10041 = vadd.f32 %v9223, %v10040
      %10042 = vmatmul.bf16.gmra.mxu0 %v9572
      %v10043 = vpop.f32.mrf.mxu0
      %v10044 = vadd.f32 %v9223, %v10043
      %v10045 = vpop.f32.mrf.mxu0
      %v10046 = vadd.f32 %v9223, %v10045
      %10047 = vmatmul.bf16.gmra.mxu0 %v9575
      %v10048 = vpop.f32.mrf.mxu0
      %v10049 = vadd.f32 %v9223, %v10048
      %v10050 = vpop.f32.mrf.mxu0
      %v10051 = vadd.f32 %v9223, %v10050
      %10052 = vdwg.mxu0
      %10053 = vmatpush.bf16.msra.mxu0 0
      %10054 = vmatpush.bf16.msra.mxu0 0
      %10055 = vmatpush.bf16.msra.mxu0 0
      %10056 = vmatpush.bf16.msra.mxu0 0
      %10057 = vmatpush.bf16.msra.mxu0 %v9496
      %10058 = vmatpush.bf16.msra.mxu0 %v9480
      %10059 = vmatpush.bf16.msra.mxu0 %v9464
      %10060 = vmatpush.bf16.msra.mxu0 %v9448
      %10061 = vmatmul.bf16.gmra.mxu0 %v9563
      %v10062 = vpop.f32.mrf.mxu0
      %v10063 = vadd.f32 %v9224, %v10062
      %v10064 = vpop.f32.mrf.mxu0
      %v10065 = vadd.f32 %v9224, %v10064
      %10066 = vmatmul.bf16.gmra.mxu0 %v9566
      %v10067 = vpop.f32.mrf.mxu0
      %v10068 = vadd.f32 %v9224, %v10067
      %v10069 = vpop.f32.mrf.mxu0
      %v10070 = vadd.f32 %v9224, %v10069
      %10071 = vmatmul.bf16.gmra.mxu0 %v9569
      %v10072 = vpop.f32.mrf.mxu0
      %v10073 = vadd.f32 %v9224, %v10072
      %v10074 = vpop.f32.mrf.mxu0
      %v10075 = vadd.f32 %v9224, %v10074
      %10076 = vmatmul.bf16.gmra.mxu0 %v9572
      %v10077 = vpop.f32.mrf.mxu0
      %v10078 = vadd.f32 %v9224, %v10077
      %v10079 = vpop.f32.mrf.mxu0
      %v10080 = vadd.f32 %v9224, %v10079
      %10081 = vmatmul.bf16.gmra.mxu0 %v9575
      %v10082 = vpop.f32.mrf.mxu0
      %v10083 = vadd.f32 %v9224, %v10082
      %v10084 = vpop.f32.mrf.mxu0
      %v10085 = vadd.f32 %v9224, %v10084
      %10086 = vdwg.mxu0
      %10087 = vmatpush.bf16.msra.mxu0 0
      %10088 = vmatpush.bf16.msra.mxu0 0
      %10089 = vmatpush.bf16.msra.mxu0 0
      %10090 = vmatpush.bf16.msra.mxu0 0
      %10091 = vmatpush.bf16.msra.mxu0 %v9497
      %10092 = vmatpush.bf16.msra.mxu0 %v9481
      %10093 = vmatpush.bf16.msra.mxu0 %v9465
      %10094 = vmatpush.bf16.msra.mxu0 %v9449
      %10095 = vmatmul.bf16.gmra.mxu0 %v9563
      %v10096 = vpop.f32.mrf.mxu0
      %v10097 = vadd.f32 %v9225, %v10096
      %v10098 = vpop.f32.mrf.mxu0
      %v10099 = vadd.f32 %v9225, %v10098
      %10100 = vmatmul.bf16.gmra.mxu0 %v9566
      %v10101 = vpop.f32.mrf.mxu0
      %v10102 = vadd.f32 %v9225, %v10101
      %v10103 = vpop.f32.mrf.mxu0
      %v10104 = vadd.f32 %v9225, %v10103
      %10105 = vmatmul.bf16.gmra.mxu0 %v9569
      %v10106 = vpop.f32.mrf.mxu0
      %v10107 = vadd.f32 %v9225, %v10106
      %v10108 = vpop.f32.mrf.mxu0
      %v10109 = vadd.f32 %v9225, %v10108
      %10110 = vmatmul.bf16.gmra.mxu0 %v9572
      %v10111 = vpop.f32.mrf.mxu0
      %v10112 = vadd.f32 %v9225, %v10111
      %v10113 = vpop.f32.mrf.mxu0
      %v10114 = vadd.f32 %v9225, %v10113
      %10115 = vmatmul.bf16.gmra.mxu0 %v9575
      %v10116 = vpop.f32.mrf.mxu0
      %v10117 = vadd.f32 %v9225, %v10116
      %v10118 = vpop.f32.mrf.mxu0
      %v10119 = vadd.f32 %v9225, %v10118
      %10120 = vdwg.mxu0
      %v10121 = vmax.f32 %v9587, 0.0
      %v10122 = vmax.f32 %v9621, 0.0
      %v10123 = vmax.f32 %v9655, 0.0
      %v10124 = vmax.f32 %v9689, 0.0
      %v10125 = vmax.f32 %v9723, 0.0
      %v10126 = vmax.f32 %v9757, 0.0
      %v10127 = vmax.f32 %v9791, 0.0
      %v10128 = vmax.f32 %v9825, 0.0
      %v10129 = vmax.f32 %v9859, 0.0
      %v10130 = vmax.f32 %v9893, 0.0
      %v10131 = vmax.f32 %v9927, 0.0
      %v10132 = vmax.f32 %v9961, 0.0
      %v10133 = vmax.f32 %v9995, 0.0
      %v10134 = vmax.f32 %v10029, 0.0
      %v10135 = vmax.f32 %v10063, 0.0
      %v10136 = vmax.f32 %v10097, 0.0
      %v10137 = vmax.f32 %v9589, 0.0
      %v10138 = vmax.f32 %v9623, 0.0
      %v10139 = vmax.f32 %v9657, 0.0
      %v10140 = vmax.f32 %v9691, 0.0
      %v10141 = vmax.f32 %v9725, 0.0
      %v10142 = vmax.f32 %v9759, 0.0
      %v10143 = vmax.f32 %v9793, 0.0
      %v10144 = vmax.f32 %v9827, 0.0
      %v10145 = vmax.f32 %v9861, 0.0
      %v10146 = vmax.f32 %v9895, 0.0
      %v10147 = vmax.f32 %v9929, 0.0
      %v10148 = vmax.f32 %v9963, 0.0
      %v10149 = vmax.f32 %v9997, 0.0
      %v10150 = vmax.f32 %v10031, 0.0
      %v10151 = vmax.f32 %v10065, 0.0
      %v10152 = vmax.f32 %v10099, 0.0
      %v10153 = vmax.f32 %v9592, 0.0
      %v10154 = vmax.f32 %v9626, 0.0
      %v10155 = vmax.f32 %v9660, 0.0
      %v10156 = vmax.f32 %v9694, 0.0
      %v10157 = vmax.f32 %v9728, 0.0
      %v10158 = vmax.f32 %v9762, 0.0
      %v10159 = vmax.f32 %v9796, 0.0
      %v10160 = vmax.f32 %v9830, 0.0
      %v10161 = vmax.f32 %v9864, 0.0
      %v10162 = vmax.f32 %v9898, 0.0
      %v10163 = vmax.f32 %v9932, 0.0
      %v10164 = vmax.f32 %v9966, 0.0
      %v10165 = vmax.f32 %v10000, 0.0
      %v10166 = vmax.f32 %v10034, 0.0
      %v10167 = vmax.f32 %v10068, 0.0
      %v10168 = vmax.f32 %v10102, 0.0
      %v10169 = vmax.f32 %v9594, 0.0
      %v10170 = vmax.f32 %v9628, 0.0
      %v10171 = vmax.f32 %v9662, 0.0
      %v10172 = vmax.f32 %v9696, 0.0
      %v10173 = vmax.f32 %v9730, 0.0
      %v10174 = vmax.f32 %v9764, 0.0
      %v10175 = vmax.f32 %v9798, 0.0
      %v10176 = vmax.f32 %v9832, 0.0
      %v10177 = vmax.f32 %v9866, 0.0
      %v10178 = vmax.f32 %v9900, 0.0
      %v10179 = vmax.f32 %v9934, 0.0
      %v10180 = vmax.f32 %v9968, 0.0
      %v10181 = vmax.f32 %v10002, 0.0
      %v10182 = vmax.f32 %v10036, 0.0
      %v10183 = vmax.f32 %v10070, 0.0
      %v10184 = vmax.f32 %v10104, 0.0
      %v10185 = vmax.f32 %v9597, 0.0
      %v10186 = vmax.f32 %v9631, 0.0
      %v10187 = vmax.f32 %v9665, 0.0
      %v10188 = vmax.f32 %v9699, 0.0
      %v10189 = vmax.f32 %v9733, 0.0
      %v10190 = vmax.f32 %v9767, 0.0
      %v10191 = vmax.f32 %v9801, 0.0
      %v10192 = vmax.f32 %v9835, 0.0
      %v10193 = vmax.f32 %v9869, 0.0
      %v10194 = vmax.f32 %v9903, 0.0
      %v10195 = vmax.f32 %v9937, 0.0
      %v10196 = vmax.f32 %v9971, 0.0
      %v10197 = vmax.f32 %v10005, 0.0
      %v10198 = vmax.f32 %v10039, 0.0
      %v10199 = vmax.f32 %v10073, 0.0
      %v10200 = vmax.f32 %v10107, 0.0
      %v10201 = vmax.f32 %v9599, 0.0
      %v10202 = vmax.f32 %v9633, 0.0
      %v10203 = vmax.f32 %v9667, 0.0
      %v10204 = vmax.f32 %v9701, 0.0
      %v10205 = vmax.f32 %v9735, 0.0
      %v10206 = vmax.f32 %v9769, 0.0
      %v10207 = vmax.f32 %v9803, 0.0
      %v10208 = vmax.f32 %v9837, 0.0
      %v10209 = vmax.f32 %v9871, 0.0
      %v10210 = vmax.f32 %v9905, 0.0
      %v10211 = vmax.f32 %v9939, 0.0
      %v10212 = vmax.f32 %v9973, 0.0
      %v10213 = vmax.f32 %v10007, 0.0
      %v10214 = vmax.f32 %v10041, 0.0
      %v10215 = vmax.f32 %v10075, 0.0
      %v10216 = vmax.f32 %v10109, 0.0
      %v10217 = vmax.f32 %v9602, 0.0
      %v10218 = vmax.f32 %v9636, 0.0
      %v10219 = vmax.f32 %v9670, 0.0
      %v10220 = vmax.f32 %v9704, 0.0
      %v10221 = vmax.f32 %v9738, 0.0
      %v10222 = vmax.f32 %v9772, 0.0
      %v10223 = vmax.f32 %v9806, 0.0
      %v10224 = vmax.f32 %v9840, 0.0
      %v10225 = vmax.f32 %v9874, 0.0
      %v10226 = vmax.f32 %v9908, 0.0
      %v10227 = vmax.f32 %v9942, 0.0
      %v10228 = vmax.f32 %v9976, 0.0
      %v10229 = vmax.f32 %v10010, 0.0
      %v10230 = vmax.f32 %v10044, 0.0
      %v10231 = vmax.f32 %v10078, 0.0
      %v10232 = vmax.f32 %v10112, 0.0
      %v10233 = vmax.f32 %v9604, 0.0
      %v10234 = vmax.f32 %v9638, 0.0
      %v10235 = vmax.f32 %v9672, 0.0
      %v10236 = vmax.f32 %v9706, 0.0
      %v10237 = vmax.f32 %v9740, 0.0
      %v10238 = vmax.f32 %v9774, 0.0
      %v10239 = vmax.f32 %v9808, 0.0
      %v10240 = vmax.f32 %v9842, 0.0
      %v10241 = vmax.f32 %v9876, 0.0
      %v10242 = vmax.f32 %v9910, 0.0
      %v10243 = vmax.f32 %v9944, 0.0
      %v10244 = vmax.f32 %v9978, 0.0
      %v10245 = vmax.f32 %v10012, 0.0
      %v10246 = vmax.f32 %v10046, 0.0
      %v10247 = vmax.f32 %v10080, 0.0
      %v10248 = vmax.f32 %v10114, 0.0
      %v10249 = vmax.f32 %v9607, 0.0
      %v10250 = vmax.f32 %v9641, 0.0
      %v10251 = vmax.f32 %v9675, 0.0
      %v10252 = vmax.f32 %v9709, 0.0
      %v10253 = vmax.f32 %v9743, 0.0
      %v10254 = vmax.f32 %v9777, 0.0
      %v10255 = vmax.f32 %v9811, 0.0
      %v10256 = vmax.f32 %v9845, 0.0
      %v10257 = vmax.f32 %v9879, 0.0
      %v10258 = vmax.f32 %v9913, 0.0
      %v10259 = vmax.f32 %v9947, 0.0
      %v10260 = vmax.f32 %v9981, 0.0
      %v10261 = vmax.f32 %v10015, 0.0
      %v10262 = vmax.f32 %v10049, 0.0
      %v10263 = vmax.f32 %v10083, 0.0
      %v10264 = vmax.f32 %v10117, 0.0
      %v10265 = vmax.f32 %v9609, 0.0
      %v10266 = vmax.f32 %v9643, 0.0
      %v10267 = vmax.f32 %v9677, 0.0
      %v10268 = vmax.f32 %v9711, 0.0
      %v10269 = vmax.f32 %v9745, 0.0
      %v10270 = vmax.f32 %v9779, 0.0
      %v10271 = vmax.f32 %v9813, 0.0
      %v10272 = vmax.f32 %v9847, 0.0
      %v10273 = vmax.f32 %v9881, 0.0
      %v10274 = vmax.f32 %v9915, 0.0
      %v10275 = vmax.f32 %v9949, 0.0
      %v10276 = vmax.f32 %v9983, 0.0
      %v10277 = vmax.f32 %v10017, 0.0
      %v10278 = vmax.f32 %v10051, 0.0
      %v10279 = vmax.f32 %v10085, 0.0
      %v10280 = vmax.f32 %v10119, 0.0
      %v10281 = vpack.c.bf16 %v10137, %v10121
      %v10282 = vpack.c.bf16 %v10138, %v10122
      %v10283 = vpack.c.bf16 %v10139, %v10123
      %v10284 = vpack.c.bf16 %v10140, %v10124
      %v10285 = vpack.c.bf16 %v10141, %v10125
      %v10286 = vpack.c.bf16 %v10142, %v10126
      %v10287 = vpack.c.bf16 %v10143, %v10127
      %v10288 = vpack.c.bf16 %v10144, %v10128
      %v10289 = vpack.c.bf16 %v10145, %v10129
      %v10290 = vpack.c.bf16 %v10146, %v10130
      %v10291 = vpack.c.bf16 %v10147, %v10131
      %v10292 = vpack.c.bf16 %v10148, %v10132
      %v10293 = vpack.c.bf16 %v10149, %v10133
      %v10294 = vpack.c.bf16 %v10150, %v10134
      %v10295 = vpack.c.bf16 %v10151, %v10135
      %v10296 = vpack.c.bf16 %v10152, %v10136
      %v10297 = vpack.c.bf16 %v10169, %v10153
      %v10298 = vpack.c.bf16 %v10170, %v10154
      %v10299 = vpack.c.bf16 %v10171, %v10155
      %v10300 = vpack.c.bf16 %v10172, %v10156
      %v10301 = vpack.c.bf16 %v10173, %v10157
      %v10302 = vpack.c.bf16 %v10174, %v10158
      %v10303 = vpack.c.bf16 %v10175, %v10159
      %v10304 = vpack.c.bf16 %v10176, %v10160
      %v10305 = vpack.c.bf16 %v10177, %v10161
      %v10306 = vpack.c.bf16 %v10178, %v10162
      %v10307 = vpack.c.bf16 %v10179, %v10163
      %v10308 = vpack.c.bf16 %v10180, %v10164
      %v10309 = vpack.c.bf16 %v10181, %v10165
      %v10310 = vpack.c.bf16 %v10182, %v10166
      %v10311 = vpack.c.bf16 %v10183, %v10167
      %v10312 = vpack.c.bf16 %v10184, %v10168
      %v10313 = vpack.c.bf16 %v10201, %v10185
      %v10314 = vpack.c.bf16 %v10202, %v10186
      %v10315 = vpack.c.bf16 %v10203, %v10187
      %v10316 = vpack.c.bf16 %v10204, %v10188
      %v10317 = vpack.c.bf16 %v10205, %v10189
      %v10318 = vpack.c.bf16 %v10206, %v10190
      %v10319 = vpack.c.bf16 %v10207, %v10191
      %v10320 = vpack.c.bf16 %v10208, %v10192
      %v10321 = vpack.c.bf16 %v10209, %v10193
      %v10322 = vpack.c.bf16 %v10210, %v10194
      %v10323 = vpack.c.bf16 %v10211, %v10195
      %v10324 = vpack.c.bf16 %v10212, %v10196
      %v10325 = vpack.c.bf16 %v10213, %v10197
      %v10326 = vpack.c.bf16 %v10214, %v10198
      %v10327 = vpack.c.bf16 %v10215, %v10199
      %v10328 = vpack.c.bf16 %v10216, %v10200
      %v10329 = vpack.c.bf16 %v10233, %v10217
      %v10330 = vpack.c.bf16 %v10234, %v10218
      %v10331 = vpack.c.bf16 %v10235, %v10219
      %v10332 = vpack.c.bf16 %v10236, %v10220
      %v10333 = vpack.c.bf16 %v10237, %v10221
      %v10334 = vpack.c.bf16 %v10238, %v10222
      %v10335 = vpack.c.bf16 %v10239, %v10223
      %v10336 = vpack.c.bf16 %v10240, %v10224
      %v10337 = vpack.c.bf16 %v10241, %v10225
      %v10338 = vpack.c.bf16 %v10242, %v10226
      %v10339 = vpack.c.bf16 %v10243, %v10227
      %v10340 = vpack.c.bf16 %v10244, %v10228
      %v10341 = vpack.c.bf16 %v10245, %v10229
      %v10342 = vpack.c.bf16 %v10246, %v10230
      %v10343 = vpack.c.bf16 %v10247, %v10231
      %v10344 = vpack.c.bf16 %v10248, %v10232
      %v10345 = vpack.c.bf16 %v10265, %v10249
      %v10346 = vpack.c.bf16 %v10266, %v10250
      %v10347 = vpack.c.bf16 %v10267, %v10251
      %v10348 = vpack.c.bf16 %v10268, %v10252
      %v10349 = vpack.c.bf16 %v10269, %v10253
      %v10350 = vpack.c.bf16 %v10270, %v10254
      %v10351 = vpack.c.bf16 %v10271, %v10255
      %v10352 = vpack.c.bf16 %v10272, %v10256
      %v10353 = vpack.c.bf16 %v10273, %v10257
      %v10354 = vpack.c.bf16 %v10274, %v10258
      %v10355 = vpack.c.bf16 %v10275, %v10259
      %v10356 = vpack.c.bf16 %v10276, %v10260
      %v10357 = vpack.c.bf16 %v10277, %v10261
      %v10358 = vpack.c.bf16 %v10278, %v10262
      %v10359 = vpack.c.bf16 %v10279, %v10263
      %v10360 = vpack.c.bf16 %v10280, %v10264
      %s10361 = scalar_lea.vmem %s9, 2048
      %v10362 = vld [vmem:[%s10361] sm:$0xf]
      %v10363 = vld [vmem:[%s10361 + $0x4] sm:$0xf]
      %v10364 = vld [vmem:[%s10361 + $0x8] sm:$0xf]
      %v10365 = vld [vmem:[%s10361 + $0xc] sm:$0xf]
      %v10366 = vld [vmem:[%s10361 + $0x10] sm:$0xf]
      %v10367 = vld [vmem:[%s10361 + $0x14] sm:$0xf]
      %v10368 = vld [vmem:[%s10361 + $0x18] sm:$0xf]
      %v10369 = vld [vmem:[%s10361 + $0x1c] sm:$0xf]
      %v10370 = vld [vmem:[%s10361 + $0x20] sm:$0xf]
      %v10371 = vld [vmem:[%s10361 + $0x24] sm:$0xf]
      %v10372 = vld [vmem:[%s10361 + $0x28] sm:$0xf]
      %v10373 = vld [vmem:[%s10361 + $0x2c] sm:$0xf]
      %v10374 = vld [vmem:[%s10361 + $0x30] sm:$0xf]
      %v10375 = vld [vmem:[%s10361 + $0x34] sm:$0xf]
      %v10376 = vld [vmem:[%s10361 + $0x38] sm:$0xf]
      %v10377 = vld [vmem:[%s10361 + $0x3c] sm:$0xf]
      %v10378 = vld [vmem:[%s10361 + $0x40] sm:$0xf]
      %v10379 = vld [vmem:[%s10361 + $0x44] sm:$0xf]
      %v10380 = vld [vmem:[%s10361 + $0x48] sm:$0xf]
      %v10381 = vld [vmem:[%s10361 + $0x4c] sm:$0xf]
      %v10382 = vld [vmem:[%s10361 + $0x50] sm:$0xf]
      %v10383 = vld [vmem:[%s10361 + $0x54] sm:$0xf]
      %v10384 = vld [vmem:[%s10361 + $0x58] sm:$0xf]
      %v10385 = vld [vmem:[%s10361 + $0x5c] sm:$0xf]
      %v10386 = vld [vmem:[%s10361 + $0x60] sm:$0xf]
      %v10387 = vld [vmem:[%s10361 + $0x64] sm:$0xf]
      %v10388 = vld [vmem:[%s10361 + $0x68] sm:$0xf]
      %v10389 = vld [vmem:[%s10361 + $0x6c] sm:$0xf]
      %v10390 = vld [vmem:[%s10361 + $0x70] sm:$0xf]
      %v10391 = vld [vmem:[%s10361 + $0x74] sm:$0xf]
      %v10392 = vld [vmem:[%s10361 + $0x78] sm:$0xf]
      %v10393 = vld [vmem:[%s10361 + $0x7c] sm:$0xf]
      %v10394 = vld [vmem:[%s10361 + $0x80] sm:$0xf]
      %v10395 = vld [vmem:[%s10361 + $0x84] sm:$0xf]
      %v10396 = vld [vmem:[%s10361 + $0x88] sm:$0xf]
      %v10397 = vld [vmem:[%s10361 + $0x8c] sm:$0xf]
      %v10398 = vld [vmem:[%s10361 + $0x90] sm:$0xf]
      %v10399 = vld [vmem:[%s10361 + $0x94] sm:$0xf]
      %v10400 = vld [vmem:[%s10361 + $0x98] sm:$0xf]
      %v10401 = vld [vmem:[%s10361 + $0x9c] sm:$0xf]
      %v10402 = vld [vmem:[%s10361 + $0xa0] sm:$0xf]
      %v10403 = vld [vmem:[%s10361 + $0xa4] sm:$0xf]
      %v10404 = vld [vmem:[%s10361 + $0xa8] sm:$0xf]
      %v10405 = vld [vmem:[%s10361 + $0xac] sm:$0xf]
      %v10406 = vld [vmem:[%s10361 + $0xb0] sm:$0xf]
      %v10407 = vld [vmem:[%s10361 + $0xb4] sm:$0xf]
      %v10408 = vld [vmem:[%s10361 + $0xb8] sm:$0xf]
      %v10409 = vld [vmem:[%s10361 + $0xbc] sm:$0xf]
      %v10410 = vld [vmem:[%s10361 + $0xc0] sm:$0xf]
      %v10411 = vld [vmem:[%s10361 + $0xc4] sm:$0xf]
      %v10412 = vld [vmem:[%s10361 + $0xc8] sm:$0xf]
      %v10413 = vld [vmem:[%s10361 + $0xcc] sm:$0xf]
      %v10414 = vld [vmem:[%s10361 + $0xd0] sm:$0xf]
      %v10415 = vld [vmem:[%s10361 + $0xd4] sm:$0xf]
      %v10416 = vld [vmem:[%s10361 + $0xd8] sm:$0xf]
      %v10417 = vld [vmem:[%s10361 + $0xdc] sm:$0xf]
      %v10418 = vld [vmem:[%s10361 + $0xe0] sm:$0xf]
      %v10419 = vld [vmem:[%s10361 + $0xe4] sm:$0xf]
      %v10420 = vld [vmem:[%s10361 + $0xe8] sm:$0xf]
      %v10421 = vld [vmem:[%s10361 + $0xec] sm:$0xf]
      %v10422 = vld [vmem:[%s10361 + $0xf0] sm:$0xf]
      %v10423 = vld [vmem:[%s10361 + $0xf4] sm:$0xf]
      %v10424 = vld [vmem:[%s10361 + $0xf8] sm:$0xf]
      %v10425 = vld [vmem:[%s10361 + $0xfc] sm:$0xf]
      %v10426 = vld [vmem:[%s10361 + $0x100] sm:$0xf]
      %v10427 = vld [vmem:[%s10361 + $0x104] sm:$0xf]
      %v10428 = vld [vmem:[%s10361 + $0x108] sm:$0xf]
      %v10429 = vld [vmem:[%s10361 + $0x10c] sm:$0xf]
      %v10430 = vld [vmem:[%s10361 + $0x110] sm:$0xf]
      %v10431 = vld [vmem:[%s10361 + $0x114] sm:$0xf]
      %v10432 = vld [vmem:[%s10361 + $0x118] sm:$0xf]
      %v10433 = vld [vmem:[%s10361 + $0x11c] sm:$0xf]
      %v10434 = vld [vmem:[%s10361 + $0x120] sm:$0xf]
      %v10435 = vld [vmem:[%s10361 + $0x124] sm:$0xf]
      %v10436 = vld [vmem:[%s10361 + $0x128] sm:$0xf]
      %v10437 = vld [vmem:[%s10361 + $0x12c] sm:$0xf]
      %v10438 = vld [vmem:[%s10361 + $0x130] sm:$0xf]
      %v10439 = vld [vmem:[%s10361 + $0x134] sm:$0xf]
      %v10440 = vld [vmem:[%s10361 + $0x138] sm:$0xf]
      %v10441 = vld [vmem:[%s10361 + $0x13c] sm:$0xf]
      %v10442 = vld [vmem:[%s10361 + $0x140] sm:$0xf]
      %v10443 = vld [vmem:[%s10361 + $0x144] sm:$0xf]
      %v10444 = vld [vmem:[%s10361 + $0x148] sm:$0xf]
      %v10445 = vld [vmem:[%s10361 + $0x14c] sm:$0xf]
      %v10446 = vld [vmem:[%s10361 + $0x150] sm:$0xf]
      %v10447 = vld [vmem:[%s10361 + $0x154] sm:$0xf]
      %v10448 = vld [vmem:[%s10361 + $0x158] sm:$0xf]
      %v10449 = vld [vmem:[%s10361 + $0x15c] sm:$0xf]
      %v10450 = vld [vmem:[%s10361 + $0x160] sm:$0xf]
      %v10451 = vld [vmem:[%s10361 + $0x164] sm:$0xf]
      %v10452 = vld [vmem:[%s10361 + $0x168] sm:$0xf]
      %v10453 = vld [vmem:[%s10361 + $0x16c] sm:$0xf]
      %v10454 = vld [vmem:[%s10361 + $0x170] sm:$0xf]
      %v10455 = vld [vmem:[%s10361 + $0x174] sm:$0xf]
      %v10456 = vld [vmem:[%s10361 + $0x178] sm:$0xf]
      %v10457 = vld [vmem:[%s10361 + $0x17c] sm:$0xf]
      %v10458 = vld [vmem:[%s10361 + $0x180] sm:$0xf]
      %v10459 = vld [vmem:[%s10361 + $0x184] sm:$0xf]
      %v10460 = vld [vmem:[%s10361 + $0x188] sm:$0xf]
      %v10461 = vld [vmem:[%s10361 + $0x18c] sm:$0xf]
      %v10462 = vld [vmem:[%s10361 + $0x190] sm:$0xf]
      %v10463 = vld [vmem:[%s10361 + $0x194] sm:$0xf]
      %v10464 = vld [vmem:[%s10361 + $0x198] sm:$0xf]
      %v10465 = vld [vmem:[%s10361 + $0x19c] sm:$0xf]
      %v10466 = vld [vmem:[%s10361 + $0x1a0] sm:$0xf]
      %v10467 = vld [vmem:[%s10361 + $0x1a4] sm:$0xf]
      %v10468 = vld [vmem:[%s10361 + $0x1a8] sm:$0xf]
      %v10469 = vld [vmem:[%s10361 + $0x1ac] sm:$0xf]
      %v10470 = vld [vmem:[%s10361 + $0x1b0] sm:$0xf]
      %v10471 = vld [vmem:[%s10361 + $0x1b4] sm:$0xf]
      %v10472 = vld [vmem:[%s10361 + $0x1b8] sm:$0xf]
      %v10473 = vld [vmem:[%s10361 + $0x1bc] sm:$0xf]
      %v10474 = vld [vmem:[%s10361 + $0x1c0] sm:$0xf]
      %v10475 = vld [vmem:[%s10361 + $0x1c4] sm:$0xf]
      %v10476 = vld [vmem:[%s10361 + $0x1c8] sm:$0xf]
      %v10477 = vld [vmem:[%s10361 + $0x1cc] sm:$0xf]
      %v10478 = vld [vmem:[%s10361 + $0x1d0] sm:$0xf]
      %v10479 = vld [vmem:[%s10361 + $0x1d4] sm:$0xf]
      %v10480 = vld [vmem:[%s10361 + $0x1d8] sm:$0xf]
      %v10481 = vld [vmem:[%s10361 + $0x1dc] sm:$0xf]
      %v10482 = vld [vmem:[%s10361 + $0x1e0] sm:$0xf]
      %v10483 = vld [vmem:[%s10361 + $0x1e4] sm:$0xf]
      %v10484 = vld [vmem:[%s10361 + $0x1e8] sm:$0xf]
      %v10485 = vld [vmem:[%s10361 + $0x1ec] sm:$0xf]
      %v10486 = vld [vmem:[%s10361 + $0x1f0] sm:$0xf]
      %v10487 = vld [vmem:[%s10361 + $0x1f4] sm:$0xf]
      %v10488 = vld [vmem:[%s10361 + $0x1f8] sm:$0xf]
      %v10489 = vld [vmem:[%s10361 + $0x1fc] sm:$0xf]
      %v10490 = vld [vmem:[%s10361 + $0x200] sm:$0xf]
      %v10491 = vld [vmem:[%s10361 + $0x204] sm:$0xf]
      %v10492 = vld [vmem:[%s10361 + $0x208] sm:$0xf]
      %v10493 = vld [vmem:[%s10361 + $0x20c] sm:$0xf]
      %v10494 = vld [vmem:[%s10361 + $0x210] sm:$0xf]
      %v10495 = vld [vmem:[%s10361 + $0x214] sm:$0xf]
      %v10496 = vld [vmem:[%s10361 + $0x218] sm:$0xf]
      %v10497 = vld [vmem:[%s10361 + $0x21c] sm:$0xf]
      %v10498 = vld [vmem:[%s10361 + $0x220] sm:$0xf]
      %v10499 = vld [vmem:[%s10361 + $0x224] sm:$0xf]
      %v10500 = vld [vmem:[%s10361 + $0x228] sm:$0xf]
      %v10501 = vld [vmem:[%s10361 + $0x22c] sm:$0xf]
      %v10502 = vld [vmem:[%s10361 + $0x230] sm:$0xf]
      %v10503 = vld [vmem:[%s10361 + $0x234] sm:$0xf]
      %v10504 = vld [vmem:[%s10361 + $0x238] sm:$0xf]
      %v10505 = vld [vmem:[%s10361 + $0x23c] sm:$0xf]
      %v10506 = vld [vmem:[%s10361 + $0x240] sm:$0xf]
      %v10507 = vld [vmem:[%s10361 + $0x244] sm:$0xf]
      %v10508 = vld [vmem:[%s10361 + $0x248] sm:$0xf]
      %v10509 = vld [vmem:[%s10361 + $0x24c] sm:$0xf]
      %v10510 = vld [vmem:[%s10361 + $0x250] sm:$0xf]
      %v10511 = vld [vmem:[%s10361 + $0x254] sm:$0xf]
      %v10512 = vld [vmem:[%s10361 + $0x258] sm:$0xf]
      %v10513 = vld [vmem:[%s10361 + $0x25c] sm:$0xf]
      %v10514 = vld [vmem:[%s10361 + $0x260] sm:$0xf]
      %v10515 = vld [vmem:[%s10361 + $0x264] sm:$0xf]
      %v10516 = vld [vmem:[%s10361 + $0x268] sm:$0xf]
      %v10517 = vld [vmem:[%s10361 + $0x26c] sm:$0xf]
      %v10518 = vld [vmem:[%s10361 + $0x270] sm:$0xf]
      %v10519 = vld [vmem:[%s10361 + $0x274] sm:$0xf]
      %v10520 = vld [vmem:[%s10361 + $0x278] sm:$0xf]
      %v10521 = vld [vmem:[%s10361 + $0x27c] sm:$0xf]
      %v10522 = vld [vmem:[%s10361 + $0x280] sm:$0xf]
      %v10523 = vld [vmem:[%s10361 + $0x284] sm:$0xf]
      %v10524 = vld [vmem:[%s10361 + $0x288] sm:$0xf]
      %v10525 = vld [vmem:[%s10361 + $0x28c] sm:$0xf]
      %v10526 = vld [vmem:[%s10361 + $0x290] sm:$0xf]
      %v10527 = vld [vmem:[%s10361 + $0x294] sm:$0xf]
      %v10528 = vld [vmem:[%s10361 + $0x298] sm:$0xf]
      %v10529 = vld [vmem:[%s10361 + $0x29c] sm:$0xf]
      %v10530 = vld [vmem:[%s10361 + $0x2a0] sm:$0xf]
      %v10531 = vld [vmem:[%s10361 + $0x2a4] sm:$0xf]
      %v10532 = vld [vmem:[%s10361 + $0x2a8] sm:$0xf]
      %v10533 = vld [vmem:[%s10361 + $0x2ac] sm:$0xf]
      %v10534 = vld [vmem:[%s10361 + $0x2b0] sm:$0xf]
      %v10535 = vld [vmem:[%s10361 + $0x2b4] sm:$0xf]
      %v10536 = vld [vmem:[%s10361 + $0x2b8] sm:$0xf]
      %v10537 = vld [vmem:[%s10361 + $0x2bc] sm:$0xf]
      %v10538 = vld [vmem:[%s10361 + $0x2c0] sm:$0xf]
      %v10539 = vld [vmem:[%s10361 + $0x2c4] sm:$0xf]
      %v10540 = vld [vmem:[%s10361 + $0x2c8] sm:$0xf]
      %v10541 = vld [vmem:[%s10361 + $0x2cc] sm:$0xf]
      %v10542 = vld [vmem:[%s10361 + $0x2d0] sm:$0xf]
      %v10543 = vld [vmem:[%s10361 + $0x2d4] sm:$0xf]
      %v10544 = vld [vmem:[%s10361 + $0x2d8] sm:$0xf]
      %v10545 = vld [vmem:[%s10361 + $0x2dc] sm:$0xf]
      %v10546 = vld [vmem:[%s10361 + $0x2e0] sm:$0xf]
      %v10547 = vld [vmem:[%s10361 + $0x2e4] sm:$0xf]
      %v10548 = vld [vmem:[%s10361 + $0x2e8] sm:$0xf]
      %v10549 = vld [vmem:[%s10361 + $0x2ec] sm:$0xf]
      %v10550 = vld [vmem:[%s10361 + $0x2f0] sm:$0xf]
      %v10551 = vld [vmem:[%s10361 + $0x2f4] sm:$0xf]
      %v10552 = vld [vmem:[%s10361 + $0x2f8] sm:$0xf]
      %v10553 = vld [vmem:[%s10361 + $0x2fc] sm:$0xf]
      %v10554 = vld [vmem:[%s10361 + $0x300] sm:$0xf]
      %v10555 = vld [vmem:[%s10361 + $0x304] sm:$0xf]
      %v10556 = vld [vmem:[%s10361 + $0x308] sm:$0xf]
      %v10557 = vld [vmem:[%s10361 + $0x30c] sm:$0xf]
      %v10558 = vld [vmem:[%s10361 + $0x310] sm:$0xf]
      %v10559 = vld [vmem:[%s10361 + $0x314] sm:$0xf]
      %v10560 = vld [vmem:[%s10361 + $0x318] sm:$0xf]
      %v10561 = vld [vmem:[%s10361 + $0x31c] sm:$0xf]
      %v10562 = vld [vmem:[%s10361 + $0x320] sm:$0xf]
      %v10563 = vld [vmem:[%s10361 + $0x324] sm:$0xf]
      %v10564 = vld [vmem:[%s10361 + $0x328] sm:$0xf]
      %v10565 = vld [vmem:[%s10361 + $0x32c] sm:$0xf]
      %v10566 = vld [vmem:[%s10361 + $0x330] sm:$0xf]
      %v10567 = vld [vmem:[%s10361 + $0x334] sm:$0xf]
      %v10568 = vld [vmem:[%s10361 + $0x338] sm:$0xf]
      %v10569 = vld [vmem:[%s10361 + $0x33c] sm:$0xf]
      %v10570 = vld [vmem:[%s10361 + $0x340] sm:$0xf]
      %v10571 = vld [vmem:[%s10361 + $0x344] sm:$0xf]
      %v10572 = vld [vmem:[%s10361 + $0x348] sm:$0xf]
      %v10573 = vld [vmem:[%s10361 + $0x34c] sm:$0xf]
      %v10574 = vld [vmem:[%s10361 + $0x350] sm:$0xf]
      %v10575 = vld [vmem:[%s10361 + $0x354] sm:$0xf]
      %v10576 = vld [vmem:[%s10361 + $0x358] sm:$0xf]
      %v10577 = vld [vmem:[%s10361 + $0x35c] sm:$0xf]
      %v10578 = vld [vmem:[%s10361 + $0x360] sm:$0xf]
      %v10579 = vld [vmem:[%s10361 + $0x364] sm:$0xf]
      %v10580 = vld [vmem:[%s10361 + $0x368] sm:$0xf]
      %v10581 = vld [vmem:[%s10361 + $0x36c] sm:$0xf]
      %v10582 = vld [vmem:[%s10361 + $0x370] sm:$0xf]
      %v10583 = vld [vmem:[%s10361 + $0x374] sm:$0xf]
      %v10584 = vld [vmem:[%s10361 + $0x378] sm:$0xf]
      %v10585 = vld [vmem:[%s10361 + $0x37c] sm:$0xf]
      %v10586 = vld [vmem:[%s10361 + $0x380] sm:$0xf]
      %v10587 = vld [vmem:[%s10361 + $0x384] sm:$0xf]
      %v10588 = vld [vmem:[%s10361 + $0x388] sm:$0xf]
      %v10589 = vld [vmem:[%s10361 + $0x38c] sm:$0xf]
      %v10590 = vld [vmem:[%s10361 + $0x390] sm:$0xf]
      %v10591 = vld [vmem:[%s10361 + $0x394] sm:$0xf]
      %v10592 = vld [vmem:[%s10361 + $0x398] sm:$0xf]
      %v10593 = vld [vmem:[%s10361 + $0x39c] sm:$0xf]
      %v10594 = vld [vmem:[%s10361 + $0x3a0] sm:$0xf]
      %v10595 = vld [vmem:[%s10361 + $0x3a4] sm:$0xf]
      %v10596 = vld [vmem:[%s10361 + $0x3a8] sm:$0xf]
      %v10597 = vld [vmem:[%s10361 + $0x3ac] sm:$0xf]
      %v10598 = vld [vmem:[%s10361 + $0x3b0] sm:$0xf]
      %v10599 = vld [vmem:[%s10361 + $0x3b4] sm:$0xf]
      %v10600 = vld [vmem:[%s10361 + $0x3b8] sm:$0xf]
      %v10601 = vld [vmem:[%s10361 + $0x3bc] sm:$0xf]
      %v10602 = vld [vmem:[%s10361 + $0x3c0] sm:$0xf]
      %v10603 = vld [vmem:[%s10361 + $0x3c4] sm:$0xf]
      %v10604 = vld [vmem:[%s10361 + $0x3c8] sm:$0xf]
      %v10605 = vld [vmem:[%s10361 + $0x3cc] sm:$0xf]
      %v10606 = vld [vmem:[%s10361 + $0x3d0] sm:$0xf]
      %v10607 = vld [vmem:[%s10361 + $0x3d4] sm:$0xf]
      %v10608 = vld [vmem:[%s10361 + $0x3d8] sm:$0xf]
      %v10609 = vld [vmem:[%s10361 + $0x3dc] sm:$0xf]
      %v10610 = vld [vmem:[%s10361 + $0x3e0] sm:$0xf]
      %v10611 = vld [vmem:[%s10361 + $0x3e4] sm:$0xf]
      %v10612 = vld [vmem:[%s10361 + $0x3e8] sm:$0xf]
      %v10613 = vld [vmem:[%s10361 + $0x3ec] sm:$0xf]
      %v10614 = vld [vmem:[%s10361 + $0x3f0] sm:$0xf]
      %v10615 = vld [vmem:[%s10361 + $0x3f4] sm:$0xf]
      %v10616 = vld [vmem:[%s10361 + $0x3f8] sm:$0xf]
      %v10617 = vld [vmem:[%s10361 + $0x3fc] sm:$0xf]
      %v10618 = vperm.slane %v8315, 3
      %v10875 = vunpack.c.l.b16 %v10362
      %v10876 = vunpack.c.l.b16 %v10363
      %v10877 = vunpack.c.l.b16 %v10364
      %v10878 = vunpack.c.l.b16 %v10365
      %v10879 = vunpack.c.l.b16 %v10366
      %v10880 = vunpack.c.l.b16 %v10367
      %v10881 = vunpack.c.l.b16 %v10368
      %v10882 = vunpack.c.l.b16 %v10369
      %v10883 = vunpack.c.l.b16 %v10370
      %v10884 = vunpack.c.l.b16 %v10371
      %v10885 = vunpack.c.l.b16 %v10372
      %v10886 = vunpack.c.l.b16 %v10373
      %v10887 = vunpack.c.l.b16 %v10374
      %v10888 = vunpack.c.l.b16 %v10375
      %v10889 = vunpack.c.l.b16 %v10376
      %v10890 = vunpack.c.l.b16 %v10377
      %v10891 = vunpack.c.l.b16 %v10378
      %v10892 = vunpack.c.l.b16 %v10379
      %v10893 = vunpack.c.l.b16 %v10380
      %v10894 = vunpack.c.l.b16 %v10381
      %v10895 = vunpack.c.l.b16 %v10382
      %v10896 = vunpack.c.l.b16 %v10383
      %v10897 = vunpack.c.l.b16 %v10384
      %v10898 = vunpack.c.l.b16 %v10385
      %v10899 = vunpack.c.l.b16 %v10386
      %v10900 = vunpack.c.l.b16 %v10387
      %v10901 = vunpack.c.l.b16 %v10388
      %v10902 = vunpack.c.l.b16 %v10389
      %v10903 = vunpack.c.l.b16 %v10390
      %v10904 = vunpack.c.l.b16 %v10391
      %v10905 = vunpack.c.l.b16 %v10392
      %v10906 = vunpack.c.l.b16 %v10393
      %v10907 = vunpack.c.l.b16 %v10394
      %v10908 = vunpack.c.l.b16 %v10395
      %v10909 = vunpack.c.l.b16 %v10396
      %v10910 = vunpack.c.l.b16 %v10397
      %v10911 = vunpack.c.l.b16 %v10398
      %v10912 = vunpack.c.l.b16 %v10399
      %v10913 = vunpack.c.l.b16 %v10400
      %v10914 = vunpack.c.l.b16 %v10401
      %v10915 = vunpack.c.l.b16 %v10402
      %v10916 = vunpack.c.l.b16 %v10403
      %v10917 = vunpack.c.l.b16 %v10404
      %v10918 = vunpack.c.l.b16 %v10405
      %v10919 = vunpack.c.l.b16 %v10406
      %v10920 = vunpack.c.l.b16 %v10407
      %v10921 = vunpack.c.l.b16 %v10408
      %v10922 = vunpack.c.l.b16 %v10409
      %v10923 = vunpack.c.l.b16 %v10410
      %v10924 = vunpack.c.l.b16 %v10411
      %v10925 = vunpack.c.l.b16 %v10412
      %v10926 = vunpack.c.l.b16 %v10413
      %v10927 = vunpack.c.l.b16 %v10414
      %v10928 = vunpack.c.l.b16 %v10415
      %v10929 = vunpack.c.l.b16 %v10416
      %v10930 = vunpack.c.l.b16 %v10417
      %v10931 = vunpack.c.l.b16 %v10418
      %v10932 = vunpack.c.l.b16 %v10419
      %v10933 = vunpack.c.l.b16 %v10420
      %v10934 = vunpack.c.l.b16 %v10421
      %v10935 = vunpack.c.l.b16 %v10422
      %v10936 = vunpack.c.l.b16 %v10423
      %v10937 = vunpack.c.l.b16 %v10424
      %v10938 = vunpack.c.l.b16 %v10425
      %v10939 = vunpack.c.l.b16 %v10426
      %v10940 = vunpack.c.l.b16 %v10427
      %v10941 = vunpack.c.l.b16 %v10428
      %v10942 = vunpack.c.l.b16 %v10429
      %v10943 = vunpack.c.l.b16 %v10430
      %v10944 = vunpack.c.l.b16 %v10431
      %v10945 = vunpack.c.l.b16 %v10432
      %v10946 = vunpack.c.l.b16 %v10433
      %v10947 = vunpack.c.l.b16 %v10434
      %v10948 = vunpack.c.l.b16 %v10435
      %v10949 = vunpack.c.l.b16 %v10436
      %v10950 = vunpack.c.l.b16 %v10437
      %v10951 = vunpack.c.l.b16 %v10438
      %v10952 = vunpack.c.l.b16 %v10439
      %v10953 = vunpack.c.l.b16 %v10440
      %v10954 = vunpack.c.l.b16 %v10441
      %v10955 = vunpack.c.l.b16 %v10442
      %v10956 = vunpack.c.l.b16 %v10443
      %v10957 = vunpack.c.l.b16 %v10444
      %v10958 = vunpack.c.l.b16 %v10445
      %v10959 = vunpack.c.l.b16 %v10446
      %v10960 = vunpack.c.l.b16 %v10447
      %v10961 = vunpack.c.l.b16 %v10448
      %v10962 = vunpack.c.l.b16 %v10449
      %v10963 = vunpack.c.l.b16 %v10450
      %v10964 = vunpack.c.l.b16 %v10451
      %v10965 = vunpack.c.l.b16 %v10452
      %v10966 = vunpack.c.l.b16 %v10453
      %v10967 = vunpack.c.l.b16 %v10454
      %v10968 = vunpack.c.l.b16 %v10455
      %v10969 = vunpack.c.l.b16 %v10456
      %v10970 = vunpack.c.l.b16 %v10457
      %v10971 = vunpack.c.l.b16 %v10458
      %v10972 = vunpack.c.l.b16 %v10459
      %v10973 = vunpack.c.l.b16 %v10460
      %v10974 = vunpack.c.l.b16 %v10461
      %v10975 = vunpack.c.l.b16 %v10462
      %v10976 = vunpack.c.l.b16 %v10463
      %v10977 = vunpack.c.l.b16 %v10464
      %v10978 = vunpack.c.l.b16 %v10465
      %v10979 = vunpack.c.l.b16 %v10466
      %v10980 = vunpack.c.l.b16 %v10467
      %v10981 = vunpack.c.l.b16 %v10468
      %v10982 = vunpack.c.l.b16 %v10469
      %v10983 = vunpack.c.l.b16 %v10470
      %v10984 = vunpack.c.l.b16 %v10471
      %v10985 = vunpack.c.l.b16 %v10472
      %v10986 = vunpack.c.l.b16 %v10473
      %v10987 = vunpack.c.l.b16 %v10474
      %v10988 = vunpack.c.l.b16 %v10475
      %v10989 = vunpack.c.l.b16 %v10476
      %v10990 = vunpack.c.l.b16 %v10477
      %v10991 = vunpack.c.l.b16 %v10478
      %v10992 = vunpack.c.l.b16 %v10479
      %v10993 = vunpack.c.l.b16 %v10480
      %v10994 = vunpack.c.l.b16 %v10481
      %v10995 = vunpack.c.l.b16 %v10482
      %v10996 = vunpack.c.l.b16 %v10483
      %v10997 = vunpack.c.l.b16 %v10484
      %v10998 = vunpack.c.l.b16 %v10485
      %v10999 = vunpack.c.l.b16 %v10486
      %v11000 = vunpack.c.l.b16 %v10487
      %v11001 = vunpack.c.l.b16 %v10488
      %v11002 = vunpack.c.l.b16 %v10489
      %v11003 = vunpack.c.l.b16 %v10490
      %v11004 = vunpack.c.l.b16 %v10491
      %v11005 = vunpack.c.l.b16 %v10492
      %v11006 = vunpack.c.l.b16 %v10493
      %v11007 = vunpack.c.l.b16 %v10494
      %v11008 = vunpack.c.l.b16 %v10495
      %v11009 = vunpack.c.l.b16 %v10496
      %v11010 = vunpack.c.l.b16 %v10497
      %v11011 = vunpack.c.l.b16 %v10498
      %v11012 = vunpack.c.l.b16 %v10499
      %v11013 = vunpack.c.l.b16 %v10500
      %v11014 = vunpack.c.l.b16 %v10501
      %v11015 = vunpack.c.l.b16 %v10502
      %v11016 = vunpack.c.l.b16 %v10503
      %v11017 = vunpack.c.l.b16 %v10504
      %v11018 = vunpack.c.l.b16 %v10505
      %v11019 = vunpack.c.l.b16 %v10506
      %v11020 = vunpack.c.l.b16 %v10507
      %v11021 = vunpack.c.l.b16 %v10508
      %v11022 = vunpack.c.l.b16 %v10509
      %v11023 = vunpack.c.l.b16 %v10510
      %v11024 = vunpack.c.l.b16 %v10511
      %v11025 = vunpack.c.l.b16 %v10512
      %v11026 = vunpack.c.l.b16 %v10513
      %v11027 = vunpack.c.l.b16 %v10514
      %v11028 = vunpack.c.l.b16 %v10515
      %v11029 = vunpack.c.l.b16 %v10516
      %v11030 = vunpack.c.l.b16 %v10517
      %v11031 = vunpack.c.l.b16 %v10518
      %v11032 = vunpack.c.l.b16 %v10519
      %v11033 = vunpack.c.l.b16 %v10520
      %v11034 = vunpack.c.l.b16 %v10521
      %v11035 = vunpack.c.l.b16 %v10522
      %v11036 = vunpack.c.l.b16 %v10523
      %v11037 = vunpack.c.l.b16 %v10524
      %v11038 = vunpack.c.l.b16 %v10525
      %v11039 = vunpack.c.l.b16 %v10526
      %v11040 = vunpack.c.l.b16 %v10527
      %v11041 = vunpack.c.l.b16 %v10528
      %v11042 = vunpack.c.l.b16 %v10529
      %v11043 = vunpack.c.l.b16 %v10530
      %v11044 = vunpack.c.l.b16 %v10531
      %v11045 = vunpack.c.l.b16 %v10532
      %v11046 = vunpack.c.l.b16 %v10533
      %v11047 = vunpack.c.l.b16 %v10534
      %v11048 = vunpack.c.l.b16 %v10535
      %v11049 = vunpack.c.l.b16 %v10536
      %v11050 = vunpack.c.l.b16 %v10537
      %v11051 = vunpack.c.l.b16 %v10538
      %v11052 = vunpack.c.l.b16 %v10539
      %v11053 = vunpack.c.l.b16 %v10540
      %v11054 = vunpack.c.l.b16 %v10541
      %v11055 = vunpack.c.l.b16 %v10542
      %v11056 = vunpack.c.l.b16 %v10543
      %v11057 = vunpack.c.l.b16 %v10544
      %v11058 = vunpack.c.l.b16 %v10545
      %v11059 = vunpack.c.l.b16 %v10546
      %v11060 = vunpack.c.l.b16 %v10547
      %v11061 = vunpack.c.l.b16 %v10548
      %v11062 = vunpack.c.l.b16 %v10549
      %v11063 = vunpack.c.l.b16 %v10550
      %v11064 = vunpack.c.l.b16 %v10551
      %v11065 = vunpack.c.l.b16 %v10552
      %v11066 = vunpack.c.l.b16 %v10553
      %v11067 = vunpack.c.l.b16 %v10554
      %v11068 = vunpack.c.l.b16 %v10555
      %v11069 = vunpack.c.l.b16 %v10556
      %v11070 = vunpack.c.l.b16 %v10557
      %v11071 = vunpack.c.l.b16 %v10558
      %v11072 = vunpack.c.l.b16 %v10559
      %v11073 = vunpack.c.l.b16 %v10560
      %v11074 = vunpack.c.l.b16 %v10561
      %v11075 = vunpack.c.l.b16 %v10562
      %v11076 = vunpack.c.l.b16 %v10563
      %v11077 = vunpack.c.l.b16 %v10564
      %v11078 = vunpack.c.l.b16 %v10565
      %v11079 = vunpack.c.l.b16 %v10566
      %v11080 = vunpack.c.l.b16 %v10567
      %v11081 = vunpack.c.l.b16 %v10568
      %v11082 = vunpack.c.l.b16 %v10569
      %v11083 = vunpack.c.l.b16 %v10570
      %v11084 = vunpack.c.l.b16 %v10571
      %v11085 = vunpack.c.l.b16 %v10572
      %v11086 = vunpack.c.l.b16 %v10573
      %v11087 = vunpack.c.l.b16 %v10574
      %v11088 = vunpack.c.l.b16 %v10575
      %v11089 = vunpack.c.l.b16 %v10576
      %v11090 = vunpack.c.l.b16 %v10577
      %v11091 = vunpack.c.l.b16 %v10578
      %v11092 = vunpack.c.l.b16 %v10579
      %v11093 = vunpack.c.l.b16 %v10580
      %v11094 = vunpack.c.l.b16 %v10581
      %v11095 = vunpack.c.l.b16 %v10582
      %v11096 = vunpack.c.l.b16 %v10583
      %v11097 = vunpack.c.l.b16 %v10584
      %v11098 = vunpack.c.l.b16 %v10585
      %v11099 = vunpack.c.l.b16 %v10586
      %v11100 = vunpack.c.l.b16 %v10587
      %v11101 = vunpack.c.l.b16 %v10588
      %v11102 = vunpack.c.l.b16 %v10589
      %v11103 = vunpack.c.l.b16 %v10590
      %v11104 = vunpack.c.l.b16 %v10591
      %v11105 = vunpack.c.l.b16 %v10592
      %v11106 = vunpack.c.l.b16 %v10593
      %v11107 = vunpack.c.l.b16 %v10594
      %v11108 = vunpack.c.l.b16 %v10595
      %v11109 = vunpack.c.l.b16 %v10596
      %v11110 = vunpack.c.l.b16 %v10597
      %v11111 = vunpack.c.l.b16 %v10598
      %v11112 = vunpack.c.l.b16 %v10599
      %v11113 = vunpack.c.l.b16 %v10600
      %v11114 = vunpack.c.l.b16 %v10601
      %v11115 = vunpack.c.l.b16 %v10602
      %v11116 = vunpack.c.l.b16 %v10603
      %v11117 = vunpack.c.l.b16 %v10604
      %v11118 = vunpack.c.l.b16 %v10605
      %v11119 = vunpack.c.l.b16 %v10606
      %v11120 = vunpack.c.l.b16 %v10607
      %v11121 = vunpack.c.l.b16 %v10608
      %v11122 = vunpack.c.l.b16 %v10609
      %v11123 = vunpack.c.l.b16 %v10610
      %v11124 = vunpack.c.l.b16 %v10611
      %v11125 = vunpack.c.l.b16 %v10612
      %v11126 = vunpack.c.l.b16 %v10613
      %v11127 = vunpack.c.l.b16 %v10614
      %v11128 = vunpack.c.l.b16 %v10615
      %v11129 = vunpack.c.l.b16 %v10616
      %v11130 = vunpack.c.l.b16 %v10617
      %v11131 = vpack.c.b16 %v10876, %v10875
      %v11132 = vpack.c.b16 %v10878, %v10877
      %v11133 = vpack.c.b16 %v10880, %v10879
      %v11134 = vpack.c.b16 %v10882, %v10881
      %v11135 = vpack.c.b16 %v10884, %v10883
      %v11136 = vpack.c.b16 %v10886, %v10885
      %v11137 = vpack.c.b16 %v10888, %v10887
      %v11138 = vpack.c.b16 %v10890, %v10889
      %v11139 = vpack.c.b16 %v10892, %v10891
      %v11140 = vpack.c.b16 %v10894, %v10893
      %v11141 = vpack.c.b16 %v10896, %v10895
      %v11142 = vpack.c.b16 %v10898, %v10897
      %v11143 = vpack.c.b16 %v10900, %v10899
      %v11144 = vpack.c.b16 %v10902, %v10901
      %v11145 = vpack.c.b16 %v10904, %v10903
      %v11146 = vpack.c.b16 %v10906, %v10905
      %v11147 = vpack.c.b16 %v10908, %v10907
      %v11148 = vpack.c.b16 %v10910, %v10909
      %v11149 = vpack.c.b16 %v10912, %v10911
      %v11150 = vpack.c.b16 %v10914, %v10913
      %v11151 = vpack.c.b16 %v10916, %v10915
      %v11152 = vpack.c.b16 %v10918, %v10917
      %v11153 = vpack.c.b16 %v10920, %v10919
      %v11154 = vpack.c.b16 %v10922, %v10921
      %v11155 = vpack.c.b16 %v10924, %v10923
      %v11156 = vpack.c.b16 %v10926, %v10925
      %v11157 = vpack.c.b16 %v10928, %v10927
      %v11158 = vpack.c.b16 %v10930, %v10929
      %v11159 = vpack.c.b16 %v10932, %v10931
      %v11160 = vpack.c.b16 %v10934, %v10933
      %v11161 = vpack.c.b16 %v10936, %v10935
      %v11162 = vpack.c.b16 %v10938, %v10937
      %v11163 = vpack.c.b16 %v10940, %v10939
      %v11164 = vpack.c.b16 %v10942, %v10941
      %v11165 = vpack.c.b16 %v10944, %v10943
      %v11166 = vpack.c.b16 %v10946, %v10945
      %v11167 = vpack.c.b16 %v10948, %v10947
      %v11168 = vpack.c.b16 %v10950, %v10949
      %v11169 = vpack.c.b16 %v10952, %v10951
      %v11170 = vpack.c.b16 %v10954, %v10953
      %v11171 = vpack.c.b16 %v10956, %v10955
      %v11172 = vpack.c.b16 %v10958, %v10957
      %v11173 = vpack.c.b16 %v10960, %v10959
      %v11174 = vpack.c.b16 %v10962, %v10961
      %v11175 = vpack.c.b16 %v10964, %v10963
      %v11176 = vpack.c.b16 %v10966, %v10965
      %v11177 = vpack.c.b16 %v10968, %v10967
      %v11178 = vpack.c.b16 %v10970, %v10969
      %v11179 = vpack.c.b16 %v10972, %v10971
      %v11180 = vpack.c.b16 %v10974, %v10973
      %v11181 = vpack.c.b16 %v10976, %v10975
      %v11182 = vpack.c.b16 %v10978, %v10977
      %v11183 = vpack.c.b16 %v10980, %v10979
      %v11184 = vpack.c.b16 %v10982, %v10981
      %v11185 = vpack.c.b16 %v10984, %v10983
      %v11186 = vpack.c.b16 %v10986, %v10985
      %v11187 = vpack.c.b16 %v10988, %v10987
      %v11188 = vpack.c.b16 %v10990, %v10989
      %v11189 = vpack.c.b16 %v10992, %v10991
      %v11190 = vpack.c.b16 %v10994, %v10993
      %v11191 = vpack.c.b16 %v10996, %v10995
      %v11192 = vpack.c.b16 %v10998, %v10997
      %v11193 = vpack.c.b16 %v11000, %v10999
      %v11194 = vpack.c.b16 %v11002, %v11001
      %v11195 = vpack.c.b16 %v11004, %v11003
      %v11196 = vpack.c.b16 %v11006, %v11005
      %v11197 = vpack.c.b16 %v11008, %v11007
      %v11198 = vpack.c.b16 %v11010, %v11009
      %v11199 = vpack.c.b16 %v11012, %v11011
      %v11200 = vpack.c.b16 %v11014, %v11013
      %v11201 = vpack.c.b16 %v11016, %v11015
      %v11202 = vpack.c.b16 %v11018, %v11017
      %v11203 = vpack.c.b16 %v11020, %v11019
      %v11204 = vpack.c.b16 %v11022, %v11021
      %v11205 = vpack.c.b16 %v11024, %v11023
      %v11206 = vpack.c.b16 %v11026, %v11025
      %v11207 = vpack.c.b16 %v11028, %v11027
      %v11208 = vpack.c.b16 %v11030, %v11029
      %v11209 = vpack.c.b16 %v11032, %v11031
      %v11210 = vpack.c.b16 %v11034, %v11033
      %v11211 = vpack.c.b16 %v11036, %v11035
      %v11212 = vpack.c.b16 %v11038, %v11037
      %v11213 = vpack.c.b16 %v11040, %v11039
      %v11214 = vpack.c.b16 %v11042, %v11041
      %v11215 = vpack.c.b16 %v11044, %v11043
      %v11216 = vpack.c.b16 %v11046, %v11045
      %v11217 = vpack.c.b16 %v11048, %v11047
      %v11218 = vpack.c.b16 %v11050, %v11049
      %v11219 = vpack.c.b16 %v11052, %v11051
      %v11220 = vpack.c.b16 %v11054, %v11053
      %v11221 = vpack.c.b16 %v11056, %v11055
      %v11222 = vpack.c.b16 %v11058, %v11057
      %v11223 = vpack.c.b16 %v11060, %v11059
      %v11224 = vpack.c.b16 %v11062, %v11061
      %v11225 = vpack.c.b16 %v11064, %v11063
      %v11226 = vpack.c.b16 %v11066, %v11065
      %v11227 = vpack.c.b16 %v11068, %v11067
      %v11228 = vpack.c.b16 %v11070, %v11069
      %v11229 = vpack.c.b16 %v11072, %v11071
      %v11230 = vpack.c.b16 %v11074, %v11073
      %v11231 = vpack.c.b16 %v11076, %v11075
      %v11232 = vpack.c.b16 %v11078, %v11077
      %v11233 = vpack.c.b16 %v11080, %v11079
      %v11234 = vpack.c.b16 %v11082, %v11081
      %v11235 = vpack.c.b16 %v11084, %v11083
      %v11236 = vpack.c.b16 %v11086, %v11085
      %v11237 = vpack.c.b16 %v11088, %v11087
      %v11238 = vpack.c.b16 %v11090, %v11089
      %v11239 = vpack.c.b16 %v11092, %v11091
      %v11240 = vpack.c.b16 %v11094, %v11093
      %v11241 = vpack.c.b16 %v11096, %v11095
      %v11242 = vpack.c.b16 %v11098, %v11097
      %v11243 = vpack.c.b16 %v11100, %v11099
      %v11244 = vpack.c.b16 %v11102, %v11101
      %v11245 = vpack.c.b16 %v11104, %v11103
      %v11246 = vpack.c.b16 %v11106, %v11105
      %v11247 = vpack.c.b16 %v11108, %v11107
      %v11248 = vpack.c.b16 %v11110, %v11109
      %v11249 = vpack.c.b16 %v11112, %v11111
      %v11250 = vpack.c.b16 %v11114, %v11113
      %v11251 = vpack.c.b16 %v11116, %v11115
      %v11252 = vpack.c.b16 %v11118, %v11117
      %v11253 = vpack.c.b16 %v11120, %v11119
      %v11254 = vpack.c.b16 %v11122, %v11121
      %v11255 = vpack.c.b16 %v11124, %v11123
      %v11256 = vpack.c.b16 %v11126, %v11125
      %v11257 = vpack.c.b16 %v11128, %v11127
      %v11258 = vpack.c.b16 %v11130, %v11129
      %11387 = vmatpush.bf16.msra.mxu0 %v11138
      %11388 = vmatpush.bf16.msra.mxu0 %v11137
      %11389 = vmatpush.bf16.msra.mxu0 %v11136
      %11390 = vmatpush.bf16.msra.mxu0 %v11135
      %11391 = vmatpush.bf16.msra.mxu0 %v11134
      %11392 = vmatpush.bf16.msra.mxu0 %v11133
      %11393 = vmatpush.bf16.msra.mxu0 %v11132
      %11394 = vmatpush.bf16.msra.mxu0 %v11131
      %11395 = vmatmul.bf16.gmra.mxu0 %v10281
      %v11396 = vpop.f32.mrf.mxu0
      %v11397 = vadd.f32 %v10618, %v11396
      %v11398 = vpop.f32.mrf.mxu0
      %v11399 = vadd.f32 %v10618, %v11398
      %11400 = vmatmul.bf16.gmra.mxu0 %v10297
      %v11401 = vpop.f32.mrf.mxu0
      %v11402 = vadd.f32 %v10618, %v11401
      %v11403 = vpop.f32.mrf.mxu0
      %v11404 = vadd.f32 %v10618, %v11403
      %11405 = vmatmul.bf16.gmra.mxu0 %v10313
      %v11406 = vpop.f32.mrf.mxu0
      %v11407 = vadd.f32 %v10618, %v11406
      %v11408 = vpop.f32.mrf.mxu0
      %v11409 = vadd.f32 %v10618, %v11408
      %11410 = vmatmul.bf16.gmra.mxu0 %v10329
      %v11411 = vpop.f32.mrf.mxu0
      %v11412 = vadd.f32 %v10618, %v11411
      %v11413 = vpop.f32.mrf.mxu0
      %v11414 = vadd.f32 %v10618, %v11413
      %11415 = vmatmul.bf16.gmra.mxu0 %v10345
      %v11416 = vpop.f32.mrf.mxu0
      %v11417 = vadd.f32 %v10618, %v11416
      %v11418 = vpop.f32.mrf.mxu0
      %v11419 = vadd.f32 %v10618, %v11418
      %11420 = vdwg.mxu0
      %11421 = vmatpush.bf16.msra.mxu0 %v11146
      %11422 = vmatpush.bf16.msra.mxu0 %v11145
      %11423 = vmatpush.bf16.msra.mxu0 %v11144
      %11424 = vmatpush.bf16.msra.mxu0 %v11143
      %11425 = vmatpush.bf16.msra.mxu0 %v11142
      %11426 = vmatpush.bf16.msra.mxu0 %v11141
      %11427 = vmatpush.bf16.msra.mxu0 %v11140
      %11428 = vmatpush.bf16.msra.mxu0 %v11139
      %11429 = vmatmul.bf16.gmra.mxu0 %v10282
      %v11430 = vpop.f32.mrf.mxu0
      %v11431 = vadd.f32 %v11397, %v11430
      %v11432 = vpop.f32.mrf.mxu0
      %v11433 = vadd.f32 %v11399, %v11432
      %11434 = vmatmul.bf16.gmra.mxu0 %v10298
      %v11435 = vpop.f32.mrf.mxu0
      %v11436 = vadd.f32 %v11402, %v11435
      %v11437 = vpop.f32.mrf.mxu0
      %v11438 = vadd.f32 %v11404, %v11437
      %11439 = vmatmul.bf16.gmra.mxu0 %v10314
      %v11440 = vpop.f32.mrf.mxu0
      %v11441 = vadd.f32 %v11407, %v11440
      %v11442 = vpop.f32.mrf.mxu0
      %v11443 = vadd.f32 %v11409, %v11442
      %11444 = vmatmul.bf16.gmra.mxu0 %v10330
      %v11445 = vpop.f32.mrf.mxu0
      %v11446 = vadd.f32 %v11412, %v11445
      %v11447 = vpop.f32.mrf.mxu0
      %v11448 = vadd.f32 %v11414, %v11447
      %11449 = vmatmul.bf16.gmra.mxu0 %v10346
      %v11450 = vpop.f32.mrf.mxu0
      %v11451 = vadd.f32 %v11417, %v11450
      %v11452 = vpop.f32.mrf.mxu0
      %v11453 = vadd.f32 %v11419, %v11452
      %11454 = vdwg.mxu0
      %11455 = vmatpush.bf16.msra.mxu0 %v11154
      %11456 = vmatpush.bf16.msra.mxu0 %v11153
      %11457 = vmatpush.bf16.msra.mxu0 %v11152
      %11458 = vmatpush.bf16.msra.mxu0 %v11151
      %11459 = vmatpush.bf16.msra.mxu0 %v11150
      %11460 = vmatpush.bf16.msra.mxu0 %v11149
      %11461 = vmatpush.bf16.msra.mxu0 %v11148
      %11462 = vmatpush.bf16.msra.mxu0 %v11147
      %11463 = vmatmul.bf16.gmra.mxu0 %v10283
      %v11464 = vpop.f32.mrf.mxu0
      %v11465 = vadd.f32 %v11431, %v11464
      %v11466 = vpop.f32.mrf.mxu0
      %v11467 = vadd.f32 %v11433, %v11466
      %11468 = vmatmul.bf16.gmra.mxu0 %v10299
      %v11469 = vpop.f32.mrf.mxu0
      %v11470 = vadd.f32 %v11436, %v11469
      %v11471 = vpop.f32.mrf.mxu0
      %v11472 = vadd.f32 %v11438, %v11471
      %11473 = vmatmul.bf16.gmra.mxu0 %v10315
      %v11474 = vpop.f32.mrf.mxu0
      %v11475 = vadd.f32 %v11441, %v11474
      %v11476 = vpop.f32.mrf.mxu0
      %v11477 = vadd.f32 %v11443, %v11476
      %11478 = vmatmul.bf16.gmra.mxu0 %v10331
      %v11479 = vpop.f32.mrf.mxu0
      %v11480 = vadd.f32 %v11446, %v11479
      %v11481 = vpop.f32.mrf.mxu0
      %v11482 = vadd.f32 %v11448, %v11481
      %11483 = vmatmul.bf16.gmra.mxu0 %v10347
      %v11484 = vpop.f32.mrf.mxu0
      %v11485 = vadd.f32 %v11451, %v11484
      %v11486 = vpop.f32.mrf.mxu0
      %v11487 = vadd.f32 %v11453, %v11486
      %11488 = vdwg.mxu0
      %11489 = vmatpush.bf16.msra.mxu0 %v11162
      %11490 = vmatpush.bf16.msra.mxu0 %v11161
      %11491 = vmatpush.bf16.msra.mxu0 %v11160
      %11492 = vmatpush.bf16.msra.mxu0 %v11159
      %11493 = vmatpush.bf16.msra.mxu0 %v11158
      %11494 = vmatpush.bf16.msra.mxu0 %v11157
      %11495 = vmatpush.bf16.msra.mxu0 %v11156
      %11496 = vmatpush.bf16.msra.mxu0 %v11155
      %11497 = vmatmul.bf16.gmra.mxu0 %v10284
      %v11498 = vpop.f32.mrf.mxu0
      %v11499 = vadd.f32 %v11465, %v11498
      %v11500 = vpop.f32.mrf.mxu0
      %v11501 = vadd.f32 %v11467, %v11500
      %11502 = vmatmul.bf16.gmra.mxu0 %v10300
      %v11503 = vpop.f32.mrf.mxu0
      %v11504 = vadd.f32 %v11470, %v11503
      %v11505 = vpop.f32.mrf.mxu0
      %v11506 = vadd.f32 %v11472, %v11505
      %11507 = vmatmul.bf16.gmra.mxu0 %v10316
      %v11508 = vpop.f32.mrf.mxu0
      %v11509 = vadd.f32 %v11475, %v11508
      %v11510 = vpop.f32.mrf.mxu0
      %v11511 = vadd.f32 %v11477, %v11510
      %11512 = vmatmul.bf16.gmra.mxu0 %v10332
      %v11513 = vpop.f32.mrf.mxu0
      %v11514 = vadd.f32 %v11480, %v11513
      %v11515 = vpop.f32.mrf.mxu0
      %v11516 = vadd.f32 %v11482, %v11515
      %11517 = vmatmul.bf16.gmra.mxu0 %v10348
      %v11518 = vpop.f32.mrf.mxu0
      %v11519 = vadd.f32 %v11485, %v11518
      %v11520 = vpop.f32.mrf.mxu0
      %v11521 = vadd.f32 %v11487, %v11520
      %11522 = vdwg.mxu0
      %11523 = vmatpush.bf16.msra.mxu0 %v11170
      %11524 = vmatpush.bf16.msra.mxu0 %v11169
      %11525 = vmatpush.bf16.msra.mxu0 %v11168
      %11526 = vmatpush.bf16.msra.mxu0 %v11167
      %11527 = vmatpush.bf16.msra.mxu0 %v11166
      %11528 = vmatpush.bf16.msra.mxu0 %v11165
      %11529 = vmatpush.bf16.msra.mxu0 %v11164
      %11530 = vmatpush.bf16.msra.mxu0 %v11163
      %11531 = vmatmul.bf16.gmra.mxu0 %v10285
      %v11532 = vpop.f32.mrf.mxu0
      %v11533 = vadd.f32 %v11499, %v11532
      %v11534 = vpop.f32.mrf.mxu0
      %v11535 = vadd.f32 %v11501, %v11534
      %11536 = vmatmul.bf16.gmra.mxu0 %v10301
      %v11537 = vpop.f32.mrf.mxu0
      %v11538 = vadd.f32 %v11504, %v11537
      %v11539 = vpop.f32.mrf.mxu0
      %v11540 = vadd.f32 %v11506, %v11539
      %11541 = vmatmul.bf16.gmra.mxu0 %v10317
      %v11542 = vpop.f32.mrf.mxu0
      %v11543 = vadd.f32 %v11509, %v11542
      %v11544 = vpop.f32.mrf.mxu0
      %v11545 = vadd.f32 %v11511, %v11544
      %11546 = vmatmul.bf16.gmra.mxu0 %v10333
      %v11547 = vpop.f32.mrf.mxu0
      %v11548 = vadd.f32 %v11514, %v11547
      %v11549 = vpop.f32.mrf.mxu0
      %v11550 = vadd.f32 %v11516, %v11549
      %11551 = vmatmul.bf16.gmra.mxu0 %v10349
      %v11552 = vpop.f32.mrf.mxu0
      %v11553 = vadd.f32 %v11519, %v11552
      %v11554 = vpop.f32.mrf.mxu0
      %v11555 = vadd.f32 %v11521, %v11554
      %11556 = vdwg.mxu0
      %11557 = vmatpush.bf16.msra.mxu0 %v11178
      %11558 = vmatpush.bf16.msra.mxu0 %v11177
      %11559 = vmatpush.bf16.msra.mxu0 %v11176
      %11560 = vmatpush.bf16.msra.mxu0 %v11175
      %11561 = vmatpush.bf16.msra.mxu0 %v11174
      %11562 = vmatpush.bf16.msra.mxu0 %v11173
      %11563 = vmatpush.bf16.msra.mxu0 %v11172
      %11564 = vmatpush.bf16.msra.mxu0 %v11171
      %11565 = vmatmul.bf16.gmra.mxu0 %v10286
      %v11566 = vpop.f32.mrf.mxu0
      %v11567 = vadd.f32 %v11533, %v11566
      %v11568 = vpop.f32.mrf.mxu0
      %v11569 = vadd.f32 %v11535, %v11568
      %11570 = vmatmul.bf16.gmra.mxu0 %v10302
      %v11571 = vpop.f32.mrf.mxu0
      %v11572 = vadd.f32 %v11538, %v11571
      %v11573 = vpop.f32.mrf.mxu0
      %v11574 = vadd.f32 %v11540, %v11573
      %11575 = vmatmul.bf16.gmra.mxu0 %v10318
      %v11576 = vpop.f32.mrf.mxu0
      %v11577 = vadd.f32 %v11543, %v11576
      %v11578 = vpop.f32.mrf.mxu0
      %v11579 = vadd.f32 %v11545, %v11578
      %11580 = vmatmul.bf16.gmra.mxu0 %v10334
      %v11581 = vpop.f32.mrf.mxu0
      %v11582 = vadd.f32 %v11548, %v11581
      %v11583 = vpop.f32.mrf.mxu0
      %v11584 = vadd.f32 %v11550, %v11583
      %11585 = vmatmul.bf16.gmra.mxu0 %v10350
      %v11586 = vpop.f32.mrf.mxu0
      %v11587 = vadd.f32 %v11553, %v11586
      %v11588 = vpop.f32.mrf.mxu0
      %v11589 = vadd.f32 %v11555, %v11588
      %11590 = vdwg.mxu0
      %11591 = vmatpush.bf16.msra.mxu0 %v11186
      %11592 = vmatpush.bf16.msra.mxu0 %v11185
      %11593 = vmatpush.bf16.msra.mxu0 %v11184
      %11594 = vmatpush.bf16.msra.mxu0 %v11183
      %11595 = vmatpush.bf16.msra.mxu0 %v11182
      %11596 = vmatpush.bf16.msra.mxu0 %v11181
      %11597 = vmatpush.bf16.msra.mxu0 %v11180
      %11598 = vmatpush.bf16.msra.mxu0 %v11179
      %11599 = vmatmul.bf16.gmra.mxu0 %v10287
      %v11600 = vpop.f32.mrf.mxu0
      %v11601 = vadd.f32 %v11567, %v11600
      %v11602 = vpop.f32.mrf.mxu0
      %v11603 = vadd.f32 %v11569, %v11602
      %11604 = vmatmul.bf16.gmra.mxu0 %v10303
      %v11605 = vpop.f32.mrf.mxu0
      %v11606 = vadd.f32 %v11572, %v11605
      %v11607 = vpop.f32.mrf.mxu0
      %v11608 = vadd.f32 %v11574, %v11607
      %11609 = vmatmul.bf16.gmra.mxu0 %v10319
      %v11610 = vpop.f32.mrf.mxu0
      %v11611 = vadd.f32 %v11577, %v11610
      %v11612 = vpop.f32.mrf.mxu0
      %v11613 = vadd.f32 %v11579, %v11612
      %11614 = vmatmul.bf16.gmra.mxu0 %v10335
      %v11615 = vpop.f32.mrf.mxu0
      %v11616 = vadd.f32 %v11582, %v11615
      %v11617 = vpop.f32.mrf.mxu0
      %v11618 = vadd.f32 %v11584, %v11617
      %11619 = vmatmul.bf16.gmra.mxu0 %v10351
      %v11620 = vpop.f32.mrf.mxu0
      %v11621 = vadd.f32 %v11587, %v11620
      %v11622 = vpop.f32.mrf.mxu0
      %v11623 = vadd.f32 %v11589, %v11622
      %11624 = vdwg.mxu0
      %11625 = vmatpush.bf16.msra.mxu0 %v11194
      %11626 = vmatpush.bf16.msra.mxu0 %v11193
      %11627 = vmatpush.bf16.msra.mxu0 %v11192
      %11628 = vmatpush.bf16.msra.mxu0 %v11191
      %11629 = vmatpush.bf16.msra.mxu0 %v11190
      %11630 = vmatpush.bf16.msra.mxu0 %v11189
      %11631 = vmatpush.bf16.msra.mxu0 %v11188
      %11632 = vmatpush.bf16.msra.mxu0 %v11187
      %11633 = vmatmul.bf16.gmra.mxu0 %v10288
      %v11634 = vpop.f32.mrf.mxu0
      %v11635 = vadd.f32 %v11601, %v11634
      %v11636 = vpop.f32.mrf.mxu0
      %v11637 = vadd.f32 %v11603, %v11636
      %11638 = vmatmul.bf16.gmra.mxu0 %v10304
      %v11639 = vpop.f32.mrf.mxu0
      %v11640 = vadd.f32 %v11606, %v11639
      %v11641 = vpop.f32.mrf.mxu0
      %v11642 = vadd.f32 %v11608, %v11641
      %11643 = vmatmul.bf16.gmra.mxu0 %v10320
      %v11644 = vpop.f32.mrf.mxu0
      %v11645 = vadd.f32 %v11611, %v11644
      %v11646 = vpop.f32.mrf.mxu0
      %v11647 = vadd.f32 %v11613, %v11646
      %11648 = vmatmul.bf16.gmra.mxu0 %v10336
      %v11649 = vpop.f32.mrf.mxu0
      %v11650 = vadd.f32 %v11616, %v11649
      %v11651 = vpop.f32.mrf.mxu0
      %v11652 = vadd.f32 %v11618, %v11651
      %11653 = vmatmul.bf16.gmra.mxu0 %v10352
      %v11654 = vpop.f32.mrf.mxu0
      %v11655 = vadd.f32 %v11621, %v11654
      %v11656 = vpop.f32.mrf.mxu0
      %v11657 = vadd.f32 %v11623, %v11656
      %11658 = vdwg.mxu0
      %11659 = vmatpush.bf16.msra.mxu0 %v11202
      %11660 = vmatpush.bf16.msra.mxu0 %v11201
      %11661 = vmatpush.bf16.msra.mxu0 %v11200
      %11662 = vmatpush.bf16.msra.mxu0 %v11199
      %11663 = vmatpush.bf16.msra.mxu0 %v11198
      %11664 = vmatpush.bf16.msra.mxu0 %v11197
      %11665 = vmatpush.bf16.msra.mxu0 %v11196
      %11666 = vmatpush.bf16.msra.mxu0 %v11195
      %11667 = vmatmul.bf16.gmra.mxu0 %v10289
      %v11668 = vpop.f32.mrf.mxu0
      %v11669 = vadd.f32 %v11635, %v11668
      %v11670 = vpop.f32.mrf.mxu0
      %v11671 = vadd.f32 %v11637, %v11670
      %11672 = vmatmul.bf16.gmra.mxu0 %v10305
      %v11673 = vpop.f32.mrf.mxu0
      %v11674 = vadd.f32 %v11640, %v11673
      %v11675 = vpop.f32.mrf.mxu0
      %v11676 = vadd.f32 %v11642, %v11675
      %11677 = vmatmul.bf16.gmra.mxu0 %v10321
      %v11678 = vpop.f32.mrf.mxu0
      %v11679 = vadd.f32 %v11645, %v11678
      %v11680 = vpop.f32.mrf.mxu0
      %v11681 = vadd.f32 %v11647, %v11680
      %11682 = vmatmul.bf16.gmra.mxu0 %v10337
      %v11683 = vpop.f32.mrf.mxu0
      %v11684 = vadd.f32 %v11650, %v11683
      %v11685 = vpop.f32.mrf.mxu0
      %v11686 = vadd.f32 %v11652, %v11685
      %11687 = vmatmul.bf16.gmra.mxu0 %v10353
      %v11688 = vpop.f32.mrf.mxu0
      %v11689 = vadd.f32 %v11655, %v11688
      %v11690 = vpop.f32.mrf.mxu0
      %v11691 = vadd.f32 %v11657, %v11690
      %11692 = vdwg.mxu0
      %11693 = vmatpush.bf16.msra.mxu0 %v11210
      %11694 = vmatpush.bf16.msra.mxu0 %v11209
      %11695 = vmatpush.bf16.msra.mxu0 %v11208
      %11696 = vmatpush.bf16.msra.mxu0 %v11207
      %11697 = vmatpush.bf16.msra.mxu0 %v11206
      %11698 = vmatpush.bf16.msra.mxu0 %v11205
      %11699 = vmatpush.bf16.msra.mxu0 %v11204
      %11700 = vmatpush.bf16.msra.mxu0 %v11203
      %11701 = vmatmul.bf16.gmra.mxu0 %v10290
      %v11702 = vpop.f32.mrf.mxu0
      %v11703 = vadd.f32 %v11669, %v11702
      %v11704 = vpop.f32.mrf.mxu0
      %v11705 = vadd.f32 %v11671, %v11704
      %11706 = vmatmul.bf16.gmra.mxu0 %v10306
      %v11707 = vpop.f32.mrf.mxu0
      %v11708 = vadd.f32 %v11674, %v11707
      %v11709 = vpop.f32.mrf.mxu0
      %v11710 = vadd.f32 %v11676, %v11709
      %11711 = vmatmul.bf16.gmra.mxu0 %v10322
      %v11712 = vpop.f32.mrf.mxu0
      %v11713 = vadd.f32 %v11679, %v11712
      %v11714 = vpop.f32.mrf.mxu0
      %v11715 = vadd.f32 %v11681, %v11714
      %11716 = vmatmul.bf16.gmra.mxu0 %v10338
      %v11717 = vpop.f32.mrf.mxu0
      %v11718 = vadd.f32 %v11684, %v11717
      %v11719 = vpop.f32.mrf.mxu0
      %v11720 = vadd.f32 %v11686, %v11719
      %11721 = vmatmul.bf16.gmra.mxu0 %v10354
      %v11722 = vpop.f32.mrf.mxu0
      %v11723 = vadd.f32 %v11689, %v11722
      %v11724 = vpop.f32.mrf.mxu0
      %v11725 = vadd.f32 %v11691, %v11724
      %11726 = vdwg.mxu0
      %11727 = vmatpush.bf16.msra.mxu0 %v11218
      %11728 = vmatpush.bf16.msra.mxu0 %v11217
      %11729 = vmatpush.bf16.msra.mxu0 %v11216
      %11730 = vmatpush.bf16.msra.mxu0 %v11215
      %11731 = vmatpush.bf16.msra.mxu0 %v11214
      %11732 = vmatpush.bf16.msra.mxu0 %v11213
      %11733 = vmatpush.bf16.msra.mxu0 %v11212
      %11734 = vmatpush.bf16.msra.mxu0 %v11211
      %11735 = vmatmul.bf16.gmra.mxu0 %v10291
      %v11736 = vpop.f32.mrf.mxu0
      %v11737 = vadd.f32 %v11703, %v11736
      %v11738 = vpop.f32.mrf.mxu0
      %v11739 = vadd.f32 %v11705, %v11738
      %11740 = vmatmul.bf16.gmra.mxu0 %v10307
      %v11741 = vpop.f32.mrf.mxu0
      %v11742 = vadd.f32 %v11708, %v11741
      %v11743 = vpop.f32.mrf.mxu0
      %v11744 = vadd.f32 %v11710, %v11743
      %11745 = vmatmul.bf16.gmra.mxu0 %v10323
      %v11746 = vpop.f32.mrf.mxu0
      %v11747 = vadd.f32 %v11713, %v11746
      %v11748 = vpop.f32.mrf.mxu0
      %v11749 = vadd.f32 %v11715, %v11748
      %11750 = vmatmul.bf16.gmra.mxu0 %v10339
      %v11751 = vpop.f32.mrf.mxu0
      %v11752 = vadd.f32 %v11718, %v11751
      %v11753 = vpop.f32.mrf.mxu0
      %v11754 = vadd.f32 %v11720, %v11753
      %11755 = vmatmul.bf16.gmra.mxu0 %v10355
      %v11756 = vpop.f32.mrf.mxu0
      %v11757 = vadd.f32 %v11723, %v11756
      %v11758 = vpop.f32.mrf.mxu0
      %v11759 = vadd.f32 %v11725, %v11758
      %11760 = vdwg.mxu0
      %11761 = vmatpush.bf16.msra.mxu0 %v11226
      %11762 = vmatpush.bf16.msra.mxu0 %v11225
      %11763 = vmatpush.bf16.msra.mxu0 %v11224
      %11764 = vmatpush.bf16.msra.mxu0 %v11223
      %11765 = vmatpush.bf16.msra.mxu0 %v11222
      %11766 = vmatpush.bf16.msra.mxu0 %v11221
      %11767 = vmatpush.bf16.msra.mxu0 %v11220
      %11768 = vmatpush.bf16.msra.mxu0 %v11219
      %11769 = vmatmul.bf16.gmra.mxu0 %v10292
      %v11770 = vpop.f32.mrf.mxu0
      %v11771 = vadd.f32 %v11737, %v11770
      %v11772 = vpop.f32.mrf.mxu0
      %v11773 = vadd.f32 %v11739, %v11772
      %11774 = vmatmul.bf16.gmra.mxu0 %v10308
      %v11775 = vpop.f32.mrf.mxu0
      %v11776 = vadd.f32 %v11742, %v11775
      %v11777 = vpop.f32.mrf.mxu0
      %v11778 = vadd.f32 %v11744, %v11777
      %11779 = vmatmul.bf16.gmra.mxu0 %v10324
      %v11780 = vpop.f32.mrf.mxu0
      %v11781 = vadd.f32 %v11747, %v11780
      %v11782 = vpop.f32.mrf.mxu0
      %v11783 = vadd.f32 %v11749, %v11782
      %11784 = vmatmul.bf16.gmra.mxu0 %v10340
      %v11785 = vpop.f32.mrf.mxu0
      %v11786 = vadd.f32 %v11752, %v11785
      %v11787 = vpop.f32.mrf.mxu0
      %v11788 = vadd.f32 %v11754, %v11787
      %11789 = vmatmul.bf16.gmra.mxu0 %v10356
      %v11790 = vpop.f32.mrf.mxu0
      %v11791 = vadd.f32 %v11757, %v11790
      %v11792 = vpop.f32.mrf.mxu0
      %v11793 = vadd.f32 %v11759, %v11792
      %11794 = vdwg.mxu0
      %11795 = vmatpush.bf16.msra.mxu0 %v11234
      %11796 = vmatpush.bf16.msra.mxu0 %v11233
      %11797 = vmatpush.bf16.msra.mxu0 %v11232
      %11798 = vmatpush.bf16.msra.mxu0 %v11231
      %11799 = vmatpush.bf16.msra.mxu0 %v11230
      %11800 = vmatpush.bf16.msra.mxu0 %v11229
      %11801 = vmatpush.bf16.msra.mxu0 %v11228
      %11802 = vmatpush.bf16.msra.mxu0 %v11227
      %11803 = vmatmul.bf16.gmra.mxu0 %v10293
      %v11804 = vpop.f32.mrf.mxu0
      %v11805 = vadd.f32 %v11771, %v11804
      %v11806 = vpop.f32.mrf.mxu0
      %v11807 = vadd.f32 %v11773, %v11806
      %11808 = vmatmul.bf16.gmra.mxu0 %v10309
      %v11809 = vpop.f32.mrf.mxu0
      %v11810 = vadd.f32 %v11776, %v11809
      %v11811 = vpop.f32.mrf.mxu0
      %v11812 = vadd.f32 %v11778, %v11811
      %11813 = vmatmul.bf16.gmra.mxu0 %v10325
      %v11814 = vpop.f32.mrf.mxu0
      %v11815 = vadd.f32 %v11781, %v11814
      %v11816 = vpop.f32.mrf.mxu0
      %v11817 = vadd.f32 %v11783, %v11816
      %11818 = vmatmul.bf16.gmra.mxu0 %v10341
      %v11819 = vpop.f32.mrf.mxu0
      %v11820 = vadd.f32 %v11786, %v11819
      %v11821 = vpop.f32.mrf.mxu0
      %v11822 = vadd.f32 %v11788, %v11821
      %11823 = vmatmul.bf16.gmra.mxu0 %v10357
      %v11824 = vpop.f32.mrf.mxu0
      %v11825 = vadd.f32 %v11791, %v11824
      %v11826 = vpop.f32.mrf.mxu0
      %v11827 = vadd.f32 %v11793, %v11826
      %11828 = vdwg.mxu0
      %11829 = vmatpush.bf16.msra.mxu0 %v11242
      %11830 = vmatpush.bf16.msra.mxu0 %v11241
      %11831 = vmatpush.bf16.msra.mxu0 %v11240
      %11832 = vmatpush.bf16.msra.mxu0 %v11239
      %11833 = vmatpush.bf16.msra.mxu0 %v11238
      %11834 = vmatpush.bf16.msra.mxu0 %v11237
      %11835 = vmatpush.bf16.msra.mxu0 %v11236
      %11836 = vmatpush.bf16.msra.mxu0 %v11235
      %11837 = vmatmul.bf16.gmra.mxu0 %v10294
      %v11838 = vpop.f32.mrf.mxu0
      %v11839 = vadd.f32 %v11805, %v11838
      %v11840 = vpop.f32.mrf.mxu0
      %v11841 = vadd.f32 %v11807, %v11840
      %11842 = vmatmul.bf16.gmra.mxu0 %v10310
      %v11843 = vpop.f32.mrf.mxu0
      %v11844 = vadd.f32 %v11810, %v11843
      %v11845 = vpop.f32.mrf.mxu0
      %v11846 = vadd.f32 %v11812, %v11845
      %11847 = vmatmul.bf16.gmra.mxu0 %v10326
      %v11848 = vpop.f32.mrf.mxu0
      %v11849 = vadd.f32 %v11815, %v11848
      %v11850 = vpop.f32.mrf.mxu0
      %v11851 = vadd.f32 %v11817, %v11850
      %11852 = vmatmul.bf16.gmra.mxu0 %v10342
      %v11853 = vpop.f32.mrf.mxu0
      %v11854 = vadd.f32 %v11820, %v11853
      %v11855 = vpop.f32.mrf.mxu0
      %v11856 = vadd.f32 %v11822, %v11855
      %11857 = vmatmul.bf16.gmra.mxu0 %v10358
      %v11858 = vpop.f32.mrf.mxu0
      %v11859 = vadd.f32 %v11825, %v11858
      %v11860 = vpop.f32.mrf.mxu0
      %v11861 = vadd.f32 %v11827, %v11860
      %11862 = vdwg.mxu0
      %11863 = vmatpush.bf16.msra.mxu0 %v11250
      %11864 = vmatpush.bf16.msra.mxu0 %v11249
      %11865 = vmatpush.bf16.msra.mxu0 %v11248
      %11866 = vmatpush.bf16.msra.mxu0 %v11247
      %11867 = vmatpush.bf16.msra.mxu0 %v11246
      %11868 = vmatpush.bf16.msra.mxu0 %v11245
      %11869 = vmatpush.bf16.msra.mxu0 %v11244
      %11870 = vmatpush.bf16.msra.mxu0 %v11243
      %11871 = vmatmul.bf16.gmra.mxu0 %v10295
      %v11872 = vpop.f32.mrf.mxu0
      %v11873 = vadd.f32 %v11839, %v11872
      %v11874 = vpop.f32.mrf.mxu0
      %v11875 = vadd.f32 %v11841, %v11874
      %11876 = vmatmul.bf16.gmra.mxu0 %v10311
      %v11877 = vpop.f32.mrf.mxu0
      %v11878 = vadd.f32 %v11844, %v11877
      %v11879 = vpop.f32.mrf.mxu0
      %v11880 = vadd.f32 %v11846, %v11879
      %11881 = vmatmul.bf16.gmra.mxu0 %v10327
      %v11882 = vpop.f32.mrf.mxu0
      %v11883 = vadd.f32 %v11849, %v11882
      %v11884 = vpop.f32.mrf.mxu0
      %v11885 = vadd.f32 %v11851, %v11884
      %11886 = vmatmul.bf16.gmra.mxu0 %v10343
      %v11887 = vpop.f32.mrf.mxu0
      %v11888 = vadd.f32 %v11854, %v11887
      %v11889 = vpop.f32.mrf.mxu0
      %v11890 = vadd.f32 %v11856, %v11889
      %11891 = vmatmul.bf16.gmra.mxu0 %v10359
      %v11892 = vpop.f32.mrf.mxu0
      %v11893 = vadd.f32 %v11859, %v11892
      %v11894 = vpop.f32.mrf.mxu0
      %v11895 = vadd.f32 %v11861, %v11894
      %11896 = vdwg.mxu0
      %11897 = vmatpush.bf16.msra.mxu0 %v11258
      %11898 = vmatpush.bf16.msra.mxu0 %v11257
      %11899 = vmatpush.bf16.msra.mxu0 %v11256
      %11900 = vmatpush.bf16.msra.mxu0 %v11255
      %11901 = vmatpush.bf16.msra.mxu0 %v11254
      %11902 = vmatpush.bf16.msra.mxu0 %v11253
      %11903 = vmatpush.bf16.msra.mxu0 %v11252
      %11904 = vmatpush.bf16.msra.mxu0 %v11251
      %11905 = vmatmul.bf16.gmra.mxu0 %v10296
      %v11906 = vpop.f32.mrf.mxu0
      %v11907 = vadd.f32 %v11873, %v11906
      %v11908 = vpop.f32.mrf.mxu0
      %v11909 = vadd.f32 %v11875, %v11908
      %11910 = vmatmul.bf16.gmra.mxu0 %v10312
      %v11911 = vpop.f32.mrf.mxu0
      %v11912 = vadd.f32 %v11878, %v11911
      %v11913 = vpop.f32.mrf.mxu0
      %v11914 = vadd.f32 %v11880, %v11913
      %11915 = vmatmul.bf16.gmra.mxu0 %v10328
      %v11916 = vpop.f32.mrf.mxu0
      %v11917 = vadd.f32 %v11883, %v11916
      %v11918 = vpop.f32.mrf.mxu0
      %v11919 = vadd.f32 %v11885, %v11918
      %11920 = vmatmul.bf16.gmra.mxu0 %v10344
      %v11921 = vpop.f32.mrf.mxu0
      %v11922 = vadd.f32 %v11888, %v11921
      %v11923 = vpop.f32.mrf.mxu0
      %v11924 = vadd.f32 %v11890, %v11923
      %11925 = vmatmul.bf16.gmra.mxu0 %v10360
      %v11926 = vpop.f32.mrf.mxu0
      %v11927 = vadd.f32 %v11893, %v11926
      %v11928 = vpop.f32.mrf.mxu0
      %v11929 = vadd.f32 %v11895, %v11928
      %11930 = vdwg.mxu0
      %v11931 = vadd.f32 %v9125, %v11907
      %v11932 = vadd.f32 %v9126, %v11909
      %v11933 = vadd.f32 %v9127, %v11912
      %v11934 = vadd.f32 %v9128, %v11914
      %v11935 = vadd.f32 %v9129, %v11917
      %v11936 = vadd.f32 %v9130, %v11919
      %v11937 = vadd.f32 %v9131, %v11922
      %v11938 = vadd.f32 %v9132, %v11924
      %v11939 = vadd.f32 %v9133, %v11927
      %v11940 = vadd.f32 %v9134, %v11929
      %v11941 = vsel %vm635, %v11931, 0.0
      %11942 = vadd.xlane.f32.xlu0 %v11941
      %v11943 = vpop.xlane.xlu0 %11942
      %v11944 = vsel %vm635, %v11932, 0.0
      %11945 = vadd.xlane.f32.xlu0 %v11944
      %v11946 = vpop.xlane.xlu0 %11945
      %v11947 = vsel %vm635, %v11933, 0.0
      %11948 = vadd.xlane.f32.xlu0 %v11947
      %v11949 = vpop.xlane.xlu0 %11948
      %v11950 = vsel %vm635, %v11934, 0.0
      %11951 = vadd.xlane.f32.xlu0 %v11950
      %v11952 = vpop.xlane.xlu0 %11951
      %v11953 = vsel %vm635, %v11935, 0.0
      %11954 = vadd.xlane.f32.xlu0 %v11953
      %v11955 = vpop.xlane.xlu0 %11954
      %v11956 = vsel %vm635, %v11936, 0.0
      %11957 = vadd.xlane.f32.xlu0 %v11956
      %v11958 = vpop.xlane.xlu0 %11957
      %v11959 = vsel %vm635, %v11937, 0.0
      %11960 = vadd.xlane.f32.xlu0 %v11959
      %v11961 = vpop.xlane.xlu0 %11960
      %v11962 = vsel %vm635, %v11938, 0.0
      %11963 = vadd.xlane.f32.xlu0 %v11962
      %v11964 = vpop.xlane.xlu0 %11963
      %v11965 = vsel %vm635, %v11939, 0.0
      %11966 = vadd.xlane.f32.xlu0 %v11965
      %v11967 = vpop.xlane.xlu0 %11966
      %v11968 = vsel %vm635, %v11940, 0.0
      %11969 = vadd.xlane.f32.xlu0 %v11968
      %v11970 = vpop.xlane.xlu0 %11969
      %v11971 = vmul.f32 %v11943, %v1187
      %v11972 = vmul.f32 %v11946, %v1187
      %v11973 = vmul.f32 %v11949, %v1187
      %v11974 = vmul.f32 %v11952, %v1187
      %v11975 = vmul.f32 %v11955, %v1187
      %v11976 = vmul.f32 %v11958, %v1187
      %v11977 = vmul.f32 %v11961, %v1187
      %v11978 = vmul.f32 %v11964, %v1187
      %v11979 = vmul.f32 %v11967, %v1187
      %v11980 = vmul.f32 %v11970, %v1187
      %v11981 = vsub.f32 %v11931, %v11971
      %v11982 = vsub.f32 %v11932, %v11972
      %v11983 = vsub.f32 %v11933, %v11973
      %v11984 = vsub.f32 %v11934, %v11974
      %v11985 = vsub.f32 %v11935, %v11975
      %v11986 = vsub.f32 %v11936, %v11976
      %v11987 = vsub.f32 %v11937, %v11977
      %v11988 = vsub.f32 %v11938, %v11978
      %v11989 = vsub.f32 %v11939, %v11979
      %v11990 = vsub.f32 %v11940, %v11980
      %v11991 = vmul.f32 %v11981, %v11981
      %v11992 = vmul.f32 %v11982, %v11982
      %v11993 = vmul.f32 %v11983, %v11983
      %v11994 = vmul.f32 %v11984, %v11984
      %v11995 = vmul.f32 %v11985, %v11985
      %v11996 = vmul.f32 %v11986, %v11986
      %v11997 = vmul.f32 %v11987, %v11987
      %v11998 = vmul.f32 %v11988, %v11988
      %v11999 = vmul.f32 %v11989, %v11989
      %v12000 = vmul.f32 %v11990, %v11990
      %v12001 = vsel %vm635, %v11991, 0.0
      %12002 = vadd.xlane.f32.xlu0 %v12001
      %v12003 = vpop.xlane.xlu0 %12002
      %v12004 = vsel %vm635, %v11992, 0.0
      %12005 = vadd.xlane.f32.xlu0 %v12004
      %v12006 = vpop.xlane.xlu0 %12005
      %v12007 = vsel %vm635, %v11993, 0.0
      %12008 = vadd.xlane.f32.xlu0 %v12007
      %v12009 = vpop.xlane.xlu0 %12008
      %v12010 = vsel %vm635, %v11994, 0.0
      %12011 = vadd.xlane.f32.xlu0 %v12010
      %v12012 = vpop.xlane.xlu0 %12011
      %v12013 = vsel %vm635, %v11995, 0.0
      %12014 = vadd.xlane.f32.xlu0 %v12013
      %v12015 = vpop.xlane.xlu0 %12014
      %v12016 = vsel %vm635, %v11996, 0.0
      %12017 = vadd.xlane.f32.xlu0 %v12016
      %v12018 = vpop.xlane.xlu0 %12017
      %v12019 = vsel %vm635, %v11997, 0.0
      %12020 = vadd.xlane.f32.xlu0 %v12019
      %v12021 = vpop.xlane.xlu0 %12020
      %v12022 = vsel %vm635, %v11998, 0.0
      %12023 = vadd.xlane.f32.xlu0 %v12022
      %v12024 = vpop.xlane.xlu0 %12023
      %v12025 = vsel %vm635, %v11999, 0.0
      %12026 = vadd.xlane.f32.xlu0 %v12025
      %v12027 = vpop.xlane.xlu0 %12026
      %v12028 = vsel %vm635, %v12000, 0.0
      %12029 = vadd.xlane.f32.xlu0 %v12028
      %v12030 = vpop.xlane.xlu0 %12029
      %v12031 = vmul.f32 %v12003, %v1187
      %v12032 = vmul.f32 %v12006, %v1187
      %v12033 = vmul.f32 %v12009, %v1187
      %v12034 = vmul.f32 %v12012, %v1187
      %v12035 = vmul.f32 %v12015, %v1187
      %v12036 = vmul.f32 %v12018, %v1187
      %v12037 = vmul.f32 %v12021, %v1187
      %v12038 = vmul.f32 %v12024, %v1187
      %v12039 = vmul.f32 %v12027, %v1187
      %v12040 = vmul.f32 %v12030, %v1187
      %v12041 = vadd.f32 %v12031, 1e-05
      %v12042 = vadd.f32 %v12032, 1e-05
      %v12043 = vadd.f32 %v12033, 1e-05
      %v12044 = vadd.f32 %v12034, 1e-05
      %v12045 = vadd.f32 %v12035, 1e-05
      %v12046 = vadd.f32 %v12036, 1e-05
      %v12047 = vadd.f32 %v12037, 1e-05
      %v12048 = vadd.f32 %v12038, 1e-05
      %v12049 = vadd.f32 %v12039, 1e-05
      %v12050 = vadd.f32 %v12040, 1e-05
      %v12051 = vrsqrt.pop %v12041
      %v12052 = vmul.f32 %v12051, %v12041
      %v12053 = vmul.f32 %v12052, %v12051
      %v12054 = vmul.f32 0.5, %v12053
      %v12055 = vsub.f32 1.5, %v12054
      %v12056 = vmul.f32 %v12051, %v12055
      %vm12057 = vweird.f32 %v12041
      %vm12058 = vweird.f32 %v12051
      %vm12059 = vmor %vm12057, %vm12058
      %v12060 = vsel %vm12059, %v12051, %v12056
      %v12061 = vrsqrt.pop %v12042
      %v12062 = vmul.f32 %v12061, %v12042
      %v12063 = vmul.f32 %v12062, %v12061
      %v12064 = vmul.f32 0.5, %v12063
      %v12065 = vsub.f32 1.5, %v12064
      %v12066 = vmul.f32 %v12061, %v12065
      %vm12067 = vweird.f32 %v12042
      %vm12068 = vweird.f32 %v12061
      %vm12069 = vmor %vm12067, %vm12068
      %v12070 = vsel %vm12069, %v12061, %v12066
      %v12071 = vrsqrt.pop %v12043
      %v12072 = vmul.f32 %v12071, %v12043
      %v12073 = vmul.f32 %v12072, %v12071
      %v12074 = vmul.f32 0.5, %v12073
      %v12075 = vsub.f32 1.5, %v12074
      %v12076 = vmul.f32 %v12071, %v12075
      %vm12077 = vweird.f32 %v12043
      %vm12078 = vweird.f32 %v12071
      %vm12079 = vmor %vm12077, %vm12078
      %v12080 = vsel %vm12079, %v12071, %v12076
      %v12081 = vrsqrt.pop %v12044
      %v12082 = vmul.f32 %v12081, %v12044
      %v12083 = vmul.f32 %v12082, %v12081
      %v12084 = vmul.f32 0.5, %v12083
      %v12085 = vsub.f32 1.5, %v12084
      %v12086 = vmul.f32 %v12081, %v12085
      %vm12087 = vweird.f32 %v12044
      %vm12088 = vweird.f32 %v12081
      %vm12089 = vmor %vm12087, %vm12088
      %v12090 = vsel %vm12089, %v12081, %v12086
      %v12091 = vrsqrt.pop %v12045
      %v12092 = vmul.f32 %v12091, %v12045
      %v12093 = vmul.f32 %v12092, %v12091
      %v12094 = vmul.f32 0.5, %v12093
      %v12095 = vsub.f32 1.5, %v12094
      %v12096 = vmul.f32 %v12091, %v12095
      %vm12097 = vweird.f32 %v12045
      %vm12098 = vweird.f32 %v12091
      %vm12099 = vmor %vm12097, %vm12098
      %v12100 = vsel %vm12099, %v12091, %v12096
      %v12101 = vrsqrt.pop %v12046
      %v12102 = vmul.f32 %v12101, %v12046
      %v12103 = vmul.f32 %v12102, %v12101
      %v12104 = vmul.f32 0.5, %v12103
      %v12105 = vsub.f32 1.5, %v12104
      %v12106 = vmul.f32 %v12101, %v12105
      %vm12107 = vweird.f32 %v12046
      %vm12108 = vweird.f32 %v12101
      %vm12109 = vmor %vm12107, %vm12108
      %v12110 = vsel %vm12109, %v12101, %v12106
      %v12111 = vrsqrt.pop %v12047
      %v12112 = vmul.f32 %v12111, %v12047
      %v12113 = vmul.f32 %v12112, %v12111
      %v12114 = vmul.f32 0.5, %v12113
      %v12115 = vsub.f32 1.5, %v12114
      %v12116 = vmul.f32 %v12111, %v12115
      %vm12117 = vweird.f32 %v12047
      %vm12118 = vweird.f32 %v12111
      %vm12119 = vmor %vm12117, %vm12118
      %v12120 = vsel %vm12119, %v12111, %v12116
      %v12121 = vrsqrt.pop %v12048
      %v12122 = vmul.f32 %v12121, %v12048
      %v12123 = vmul.f32 %v12122, %v12121
      %v12124 = vmul.f32 0.5, %v12123
      %v12125 = vsub.f32 1.5, %v12124
      %v12126 = vmul.f32 %v12121, %v12125
      %vm12127 = vweird.f32 %v12048
      %vm12128 = vweird.f32 %v12121
      %vm12129 = vmor %vm12127, %vm12128
      %v12130 = vsel %vm12129, %v12121, %v12126
      %v12131 = vrsqrt.pop %v12049
      %v12132 = vmul.f32 %v12131, %v12049
      %v12133 = vmul.f32 %v12132, %v12131
      %v12134 = vmul.f32 0.5, %v12133
      %v12135 = vsub.f32 1.5, %v12134
      %v12136 = vmul.f32 %v12131, %v12135
      %vm12137 = vweird.f32 %v12049
      %vm12138 = vweird.f32 %v12131
      %vm12139 = vmor %vm12137, %vm12138
      %v12140 = vsel %vm12139, %v12131, %v12136
      %v12141 = vrsqrt.pop %v12050
      %v12142 = vmul.f32 %v12141, %v12050
      %v12143 = vmul.f32 %v12142, %v12141
      %v12144 = vmul.f32 0.5, %v12143
      %v12145 = vsub.f32 1.5, %v12144
      %v12146 = vmul.f32 %v12141, %v12145
      %vm12147 = vweird.f32 %v12050
      %vm12148 = vweird.f32 %v12141
      %vm12149 = vmor %vm12147, %vm12148
      %v12150 = vsel %vm12149, %v12141, %v12146
      %v12151 = vmul.f32 %v11981, %v12060
      %v12152 = vmul.f32 %v11982, %v12070
      %v12153 = vmul.f32 %v11983, %v12080
      %v12154 = vmul.f32 %v11984, %v12090
      %v12155 = vmul.f32 %v11985, %v12100
      %v12156 = vmul.f32 %v11986, %v12110
      %v12157 = vmul.f32 %v11987, %v12120
      %v12158 = vmul.f32 %v11988, %v12130
      %v12159 = vmul.f32 %v11989, %v12140
      %v12160 = vmul.f32 %v11990, %v12150
      %v12161 = vperm.slane %v8315, 4
      %v12162 = vmul.f32 %v12151, %v12161
      %v12163 = vmul.f32 %v12152, %v12161
      %v12164 = vmul.f32 %v12153, %v12161
      %v12165 = vmul.f32 %v12154, %v12161
      %v12166 = vmul.f32 %v12155, %v12161
      %v12167 = vmul.f32 %v12156, %v12161
      %v12168 = vmul.f32 %v12157, %v12161
      %v12169 = vmul.f32 %v12158, %v12161
      %v12170 = vmul.f32 %v12159, %v12161
      %v12171 = vmul.f32 %v12160, %v12161
      %v12172 = vperm.slane %v8315, 5
      %v12173 = vadd.f32 %v12162, %v12172
      %v12174 = vadd.f32 %v12163, %v12172
      %v12175 = vadd.f32 %v12164, %v12172
      %v12176 = vadd.f32 %v12165, %v12172
      %v12177 = vadd.f32 %v12166, %v12172
      %v12178 = vadd.f32 %v12167, %v12172
      %v12179 = vadd.f32 %v12168, %v12172
      %v12180 = vadd.f32 %v12169, %v12172
      %v12181 = vadd.f32 %v12170, %v12172
      %v12182 = vadd.f32 %v12171, %v12172
      %v12183 = vpack.c.bf16 %v12174, %v12173
      %v12184 = vpack.c.bf16 %v12176, %v12175
      %v12185 = vpack.c.bf16 %v12178, %v12177
      %v12186 = vpack.c.bf16 %v12180, %v12179
      %v12187 = vpack.c.bf16 %v12182, %v12181
      %v12188 = vld [vmem:[%s10] sm:$0xf]
      %v12189 = vld [vmem:[%s10 + $0x4] sm:$0xf]
      %v12190 = vld [vmem:[%s10 + $0x8] sm:$0xf]
      %v12191 = vld [vmem:[%s10 + $0xc] sm:$0xf]
      %v12192 = vld [vmem:[%s10 + $0x10] sm:$0xf]
      %v12193 = vld [vmem:[%s10 + $0x14] sm:$0xf]
      %v12194 = vld [vmem:[%s10 + $0x18] sm:$0xf]
      %v12195 = vld [vmem:[%s10 + $0x1c] sm:$0xf]
      %v12196 = vld [vmem:[%s11] sm:$0x1]
      %v12198 = vperm.slane %v12196, 0
      %v12208 = vunpack.c.l.b16 %v12188
      %v12209 = vunpack.c.l.b16 %v12189
      %v12210 = vunpack.c.l.b16 %v12190
      %v12211 = vunpack.c.l.b16 %v12191
      %v12212 = vunpack.c.l.b16 %v12192
      %v12213 = vunpack.c.l.b16 %v12193
      %v12214 = vunpack.c.l.b16 %v12194
      %v12215 = vunpack.c.l.b16 %v12195
      %v12216 = vpack.c.b16 %v12209, %v12208
      %v12217 = vpack.c.b16 %v12211, %v12210
      %v12218 = vpack.c.b16 %v12213, %v12212
      %v12219 = vpack.c.b16 %v12215, %v12214
      %v12225 = vsel %vm635, %v12183, 0
      %v12228 = vsel %vm635, %v12184, 0
      %v12231 = vsel %vm635, %v12185, 0
      %v12234 = vsel %vm635, %v12186, 0
      %v12237 = vsel %vm635, %v12187, 0
      %12239 = vmatpush.bf16.msra.mxu0 0
      %12240 = vmatpush.bf16.msra.mxu0 0
      %12241 = vmatpush.bf16.msra.mxu0 0
      %12242 = vmatpush.bf16.msra.mxu0 0
      %12243 = vmatpush.bf16.msra.mxu0 %v12219
      %12244 = vmatpush.bf16.msra.mxu0 %v12218
      %12245 = vmatpush.bf16.msra.mxu0 %v12217
      %12246 = vmatpush.bf16.msra.mxu0 %v12216
      %12247 = vmatmul.bf16.gmra.mxu0 %v12225
      %v12248 = vpop.f32.mrf.mxu0
      %v12249 = vadd.f32 %v12198, %v12248
      %v12250 = vpop.f32.mrf.mxu0
      %v12251 = vadd.f32 %v12198, %v12250
      %12252 = vmatmul.bf16.gmra.mxu0 %v12228
      %v12253 = vpop.f32.mrf.mxu0
      %v12254 = vadd.f32 %v12198, %v12253
      %v12255 = vpop.f32.mrf.mxu0
      %v12256 = vadd.f32 %v12198, %v12255
      %12257 = vmatmul.bf16.gmra.mxu0 %v12231
      %v12258 = vpop.f32.mrf.mxu0
      %v12259 = vadd.f32 %v12198, %v12258
      %v12260 = vpop.f32.mrf.mxu0
      %v12261 = vadd.f32 %v12198, %v12260
      %12262 = vmatmul.bf16.gmra.mxu0 %v12234
      %v12263 = vpop.f32.mrf.mxu0
      %v12264 = vadd.f32 %v12198, %v12263
      %v12265 = vpop.f32.mrf.mxu0
      %v12266 = vadd.f32 %v12198, %v12265
      %12267 = vmatmul.bf16.gmra.mxu0 %v12237
      %v12268 = vpop.f32.mrf.mxu0
      %v12269 = vadd.f32 %v12198, %v12268
      %v12270 = vpop.f32.mrf.mxu0
      %v12271 = vadd.f32 %v12198, %v12270
      %12272 = vdwg.mxu0
      %12273 = vst [vmem:[%s415] sm:$0xff] %v12249
      %12274 = vst [vmem:[%s415 + $0x8] sm:$0xff] %v12251
      %12275 = vst [vmem:[%s415 + $0x10] sm:$0xff] %v12254
      %12276 = vst [vmem:[%s415 + $0x18] sm:$0xff] %v12256
      %12277 = vst [vmem:[%s415 + $0x20] sm:$0xff] %v12259
      %12278 = vst [vmem:[%s415 + $0x28] sm:$0xff] %v12261
      %12279 = vst [vmem:[%s415 + $0x30] sm:$0xff] %v12264
      %12280 = vst [vmem:[%s415 + $0x38] sm:$0xff] %v12266
      %12281 = vst [vmem:[%s415 + $0x40] sm:$0xff] %v12269
      %12282 = vst [vmem:[%s415 + $0x48] sm:$0xff] %v12271
      %s12283 = smul.u32 10, %s23
      %p12284 = scmp.lt.s32.totalorder %s12283, 39
      %s12285 = scalar_select %p12284, %s12283, 39
      %s12286 = smul.addr %s12285, 8
      %s12287 = scalar_lea.vmem %s12, %s12286
      // Predicated region
      $region90: #{wave_transformer.1} parent=67 // pred_check
        %p12288 = pneg %p298
      $region91: #{wave_transformer.1} parent=67 // pred_check_branch
        %12290 = sbr.rel (%p12288) target = $region93
      $region92: #{wave_transformer.1} parent=67 // pred_region
        %s12291 = smul.u32 10, %s23
      $region93: #{wave_transformer.1} parent=67 // pred_fallthru
        _
    $region68: #{wave_transformer.1} parent=5 // pred_fallthru
      _
    %p12292 = scmp.le.s32.totalorder 2, %s18
    // Predicated region
    $region94: #{wave_transformer.1} parent=5 // pred_check
      %p12293 = pneg %p12292
    $region95: #{wave_transformer.1} parent=5 // pred_check_branch
      %12295 = sbr.rel (%p12293) target = $region97
    $region96: #{wave_transformer.1} parent=5 // pred_region
      %s12296 = ssub.s32 %s18, 2
      // Predicated region
      $region98: #{wave_transformer.1} parent=96 // pred_check
        %p12297 = pneg %p304
      $region99: #{wave_transformer.1} parent=96 // pred_check_branch
        %12299 = sbr.rel (%p12297) target = $region101
      $region100: #{wave_transformer.1} parent=96 // pred_region
        %s12300 = smul.u32 10, %s24
        %p12301 = scmp.lt.s32.totalorder %s12300, 39
        %s12302 = scalar_select %p12301, %s12300, 39
        %s12303 = smul.addr %s12302, 8
        %s12304 = scalar_lea.vmem %s12, %s12303
      $region101: #{wave_transformer.1} parent=96 // pred_fallthru
        _
    $region97: #{wave_transformer.1} parent=5 // pred_fallthru
      _
  $region6: #{wave_transformer.1} parent=0 // loop_footer
    %s22 = sadd.s32 1, %s18
  $region7: #{wave_transformer.1} parent=0 // loop_footer_branch
    %17 = sbr.rel target = $region3
  $region8: #{wave_transformer.1} parent=0 // loop_exit
    _

</llo_original>
